<compile_context>
chip_gen: v7x
topology: tpu7x:2x2x1
jax: 0.10.0
libtpu: 0.0.40
codegen_flags: <defaults>
</compile_context>

<pallas_src>
import functools

import jax
import jax.numpy as jnp
from jax.experimental import pallas as pl
from jax.experimental.pallas import tpu as pltpu


# ---------------------------------------------------------------------------
# Pallas kernels
# ---------------------------------------------------------------------------

def _patch_embed_kernel(p_ref, w_ref, b_ref, o_ref):
    # (TM, K)bf16 @ (K, D)bf16 + (1, D)f32 ; f32 MXU accumulation.
    o_ref[...] = (
        jnp.dot(p_ref[...], w_ref[...], preferred_element_type=jnp.float32)
        + b_ref[...]
    )


def _encoder_kernel(
    x_ref,
    ln1w, ln1b, wqkv, bqkv, wo, bo,
    wdn, bdn, wup, bup,
    ln2w, ln2b, w1, b1, w2, b2,
    feat_ref,
    xc, ctx_scr,
    *,
    num_heads, head_dim, n_real, n_pad, b_blk, eps, mlp_chunk,
):
    """One grid step = one transformer layer applied to one batch block.

    grid = (batch_blocks, depth); depth is the inner ("arbitrary") axis so the f32 sequence
    carry `xc` is valid; layer l+1 weights are prefetched by BlockSpec while layer l computes.
    attn_scale is pre-folded into the Q weights, adapter scale into the up-projection.
    """
    l = pl.program_id(1)
    M, D = xc.shape                         # M = b_blk * n_pad

    # --- layer 0: load the (padded) bf16 token sequence into the resident f32 carry ---
    @pl.when(l == 0)
    def _():
        xc[...] = x_ref[...].reshape(M, D).astype(jnp.float32)

    x = xc[...]                             # (M, D) f32

    def layernorm(v, w_r, b_r):
        mu = jnp.mean(v, axis=-1, keepdims=True)
        c = v - mu
        var = jnp.mean(c * c, axis=-1, keepdims=True)
        return c * jax.lax.rsqrt(var + eps) * w_r[...] + b_r[...]

    def linear(v, w_r, b_r):
        # bf16 MXU matmul, f32 accumulation, f32 bias.
        return (jnp.dot(v.astype(jnp.bfloat16), w_r[...],
                        preferred_element_type=jnp.float32) + b_r[...])

    # ---------------- attention on LayerNorm1(x) ----------------
    xn = layernorm(x, ln1w, ln1b)
    qkv = linear(xn, wqkv, bqkv).astype(jnp.bfloat16)            # (M, 3D) bf16, Q pre-scaled
    qkv = qkv.reshape(b_blk, n_pad, 3 * D)
    q = qkv[:, :, :D]                                            # lane slices at D offsets
    k = qkv[:, :, D:2 * D]
    v = qkv[:, :, 2 * D:]

    mask_keys = n_pad != n_real
    if mask_keys:
        key_valid = jax.lax.broadcasted_iota(jnp.int32, (n_pad, n_pad), 1) < n_real

    # Per-head softmax(QK^T)V; each head's context is written into a lane-aligned slice of a
    # bf16 VMEM scratch so the output projection is ONE full-K (M,D)@(D,D) matmul.
    for h in range(num_heads):
        lo = h * head_dim
        hi = lo + head_dim
        s = jnp.einsum('bqd,bkd->bqk', q[:, :, lo:hi], k[:, :, lo:hi],
                       preferred_element_type=jnp.float32)        # (b, n, n) f32
        if mask_keys:
            s = jnp.where(key_valid, s, jnp.float32(-1e30))
        s = s - jnp.max(s, axis=-1, keepdims=True)
        e = jnp.exp(s)
        p = e * pl.reciprocal(jnp.sum(e, axis=-1, keepdims=True), approx=True)
        ctx = jnp.einsum('bqk,bkd->bqd', p.astype(jnp.bfloat16), v[:, :, lo:hi],
                         preferred_element_type=jnp.float32)       # (b, n, hd)
        ctx_scr[:, lo:hi] = ctx.reshape(M, head_dim).astype(jnp.bfloat16)

    attn_proj = (jnp.dot(ctx_scr[...], wo[...], preferred_element_type=jnp.float32)
                 + bo[...])
    x = x + attn_proj                       # residual (drop_path = identity at eval)

    # -------- AdaptFormer adapter (layernorm 'none', add_residual=False) --------
    # bottleneck zero-padded to a lane-dense width; 0.1 scale folded into wup/bup.
    down = jnp.maximum(linear(x, wdn, bdn), 0.0)
    adapt_x = linear(down, wup, bup)

    # ---------------- MLP on LayerNorm2(x), hidden-dim chunked ----------------
    xn2 = layernorm(x, ln2w, ln2b).astype(jnp.bfloat16)
    Hh = w1.shape[1]
    mlp_out = None
    for c0 in range(0, Hh, mlp_chunk):
        c1 = c0 + mlp_chunk
        h1 = (jnp.dot(xn2, w1[:, c0:c1], preferred_element_type=jnp.float32)
              + b1[:, c0:c1])
        # exact GELU (PyTorch nn.GELU default): 0.5*x*(1+erf(x/sqrt(2)))
        h1 = 0.5 * h1 * (1.0 + jax.lax.erf(h1 * jnp.float32(0.7071067811865475)))
        part = jnp.dot(h1.astype(jnp.bfloat16), w2[c0:c1, :],
                       preferred_element_type=jnp.float32)
        mlp_out = part if mlp_out is None else mlp_out + part
    x_new = mlp_out + b2[...] + x + adapt_x

    xc[...] = x_new

    # --- last layer: fused mean pool over patch tokens (drop cls + pad tokens) ---
    @pl.when(l == pl.num_programs(1) - 1)
    def _():
        xb = x_new.reshape(b_blk, n_pad, D)
        rows = jax.lax.broadcasted_iota(jnp.int32, (n_pad, 1), 0)
        patch_mask = jnp.logical_and(rows >= 1, rows < n_real).astype(jnp.float32)
        feat_ref[...] = jnp.sum(xb * patch_mask, axis=1) * (1.0 / (n_real - 1))


# ---------------------------------------------------------------------------
# Pallas wrappers
# ---------------------------------------------------------------------------

def _pick_vmem_limit_bytes():
    try:
        info = pltpu.get_tpu_info()
        cap = int(getattr(info, "vmem_capacity_bytes", 128 * 1024 * 1024))
    except Exception:
        cap = 128 * 1024 * 1024
    return min(96 * 1024 * 1024, (cap * 3) // 4)


def patch_embed(patches_bf16, w, b):
    """Tiled over M so the (TM,K)/(TM,D) blocks pipeline; patches pre-cast to bf16."""
    M, K = patches_bf16.shape
    D = w.shape[1]
    TM = 256 if (M > 256 and M % 256 == 0) else M
    return pl.pallas_call(
        _patch_embed_kernel,
        out_shape=jax.ShapeDtypeStruct((M, D), jnp.float32),
        grid=(M // TM,),
        in_specs=[
            pl.BlockSpec((TM, K), lambda i: (i, 0)),
            pl.BlockSpec((K, D), lambda i: (0, 0)),
            pl.BlockSpec((1, D), lambda i: (0, 0)),
        ],
        out_specs=pl.BlockSpec((TM, D), lambda i: (i, 0)),
        compiler_params=pltpu.CompilerParams(dimension_semantics=("parallel",)),
    )(patches_bf16, w, b)


def _pick_batch_block(B):
    # Prefer >=2 batch blocks (dual-TC megacore on v7x) while keeping the block modest.
    if B >= 2 and B % 2 == 0:
        b_blk = min(B // 2, 8)
        while B % b_blk != 0:
            b_blk -= 1
        return b_blk
    return B


def encoder_blocks(xseq_bf16, stacked, *, num_heads, n_real, eps=1e-6):
    """All transformer blocks in one pallas_call; returns pooled (B, D) features."""
    B, n_pad, D = xseq_bf16.shape
    depth = stacked[0].shape[0]
    head_dim = D // num_heads
    mlp_hidden = stacked[12].shape[2]

    b_blk = _pick_batch_block(B)
    num_bb = B // b_blk

    # cap the live f32 MLP intermediate (v7x VMEM budget); single chunk for small configs
    mlp_chunk = 1024 if (mlp_hidden > 2048 and mlp_hidden % 1024 == 0) else mlp_hidden

    kernel = functools.partial(
        _encoder_kernel,
        num_heads=num_heads, head_dim=head_dim,
        n_real=n_real, n_pad=n_pad, b_blk=b_blk,
        eps=eps, mlp_chunk=mlp_chunk,
    )

    def wspec(arr):
        nd = arr.ndim
        # leading depth axis selected by the layer grid index, squeezed in the kernel
        return pl.BlockSpec((None,) + arr.shape[1:],
                            lambda bb, l, _nd=nd: (l,) + (0,) * (_nd - 1))

    x_spec = pl.BlockSpec((b_blk, n_pad, D), lambda bb, l: (bb, 0, 0))
    # 3-D output so the (b_blk, D) block equals the trailing array dims (layout-legal for
    # any b_blk); reshaped to (B, D) by the caller.
    feat_spec = pl.BlockSpec((None, b_blk, D), lambda bb, l: (bb, 0, 0))

    feat = pl.pallas_call(
        kernel,
        out_shape=jax.ShapeDtypeStruct((num_bb, b_blk, D), jnp.float32),
        grid=(num_bb, depth),
        in_specs=[x_spec] + [wspec(a) for a in stacked],
        out_specs=feat_spec,
        scratch_shapes=[
            pltpu.VMEM((b_blk * n_pad, D), jnp.float32),    # resident activation carry
            pltpu.VMEM((b_blk * n_pad, D), jnp.bfloat16),   # per-head context concat
        ],
        compiler_params=pltpu.CompilerParams(
            dimension_semantics=("parallel", "arbitrary"),
            vmem_limit_bytes=_pick_vmem_limit_bytes(),
        ),
    )(xseq_bf16, *stacked)
    return feat.reshape(B, D)


# ---------------------------------------------------------------------------
# Parameters (deterministic synthetic init; weights bf16, biases/LN f32).
# attn_scale is folded into the Q third of wqkv/bqkv, adapter scale into wup/bup, and the
# adapter bottleneck is zero-padded to a multiple of 128 -- all mathematically equivalent
# to the PyTorch module's forward.
# ---------------------------------------------------------------------------

def init_params(key, *, in_chans, patch, embed_dim, depth, mlp_hidden, bottleneck,
                num_heads, adapter_scale, H, W):
    nh, nw = H // patch, W // patch
    n_real = nh * nw + 1
    K = in_chans * patch * patch
    D = embed_dim
    head_dim = D // num_heads
    attn_scale = head_dim ** (-0.5)
    bn_pad = ((bottleneck + 127) // 128) * 128
    keys = iter(jax.random.split(key, 64))
    bf16 = jnp.bfloat16

    def nrm(shape, std=0.02):
        return std * jax.random.normal(next(keys), shape, jnp.float32)

    # fused qkv with attn_scale folded into Q (columns [:D]) before the bf16 cast
    wqkv = nrm((depth, D, 3 * D)).at[:, :, :D].multiply(attn_scale)
    bqkv = nrm((depth, 1, 3 * D)).at[:, :, :D].multiply(attn_scale)

    # adapter: bottleneck zero-padded to bn_pad; 0.1 scale folded into the up projection
    wdn = jnp.pad(nrm((depth, D, bottleneck)), ((0, 0), (0, 0), (0, bn_pad - bottleneck)))
    bdn = jnp.pad(nrm((depth, 1, bottleneck)), ((0, 0), (0, 0), (0, bn_pad - bottleneck)))
    wup = jnp.pad(nrm((depth, bottleneck, D)) * adapter_scale,
                  ((0, 0), (0, bn_pad - bottleneck), (0, 0)))
    bup = nrm((depth, 1, D)) * adapter_scale

    params = {
        "patch_w": nrm((K, D)).astype(bf16),        # Conv2d weight, flattened & transposed
        "patch_b": nrm((1, D)),
        "cls_token": nrm((1, 1, D)),
        "pos_embed": nrm((1, n_real, D)),
        # per-layer weights stacked along a leading depth axis (streamed via the grid)
        "stacked": [
            jnp.ones((depth, 1, D), jnp.float32),   # ln1 weight
            jnp.zeros((depth, 1, D), jnp.float32),  # ln1 bias
            wqkv.astype(bf16),                      # fused qkv weight (Q pre-scaled)
            bqkv,                                   # fused qkv bias   (Q pre-scaled)
            nrm((depth, D, D)).astype(bf16),        # attn proj weight
            nrm((depth, 1, D)),                     # attn proj bias
            wdn.astype(bf16),                       # adapter down weight (padded)
            bdn,                                    # adapter down bias   (padded)
            wup.astype(bf16),                       # adapter up weight (scaled, padded)
            bup,                                    # adapter up bias   (scaled)
            jnp.ones((depth, 1, D), jnp.float32),   # ln2 weight
            jnp.zeros((depth, 1, D), jnp.float32),  # ln2 bias
            nrm((depth, D, mlp_hidden)).astype(bf16),   # mlp fc1 weight
            nrm((depth, 1, mlp_hidden)),                # mlp fc1 bias
            nrm((depth, mlp_hidden, D)).astype(bf16),   # mlp fc2 weight
            nrm((depth, 1, D)),                         # mlp fc2 bias
        ],
    }
    return params


# ---------------------------------------------------------------------------
# Forward (ViTSeg_CNNprompt_adapt5.forward, out_seg=False branch)
# ---------------------------------------------------------------------------

def vitseg_forward(x_nchw, params, *, patch_size, num_heads):
    B, C, H, W = x_nchw.shape
    p = patch_size
    nh, nw = H // p, W // p
    num_patches = nh * nw
    n_real = num_patches + 1
    n_pad = ((n_real + 127) // 128) * 128      # lane-dense token count (scores / P@V)

    # patch unfold (glue; matches Conv2d(kernel=stride=patch) flattening order c,u,v)
    patches = (
        x_nchw.reshape(B, C, nh, p, nw, p)
        .transpose(0, 2, 4, 1, 3, 5)
        .reshape(B * num_patches, C * p * p)
    ).astype(jnp.bfloat16)
    tok = patch_embed(patches, params["patch_w"], params["patch_b"])   # (B*P, D) f32
    D = tok.shape[-1]
    tok = tok.reshape(B, num_patches, D)

    # cls token + positional embedding (glue), pad tokens, ship bf16 to the kernel
    cls = jnp.broadcast_to(params["cls_token"], (B, 1, D)).astype(tok.dtype)
    xseq = jnp.concatenate([cls, tok], axis=1) + params["pos_embed"].astype(tok.dtype)
    if n_pad > n_real:
        xseq = jnp.pad(xseq, ((0, 0), (0, n_pad - n_real), (0, 0)))
    xseq = xseq.astype(jnp.bfloat16)

    # all transformer blocks + fused mean pool in one Pallas call
    feat = encoder_blocks(xseq, params["stacked"], num_heads=num_heads, n_real=n_real)
    return {"seg": None, "feat": feat}


# ---------------------------------------------------------------------------

if __name__ == "__main__":
    key = jax.random.PRNGKey(0)
    k_param, k_x = jax.random.split(key)

    # small, shape-consistent configuration
    B, C, H, W = 2, 3, 32, 32
    patch_size = 16            # -> 2x2 = 4 patches, N = 5 tokens (padded to 128)
    embed_dim = 256
    depth = 2
    num_heads = 2              # head_dim = 128 (lane-aligned head slices)
    mlp_hidden = embed_dim * 4
    bottleneck = 64            # AdaptFormer adapter bottleneck (zero-padded to 128)
    adapter_scale = 0.1

    params = init_params(
        k_param,
        in_chans=C, patch=patch_size, embed_dim=embed_dim, depth=depth,
        mlp_hidden=mlp_hidden, bottleneck=bottleneck,
        num_heads=num_heads, adapter_scale=adapter_scale, H=H, W=W,
    )
    x = jax.random.normal(k_x, (B, C, H, W), jnp.float32)

    fwd = jax.jit(functools.partial(vitseg_forward, patch_size=patch_size,
                                    num_heads=num_heads))
    out = fwd(x, params)
    jax.block_until_ready(out["feat"])
    assert out["feat"].shape == (B, embed_dim)
    print("KERNEL_OK")
</pallas_src>

<mosaic_0001>
module attributes {stable_mosaic.version = 11 : i64} {
  func.func @_patch_embed_kernel(%arg0: i32, %arg1: memref<8x768xbf16, #tpu.memory_space<vmem>>, %arg2: memref<768x256xbf16, #tpu.memory_space<vmem>>, %arg3: memref<1x256xf32, #tpu.memory_space<vmem>>, %arg4: memref<8x256xf32, #tpu.memory_space<vmem>>) attributes {dimension_semantics = [#tpu.dimension_semantics<parallel>], iteration_bounds = array<i64: 1>, scalar_prefetch = 0 : i64, scratch_operands = 0 : i64, tpu.core_type = #tpu.core_type<tc>, window_params = [{transform_indices = @transform_0, window_bounds = array<i64: 8, 768>}, {pipeline_mode = #tpu.pipeline_mode<synchronous>, transform_indices = @transform_1, window_bounds = array<i64: 768, 256>}, {pipeline_mode = #tpu.pipeline_mode<synchronous>, transform_indices = @transform_2, window_bounds = array<i64: 1, 256>}, {transform_indices = @transform_3, window_bounds = array<i64: 8, 256>}]} {
    %c0 = arith.constant 0 : index
    %c0_0 = arith.constant 0 : index
    %0 = vector.load %arg1[%c0, %c0_0] : memref<8x768xbf16, #tpu.memory_space<vmem>>, vector<8x768xbf16>
    %c0_1 = arith.constant 0 : index
    %c0_2 = arith.constant 0 : index
    %1 = vector.load %arg2[%c0_1, %c0_2] : memref<768x256xbf16, #tpu.memory_space<vmem>>, vector<768x256xbf16>
    %cst = arith.constant dense<0.000000e+00> : vector<8x256xf32>
    %2 = tpu.matmul %0, %1, %cst {dimension_numbers = #tpu.dot_dimension_numbers<[1], [0], [0], [1], [0, 0, 1, 1], [], []>} : vector<8x768xbf16>, vector<768x256xbf16>, vector<8x256xf32> -> vector<8x256xf32>
    %c0_3 = arith.constant 0 : index
    %c0_4 = arith.constant 0 : index
    %3 = vector.load %arg3[%c0_3, %c0_4] : memref<1x256xf32, #tpu.memory_space<vmem>>, vector<1x256xf32>
    %4 = vector.broadcast %3 : vector<1x256xf32> to vector<8x256xf32>
    %5 = arith.addf %2, %4 : vector<8x256xf32>
    %c0_5 = arith.constant 0 : index
    %c0_6 = arith.constant 0 : index
    %6 = vector.load %arg4[%c0_5, %c0_6] : memref<8x256xf32, #tpu.memory_space<vmem>>, vector<8x256xf32>
    tpu.vector_store %arg4[%c0_5, %c0_6], %5 {strides = array<i32>} : memref<8x256xf32, #tpu.memory_space<vmem>>, vector<8x256xf32>,
    return
  }
  func.func @transform_0(%arg0: i32) -> (i32, i32) {
    %c0_i32 = arith.constant 0 : i32
    %c0_i32_0 = arith.constant 0 : i32
    return %arg0, %c0_i32 : i32, i32
  }
  func.func @transform_1(%arg0: i32) -> (i32, i32) {
    %c0_i32 = arith.constant 0 : i32
    %c0_i32_0 = arith.constant 0 : i32
    %c0_i32_1 = arith.constant 0 : i32
    return %c0_i32, %c0_i32_0 : i32, i32
  }
  func.func @transform_2(%arg0: i32) -> (i32, i32) {
    %c0_i32 = arith.constant 0 : i32
    %c0_i32_0 = arith.constant 0 : i32
    %c0_i32_1 = arith.constant 0 : i32
    return %c0_i32, %c0_i32_0 : i32, i32
  }
  func.func @transform_3(%arg0: i32) -> (i32, i32) {
    %c0_i32 = arith.constant 0 : i32
    %c0_i32_0 = arith.constant 0 : i32
    return %arg0, %c0_i32 : i32, i32
  }
}

module attributes {stable_mosaic.version = 11 : i64} {
  func.func @_encoder_kernel(%arg0: i32, %arg1: i32, %arg2: memref<1x128x256xbf16, #tpu.memory_space<vmem>>, %arg3: memref<1x1x256xf32, #tpu.memory_space<vmem>>, %arg4: memref<1x1x256xf32, #tpu.memory_space<vmem>>, %arg5: memref<1x256x768xbf16, #tpu.memory_space<vmem>>, %arg6: memref<1x1x768xf32, #tpu.memory_space<vmem>>, %arg7: memref<1x256x256xbf16, #tpu.memory_space<vmem>>, %arg8: memref<1x1x256xf32, #tpu.memory_space<vmem>>, %arg9: memref<1x256x128xbf16, #tpu.memory_space<vmem>>, %arg10: memref<1x1x128xf32, #tpu.memory_space<vmem>>, %arg11: memref<1x128x256xbf16, #tpu.memory_space<vmem>>, %arg12: memref<1x1x256xf32, #tpu.memory_space<vmem>>, %arg13: memref<1x1x256xf32, #tpu.memory_space<vmem>>, %arg14: memref<1x1x256xf32, #tpu.memory_space<vmem>>, %arg15: memref<1x256x1024xbf16, #tpu.memory_space<vmem>>, %arg16: memref<1x1x1024xf32, #tpu.memory_space<vmem>>, %arg17: memref<1x1024x256xbf16, #tpu.memory_space<vmem>>, %arg18: memref<1x1x256xf32, #tpu.memory_space<vmem>>, %arg19: memref<1x1x256xf32, #tpu.memory_space<vmem>>, %arg20: memref<128x256xf32, #tpu.memory_space<vmem>>, %arg21: memref<128x256xbf16, #tpu.memory_space<vmem>>) attributes {dimension_semantics = [#tpu.dimension_semantics<parallel>, #tpu.dimension_semantics<arbitrary>], iteration_bounds = array<i64: 2, 2>, scalar_prefetch = 0 : i64, scratch_operands = 2 : i64, tpu.core_type = #tpu.core_type<tc>, window_params = [{transform_indices = @transform_0, window_bounds = array<i64: 1, 128, 256>}, {transform_indices = @transform_1, window_bounds = array<i64: 1, 1, 256>}, {transform_indices = @transform_2, window_bounds = array<i64: 1, 1, 256>}, {transform_indices = @transform_3, window_bounds = array<i64: 1, 256, 768>}, {transform_indices = @transform_4, window_bounds = array<i64: 1, 1, 768>}, {transform_indices = @transform_5, window_bounds = array<i64: 1, 256, 256>}, {transform_indices = @transform_6, window_bounds = array<i64: 1, 1, 256>}, {transform_indices = @transform_7, window_bounds = array<i64: 1, 256, 128>}, {transform_indices = @transform_8, window_bounds = array<i64: 1, 1, 128>}, {transform_indices = @transform_9, window_bounds = array<i64: 1, 128, 256>}, {transform_indices = @transform_10, window_bounds = array<i64: 1, 1, 256>}, {transform_indices = @transform_11, window_bounds = array<i64: 1, 1, 256>}, {transform_indices = @transform_12, window_bounds = array<i64: 1, 1, 256>}, {transform_indices = @transform_13, window_bounds = array<i64: 1, 256, 1024>}, {transform_indices = @transform_14, window_bounds = array<i64: 1, 1, 1024>}, {transform_indices = @transform_15, window_bounds = array<i64: 1, 1024, 256>}, {transform_indices = @transform_16, window_bounds = array<i64: 1, 1, 256>}, {transform_indices = @transform_17, window_bounds = array<i64: 1, 1, 256>}]} {
    %c0_i32 = arith.constant 0 : i32
    %0 = arith.cmpi eq, %arg1, %c0_i32 : i32
    %1 = arith.extui %0 : i1 to i32
    %c0_i32_0 = arith.constant 0 : i32
    %2 = arith.cmpi ne, %1, %c0_i32_0 : i32
    scf.if %2 {
      %c0_87 = arith.constant 0 : index
      %c0_88 = arith.constant 0 : index
      %c0_89 = arith.constant 0 : index
      %169 = vector.load %arg2[%c0_87, %c0_88, %c0_89] : memref<1x128x256xbf16, #tpu.memory_space<vmem>>, vector<1x128x256xbf16>
      %170 = vector.shape_cast %169 : vector<1x128x256xbf16> to vector<128x256xbf16>
      %171 = arith.extf %170 : vector<128x256xbf16> to vector<128x256xf32>
      %c0_90 = arith.constant 0 : index
      %c0_91 = arith.constant 0 : index
      %172 = vector.load %arg20[%c0_90, %c0_91] : memref<128x256xf32, #tpu.memory_space<vmem>>, vector<128x256xf32>
      tpu.vector_store %arg20[%c0_90, %c0_91], %171 {strides = array<i32>} : memref<128x256xf32, #tpu.memory_space<vmem>>, vector<128x256xf32>,
    } else {
    }
    %c0 = arith.constant 0 : index
    %c0_1 = arith.constant 0 : index
    %3 = vector.load %arg20[%c0, %c0_1] : memref<128x256xf32, #tpu.memory_space<vmem>>, vector<128x256xf32>
    %cst = arith.constant dense<0.000000e+00> : vector<128xf32>
    %4 = vector.multi_reduction <add>, %3, %cst [1] : vector<128x256xf32> to vector<128xf32>
    %5 = vector.shape_cast %4 : vector<128xf32> to vector<128x1xf32>
    %cst_2 = arith.constant 2.560000e+02 : f32
    %6 = vector.broadcast %cst_2 : f32 to vector<128x1xf32>
    %7 = arith.divf %5, %6 : vector<128x1xf32>
    %8 = vector.broadcast %7 : vector<128x1xf32> to vector<128x256xf32>
    %9 = arith.subf %3, %8 : vector<128x256xf32>
    %10 = arith.mulf %9, %9 : vector<128x256xf32>
    %cst_3 = arith.constant dense<0.000000e+00> : vector<128xf32>
    %11 = vector.multi_reduction <add>, %10, %cst_3 [1] : vector<128x256xf32> to vector<128xf32>
    %12 = vector.shape_cast %11 : vector<128xf32> to vector<128x1xf32>
    %cst_4 = arith.constant 2.560000e+02 : f32
    %13 = vector.broadcast %cst_4 : f32 to vector<128x1xf32>
    %14 = arith.divf %12, %13 : vector<128x1xf32>
    %cst_5 = arith.constant 9.99999997E-7 : f32
    %15 = vector.broadcast %cst_5 : f32 to vector<128x1xf32>
    %16 = arith.addf %14, %15 : vector<128x1xf32>
    %17 = math.rsqrt %16 : vector<128x1xf32>
    %18 = vector.broadcast %17 : vector<128x1xf32> to vector<128x256xf32>
    %19 = arith.mulf %9, %18 : vector<128x256xf32>
    %c0_6 = arith.constant 0 : index
    %c0_7 = arith.constant 0 : index
    %c0_8 = arith.constant 0 : index
    %20 = vector.load %arg3[%c0_6, %c0_7, %c0_8] : memref<1x1x256xf32, #tpu.memory_space<vmem>>, vector<1x1x256xf32>
    %21 = vector.shape_cast %20 : vector<1x1x256xf32> to vector<1x256xf32>
    %22 = vector.broadcast %21 : vector<1x256xf32> to vector<128x256xf32>
    %23 = arith.mulf %19, %22 : vector<128x256xf32>
    %c0_9 = arith.constant 0 : index
    %c0_10 = arith.constant 0 : index
    %c0_11 = arith.constant 0 : index
    %24 = vector.load %arg4[%c0_9, %c0_10, %c0_11] : memref<1x1x256xf32, #tpu.memory_space<vmem>>, vector<1x1x256xf32>
    %25 = vector.shape_cast %24 : vector<1x1x256xf32> to vector<1x256xf32>
    %26 = vector.broadcast %25 : vector<1x256xf32> to vector<128x256xf32>
    %27 = arith.addf %23, %26 : vector<128x256xf32>
    %28 = arith.truncf %27 : vector<128x256xf32> to vector<128x256xbf16>
    %c0_12 = arith.constant 0 : index
    %c0_13 = arith.constant 0 : index
    %c0_14 = arith.constant 0 : index
    %29 = vector.load %arg5[%c0_12, %c0_13, %c0_14] : memref<1x256x768xbf16, #tpu.memory_space<vmem>>, vector<1x256x768xbf16>
    %30 = vector.shape_cast %29 : vector<1x256x768xbf16> to vector<256x768xbf16>
    %cst_15 = arith.constant dense<0.000000e+00> : vector<128x768xf32>
    %31 = tpu.matmul %28, %30, %cst_15 {dimension_numbers = #tpu.dot_dimension_numbers<[1], [0], [0], [1], [0, 0, 1, 1], [], []>} : vector<128x256xbf16>, vector<256x768xbf16>, vector<128x768xf32> -> vector<128x768xf32>
    %c0_16 = arith.constant 0 : index
    %c0_17 = arith.constant 0 : index
    %c0_18 = arith.constant 0 : index
    %32 = vector.load %arg6[%c0_16, %c0_17, %c0_18] : memref<1x1x768xf32, #tpu.memory_space<vmem>>, vector<1x1x768xf32>
    %33 = vector.shape_cast %32 : vector<1x1x768xf32> to vector<1x768xf32>
    %34 = vector.broadcast %33 : vector<1x768xf32> to vector<128x768xf32>
    %35 = arith.addf %31, %34 : vector<128x768xf32>
    %36 = arith.truncf %35 : vector<128x768xf32> to vector<128x768xbf16>
    %37 = vector.shape_cast %36 : vector<128x768xbf16> to vector<1x128x768xbf16>
    %38 = vector.extract_strided_slice %37 {offsets = [0, 0, 0], sizes = [1, 128, 256], strides = [1, 1, 1]} : vector<1x128x768xbf16> to vector<1x128x256xbf16>
    %39 = vector.extract_strided_slice %37 {offsets = [0, 0, 256], sizes = [1, 128, 256], strides = [1, 1, 1]} : vector<1x128x768xbf16> to vector<1x128x256xbf16>
    %40 = vector.extract_strided_slice %37 {offsets = [0, 0, 512], sizes = [1, 128, 256], strides = [1, 1, 1]} : vector<1x128x768xbf16> to vector<1x128x256xbf16>
    %41 = tpu.iota {dimensions = array<i32: 1>} : vector<128x128xi32>
    %c5_i32 = arith.constant 5 : i32
    %42 = vector.broadcast %c5_i32 : i32 to vector<128x128xi32>
    %43 = arith.cmpi slt, %41, %42 : vector<128x128xi32>
    %44 = vector.extract_strided_slice %38 {offsets = [0, 0, 0], sizes = [1, 128, 128], strides = [1, 1, 1]} : vector<1x128x256xbf16> to vector<1x128x128xbf16>
    %45 = vector.extract_strided_slice %39 {offsets = [0, 0, 0], sizes = [1, 128, 128], strides = [1, 1, 1]} : vector<1x128x256xbf16> to vector<1x128x128xbf16>
    "tpu.trace_start"() <{level = 10 : i32, message = "bqd,bkd->bqk"}> : () -> ()
    %cst_19 = arith.constant dense<0.000000e+00> : vector<1x128x128xf32>
    %46 = tpu.matmul %44, %45, %cst_19 {dimension_numbers = #tpu.dot_dimension_numbers<[2], [2], [1], [1], [0, 0, 0, 1, 1, 1], [0], [0]>} : vector<1x128x128xbf16>, vector<1x128x128xbf16>, vector<1x128x128xf32> -> vector<1x128x128xf32>
    %cst_20 = arith.constant -1.000000e+30 : f32
    "tpu.trace_stop"() : () -> ()
    %47 = vector.shape_cast %43 : vector<128x128xi1> to vector<1x128x128xi1>
    %48 = vector.broadcast %cst_20 : f32 to vector<1x128x128xf32>
    %49 = arith.select %47, %46, %48 : vector<1x128x128xi1>, vector<1x128x128xf32>
    %cst_21 = arith.constant dense<0xFF800000> : vector<1x128xf32>
    %50 = vector.multi_reduction <maximumf>, %49, %cst_21 [2] : vector<1x128x128xf32> to vector<1x128xf32>
    %51 = vector.shape_cast %50 : vector<1x128xf32> to vector<1x128x1xf32>
    %52 = vector.broadcast %51 : vector<1x128x1xf32> to vector<1x128x128xf32>
    %53 = arith.subf %49, %52 : vector<1x128x128xf32>
    %54 = math.exp %53 : vector<1x128x128xf32>
    %cst_22 = arith.constant dense<0.000000e+00> : vector<1x128xf32>
    %55 = vector.multi_reduction <add>, %54, %cst_22 [2] : vector<1x128x128xf32> to vector<1x128xf32>
    %56 = vector.shape_cast %55 : vector<1x128xf32> to vector<1x128x1xf32>
    %57 = tpu.reciprocal %56 {approx = true} : vector<1x128x1xf32> -> vector<1x128x1xf32>
    %58 = vector.broadcast %57 : vector<1x128x1xf32> to vector<1x128x128xf32>
    %59 = arith.mulf %54, %58 : vector<1x128x128xf32>
    %60 = arith.truncf %59 : vector<1x128x128xf32> to vector<1x128x128xbf16>
    %61 = vector.extract_strided_slice %40 {offsets = [0, 0, 0], sizes = [1, 128, 128], strides = [1, 1, 1]} : vector<1x128x256xbf16> to vector<1x128x128xbf16>
    "tpu.trace_start"() <{level = 10 : i32, message = "bqk,bkd->bqd"}> : () -> ()
    %cst_23 = arith.constant dense<0.000000e+00> : vector<1x128x128xf32>
    %62 = tpu.matmul %60, %61, %cst_23 {dimension_numbers = #tpu.dot_dimension_numbers<[2], [1], [1], [2], [0, 0, 0, 1, 1, 2], [0], [0]>} : vector<1x128x128xbf16>, vector<1x128x128xbf16>, vector<1x128x128xf32> -> vector<1x128x128xf32>
    "tpu.trace_stop"() : () -> ()
    %63 = vector.shape_cast %62 : vector<1x128x128xf32> to vector<128x128xf32>
    %64 = arith.truncf %63 : vector<128x128xf32> to vector<128x128xbf16>
    %c0_24 = arith.constant 0 : index
    %c0_25 = arith.constant 0 : index
    %65 = vector.load %arg21[%c0_24, %c0_25] : memref<128x256xbf16, #tpu.memory_space<vmem>>, vector<128x128xbf16>
    tpu.vector_store %arg21[%c0_24, %c0_25], %64 {strides = array<i32>} : memref<128x256xbf16, #tpu.memory_space<vmem>>, vector<128x128xbf16>,
    %66 = vector.extract_strided_slice %38 {offsets = [0, 0, 128], sizes = [1, 128, 128], strides = [1, 1, 1]} : vector<1x128x256xbf16> to vector<1x128x128xbf16>
    %67 = vector.extract_strided_slice %39 {offsets = [0, 0, 128], sizes = [1, 128, 128], strides = [1, 1, 1]} : vector<1x128x256xbf16> to vector<1x128x128xbf16>
    "tpu.trace_start"() <{level = 10 : i32, message = "bqd,bkd->bqk"}> : () -> ()
    %cst_26 = arith.constant dense<0.000000e+00> : vector<1x128x128xf32>
    %68 = tpu.matmul %66, %67, %cst_26 {dimension_numbers = #tpu.dot_dimension_numbers<[2], [2], [1], [1], [0, 0, 0, 1, 1, 1], [0], [0]>} : vector<1x128x128xbf16>, vector<1x128x128xbf16>, vector<1x128x128xf32> -> vector<1x128x128xf32>
    %cst_27 = arith.constant -1.000000e+30 : f32
    "tpu.trace_stop"() : () -> ()
    %69 = vector.shape_cast %43 : vector<128x128xi1> to vector<1x128x128xi1>
    %70 = vector.broadcast %cst_27 : f32 to vector<1x128x128xf32>
    %71 = arith.select %69, %68, %70 : vector<1x128x128xi1>, vector<1x128x128xf32>
    %cst_28 = arith.constant dense<0xFF800000> : vector<1x128xf32>
    %72 = vector.multi_reduction <maximumf>, %71, %cst_28 [2] : vector<1x128x128xf32> to vector<1x128xf32>
    %73 = vector.shape_cast %72 : vector<1x128xf32> to vector<1x128x1xf32>
    %74 = vector.broadcast %73 : vector<1x128x1xf32> to vector<1x128x128xf32>
    %75 = arith.subf %71, %74 : vector<1x128x128xf32>
    %76 = math.exp %75 : vector<1x128x128xf32>
    %cst_29 = arith.constant dense<0.000000e+00> : vector<1x128xf32>
    %77 = vector.multi_reduction <add>, %76, %cst_29 [2] : vector<1x128x128xf32> to vector<1x128xf32>
    %78 = vector.shape_cast %77 : vector<1x128xf32> to vector<1x128x1xf32>
    %79 = tpu.reciprocal %78 {approx = true} : vector<1x128x1xf32> -> vector<1x128x1xf32>
    %80 = vector.broadcast %79 : vector<1x128x1xf32> to vector<1x128x128xf32>
    %81 = arith.mulf %76, %80 : vector<1x128x128xf32>
    %82 = arith.truncf %81 : vector<1x128x128xf32> to vector<1x128x128xbf16>
    %83 = vector.extract_strided_slice %40 {offsets = [0, 0, 128], sizes = [1, 128, 128], strides = [1, 1, 1]} : vector<1x128x256xbf16> to vector<1x128x128xbf16>
    "tpu.trace_start"() <{level = 10 : i32, message = "bqk,bkd->bqd"}> : () -> ()
    %cst_30 = arith.constant dense<0.000000e+00> : vector<1x128x128xf32>
    %84 = tpu.matmul %82, %83, %cst_30 {dimension_numbers = #tpu.dot_dimension_numbers<[2], [1], [1], [2], [0, 0, 0, 1, 1, 2], [0], [0]>} : vector<1x128x128xbf16>, vector<1x128x128xbf16>, vector<1x128x128xf32> -> vector<1x128x128xf32>
    "tpu.trace_stop"() : () -> ()
    %85 = vector.shape_cast %84 : vector<1x128x128xf32> to vector<128x128xf32>
    %86 = arith.truncf %85 : vector<128x128xf32> to vector<128x128xbf16>
    %c0_31 = arith.constant 0 : index
    %c128 = arith.constant 128 : index
    %87 = vector.load %arg21[%c0_31, %c128] : memref<128x256xbf16, #tpu.memory_space<vmem>>, vector<128x128xbf16>
    tpu.vector_store %arg21[%c0_31, %c128], %86 {strides = array<i32>} : memref<128x256xbf16, #tpu.memory_space<vmem>>, vector<128x128xbf16>,
    %c0_32 = arith.constant 0 : index
    %c0_33 = arith.constant 0 : index
    %88 = vector.load %arg21[%c0_32, %c0_33] : memref<128x256xbf16, #tpu.memory_space<vmem>>, vector<128x256xbf16>
    %c0_34 = arith.constant 0 : index
    %c0_35 = arith.constant 0 : index
    %c0_36 = arith.constant 0 : index
    %89 = vector.load %arg7[%c0_34, %c0_35, %c0_36] : memref<1x256x256xbf16, #tpu.memory_space<vmem>>, vector<1x256x256xbf16>
    %90 = vector.shape_cast %89 : vector<1x256x256xbf16> to vector<256x256xbf16>
    %cst_37 = arith.constant dense<0.000000e+00> : vector<128x256xf32>
    %91 = tpu.matmul %88, %90, %cst_37 {dimension_numbers = #tpu.dot_dimension_numbers<[1], [0], [0], [1], [0, 0, 1, 1], [], []>} : vector<128x256xbf16>, vector<256x256xbf16>, vector<128x256xf32> -> vector<128x256xf32>
    %c0_38 = arith.constant 0 : index
    %c0_39 = arith.constant 0 : index
    %c0_40 = arith.constant 0 : index
    %92 = vector.load %arg8[%c0_38, %c0_39, %c0_40] : memref<1x1x256xf32, #tpu.memory_space<vmem>>, vector<1x1x256xf32>
    %93 = vector.shape_cast %92 : vector<1x1x256xf32> to vector<1x256xf32>
    %94 = vector.broadcast %93 : vector<1x256xf32> to vector<128x256xf32>
    %95 = arith.addf %91, %94 : vector<128x256xf32>
    %96 = arith.addf %3, %95 : vector<128x256xf32>
    %97 = arith.truncf %96 : vector<128x256xf32> to vector<128x256xbf16>
    %c0_41 = arith.constant 0 : index
    %c0_42 = arith.constant 0 : index
    %c0_43 = arith.constant 0 : index
    %98 = vector.load %arg9[%c0_41, %c0_42, %c0_43] : memref<1x256x128xbf16, #tpu.memory_space<vmem>>, vector<1x256x128xbf16>
    %99 = vector.shape_cast %98 : vector<1x256x128xbf16> to vector<256x128xbf16>
    %cst_44 = arith.constant dense<0.000000e+00> : vector<128x128xf32>
    %100 = tpu.matmul %97, %99, %cst_44 {dimension_numbers = #tpu.dot_dimension_numbers<[1], [0], [0], [1], [0, 0, 1, 1], [], []>} : vector<128x256xbf16>, vector<256x128xbf16>, vector<128x128xf32> -> vector<128x128xf32>
    %c0_45 = arith.constant 0 : index
    %c0_46 = arith.constant 0 : index
    %c0_47 = arith.constant 0 : index
    %101 = vector.load %arg10[%c0_45, %c0_46, %c0_47] : memref<1x1x128xf32, #tpu.memory_space<vmem>>, vector<1x1x128xf32>
    %102 = vector.shape_cast %101 : vector<1x1x128xf32> to vector<1x128xf32>
    %103 = vector.broadcast %102 : vector<1x128xf32> to vector<128x128xf32>
    %104 = arith.addf %100, %103 : vector<128x128xf32>
    %cst_48 = arith.constant 0.000000e+00 : f32
    %105 = vector.broadcast %cst_48 : f32 to vector<128x128xf32>
    %106 = arith.maximumf %104, %105 : vector<128x128xf32>
    %107 = arith.truncf %106 : vector<128x128xf32> to vector<128x128xbf16>
    %c0_49 = arith.constant 0 : index
    %c0_50 = arith.constant 0 : index
    %c0_51 = arith.constant 0 : index
    %108 = vector.load %arg11[%c0_49, %c0_50, %c0_51] : memref<1x128x256xbf16, #tpu.memory_space<vmem>>, vector<1x128x256xbf16>
    %109 = vector.shape_cast %108 : vector<1x128x256xbf16> to vector<128x256xbf16>
    %cst_52 = arith.constant dense<0.000000e+00> : vector<128x256xf32>
    %110 = tpu.matmul %107, %109, %cst_52 {dimension_numbers = #tpu.dot_dimension_numbers<[1], [0], [0], [1], [0, 0, 1, 1], [], []>} : vector<128x128xbf16>, vector<128x256xbf16>, vector<128x256xf32> -> vector<128x256xf32>
    %c0_53 = arith.constant 0 : index
    %c0_54 = arith.constant 0 : index
    %c0_55 = arith.constant 0 : index
    %111 = vector.load %arg12[%c0_53, %c0_54, %c0_55] : memref<1x1x256xf32, #tpu.memory_space<vmem>>, vector<1x1x256xf32>
    %112 = vector.shape_cast %111 : vector<1x1x256xf32> to vector<1x256xf32>
    %113 = vector.broadcast %112 : vector<1x256xf32> to vector<128x256xf32>
    %114 = arith.addf %110, %113 : vector<128x256xf32>
    %cst_56 = arith.constant dense<0.000000e+00> : vector<128xf32>
    %115 = vector.multi_reduction <add>, %96, %cst_56 [1] : vector<128x256xf32> to vector<128xf32>
    %116 = vector.shape_cast %115 : vector<128xf32> to vector<128x1xf32>
    %cst_57 = arith.constant 2.560000e+02 : f32
    %117 = vector.broadcast %cst_57 : f32 to vector<128x1xf32>
    %118 = arith.divf %116, %117 : vector<128x1xf32>
    %119 = vector.broadcast %118 : vector<128x1xf32> to vector<128x256xf32>
    %120 = arith.subf %96, %119 : vector<128x256xf32>
    %121 = arith.mulf %120, %120 : vector<128x256xf32>
    %cst_58 = arith.constant dense<0.000000e+00> : vector<128xf32>
    %122 = vector.multi_reduction <add>, %121, %cst_58 [1] : vector<128x256xf32> to vector<128xf32>
    %123 = vector.shape_cast %122 : vector<128xf32> to vector<128x1xf32>
    %cst_59 = arith.constant 2.560000e+02 : f32
    %124 = vector.broadcast %cst_59 : f32 to vector<128x1xf32>
    %125 = arith.divf %123, %124 : vector<128x1xf32>
    %cst_60 = arith.constant 9.99999997E-7 : f32
    %126 = vector.broadcast %cst_60 : f32 to vector<128x1xf32>
    %127 = arith.addf %125, %126 : vector<128x1xf32>
    %128 = math.rsqrt %127 : vector<128x1xf32>
    %129 = vector.broadcast %128 : vector<128x1xf32> to vector<128x256xf32>
    %130 = arith.mulf %120, %129 : vector<128x256xf32>
    %c0_61 = arith.constant 0 : index
    %c0_62 = arith.constant 0 : index
    %c0_63 = arith.constant 0 : index
    %131 = vector.load %arg13[%c0_61, %c0_62, %c0_63] : memref<1x1x256xf32, #tpu.memory_space<vmem>>, vector<1x1x256xf32>
    %132 = vector.shape_cast %131 : vector<1x1x256xf32> to vector<1x256xf32>
    %133 = vector.broadcast %132 : vector<1x256xf32> to vector<128x256xf32>
    %134 = arith.mulf %130, %133 : vector<128x256xf32>
    %c0_64 = arith.constant 0 : index
    %c0_65 = arith.constant 0 : index
    %c0_66 = arith.constant 0 : index
    %135 = vector.load %arg14[%c0_64, %c0_65, %c0_66] : memref<1x1x256xf32, #tpu.memory_space<vmem>>, vector<1x1x256xf32>
    %136 = vector.shape_cast %135 : vector<1x1x256xf32> to vector<1x256xf32>
    %137 = vector.broadcast %136 : vector<1x256xf32> to vector<128x256xf32>
    %138 = arith.addf %134, %137 : vector<128x256xf32>
    %139 = arith.truncf %138 : vector<128x256xf32> to vector<128x256xbf16>
    %c0_67 = arith.constant 0 : index
    %c0_68 = arith.constant 0 : index
    %c0_69 = arith.constant 0 : index
    %140 = vector.load %arg15[%c0_67, %c0_68, %c0_69] : memref<1x256x1024xbf16, #tpu.memory_space<vmem>>, vector<1x256x1024xbf16>
    %141 = vector.shape_cast %140 : vector<1x256x1024xbf16> to vector<256x1024xbf16>
    %cst_70 = arith.constant dense<0.000000e+00> : vector<128x1024xf32>
    %142 = tpu.matmul %139, %141, %cst_70 {dimension_numbers = #tpu.dot_dimension_numbers<[1], [0], [0], [1], [0, 0, 1, 1], [], []>} : vector<128x256xbf16>, vector<256x1024xbf16>, vector<128x1024xf32> -> vector<128x1024xf32>
    %c0_71 = arith.constant 0 : index
    %c0_72 = arith.constant 0 : index
    %c0_73 = arith.constant 0 : index
    %143 = vector.load %arg16[%c0_71, %c0_72, %c0_73] : memref<1x1x1024xf32, #tpu.memory_space<vmem>>, vector<1x1x1024xf32>
    %144 = vector.shape_cast %143 : vector<1x1x1024xf32> to vector<1x1024xf32>
    %145 = vector.broadcast %144 : vector<1x1024xf32> to vector<128x1024xf32>
    %146 = arith.addf %142, %145 : vector<128x1024xf32>
    %cst_74 = arith.constant 5.000000e-01 : f32
    %147 = vector.broadcast %cst_74 : f32 to vector<128x1024xf32>
    %148 = arith.mulf %147, %146 : vector<128x1024xf32>
    %cst_75 = arith.constant 0.707106769 : f32
    %149 = vector.broadcast %cst_75 : f32 to vector<128x1024xf32>
    %150 = arith.mulf %146, %149 : vector<128x1024xf32>
    %151 = math.erf %150 : vector<128x1024xf32>
    %cst_76 = arith.constant 1.000000e+00 : f32
    %152 = vector.broadcast %cst_76 : f32 to vector<128x1024xf32>
    %153 = arith.addf %152, %151 : vector<128x1024xf32>
    %154 = arith.mulf %148, %153 : vector<128x1024xf32>
    %155 = arith.truncf %154 : vector<128x1024xf32> to vector<128x1024xbf16>
    %c0_77 = arith.constant 0 : index
    %c0_78 = arith.constant 0 : index
    %c0_79 = arith.constant 0 : index
    %156 = vector.load %arg17[%c0_77, %c0_78, %c0_79] : memref<1x1024x256xbf16, #tpu.memory_space<vmem>>, vector<1x1024x256xbf16>
    %157 = vector.shape_cast %156 : vector<1x1024x256xbf16> to vector<1024x256xbf16>
    %cst_80 = arith.constant dense<0.000000e+00> : vector<128x256xf32>
    %158 = tpu.matmul %155, %157, %cst_80 {dimension_numbers = #tpu.dot_dimension_numbers<[1], [0], [0], [1], [0, 0, 1, 1], [], []>} : vector<128x1024xbf16>, vector<1024x256xbf16>, vector<128x256xf32> -> vector<128x256xf32>
    %c0_81 = arith.constant 0 : index
    %c0_82 = arith.constant 0 : index
    %c0_83 = arith.constant 0 : index
    %159 = vector.load %arg18[%c0_81, %c0_82, %c0_83] : memref<1x1x256xf32, #tpu.memory_space<vmem>>, vector<1x1x256xf32>
    %160 = vector.shape_cast %159 : vector<1x1x256xf32> to vector<1x256xf32>
    %161 = vector.broadcast %160 : vector<1x256xf32> to vector<128x256xf32>
    %162 = arith.addf %158, %161 : vector<128x256xf32>
    %163 = arith.addf %162, %96 : vector<128x256xf32>
    %164 = arith.addf %163, %114 : vector<128x256xf32>
    %c0_84 = arith.constant 0 : index
    %c0_85 = arith.constant 0 : index
    %165 = vector.load %arg20[%c0_84, %c0_85] : memref<128x256xf32, #tpu.memory_space<vmem>>, vector<128x256xf32>
    tpu.vector_store %arg20[%c0_84, %c0_85], %164 {strides = array<i32>} : memref<128x256xf32, #tpu.memory_space<vmem>>, vector<128x256xf32>,
    %c1_i32 = arith.constant 1 : i32
    %166 = arith.cmpi eq, %arg1, %c1_i32 : i32
    %167 = arith.extui %166 : i1 to i32
    %c0_i32_86 = arith.constant 0 : i32
    %168 = arith.cmpi ne, %167, %c0_i32_86 : i32
    scf.if %168 {
      %169 = vector.shape_cast %164 : vector<128x256xf32> to vector<1x128x256xf32>
      %170 = tpu.iota {dimensions = array<i32: 0>} : vector<128x1xi32>
      %c1_i32_87 = arith.constant 1 : i32
      %171 = vector.broadcast %c1_i32_87 : i32 to vector<128x1xi32>
      %172 = arith.cmpi sge, %170, %171 : vector<128x1xi32>
      %c5_i32_88 = arith.constant 5 : i32
      %173 = vector.broadcast %c5_i32_88 : i32 to vector<128x1xi32>
      %174 = arith.cmpi slt, %170, %173 : vector<128x1xi32>
      %175 = arith.andi %172, %174 : vector<128x1xi1>
      %176 = arith.extui %175 : vector<128x1xi1> to vector<128x1xi32>
      %177 = arith.sitofp %176 : vector<128x1xi32> to vector<128x1xf32>
      %178 = vector.shape_cast %177 : vector<128x1xf32> to vector<1x128x1xf32>
      %179 = vector.broadcast %178 : vector<1x128x1xf32> to vector<1x128x256xf32>
      %180 = arith.mulf %169, %179 : vector<1x128x256xf32>
      %cst_89 = arith.constant dense<0.000000e+00> : vector<1x256xf32>
      %181 = vector.multi_reduction <add>, %180, %cst_89 [1] : vector<1x128x256xf32> to vector<1x256xf32>
      %cst_90 = arith.constant 2.500000e-01 : f32
      %182 = vector.broadcast %cst_90 : f32 to vector<1x256xf32>
      %183 = arith.mulf %181, %182 : vector<1x256xf32>
      %c0_91 = arith.constant 0 : index
      %c0_92 = arith.constant 0 : index
      %c0_93 = arith.constant 0 : index
      %184 = vector.load %arg19[%c0_91, %c0_92, %c0_93] : memref<1x1x256xf32, #tpu.memory_space<vmem>>, vector<1x1x256xf32>
      %185 = vector.shape_cast %184 : vector<1x1x256xf32> to vector<1x256xf32>
      %186 = vector.shape_cast %183 : vector<1x256xf32> to vector<1x1x256xf32>
      tpu.vector_store %arg19[%c0_91, %c0_92, %c0_93], %186 {strides = array<i32>} : memref<1x1x256xf32, #tpu.memory_space<vmem>>, vector<1x1x256xf32>,
    } else {
    }
    return
  }
  func.func @transform_0(%arg0: i32, %arg1: i32) -> (i32, i32, i32) {
    %c0_i32 = arith.constant 0 : i32
    %c0_i32_0 = arith.constant 0 : i32
    %c0_i32_1 = arith.constant 0 : i32
    return %arg0, %c0_i32, %c0_i32_0 : i32, i32, i32
  }
  func.func @transform_1(%arg0: i32, %arg1: i32) -> (i32, i32, i32) {
    %c0_i32 = arith.constant 0 : i32
    %c0_i32_0 = arith.constant 0 : i32
    %c0_i32_1 = arith.constant 0 : i32
    return %arg1, %c0_i32, %c0_i32_0 : i32, i32, i32
  }
  func.func @transform_2(%arg0: i32, %arg1: i32) -> (i32, i32, i32) {
    %c0_i32 = arith.constant 0 : i32
    %c0_i32_0 = arith.constant 0 : i32
    %c0_i32_1 = arith.constant 0 : i32
    return %arg1, %c0_i32, %c0_i32_0 : i32, i32, i32
  }
  func.func @transform_3(%arg0: i32, %arg1: i32) -> (i32, i32, i32) {
    %c0_i32 = arith.constant 0 : i32
    %c0_i32_0 = arith.constant 0 : i32
    %c0_i32_1 = arith.constant 0 : i32
    return %arg1, %c0_i32, %c0_i32_0 : i32, i32, i32
  }
  func.func @transform_4(%arg0: i32, %arg1: i32) -> (i32, i32, i32) {
    %c0_i32 = arith.constant 0 : i32
    %c0_i32_0 = arith.constant 0 : i32
    %c0_i32_1 = arith.constant 0 : i32
    return %arg1, %c0_i32, %c0_i32_0 : i32, i32, i32
  }
  func.func @transform_5(%arg0: i32, %arg1: i32) -> (i32, i32, i32) {
    %c0_i32 = arith.constant 0 : i32
    %c0_i32_0 = arith.constant 0 : i32
    %c0_i32_1 = arith.constant 0 : i32
    return %arg1, %c0_i32, %c0_i32_0 : i32, i32, i32
  }
  func.func @transform_6(%arg0: i32, %arg1: i32) -> (i32, i32, i32) {
    %c0_i32 = arith.constant 0 : i32
    %c0_i32_0 = arith.constant 0 : i32
    %c0_i32_1 = arith.constant 0 : i32
    return %arg1, %c0_i32, %c0_i32_0 : i32, i32, i32
  }
  func.func @transform_7(%arg0: i32, %arg1: i32) -> (i32, i32, i32) {
    %c0_i32 = arith.constant 0 : i32
    %c0_i32_0 = arith.constant 0 : i32
    %c0_i32_1 = arith.constant 0 : i32
    return %arg1, %c0_i32, %c0_i32_0 : i32, i32, i32
  }
  func.func @transform_8(%arg0: i32, %arg1: i32) -> (i32, i32, i32) {
    %c0_i32 = arith.constant 0 : i32
    %c0_i32_0 = arith.constant 0 : i32
    %c0_i32_1 = arith.constant 0 : i32
    return %arg1, %c0_i32, %c0_i32_0 : i32, i32, i32
  }
  func.func @transform_9(%arg0: i32, %arg1: i32) -> (i32, i32, i32) {
    %c0_i32 = arith.constant 0 : i32
    %c0_i32_0 = arith.constant 0 : i32
    %c0_i32_1 = arith.constant 0 : i32
    return %arg1, %c0_i32, %c0_i32_0 : i32, i32, i32
  }
  func.func @transform_10(%arg0: i32, %arg1: i32) -> (i32, i32, i32) {
    %c0_i32 = arith.constant 0 : i32
    %c0_i32_0 = arith.constant 0 : i32
    %c0_i32_1 = arith.constant 0 : i32
    return %arg1, %c0_i32, %c0_i32_0 : i32, i32, i32
  }
  func.func @transform_11(%arg0: i32, %arg1: i32) -> (i32, i32, i32) {
    %c0_i32 = arith.constant 0 : i32
    %c0_i32_0 = arith.constant 0 : i32
    %c0_i32_1 = arith.constant 0 : i32
    return %arg1, %c0_i32, %c0_i32_0 : i32, i32, i32
  }
  func.func @transform_12(%arg0: i32, %arg1: i32) -> (i32, i32, i32) {
    %c0_i32 = arith.constant 0 : i32
    %c0_i32_0 = arith.constant 0 : i32
    %c0_i32_1 = arith.constant 0 : i32
    return %arg1, %c0_i32, %c0_i32_0 : i32, i32, i32
  }
  func.func @transform_13(%arg0: i32, %arg1: i32) -> (i32, i32, i32) {
    %c0_i32 = arith.constant 0 : i32
    %c0_i32_0 = arith.constant 0 : i32
    %c0_i32_1 = arith.constant 0 : i32
    return %arg1, %c0_i32, %c0_i32_0 : i32, i32, i32
  }
  func.func @transform_14(%arg0: i32, %arg1: i32) -> (i32, i32, i32) {
    %c0_i32 = arith.constant 0 : i32
    %c0_i32_0 = arith.constant 0 : i32
    %c0_i32_1 = arith.constant 0 : i32
    return %arg1, %c0_i32, %c0_i32_0 : i32, i32, i32
  }
  func.func @transform_15(%arg0: i32, %arg1: i32) -> (i32, i32, i32) {
    %c0_i32 = arith.constant 0 : i32
    %c0_i32_0 = arith.constant 0 : i32
    %c0_i32_1 = arith.constant 0 : i32
    return %arg1, %c0_i32, %c0_i32_0 : i32, i32, i32
  }
  func.func @transform_16(%arg0: i32, %arg1: i32) -> (i32, i32, i32) {
    %c0_i32 = arith.constant 0 : i32
    %c0_i32_0 = arith.constant 0 : i32
    %c0_i32_1 = arith.constant 0 : i32
    return %arg1, %c0_i32, %c0_i32_0 : i32, i32, i32
  }
  func.func @transform_17(%arg0: i32, %arg1: i32) -> (i32, i32, i32) {
    %c0_i32 = arith.constant 0 : i32
    %c0_i32_0 = arith.constant 0 : i32
    %c0_i32_1 = arith.constant 0 : i32
    return %arg0, %c0_i32, %c0_i32_0 : i32, i32, i32
  }
}

</mosaic_0001>

<llo_original>
// kernel: vitseg_forward.2
$region0: #{vitseg_forward.2}
  #allocation0 [shape = 'u32[]', space=smem, size = 0x4, offset = 0x4, fixed_abs, tag = 'smem constant byte address 0x4 - core index']
  #allocation1 [shape = 'u32[144,128]{1,0:T(1,128)}', space=vmem, size = 0x12000, scoped, tag = 'internal scratch']
  %s0 = inlined_call_operand.vmem [shape: bf16[8,768], index: 0, kind: input, shape index: {}]
  %s1 = inlined_call_operand.vmem [shape: bf16[768,256], index: 1, kind: input, shape index: {}]
  %s2 = inlined_call_operand.vmem [shape: f32[1,256], index: 2, kind: input, shape index: {}]
  %s3 = inlined_call_operand.vmem [shape: f32[8,256], index: 3, kind: output, shape index: {}]
  %s4 = sld [smem:[#allocation0]]
  $region22: #{vitseg_forward.2} parent=0
    _
  %s6 = ssub.s32 1, %s4
  %s7 = scalar_select 0, %s6, %s4
  // Predicated region
  $region2: #{vitseg_forward.2} parent=0 // pred_check
    _
  $region3: #{vitseg_forward.2} parent=0 // pred_check_branch
    %9 = sbr.rel (0) target = $region5
  $region4: #{vitseg_forward.2} parent=0 // pred_region
    _
  $region5: #{vitseg_forward.2} parent=0 // pred_fallthru
    _
  // Predicated region
  $region6: #{vitseg_forward.2} parent=0 // pred_check
    _
  $region7: #{vitseg_forward.2} parent=0 // pred_check_branch
    %11 = sbr.rel (0) target = $region9
  $region8: #{vitseg_forward.2} parent=0 // pred_region
    _
  $region9: #{vitseg_forward.2} parent=0 // pred_fallthru
    _
  // Predicated region
  $region10: #{vitseg_forward.2} parent=0 // pred_check
    _
  $region11: #{vitseg_forward.2} parent=0 // pred_check_branch
    %13 = sbr.rel (0) target = $region13
  $region12: #{vitseg_forward.2} parent=0 // pred_region
    _
  $region13: #{vitseg_forward.2} parent=0 // pred_fallthru
    _
  %v14 = vld [vmem:[%s0] sm:$0xff]
  %v15 = vld [vmem:[%s0 + $0x8] sm:$0xff]
  %v16 = vld [vmem:[%s0 + $0x10] sm:$0xff]
  %v17 = vld [vmem:[%s1] sm:$0xff]
  %v18 = vld [vmem:[%s1 + $0x8] sm:$0xff]
  %v19 = vld [vmem:[%s1 + $0x10] sm:$0xff]
  %v20 = vld [vmem:[%s1 + $0x18] sm:$0xff]
  %v21 = vld [vmem:[%s1 + $0x20] sm:$0xff]
  %v22 = vld [vmem:[%s1 + $0x28] sm:$0xff]
  %v23 = vld [vmem:[%s1 + $0x30] sm:$0xff]
  %v24 = vld [vmem:[%s1 + $0x38] sm:$0xff]
  %v25 = vld [vmem:[%s1 + $0x40] sm:$0xff]
  %v26 = vld [vmem:[%s1 + $0x48] sm:$0xff]
  %v27 = vld [vmem:[%s1 + $0x50] sm:$0xff]
  %v28 = vld [vmem:[%s1 + $0x58] sm:$0xff]
  %v29 = vld [vmem:[%s1 + $0x60] sm:$0xff]
  %v30 = vld [vmem:[%s1 + $0x68] sm:$0xff]
  %v31 = vld [vmem:[%s1 + $0x70] sm:$0xff]
  %v32 = vld [vmem:[%s1 + $0x78] sm:$0xff]
  %v33 = vld [vmem:[%s1 + $0x80] sm:$0xff]
  %v34 = vld [vmem:[%s1 + $0x88] sm:$0xff]
  %v35 = vld [vmem:[%s1 + $0x90] sm:$0xff]
  %v36 = vld [vmem:[%s1 + $0x98] sm:$0xff]
  %v37 = vld [vmem:[%s1 + $0xa0] sm:$0xff]
  %v38 = vld [vmem:[%s1 + $0xa8] sm:$0xff]
  %v39 = vld [vmem:[%s1 + $0xb0] sm:$0xff]
  %v40 = vld [vmem:[%s1 + $0xb8] sm:$0xff]
  %v41 = vld [vmem:[%s1 + $0xc0] sm:$0xff]
  %v42 = vld [vmem:[%s1 + $0xc8] sm:$0xff]
  %v43 = vld [vmem:[%s1 + $0xd0] sm:$0xff]
  %v44 = vld [vmem:[%s1 + $0xd8] sm:$0xff]
  %v45 = vld [vmem:[%s1 + $0xe0] sm:$0xff]
  %v46 = vld [vmem:[%s1 + $0xe8] sm:$0xff]
  %v47 = vld [vmem:[%s1 + $0xf0] sm:$0xff]
  %v48 = vld [vmem:[%s1 + $0xf8] sm:$0xff]
  %v49 = vld [vmem:[%s1 + $0x100] sm:$0xff]
  %v50 = vld [vmem:[%s1 + $0x108] sm:$0xff]
  %v51 = vld [vmem:[%s1 + $0x110] sm:$0xff]
  %v52 = vld [vmem:[%s1 + $0x118] sm:$0xff]
  %v53 = vld [vmem:[%s1 + $0x120] sm:$0xff]
  %v54 = vld [vmem:[%s1 + $0x128] sm:$0xff]
  %v55 = vld [vmem:[%s1 + $0x130] sm:$0xff]
  %v56 = vld [vmem:[%s1 + $0x138] sm:$0xff]
  %v57 = vld [vmem:[%s1 + $0x140] sm:$0xff]
  %v58 = vld [vmem:[%s1 + $0x148] sm:$0xff]
  %v59 = vld [vmem:[%s1 + $0x150] sm:$0xff]
  %v60 = vld [vmem:[%s1 + $0x158] sm:$0xff]
  %v61 = vld [vmem:[%s1 + $0x160] sm:$0xff]
  %v62 = vld [vmem:[%s1 + $0x168] sm:$0xff]
  %v63 = vld [vmem:[%s1 + $0x170] sm:$0xff]
  %v64 = vld [vmem:[%s1 + $0x178] sm:$0xff]
  %v65 = vld [vmem:[%s1 + $0x180] sm:$0xff]
  %v66 = vld [vmem:[%s1 + $0x188] sm:$0xff]
  %v67 = vld [vmem:[%s1 + $0x190] sm:$0xff]
  %v68 = vld [vmem:[%s1 + $0x198] sm:$0xff]
  %v69 = vld [vmem:[%s1 + $0x1a0] sm:$0xff]
  %v70 = vld [vmem:[%s1 + $0x1a8] sm:$0xff]
  %v71 = vld [vmem:[%s1 + $0x1b0] sm:$0xff]
  %v72 = vld [vmem:[%s1 + $0x1b8] sm:$0xff]
  %v73 = vld [vmem:[%s1 + $0x1c0] sm:$0xff]
  %v74 = vld [vmem:[%s1 + $0x1c8] sm:$0xff]
  %v75 = vld [vmem:[%s1 + $0x1d0] sm:$0xff]
  %v76 = vld [vmem:[%s1 + $0x1d8] sm:$0xff]
  %v77 = vld [vmem:[%s1 + $0x1e0] sm:$0xff]
  %v78 = vld [vmem:[%s1 + $0x1e8] sm:$0xff]
  %v79 = vld [vmem:[%s1 + $0x1f0] sm:$0xff]
  %v80 = vld [vmem:[%s1 + $0x1f8] sm:$0xff]
  %v81 = vld [vmem:[%s1 + $0x200] sm:$0xff]
  %v82 = vld [vmem:[%s1 + $0x208] sm:$0xff]
  %v83 = vld [vmem:[%s1 + $0x210] sm:$0xff]
  %v84 = vld [vmem:[%s1 + $0x218] sm:$0xff]
  %v85 = vld [vmem:[%s1 + $0x220] sm:$0xff]
  %v86 = vld [vmem:[%s1 + $0x228] sm:$0xff]
  %v87 = vld [vmem:[%s1 + $0x230] sm:$0xff]
  %v88 = vld [vmem:[%s1 + $0x238] sm:$0xff]
  %v89 = vld [vmem:[%s1 + $0x240] sm:$0xff]
  %v90 = vld [vmem:[%s1 + $0x248] sm:$0xff]
  %v91 = vld [vmem:[%s1 + $0x250] sm:$0xff]
  %v92 = vld [vmem:[%s1 + $0x258] sm:$0xff]
  %v93 = vld [vmem:[%s1 + $0x260] sm:$0xff]
  %v94 = vld [vmem:[%s1 + $0x268] sm:$0xff]
  %v95 = vld [vmem:[%s1 + $0x270] sm:$0xff]
  %v96 = vld [vmem:[%s1 + $0x278] sm:$0xff]
  %v97 = vld [vmem:[%s1 + $0x280] sm:$0xff]
  %v98 = vld [vmem:[%s1 + $0x288] sm:$0xff]
  %v99 = vld [vmem:[%s1 + $0x290] sm:$0xff]
  %v100 = vld [vmem:[%s1 + $0x298] sm:$0xff]
  %v101 = vld [vmem:[%s1 + $0x2a0] sm:$0xff]
  %v102 = vld [vmem:[%s1 + $0x2a8] sm:$0xff]
  %v103 = vld [vmem:[%s1 + $0x2b0] sm:$0xff]
  %v104 = vld [vmem:[%s1 + $0x2b8] sm:$0xff]
  %v105 = vld [vmem:[%s1 + $0x2c0] sm:$0xff]
  %v106 = vld [vmem:[%s1 + $0x2c8] sm:$0xff]
  %v107 = vld [vmem:[%s1 + $0x2d0] sm:$0xff]
  %v108 = vld [vmem:[%s1 + $0x2d8] sm:$0xff]
  %v109 = vld [vmem:[%s1 + $0x2e0] sm:$0xff]
  %v110 = vld [vmem:[%s1 + $0x2e8] sm:$0xff]
  %v111 = vld [vmem:[%s1 + $0x2f0] sm:$0xff]
  %v112 = vld [vmem:[%s1 + $0x2f8] sm:$0xff]
  %v113 = vld [vmem:[%s2] sm:$0x3]
  %v115 = vlaneseq
  %v116 = vshrl.u32 %v115, 7
  %v117 = vsub.s32 0, %v116
  %v118 = vrot.slane %v113, %v117
  %v119 = vlaneseq
  %v120 = vshrl.u32 %v119, 7
  %v121 = vsub.s32 1, %v120
  %v122 = vrot.slane %v113, %v121
  %v128 = vunpack.c.l.b16 %v14
  %v129 = vunpack.c.h.b16 %v14
  %v130 = vunpack.c.l.b16 %v15
  %v131 = vunpack.c.h.b16 %v15
  %v132 = vunpack.c.l.b16 %v16
  %v133 = vunpack.c.h.b16 %v16
  %v134 = vpack.c.b16 %v128, %v128
  %v135 = vpack.c.b16 %v129, %v129
  %v136 = vpack.c.b16 %v130, %v130
  %v137 = vpack.c.b16 %v131, %v131
  %v138 = vpack.c.b16 %v132, %v132
  %v139 = vpack.c.b16 %v133, %v133
  %v242 = vunpack.c.l.b16 %v17
  %v243 = vunpack.c.h.b16 %v17
  %v244 = vunpack.c.l.b16 %v18
  %v245 = vunpack.c.h.b16 %v18
  %v246 = vunpack.c.l.b16 %v19
  %v247 = vunpack.c.h.b16 %v19
  %v248 = vunpack.c.l.b16 %v20
  %v249 = vunpack.c.h.b16 %v20
  %v250 = vunpack.c.l.b16 %v21
  %v251 = vunpack.c.h.b16 %v21
  %v252 = vunpack.c.l.b16 %v22
  %v253 = vunpack.c.h.b16 %v22
  %v254 = vunpack.c.l.b16 %v23
  %v255 = vunpack.c.h.b16 %v23
  %v256 = vunpack.c.l.b16 %v24
  %v257 = vunpack.c.h.b16 %v24
  %v258 = vunpack.c.l.b16 %v25
  %v259 = vunpack.c.h.b16 %v25
  %v260 = vunpack.c.l.b16 %v26
  %v261 = vunpack.c.h.b16 %v26
  %v262 = vunpack.c.l.b16 %v27
  %v263 = vunpack.c.h.b16 %v27
  %v264 = vunpack.c.l.b16 %v28
  %v265 = vunpack.c.h.b16 %v28
  %v266 = vunpack.c.l.b16 %v29
  %v267 = vunpack.c.h.b16 %v29
  %v268 = vunpack.c.l.b16 %v30
  %v269 = vunpack.c.h.b16 %v30
  %v270 = vunpack.c.l.b16 %v31
  %v271 = vunpack.c.h.b16 %v31
  %v272 = vunpack.c.l.b16 %v32
  %v273 = vunpack.c.h.b16 %v32
  %v274 = vunpack.c.l.b16 %v33
  %v275 = vunpack.c.h.b16 %v33
  %v276 = vunpack.c.l.b16 %v34
  %v277 = vunpack.c.h.b16 %v34
  %v278 = vunpack.c.l.b16 %v35
  %v279 = vunpack.c.h.b16 %v35
  %v280 = vunpack.c.l.b16 %v36
  %v281 = vunpack.c.h.b16 %v36
  %v282 = vunpack.c.l.b16 %v37
  %v283 = vunpack.c.h.b16 %v37
  %v284 = vunpack.c.l.b16 %v38
  %v285 = vunpack.c.h.b16 %v38
  %v286 = vunpack.c.l.b16 %v39
  %v287 = vunpack.c.h.b16 %v39
  %v288 = vunpack.c.l.b16 %v40
  %v289 = vunpack.c.h.b16 %v40
  %v290 = vunpack.c.l.b16 %v41
  %v291 = vunpack.c.h.b16 %v41
  %v292 = vunpack.c.l.b16 %v42
  %v293 = vunpack.c.h.b16 %v42
  %v294 = vunpack.c.l.b16 %v43
  %v295 = vunpack.c.h.b16 %v43
  %v296 = vunpack.c.l.b16 %v44
  %v297 = vunpack.c.h.b16 %v44
  %v298 = vunpack.c.l.b16 %v45
  %v299 = vunpack.c.h.b16 %v45
  %v300 = vunpack.c.l.b16 %v46
  %v301 = vunpack.c.h.b16 %v46
  %v302 = vunpack.c.l.b16 %v47
  %v303 = vunpack.c.h.b16 %v47
  %v304 = vunpack.c.l.b16 %v48
  %v305 = vunpack.c.h.b16 %v48
  %v306 = vunpack.c.l.b16 %v49
  %v307 = vunpack.c.h.b16 %v49
  %v308 = vunpack.c.l.b16 %v50
  %v309 = vunpack.c.h.b16 %v50
  %v310 = vunpack.c.l.b16 %v51
  %v311 = vunpack.c.h.b16 %v51
  %v312 = vunpack.c.l.b16 %v52
  %v313 = vunpack.c.h.b16 %v52
  %v314 = vunpack.c.l.b16 %v53
  %v315 = vunpack.c.h.b16 %v53
  %v316 = vunpack.c.l.b16 %v54
  %v317 = vunpack.c.h.b16 %v54
  %v318 = vunpack.c.l.b16 %v55
  %v319 = vunpack.c.h.b16 %v55
  %v320 = vunpack.c.l.b16 %v56
  %v321 = vunpack.c.h.b16 %v56
  %v322 = vunpack.c.l.b16 %v57
  %v323 = vunpack.c.h.b16 %v57
  %v324 = vunpack.c.l.b16 %v58
  %v325 = vunpack.c.h.b16 %v58
  %v326 = vunpack.c.l.b16 %v59
  %v327 = vunpack.c.h.b16 %v59
  %v328 = vunpack.c.l.b16 %v60
  %v329 = vunpack.c.h.b16 %v60
  %v330 = vunpack.c.l.b16 %v61
  %v331 = vunpack.c.h.b16 %v61
  %v332 = vunpack.c.l.b16 %v62
  %v333 = vunpack.c.h.b16 %v62
  %v334 = vunpack.c.l.b16 %v63
  %v335 = vunpack.c.h.b16 %v63
  %v336 = vunpack.c.l.b16 %v64
  %v337 = vunpack.c.h.b16 %v64
  %v338 = vunpack.c.l.b16 %v65
  %v339 = vunpack.c.h.b16 %v65
  %v340 = vunpack.c.l.b16 %v66
  %v341 = vunpack.c.h.b16 %v66
  %v342 = vunpack.c.l.b16 %v67
  %v343 = vunpack.c.h.b16 %v67
  %v344 = vunpack.c.l.b16 %v68
  %v345 = vunpack.c.h.b16 %v68
  %v346 = vunpack.c.l.b16 %v69
  %v347 = vunpack.c.h.b16 %v69
  %v348 = vunpack.c.l.b16 %v70
  %v349 = vunpack.c.h.b16 %v70
  %v350 = vunpack.c.l.b16 %v71
  %v351 = vunpack.c.h.b16 %v71
  %v352 = vunpack.c.l.b16 %v72
  %v353 = vunpack.c.h.b16 %v72
  %v354 = vunpack.c.l.b16 %v73
  %v355 = vunpack.c.h.b16 %v73
  %v356 = vunpack.c.l.b16 %v74
  %v357 = vunpack.c.h.b16 %v74
  %v358 = vunpack.c.l.b16 %v75
  %v359 = vunpack.c.h.b16 %v75
  %v360 = vunpack.c.l.b16 %v76
  %v361 = vunpack.c.h.b16 %v76
  %v362 = vunpack.c.l.b16 %v77
  %v363 = vunpack.c.h.b16 %v77
  %v364 = vunpack.c.l.b16 %v78
  %v365 = vunpack.c.h.b16 %v78
  %v366 = vunpack.c.l.b16 %v79
  %v367 = vunpack.c.h.b16 %v79
  %v368 = vunpack.c.l.b16 %v80
  %v369 = vunpack.c.h.b16 %v80
  %v370 = vunpack.c.l.b16 %v81
  %v371 = vunpack.c.h.b16 %v81
  %v372 = vunpack.c.l.b16 %v82
  %v373 = vunpack.c.h.b16 %v82
  %v374 = vunpack.c.l.b16 %v83
  %v375 = vunpack.c.h.b16 %v83
  %v376 = vunpack.c.l.b16 %v84
  %v377 = vunpack.c.h.b16 %v84
  %v378 = vunpack.c.l.b16 %v85
  %v379 = vunpack.c.h.b16 %v85
  %v380 = vunpack.c.l.b16 %v86
  %v381 = vunpack.c.h.b16 %v86
  %v382 = vunpack.c.l.b16 %v87
  %v383 = vunpack.c.h.b16 %v87
  %v384 = vunpack.c.l.b16 %v88
  %v385 = vunpack.c.h.b16 %v88
  %v386 = vunpack.c.l.b16 %v89
  %v387 = vunpack.c.h.b16 %v89
  %v388 = vunpack.c.l.b16 %v90
  %v389 = vunpack.c.h.b16 %v90
  %v390 = vunpack.c.l.b16 %v91
  %v391 = vunpack.c.h.b16 %v91
  %v392 = vunpack.c.l.b16 %v92
  %v393 = vunpack.c.h.b16 %v92
  %v394 = vunpack.c.l.b16 %v93
  %v395 = vunpack.c.h.b16 %v93
  %v396 = vunpack.c.l.b16 %v94
  %v397 = vunpack.c.h.b16 %v94
  %v398 = vunpack.c.l.b16 %v95
  %v399 = vunpack.c.h.b16 %v95
  %v400 = vunpack.c.l.b16 %v96
  %v401 = vunpack.c.h.b16 %v96
  %v402 = vunpack.c.l.b16 %v97
  %v403 = vunpack.c.h.b16 %v97
  %v404 = vunpack.c.l.b16 %v98
  %v405 = vunpack.c.h.b16 %v98
  %v406 = vunpack.c.l.b16 %v99
  %v407 = vunpack.c.h.b16 %v99
  %v408 = vunpack.c.l.b16 %v100
  %v409 = vunpack.c.h.b16 %v100
  %v410 = vunpack.c.l.b16 %v101
  %v411 = vunpack.c.h.b16 %v101
  %v412 = vunpack.c.l.b16 %v102
  %v413 = vunpack.c.h.b16 %v102
  %v414 = vunpack.c.l.b16 %v103
  %v415 = vunpack.c.h.b16 %v103
  %v416 = vunpack.c.l.b16 %v104
  %v417 = vunpack.c.h.b16 %v104
  %v418 = vunpack.c.l.b16 %v105
  %v419 = vunpack.c.h.b16 %v105
  %v420 = vunpack.c.l.b16 %v106
  %v421 = vunpack.c.h.b16 %v106
  %v422 = vunpack.c.l.b16 %v107
  %v423 = vunpack.c.h.b16 %v107
  %v424 = vunpack.c.l.b16 %v108
  %v425 = vunpack.c.h.b16 %v108
  %v426 = vunpack.c.l.b16 %v109
  %v427 = vunpack.c.h.b16 %v109
  %v428 = vunpack.c.l.b16 %v110
  %v429 = vunpack.c.h.b16 %v110
  %v430 = vunpack.c.l.b16 %v111
  %v431 = vunpack.c.h.b16 %v111
  %v432 = vunpack.c.l.b16 %v112
  %v433 = vunpack.c.h.b16 %v112
  %v434 = vpack.c.b16 %v244, %v242
  %v435 = vpack.c.b16 %v245, %v243
  %v436 = vpack.c.b16 %v248, %v246
  %v437 = vpack.c.b16 %v249, %v247
  %v438 = vpack.c.b16 %v252, %v250
  %v439 = vpack.c.b16 %v253, %v251
  %v440 = vpack.c.b16 %v256, %v254
  %v441 = vpack.c.b16 %v257, %v255
  %v442 = vpack.c.b16 %v260, %v258
  %v443 = vpack.c.b16 %v261, %v259
  %v444 = vpack.c.b16 %v264, %v262
  %v445 = vpack.c.b16 %v265, %v263
  %v446 = vpack.c.b16 %v268, %v266
  %v447 = vpack.c.b16 %v269, %v267
  %v448 = vpack.c.b16 %v272, %v270
  %v449 = vpack.c.b16 %v273, %v271
  %v450 = vpack.c.b16 %v276, %v274
  %v451 = vpack.c.b16 %v277, %v275
  %v452 = vpack.c.b16 %v280, %v278
  %v453 = vpack.c.b16 %v281, %v279
  %v454 = vpack.c.b16 %v284, %v282
  %v455 = vpack.c.b16 %v285, %v283
  %v456 = vpack.c.b16 %v288, %v286
  %v457 = vpack.c.b16 %v289, %v287
  %v458 = vpack.c.b16 %v292, %v290
  %v459 = vpack.c.b16 %v293, %v291
  %v460 = vpack.c.b16 %v296, %v294
  %v461 = vpack.c.b16 %v297, %v295
  %v462 = vpack.c.b16 %v300, %v298
  %v463 = vpack.c.b16 %v301, %v299
  %v464 = vpack.c.b16 %v304, %v302
  %v465 = vpack.c.b16 %v305, %v303
  %v466 = vpack.c.b16 %v308, %v306
  %v467 = vpack.c.b16 %v309, %v307
  %v468 = vpack.c.b16 %v312, %v310
  %v469 = vpack.c.b16 %v313, %v311
  %v470 = vpack.c.b16 %v316, %v314
  %v471 = vpack.c.b16 %v317, %v315
  %v472 = vpack.c.b16 %v320, %v318
  %v473 = vpack.c.b16 %v321, %v319
  %v474 = vpack.c.b16 %v324, %v322
  %v475 = vpack.c.b16 %v325, %v323
  %v476 = vpack.c.b16 %v328, %v326
  %v477 = vpack.c.b16 %v329, %v327
  %v478 = vpack.c.b16 %v332, %v330
  %v479 = vpack.c.b16 %v333, %v331
  %v480 = vpack.c.b16 %v336, %v334
  %v481 = vpack.c.b16 %v337, %v335
  %v482 = vpack.c.b16 %v340, %v338
  %v483 = vpack.c.b16 %v341, %v339
  %v484 = vpack.c.b16 %v344, %v342
  %v485 = vpack.c.b16 %v345, %v343
  %v486 = vpack.c.b16 %v348, %v346
  %v487 = vpack.c.b16 %v349, %v347
  %v488 = vpack.c.b16 %v352, %v350
  %v489 = vpack.c.b16 %v353, %v351
  %v490 = vpack.c.b16 %v356, %v354
  %v491 = vpack.c.b16 %v357, %v355
  %v492 = vpack.c.b16 %v360, %v358
  %v493 = vpack.c.b16 %v361, %v359
  %v494 = vpack.c.b16 %v364, %v362
  %v495 = vpack.c.b16 %v365, %v363
  %v496 = vpack.c.b16 %v368, %v366
  %v497 = vpack.c.b16 %v369, %v367
  %v498 = vpack.c.b16 %v372, %v370
  %v499 = vpack.c.b16 %v373, %v371
  %v500 = vpack.c.b16 %v376, %v374
  %v501 = vpack.c.b16 %v377, %v375
  %v502 = vpack.c.b16 %v380, %v378
  %v503 = vpack.c.b16 %v381, %v379
  %v504 = vpack.c.b16 %v384, %v382
  %v505 = vpack.c.b16 %v385, %v383
  %v506 = vpack.c.b16 %v388, %v386
  %v507 = vpack.c.b16 %v389, %v387
  %v508 = vpack.c.b16 %v392, %v390
  %v509 = vpack.c.b16 %v393, %v391
  %v510 = vpack.c.b16 %v396, %v394
  %v511 = vpack.c.b16 %v397, %v395
  %v512 = vpack.c.b16 %v400, %v398
  %v513 = vpack.c.b16 %v401, %v399
  %v514 = vpack.c.b16 %v404, %v402
  %v515 = vpack.c.b16 %v405, %v403
  %v516 = vpack.c.b16 %v408, %v406
  %v517 = vpack.c.b16 %v409, %v407
  %v518 = vpack.c.b16 %v412, %v410
  %v519 = vpack.c.b16 %v413, %v411
  %v520 = vpack.c.b16 %v416, %v414
  %v521 = vpack.c.b16 %v417, %v415
  %v522 = vpack.c.b16 %v420, %v418
  %v523 = vpack.c.b16 %v421, %v419
  %v524 = vpack.c.b16 %v424, %v422
  %v525 = vpack.c.b16 %v425, %v423
  %v526 = vpack.c.b16 %v428, %v426
  %v527 = vpack.c.b16 %v429, %v427
  %v528 = vpack.c.b16 %v432, %v430
  %v529 = vpack.c.b16 %v433, %v431
  %626 = vmatprep.subr.bf16.mxu0 %v435
  %627 = vmatpush1.bf16.msra.mxu0 %v434
  %628 = vmatprep.subr.bf16.mxu0 %v437
  %629 = vmatpush1.bf16.msra.mxu0 %v436
  %630 = vmatprep.subr.bf16.mxu0 %v439
  %631 = vmatpush1.bf16.msra.mxu0 %v438
  %632 = vmatprep.subr.bf16.mxu0 %v441
  %633 = vmatpush1.bf16.msra.mxu0 %v440
  %634 = vmatprep.subr.bf16.mxu0 %v443
  %635 = vmatpush1.bf16.msra.mxu0 %v442
  %636 = vmatprep.subr.bf16.mxu0 %v445
  %637 = vmatpush1.bf16.msra.mxu0 %v444
  %638 = vmatprep.subr.bf16.mxu0 %v447
  %639 = vmatpush1.bf16.msra.mxu0 %v446
  %640 = vmatprep.subr.bf16.mxu0 %v449
  %641 = vmatpush1.bf16.msra.mxu0 %v448
  %642 = vmatprep.subr.bf16.mxu0 %v451
  %643 = vmatpush1.bf16.msra.mxu0 %v450
  %644 = vmatprep.subr.bf16.mxu0 %v453
  %645 = vmatpush1.bf16.msra.mxu0 %v452
  %646 = vmatprep.subr.bf16.mxu0 %v455
  %647 = vmatpush1.bf16.msra.mxu0 %v454
  %648 = vmatprep.subr.bf16.mxu0 %v457
  %649 = vmatpush1.bf16.msra.mxu0 %v456
  %650 = vmatprep.subr.bf16.mxu0 %v459
  %651 = vmatpush1.bf16.msra.mxu0 %v458
  %652 = vmatprep.subr.bf16.mxu0 %v461
  %653 = vmatpush1.bf16.msra.mxu0 %v460
  %654 = vmatprep.subr.bf16.mxu0 %v463
  %655 = vmatpush1.bf16.msra.mxu0 %v462
  %656 = vmatprep.subr.bf16.mxu0 %v465
  %657 = vmatpush1.bf16.msra.mxu0 %v464
  %658 = vmatprep.mubr.bf16.mxu0 %v135
  %659 = vmatmul.mubr.bf16.gmra.mrb[0].mxu0 %v134
  %v660 = vpop.f32.mrb[0].mxu0
  %v661 = vadd.f32 %v118, %v660
  %v662 = vpop.f32.mrb[0].mxu0
  %v663 = vadd.f32 %v122, %v662
  %v664 = vpop.f32.mrb[0].mxu0
  %v665 = vpop.f32.mrb[0].mxu0
  %666 = vdwg.mxu0
  %667 = vmatprep.subr.bf16.mxu0 %v467
  %668 = vmatpush1.bf16.msra.mxu0 %v466
  %669 = vmatprep.subr.bf16.mxu0 %v469
  %670 = vmatpush1.bf16.msra.mxu0 %v468
  %671 = vmatprep.subr.bf16.mxu0 %v471
  %672 = vmatpush1.bf16.msra.mxu0 %v470
  %673 = vmatprep.subr.bf16.mxu0 %v473
  %674 = vmatpush1.bf16.msra.mxu0 %v472
  %675 = vmatprep.subr.bf16.mxu0 %v475
  %676 = vmatpush1.bf16.msra.mxu0 %v474
  %677 = vmatprep.subr.bf16.mxu0 %v477
  %678 = vmatpush1.bf16.msra.mxu0 %v476
  %679 = vmatprep.subr.bf16.mxu0 %v479
  %680 = vmatpush1.bf16.msra.mxu0 %v478
  %681 = vmatprep.subr.bf16.mxu0 %v481
  %682 = vmatpush1.bf16.msra.mxu0 %v480
  %683 = vmatprep.subr.bf16.mxu0 %v483
  %684 = vmatpush1.bf16.msra.mxu0 %v482
  %685 = vmatprep.subr.bf16.mxu0 %v485
  %686 = vmatpush1.bf16.msra.mxu0 %v484
  %687 = vmatprep.subr.bf16.mxu0 %v487
  %688 = vmatpush1.bf16.msra.mxu0 %v486
  %689 = vmatprep.subr.bf16.mxu0 %v489
  %690 = vmatpush1.bf16.msra.mxu0 %v488
  %691 = vmatprep.subr.bf16.mxu0 %v491
  %692 = vmatpush1.bf16.msra.mxu0 %v490
  %693 = vmatprep.subr.bf16.mxu0 %v493
  %694 = vmatpush1.bf16.msra.mxu0 %v492
  %695 = vmatprep.subr.bf16.mxu0 %v495
  %696 = vmatpush1.bf16.msra.mxu0 %v494
  %697 = vmatprep.subr.bf16.mxu0 %v497
  %698 = vmatpush1.bf16.msra.mxu0 %v496
  %699 = vmatprep.mubr.bf16.mxu0 %v137
  %700 = vmatmul.mubr.bf16.gmra.mrb[0].mxu0 %v136
  %v701 = vpop.f32.mrb[0].mxu0
  %v702 = vadd.f32 %v661, %v701
  %v703 = vpop.f32.mrb[0].mxu0
  %v704 = vadd.f32 %v663, %v703
  %v705 = vpop.f32.mrb[0].mxu0
  %v706 = vpop.f32.mrb[0].mxu0
  %707 = vdwg.mxu0
  %708 = vmatprep.subr.bf16.mxu0 %v499
  %709 = vmatpush1.bf16.msra.mxu0 %v498
  %710 = vmatprep.subr.bf16.mxu0 %v501
  %711 = vmatpush1.bf16.msra.mxu0 %v500
  %712 = vmatprep.subr.bf16.mxu0 %v503
  %713 = vmatpush1.bf16.msra.mxu0 %v502
  %714 = vmatprep.subr.bf16.mxu0 %v505
  %715 = vmatpush1.bf16.msra.mxu0 %v504
  %716 = vmatprep.subr.bf16.mxu0 %v507
  %717 = vmatpush1.bf16.msra.mxu0 %v506
  %718 = vmatprep.subr.bf16.mxu0 %v509
  %719 = vmatpush1.bf16.msra.mxu0 %v508
  %720 = vmatprep.subr.bf16.mxu0 %v511
  %721 = vmatpush1.bf16.msra.mxu0 %v510
  %722 = vmatprep.subr.bf16.mxu0 %v513
  %723 = vmatpush1.bf16.msra.mxu0 %v512
  %724 = vmatprep.subr.bf16.mxu0 %v515
  %725 = vmatpush1.bf16.msra.mxu0 %v514
  %726 = vmatprep.subr.bf16.mxu0 %v517
  %727 = vmatpush1.bf16.msra.mxu0 %v516
  %728 = vmatprep.subr.bf16.mxu0 %v519
  %729 = vmatpush1.bf16.msra.mxu0 %v518
  %730 = vmatprep.subr.bf16.mxu0 %v521
  %731 = vmatpush1.bf16.msra.mxu0 %v520
  %732 = vmatprep.subr.bf16.mxu0 %v523
  %733 = vmatpush1.bf16.msra.mxu0 %v522
  %734 = vmatprep.subr.bf16.mxu0 %v525
  %735 = vmatpush1.bf16.msra.mxu0 %v524
  %736 = vmatprep.subr.bf16.mxu0 %v527
  %737 = vmatpush1.bf16.msra.mxu0 %v526
  %738 = vmatprep.subr.bf16.mxu0 %v529
  %739 = vmatpush1.bf16.msra.mxu0 %v528
  %740 = vmatprep.mubr.bf16.mxu0 %v139
  %741 = vmatmul.mubr.bf16.gmra.mrb[0].mxu0 %v138
  %v742 = vpop.f32.mrb[0].mxu0
  %v743 = vadd.f32 %v702, %v742
  %v744 = vpop.f32.mrb[0].mxu0
  %v745 = vadd.f32 %v704, %v744
  %v746 = vpop.f32.mrb[0].mxu0
  %v747 = vpop.f32.mrb[0].mxu0
  %748 = vdwg.mxu0
  %749 = vst [vmem:[%s3] sm:$0xff] %v743
  %750 = vst [vmem:[%s3 + $0x8] sm:$0xff] %v745
  // Predicated region
  $region14: #{vitseg_forward.2} parent=0 // pred_check
    _
  $region15: #{vitseg_forward.2} parent=0 // pred_check_branch
    %752 = sbr.rel (0) target = $region17
  $region16: #{vitseg_forward.2} parent=0 // pred_region
    _
  $region17: #{vitseg_forward.2} parent=0 // pred_fallthru
    _
  // Predicated region
  $region18: #{vitseg_forward.2} parent=0 // pred_check
    _
  $region19: #{vitseg_forward.2} parent=0 // pred_check_branch
    %754 = sbr.rel (0) target = $region21
  $region20: #{vitseg_forward.2} parent=0 // pred_region
    _
  $region21: #{vitseg_forward.2} parent=0 // pred_fallthru
    _

// kernel: vitseg_forward.3
$region0: #{vitseg_forward.3}
  #allocation0 [shape = 'u32[]', space=smem, size = 0x4, offset = 0x4, fixed_abs, tag = 'smem constant byte address 0x4 - core index']
  #allocation1 [shape = 'u32[144,128]{1,0:T(1,128)}', space=vmem, size = 0x12000, scoped, tag = 'internal scratch']
  #allocation2 [shape = 'f32[128,256]{1,0:T(8,128)}', space=vmem, size = 0x20000, scoped, tag = 'scratch operand']
  #allocation3 [shape = 'bf16[128,256]{1,0:T(16,128)(2,1)}', space=vmem, size = 0x10000, scoped, tag = 'scratch operand']
  %s0 = inlined_call_operand.hbm [shape: bf16[2,128,256], index: 0, kind: input, shape index: {}]
  %s1 = inlined_call_operand.hbm [shape: f32[2,1,256], index: 1, kind: input, shape index: {}]
  %s2 = inlined_call_operand.hbm [shape: f32[2,1,256], index: 2, kind: input, shape index: {}]
  %s3 = inlined_call_operand.hbm [shape: bf16[2,256,768], index: 3, kind: input, shape index: {}]
  %s4 = inlined_call_operand.hbm [shape: f32[2,1,768], index: 4, kind: input, shape index: {}]
  %s5 = inlined_call_operand.hbm [shape: bf16[2,256,256], index: 5, kind: input, shape index: {}]
  %s6 = inlined_call_operand.hbm [shape: f32[2,1,256], index: 6, kind: input, shape index: {}]
  %s7 = inlined_call_operand.hbm [shape: bf16[2,256,128], index: 7, kind: input, shape index: {}]
  %s8 = inlined_call_operand.hbm [shape: f32[2,1,128], index: 8, kind: input, shape index: {}]
  %s9 = inlined_call_operand.hbm [shape: bf16[2,128,256], index: 9, kind: input, shape index: {}]
  %s10 = inlined_call_operand.hbm [shape: f32[2,1,256], index: 10, kind: input, shape index: {}]
  %s11 = inlined_call_operand.hbm [shape: f32[2,1,256], index: 11, kind: input, shape index: {}]
  %s12 = inlined_call_operand.hbm [shape: f32[2,1,256], index: 12, kind: input, shape index: {}]
  %s13 = inlined_call_operand.hbm [shape: bf16[2,256,1024], index: 13, kind: input, shape index: {}]
  %s14 = inlined_call_operand.hbm [shape: f32[2,1,1024], index: 14, kind: input, shape index: {}]
  %s15 = inlined_call_operand.hbm [shape: bf16[2,1024,256], index: 15, kind: input, shape index: {}]
  %s16 = inlined_call_operand.hbm [shape: f32[2,1,256], index: 16, kind: input, shape index: {}]
  %s17 = inlined_call_operand.hbm [shape: f32[2,1,256], index: 17, kind: output, shape index: {}]
  %s18 = sld [smem:[#allocation0]]
  $region177: #{vitseg_forward.3} parent=0
    _
  %s20 = ssub.s32 1, %s18
  %s21 = scalar_select 0, %s20, %s18
  $region1: #{vitseg_forward.3} parent=0
    #allocation4 [shape = 'u8[131072]{0}', space=vmem, size = 0x20000, scoped, tag = 'input window, operand 0']
    #allocation5 [shape = 's32[2]{0}', space=sflag, size = 0x8, scoped, tag = 'scoped memory for vitseg_forward.3']
    #allocation6 [shape = 's32[2]{0}', space=sflag, size = 0x8, scoped, tag = 'scoped memory for vitseg_forward.3']
    #allocation7 [shape = 'u8[2048]{0}', space=vmem, size = 0x800, scoped, tag = 'input window, operand 1']
    #allocation8 [shape = 's32[2]{0}', space=sflag, size = 0x8, scoped, tag = 'scoped memory for vitseg_forward.3']
    #allocation9 [shape = 'u8[2048]{0}', space=vmem, size = 0x800, scoped, tag = 'input window, operand 2']
    #allocation10 [shape = 'u8[786432]{0}', space=vmem, size = 0xc0000, scoped, tag = 'input window, operand 3']
    #allocation11 [shape = 's32[2]{0}', space=sflag, size = 0x8, scoped, tag = 'scoped memory for vitseg_forward.3']
    #allocation12 [shape = 'u8[6144]{0}', space=vmem, size = 0x1800, scoped, tag = 'input window, operand 4']
    #allocation13 [shape = 'u8[262144]{0}', space=vmem, size = 0x40000, scoped, tag = 'input window, operand 5']
    #allocation14 [shape = 's32[2]{0}', space=sflag, size = 0x8, scoped, tag = 'scoped memory for vitseg_forward.3']
    #allocation15 [shape = 'u8[2048]{0}', space=vmem, size = 0x800, scoped, tag = 'input window, operand 6']
    #allocation16 [shape = 'u8[131072]{0}', space=vmem, size = 0x20000, scoped, tag = 'input window, operand 7']
    #allocation17 [shape = 's32[2]{0}', space=sflag, size = 0x8, scoped, tag = 'scoped memory for vitseg_forward.3']
    #allocation18 [shape = 'u8[1024]{0}', space=vmem, size = 0x400, scoped, tag = 'input window, operand 8']
    #allocation19 [shape = 'u8[131072]{0}', space=vmem, size = 0x20000, scoped, tag = 'input window, operand 9']
    #allocation20 [shape = 's32[2]{0}', space=sflag, size = 0x8, scoped, tag = 'scoped memory for vitseg_forward.3']
    #allocation21 [shape = 'u8[2048]{0}', space=vmem, size = 0x800, scoped, tag = 'input window, operand 10']
    #allocation22 [shape = 'u8[2048]{0}', space=vmem, size = 0x800, scoped, tag = 'input window, operand 11']
    #allocation23 [shape = 's32[2]{0}', space=sflag, size = 0x8, scoped, tag = 'scoped memory for vitseg_forward.3']
    #allocation24 [shape = 'u8[2048]{0}', space=vmem, size = 0x800, scoped, tag = 'input window, operand 12']
    #allocation25 [shape = 'u8[1048576]{0}', space=vmem, size = 0x100000, scoped, tag = 'input window, operand 13']
    #allocation26 [shape = 's32[2]{0}', space=sflag, size = 0x8, scoped, tag = 'scoped memory for vitseg_forward.3']
    #allocation27 [shape = 'u8[8192]{0}', space=vmem, size = 0x2000, scoped, tag = 'input window, operand 14']
    #allocation28 [shape = 'u8[1048576]{0}', space=vmem, size = 0x100000, scoped, tag = 'input window, operand 15']
    #allocation29 [shape = 's32[2]{0}', space=sflag, size = 0x8, scoped, tag = 'scoped memory for vitseg_forward.3']
    #allocation30 [shape = 'u8[2048]{0}', space=vmem, size = 0x800, scoped, tag = 'input window, operand 16']
    #allocation31 [shape = 'u8[2048]{0}', space=vmem, size = 0x800, scoped, tag = 'output window, operand 0']
    %22 = vsyncpa [#allocation5], 0
    %s23 = scalar_lea.sflag [#allocation5], 1
    %24 = vsyncpa %s23, 0
    %25 = vsyncpa [#allocation8], 0
    %s26 = scalar_lea.sflag [#allocation8], 1
    %27 = vsyncpa %s26, 0
    %28 = vsyncpa [#allocation11], 0
    %s29 = scalar_lea.sflag [#allocation11], 1
    %30 = vsyncpa %s29, 0
    %31 = vsyncpa [#allocation14], 0
    %s32 = scalar_lea.sflag [#allocation14], 1
    %33 = vsyncpa %s32, 0
    %34 = vsyncpa [#allocation17], 0
    %s35 = scalar_lea.sflag [#allocation17], 1
    %36 = vsyncpa %s35, 0
    %37 = vsyncpa [#allocation20], 0
    %s38 = scalar_lea.sflag [#allocation20], 1
    %39 = vsyncpa %s38, 0
    %40 = vsyncpa [#allocation23], 0
    %s41 = scalar_lea.sflag [#allocation23], 1
    %42 = vsyncpa %s41, 0
    %43 = vsyncpa [#allocation26], 0
    %s44 = scalar_lea.sflag [#allocation26], 1
    %45 = vsyncpa %s44, 0
    %46 = vsyncpa [#allocation29], 0
    %s47 = scalar_lea.sflag [#allocation29], 1
    %48 = vsyncpa %s47, 0
    %49 = vsyncpa [#allocation6], 0
    %s50 = scalar_lea.sflag [#allocation6], 1
    %51 = vsyncpa %s50, 0
    loop: start=0, step=1, limit=6
    $region2: #{vitseg_forward.3} parent=1 // loop_pre_header
      _
    $region3: #{vitseg_forward.3} parent=1 // loop_header
      %s53 = sphi 0, %s57
      %p54 = scmp.ge.s32.totalorder %s53, 6
      %s60 = sphi 0, %s72
      %s61 = sphi 0, %s68
      %s62 = sphi 0, %s60
      %s63 = sphi 0, %s61
      %s64 = sphi 0, %s62
      %s65 = sphi 0, %s63
      %s75 = sphi 0, %s77
      %s78 = sphi 0, %s75
      %s79 = sphi 0, %s78
      %s95 = sphi 0, %s79
      %s101 = sphi 0, %s103
      %s104 = sphi 0, %s101
      %s105 = sphi 0, %s104
      %s121 = sphi 0, %s105
      %s127 = sphi 0, %s129
      %s130 = sphi 0, %s127
      %s131 = sphi 0, %s130
      %s147 = sphi 0, %s131
      %s153 = sphi 0, %s155
      %s156 = sphi 0, %s153
      %s157 = sphi 0, %s156
      %s173 = sphi 0, %s157
      %s179 = sphi 0, %s181
      %s182 = sphi 0, %s179
      %s183 = sphi 0, %s182
      %s199 = sphi 0, %s183
      %s205 = sphi 0, %s207
      %s208 = sphi 0, %s205
      %s209 = sphi 0, %s208
      %s225 = sphi 0, %s209
      %s231 = sphi 0, %s233
      %s234 = sphi 0, %s231
      %s235 = sphi 0, %s234
      %s251 = sphi 0, %s235
      %s257 = sphi 0, %s259
      %s260 = sphi 0, %s257
      %s261 = sphi 0, %s260
      %s277 = sphi 0, %s261
      %s283 = sphi 0, %s285
      %s286 = sphi 0, %s283
      %s287 = sphi 0, %s286
      %s303 = sphi 0, %s287
      %s309 = sphi 0, %s311
      %s312 = sphi 0, %s309
      %s313 = sphi 0, %s312
      %s329 = sphi 0, %s313
      %s335 = sphi 0, %s337
      %s338 = sphi 0, %s335
      %s339 = sphi 0, %s338
      %s355 = sphi 0, %s339
      %s361 = sphi 0, %s363
      %s364 = sphi 0, %s361
      %s365 = sphi 0, %s364
      %s381 = sphi 0, %s365
      %s387 = sphi 0, %s389
      %s390 = sphi 0, %s387
      %s391 = sphi 0, %s390
      %s407 = sphi 0, %s391
      %s413 = sphi 0, %s415
      %s416 = sphi 0, %s413
      %s417 = sphi 0, %s416
      %s433 = sphi 0, %s417
      %s439 = sphi 0, %s441
      %s442 = sphi 0, %s439
      %s443 = sphi 0, %s442
      %s459 = sphi 0, %s443
      %s465 = sphi 0, %s467
      %s468 = sphi 0, %s465
      %s469 = sphi 0, %s468
      %s485 = sphi 0, %s469
      %s491 = sphi 0, %s493
      %s494 = sphi 0, %s491
      %s495 = sphi 0, %s494
      %s511 = sphi 0, %s495
      %s517 = sphi 0, %s519
      %s520 = sphi 0, %s517
      %s521 = sphi 0, %s520
      %s537 = sphi 0, %s521
    $region4: #{vitseg_forward.3} parent=1 // loop_header_branch
      %56 = sbr.rel (%p54) target = $region8
    $region5: #{vitseg_forward.3} parent=1 // loop_body
      %s58 = ssub.s32 %s53, 1
      %s59 = ssub.s32 %s53, 2
      %s66 = sadd.s32 1, %s61
      %p67 = scmp.ge.s32.totalorder %s66, 2
      %s68 = scalar_select %p67, 0, %s66
      %s69 = sadd.s32 1, %s60
      %s70 = scalar_select %p67, %s69, %s60
      %p71 = scmp.ge.s32.totalorder %s70, 2
      %s72 = scalar_select %p71, 0, %s70
      %s73 = ssub.s32 %s60, %s72
      %p74 = scmp.eq.s32.totalorder %s73, 0
      %s76 = sadd.s32 %s75, 1
      %s77 = scalar_select %p74, %s75, %s76
      %p80 = pneg %p74
      %p81 = scmp.eq.s32.totalorder %s53, 3
      %p82 = por %p80, %p81
      %p83 = scmp.ne.s32.totalorder %s75, %s78
      %p84 = scmp.eq.s32.totalorder %s53, 0
      %p85 = por %p83, %p84
      %p86 = scmp.ne.s32.totalorder %s75, %s78
      %p87 = scmp.eq.s32.totalorder %s58, 3
      %p88 = por %p86, %p87
      %p89 = scmp.ne.s32.totalorder %s78, %s79
      %p90 = scmp.eq.s32.totalorder %s58, 0
      %p91 = por %p89, %p90
      %p92 = scmp.ne.s32.totalorder %s78, %s79
      %p93 = scmp.eq.s32.totalorder %s59, 3
      %p94 = por %p92, %p93
      %p96 = scmp.ne.s32.totalorder %s79, %s95
      %p97 = scmp.eq.s32.totalorder %s59, 0
      %p98 = por %p96, %p97
      %s99 = ssub.s32 %s61, %s68
      %p100 = scmp.eq.s32.totalorder %s99, 0
      %s102 = sadd.s32 %s101, 1
      %s103 = scalar_select %p100, %s101, %s102
      %p106 = pneg %p100
      %p107 = scmp.eq.s32.totalorder %s53, 3
      %p108 = por %p106, %p107
      %p109 = scmp.ne.s32.totalorder %s101, %s104
      %p110 = scmp.eq.s32.totalorder %s53, 0
      %p111 = por %p109, %p110
      %p112 = scmp.ne.s32.totalorder %s101, %s104
      %p113 = scmp.eq.s32.totalorder %s58, 3
      %p114 = por %p112, %p113
      %p115 = scmp.ne.s32.totalorder %s104, %s105
      %p116 = scmp.eq.s32.totalorder %s58, 0
      %p117 = por %p115, %p116
      %p118 = scmp.ne.s32.totalorder %s104, %s105
      %p119 = scmp.eq.s32.totalorder %s59, 3
      %p120 = por %p118, %p119
      %p122 = scmp.ne.s32.totalorder %s105, %s121
      %p123 = scmp.eq.s32.totalorder %s59, 0
      %p124 = por %p122, %p123
      %s125 = ssub.s32 %s61, %s68
      %p126 = scmp.eq.s32.totalorder %s125, 0
      %s128 = sadd.s32 %s127, 1
      %s129 = scalar_select %p126, %s127, %s128
      %p132 = pneg %p126
      %p133 = scmp.eq.s32.totalorder %s53, 3
      %p134 = por %p132, %p133
      %p135 = scmp.ne.s32.totalorder %s127, %s130
      %p136 = scmp.eq.s32.totalorder %s53, 0
      %p137 = por %p135, %p136
      %p138 = scmp.ne.s32.totalorder %s127, %s130
      %p139 = scmp.eq.s32.totalorder %s58, 3
      %p140 = por %p138, %p139
      %p141 = scmp.ne.s32.totalorder %s130, %s131
      %p142 = scmp.eq.s32.totalorder %s58, 0
      %p143 = por %p141, %p142
      %p144 = scmp.ne.s32.totalorder %s130, %s131
      %p145 = scmp.eq.s32.totalorder %s59, 3
      %p146 = por %p144, %p145
      %p148 = scmp.ne.s32.totalorder %s131, %s147
      %p149 = scmp.eq.s32.totalorder %s59, 0
      %p150 = por %p148, %p149
      %s151 = ssub.s32 %s61, %s68
      %p152 = scmp.eq.s32.totalorder %s151, 0
      %s154 = sadd.s32 %s153, 1
      %s155 = scalar_select %p152, %s153, %s154
      %p158 = pneg %p152
      %p159 = scmp.eq.s32.totalorder %s53, 3
      %p160 = por %p158, %p159
      %p161 = scmp.ne.s32.totalorder %s153, %s156
      %p162 = scmp.eq.s32.totalorder %s53, 0
      %p163 = por %p161, %p162
      %p164 = scmp.ne.s32.totalorder %s153, %s156
      %p165 = scmp.eq.s32.totalorder %s58, 3
      %p166 = por %p164, %p165
      %p167 = scmp.ne.s32.totalorder %s156, %s157
      %p168 = scmp.eq.s32.totalorder %s58, 0
      %p169 = por %p167, %p168
      %p170 = scmp.ne.s32.totalorder %s156, %s157
      %p171 = scmp.eq.s32.totalorder %s59, 3
      %p172 = por %p170, %p171
      %p174 = scmp.ne.s32.totalorder %s157, %s173
      %p175 = scmp.eq.s32.totalorder %s59, 0
      %p176 = por %p174, %p175
      %s177 = ssub.s32 %s61, %s68
      %p178 = scmp.eq.s32.totalorder %s177, 0
      %s180 = sadd.s32 %s179, 1
      %s181 = scalar_select %p178, %s179, %s180
      %p184 = pneg %p178
      %p185 = scmp.eq.s32.totalorder %s53, 3
      %p186 = por %p184, %p185
      %p187 = scmp.ne.s32.totalorder %s179, %s182
      %p188 = scmp.eq.s32.totalorder %s53, 0
      %p189 = por %p187, %p188
      %p190 = scmp.ne.s32.totalorder %s179, %s182
      %p191 = scmp.eq.s32.totalorder %s58, 3
      %p192 = por %p190, %p191
      %p193 = scmp.ne.s32.totalorder %s182, %s183
      %p194 = scmp.eq.s32.totalorder %s58, 0
      %p195 = por %p193, %p194
      %p196 = scmp.ne.s32.totalorder %s182, %s183
      %p197 = scmp.eq.s32.totalorder %s59, 3
      %p198 = por %p196, %p197
      %p200 = scmp.ne.s32.totalorder %s183, %s199
      %p201 = scmp.eq.s32.totalorder %s59, 0
      %p202 = por %p200, %p201
      %s203 = ssub.s32 %s61, %s68
      %p204 = scmp.eq.s32.totalorder %s203, 0
      %s206 = sadd.s32 %s205, 1
      %s207 = scalar_select %p204, %s205, %s206
      %p210 = pneg %p204
      %p211 = scmp.eq.s32.totalorder %s53, 3
      %p212 = por %p210, %p211
      %p213 = scmp.ne.s32.totalorder %s205, %s208
      %p214 = scmp.eq.s32.totalorder %s53, 0
      %p215 = por %p213, %p214
      %p216 = scmp.ne.s32.totalorder %s205, %s208
      %p217 = scmp.eq.s32.totalorder %s58, 3
      %p218 = por %p216, %p217
      %p219 = scmp.ne.s32.totalorder %s208, %s209
      %p220 = scmp.eq.s32.totalorder %s58, 0
      %p221 = por %p219, %p220
      %p222 = scmp.ne.s32.totalorder %s208, %s209
      %p223 = scmp.eq.s32.totalorder %s59, 3
      %p224 = por %p222, %p223
      %p226 = scmp.ne.s32.totalorder %s209, %s225
      %p227 = scmp.eq.s32.totalorder %s59, 0
      %p228 = por %p226, %p227
      %s229 = ssub.s32 %s61, %s68
      %p230 = scmp.eq.s32.totalorder %s229, 0
      %s232 = sadd.s32 %s231, 1
      %s233 = scalar_select %p230, %s231, %s232
      %p236 = pneg %p230
      %p237 = scmp.eq.s32.totalorder %s53, 3
      %p238 = por %p236, %p237
      %p239 = scmp.ne.s32.totalorder %s231, %s234
      %p240 = scmp.eq.s32.totalorder %s53, 0
      %p241 = por %p239, %p240
      %p242 = scmp.ne.s32.totalorder %s231, %s234
      %p243 = scmp.eq.s32.totalorder %s58, 3
      %p244 = por %p242, %p243
      %p245 = scmp.ne.s32.totalorder %s234, %s235
      %p246 = scmp.eq.s32.totalorder %s58, 0
      %p247 = por %p245, %p246
      %p248 = scmp.ne.s32.totalorder %s234, %s235
      %p249 = scmp.eq.s32.totalorder %s59, 3
      %p250 = por %p248, %p249
      %p252 = scmp.ne.s32.totalorder %s235, %s251
      %p253 = scmp.eq.s32.totalorder %s59, 0
      %p254 = por %p252, %p253
      %s255 = ssub.s32 %s61, %s68
      %p256 = scmp.eq.s32.totalorder %s255, 0
      %s258 = sadd.s32 %s257, 1
      %s259 = scalar_select %p256, %s257, %s258
      %p262 = pneg %p256
      %p263 = scmp.eq.s32.totalorder %s53, 3
      %p264 = por %p262, %p263
      %p265 = scmp.ne.s32.totalorder %s257, %s260
      %p266 = scmp.eq.s32.totalorder %s53, 0
      %p267 = por %p265, %p266
      %p268 = scmp.ne.s32.totalorder %s257, %s260
      %p269 = scmp.eq.s32.totalorder %s58, 3
      %p270 = por %p268, %p269
      %p271 = scmp.ne.s32.totalorder %s260, %s261
      %p272 = scmp.eq.s32.totalorder %s58, 0
      %p273 = por %p271, %p272
      %p274 = scmp.ne.s32.totalorder %s260, %s261
      %p275 = scmp.eq.s32.totalorder %s59, 3
      %p276 = por %p274, %p275
      %p278 = scmp.ne.s32.totalorder %s261, %s277
      %p279 = scmp.eq.s32.totalorder %s59, 0
      %p280 = por %p278, %p279
      %s281 = ssub.s32 %s61, %s68
      %p282 = scmp.eq.s32.totalorder %s281, 0
      %s284 = sadd.s32 %s283, 1
      %s285 = scalar_select %p282, %s283, %s284
      %p288 = pneg %p282
      %p289 = scmp.eq.s32.totalorder %s53, 3
      %p290 = por %p288, %p289
      %p291 = scmp.ne.s32.totalorder %s283, %s286
      %p292 = scmp.eq.s32.totalorder %s53, 0
      %p293 = por %p291, %p292
      %p294 = scmp.ne.s32.totalorder %s283, %s286
      %p295 = scmp.eq.s32.totalorder %s58, 3
      %p296 = por %p294, %p295
      %p297 = scmp.ne.s32.totalorder %s286, %s287
      %p298 = scmp.eq.s32.totalorder %s58, 0
      %p299 = por %p297, %p298
      %p300 = scmp.ne.s32.totalorder %s286, %s287
      %p301 = scmp.eq.s32.totalorder %s59, 3
      %p302 = por %p300, %p301
      %p304 = scmp.ne.s32.totalorder %s287, %s303
      %p305 = scmp.eq.s32.totalorder %s59, 0
      %p306 = por %p304, %p305
      %s307 = ssub.s32 %s61, %s68
      %p308 = scmp.eq.s32.totalorder %s307, 0
      %s310 = sadd.s32 %s309, 1
      %s311 = scalar_select %p308, %s309, %s310
      %p314 = pneg %p308
      %p315 = scmp.eq.s32.totalorder %s53, 3
      %p316 = por %p314, %p315
      %p317 = scmp.ne.s32.totalorder %s309, %s312
      %p318 = scmp.eq.s32.totalorder %s53, 0
      %p319 = por %p317, %p318
      %p320 = scmp.ne.s32.totalorder %s309, %s312
      %p321 = scmp.eq.s32.totalorder %s58, 3
      %p322 = por %p320, %p321
      %p323 = scmp.ne.s32.totalorder %s312, %s313
      %p324 = scmp.eq.s32.totalorder %s58, 0
      %p325 = por %p323, %p324
      %p326 = scmp.ne.s32.totalorder %s312, %s313
      %p327 = scmp.eq.s32.totalorder %s59, 3
      %p328 = por %p326, %p327
      %p330 = scmp.ne.s32.totalorder %s313, %s329
      %p331 = scmp.eq.s32.totalorder %s59, 0
      %p332 = por %p330, %p331
      %s333 = ssub.s32 %s61, %s68
      %p334 = scmp.eq.s32.totalorder %s333, 0
      %s336 = sadd.s32 %s335, 1
      %s337 = scalar_select %p334, %s335, %s336
      %p340 = pneg %p334
      %p341 = scmp.eq.s32.totalorder %s53, 3
      %p342 = por %p340, %p341
      %p343 = scmp.ne.s32.totalorder %s335, %s338
      %p344 = scmp.eq.s32.totalorder %s53, 0
      %p345 = por %p343, %p344
      %p346 = scmp.ne.s32.totalorder %s335, %s338
      %p347 = scmp.eq.s32.totalorder %s58, 3
      %p348 = por %p346, %p347
      %p349 = scmp.ne.s32.totalorder %s338, %s339
      %p350 = scmp.eq.s32.totalorder %s58, 0
      %p351 = por %p349, %p350
      %p352 = scmp.ne.s32.totalorder %s338, %s339
      %p353 = scmp.eq.s32.totalorder %s59, 3
      %p354 = por %p352, %p353
      %p356 = scmp.ne.s32.totalorder %s339, %s355
      %p357 = scmp.eq.s32.totalorder %s59, 0
      %p358 = por %p356, %p357
      %s359 = ssub.s32 %s61, %s68
      %p360 = scmp.eq.s32.totalorder %s359, 0
      %s362 = sadd.s32 %s361, 1
      %s363 = scalar_select %p360, %s361, %s362
      %p366 = pneg %p360
      %p367 = scmp.eq.s32.totalorder %s53, 3
      %p368 = por %p366, %p367
      %p369 = scmp.ne.s32.totalorder %s361, %s364
      %p370 = scmp.eq.s32.totalorder %s53, 0
      %p371 = por %p369, %p370
      %p372 = scmp.ne.s32.totalorder %s361, %s364
      %p373 = scmp.eq.s32.totalorder %s58, 3
      %p374 = por %p372, %p373
      %p375 = scmp.ne.s32.totalorder %s364, %s365
      %p376 = scmp.eq.s32.totalorder %s58, 0
      %p377 = por %p375, %p376
      %p378 = scmp.ne.s32.totalorder %s364, %s365
      %p379 = scmp.eq.s32.totalorder %s59, 3
      %p380 = por %p378, %p379
      %p382 = scmp.ne.s32.totalorder %s365, %s381
      %p383 = scmp.eq.s32.totalorder %s59, 0
      %p384 = por %p382, %p383
      %s385 = ssub.s32 %s61, %s68
      %p386 = scmp.eq.s32.totalorder %s385, 0
      %s388 = sadd.s32 %s387, 1
      %s389 = scalar_select %p386, %s387, %s388
      %p392 = pneg %p386
      %p393 = scmp.eq.s32.totalorder %s53, 3
      %p394 = por %p392, %p393
      %p395 = scmp.ne.s32.totalorder %s387, %s390
      %p396 = scmp.eq.s32.totalorder %s53, 0
      %p397 = por %p395, %p396
      %p398 = scmp.ne.s32.totalorder %s387, %s390
      %p399 = scmp.eq.s32.totalorder %s58, 3
      %p400 = por %p398, %p399
      %p401 = scmp.ne.s32.totalorder %s390, %s391
      %p402 = scmp.eq.s32.totalorder %s58, 0
      %p403 = por %p401, %p402
      %p404 = scmp.ne.s32.totalorder %s390, %s391
      %p405 = scmp.eq.s32.totalorder %s59, 3
      %p406 = por %p404, %p405
      %p408 = scmp.ne.s32.totalorder %s391, %s407
      %p409 = scmp.eq.s32.totalorder %s59, 0
      %p410 = por %p408, %p409
      %s411 = ssub.s32 %s61, %s68
      %p412 = scmp.eq.s32.totalorder %s411, 0
      %s414 = sadd.s32 %s413, 1
      %s415 = scalar_select %p412, %s413, %s414
      %p418 = pneg %p412
      %p419 = scmp.eq.s32.totalorder %s53, 3
      %p420 = por %p418, %p419
      %p421 = scmp.ne.s32.totalorder %s413, %s416
      %p422 = scmp.eq.s32.totalorder %s53, 0
      %p423 = por %p421, %p422
      %p424 = scmp.ne.s32.totalorder %s413, %s416
      %p425 = scmp.eq.s32.totalorder %s58, 3
      %p426 = por %p424, %p425
      %p427 = scmp.ne.s32.totalorder %s416, %s417
      %p428 = scmp.eq.s32.totalorder %s58, 0
      %p429 = por %p427, %p428
      %p430 = scmp.ne.s32.totalorder %s416, %s417
      %p431 = scmp.eq.s32.totalorder %s59, 3
      %p432 = por %p430, %p431
      %p434 = scmp.ne.s32.totalorder %s417, %s433
      %p435 = scmp.eq.s32.totalorder %s59, 0
      %p436 = por %p434, %p435
      %s437 = ssub.s32 %s61, %s68
      %p438 = scmp.eq.s32.totalorder %s437, 0
      %s440 = sadd.s32 %s439, 1
      %s441 = scalar_select %p438, %s439, %s440
      %p444 = pneg %p438
      %p445 = scmp.eq.s32.totalorder %s53, 3
      %p446 = por %p444, %p445
      %p447 = scmp.ne.s32.totalorder %s439, %s442
      %p448 = scmp.eq.s32.totalorder %s53, 0
      %p449 = por %p447, %p448
      %p450 = scmp.ne.s32.totalorder %s439, %s442
      %p451 = scmp.eq.s32.totalorder %s58, 3
      %p452 = por %p450, %p451
      %p453 = scmp.ne.s32.totalorder %s442, %s443
      %p454 = scmp.eq.s32.totalorder %s58, 0
      %p455 = por %p453, %p454
      %p456 = scmp.ne.s32.totalorder %s442, %s443
      %p457 = scmp.eq.s32.totalorder %s59, 3
      %p458 = por %p456, %p457
      %p460 = scmp.ne.s32.totalorder %s443, %s459
      %p461 = scmp.eq.s32.totalorder %s59, 0
      %p462 = por %p460, %p461
      %s463 = ssub.s32 %s61, %s68
      %p464 = scmp.eq.s32.totalorder %s463, 0
      %s466 = sadd.s32 %s465, 1
      %s467 = scalar_select %p464, %s465, %s466
      %p470 = pneg %p464
      %p471 = scmp.eq.s32.totalorder %s53, 3
      %p472 = por %p470, %p471
      %p473 = scmp.ne.s32.totalorder %s465, %s468
      %p474 = scmp.eq.s32.totalorder %s53, 0
      %p475 = por %p473, %p474
      %p476 = scmp.ne.s32.totalorder %s465, %s468
      %p477 = scmp.eq.s32.totalorder %s58, 3
      %p478 = por %p476, %p477
      %p479 = scmp.ne.s32.totalorder %s468, %s469
      %p480 = scmp.eq.s32.totalorder %s58, 0
      %p481 = por %p479, %p480
      %p482 = scmp.ne.s32.totalorder %s468, %s469
      %p483 = scmp.eq.s32.totalorder %s59, 3
      %p484 = por %p482, %p483
      %p486 = scmp.ne.s32.totalorder %s469, %s485
      %p487 = scmp.eq.s32.totalorder %s59, 0
      %p488 = por %p486, %p487
      %s489 = ssub.s32 %s61, %s68
      %p490 = scmp.eq.s32.totalorder %s489, 0
      %s492 = sadd.s32 %s491, 1
      %s493 = scalar_select %p490, %s491, %s492
      %p496 = pneg %p490
      %p497 = scmp.eq.s32.totalorder %s53, 3
      %p498 = por %p496, %p497
      %p499 = scmp.ne.s32.totalorder %s491, %s494
      %p500 = scmp.eq.s32.totalorder %s53, 0
      %p501 = por %p499, %p500
      %p502 = scmp.ne.s32.totalorder %s491, %s494
      %p503 = scmp.eq.s32.totalorder %s58, 3
      %p504 = por %p502, %p503
      %p505 = scmp.ne.s32.totalorder %s494, %s495
      %p506 = scmp.eq.s32.totalorder %s58, 0
      %p507 = por %p505, %p506
      %p508 = scmp.ne.s32.totalorder %s494, %s495
      %p509 = scmp.eq.s32.totalorder %s59, 3
      %p510 = por %p508, %p509
      %p512 = scmp.ne.s32.totalorder %s495, %s511
      %p513 = scmp.eq.s32.totalorder %s59, 0
      %p514 = por %p512, %p513
      %s515 = ssub.s32 %s60, %s72
      %p516 = scmp.eq.s32.totalorder %s515, 0
      %s518 = sadd.s32 %s517, 1
      %s519 = scalar_select %p516, %s517, %s518
      %p522 = pneg %p516
      %p523 = scmp.eq.s32.totalorder %s53, 3
      %p524 = por %p522, %p523
      %p525 = scmp.ne.s32.totalorder %s517, %s520
      %p526 = scmp.eq.s32.totalorder %s53, 0
      %p527 = por %p525, %p526
      %p528 = scmp.ne.s32.totalorder %s517, %s520
      %p529 = scmp.eq.s32.totalorder %s58, 3
      %p530 = por %p528, %p529
      %p531 = scmp.ne.s32.totalorder %s520, %s521
      %p532 = scmp.eq.s32.totalorder %s58, 0
      %p533 = por %p531, %p532
      %p534 = scmp.ne.s32.totalorder %s520, %s521
      %p535 = scmp.eq.s32.totalorder %s59, 3
      %p536 = por %p534, %p535
      %p538 = scmp.ne.s32.totalorder %s521, %s537
      %p539 = scmp.eq.s32.totalorder %s59, 0
      %p540 = por %p538, %p539
      %p541 = scmp.le.s32.totalorder 1, %s53
      %p542 = scmp.lt.s32.totalorder %s53, 5
      %p543 = pnand %p541, %p542
      %p544 = pneg %p543
      // Predicated region
      $region9: #{vitseg_forward.3} parent=5 // pred_check
        _
      $region10: #{vitseg_forward.3} parent=5 // pred_check_branch
        %546 = sbr.rel (%p543) target = $region12
      $region11: #{vitseg_forward.3} parent=5 // pred_region
        %s547 = ssub.s32 %s53, 1
      $region12: #{vitseg_forward.3} parent=5 // pred_fallthru
        _
      %p548 = scmp.lt.s32.totalorder %s53, 4
      // Predicated region
      $region13: #{vitseg_forward.3} parent=5 // pred_check
        %p549 = pneg %p548
      $region14: #{vitseg_forward.3} parent=5 // pred_check_branch
        %551 = sbr.rel (%p549) target = $region16
      $region15: #{vitseg_forward.3} parent=5 // pred_region
        // Predicated region
        $region17: #{vitseg_forward.3} parent=15 // pred_check
          %p552 = pneg %p85
        $region18: #{vitseg_forward.3} parent=15 // pred_check_branch
          %554 = sbr.rel (%p552) target = $region20
        $region19: #{vitseg_forward.3} parent=15 // pred_region
          %s555 = sand.u32 %s75, 1
          %s556 = scalar_lea.sflag [#allocation5], %s555
          %s557 = sand.u32 %s75, 1
          %s558 = smul.addr %s557, 128
          %s559 = scalar_lea.vmem [#allocation4], %s558
          %s561 = ssub.s32 2048, 2048
          %562 = vsyncadd %s556, %s561
          %s563 = smul.addr %s60, 32
          %s564 = smul.addr %s563, 64
          %s565 = scalar_lea.hbm %s0, %s564
          %s566 = sshll.u32 %s559, 4
          %s567 = int_to_ptr.vmem [resolvable:$true] %s566
          %572 = dma.hbm_to_vmem [thread:$0]  %s565, 2048, %s567, %s556, 128, 128, 8
        $region20: #{vitseg_forward.3} parent=15 // pred_fallthru
          _
        // Predicated region
        $region21: #{vitseg_forward.3} parent=15 // pred_check
          %p573 = pneg %p111
        $region22: #{vitseg_forward.3} parent=15 // pred_check_branch
          %575 = sbr.rel (%p573) target = $region24
        $region23: #{vitseg_forward.3} parent=15 // pred_region
          %s576 = sand.u32 %s53, 1
          %s577 = scalar_lea.sflag [#allocation8], %s576
          %s578 = sand.u32 %s101, 1
          %s579 = smul.addr %s578, 2
          %s580 = scalar_lea.vmem [#allocation7], %s579
          %s582 = ssub.s32 32, 32
          %583 = vsyncadd %s577, %s582
          %s584 = smul.addr %s61, 2
          %s585 = smul.addr %s584, 16
          %s586 = scalar_lea.hbm %s1, %s585
          %s588 = sshll.u32 %s580, 4
          %s589 = int_to_ptr.vmem [resolvable:$true] %s588
          %591 = dma.hbm_to_vmem [thread:$0]  %s586, 32, %s589, %s577
        $region24: #{vitseg_forward.3} parent=15 // pred_fallthru
          _
        // Predicated region
        $region25: #{vitseg_forward.3} parent=15 // pred_check
          %p592 = pneg %p137
        $region26: #{vitseg_forward.3} parent=15 // pred_check_branch
          %594 = sbr.rel (%p592) target = $region28
        $region27: #{vitseg_forward.3} parent=15 // pred_region
          %s595 = sand.u32 %s53, 1
          %s596 = scalar_lea.sflag [#allocation8], %s595
          %s597 = sand.u32 %s127, 1
          %s598 = smul.addr %s597, 2
          %s599 = scalar_lea.vmem [#allocation9], %s598
          %s601 = ssub.s32 32, 32
          %602 = vsyncadd %s596, %s601
          %s603 = smul.addr %s61, 2
          %s604 = smul.addr %s603, 16
          %s605 = scalar_lea.hbm %s2, %s604
          %s607 = sshll.u32 %s599, 4
          %s608 = int_to_ptr.vmem [resolvable:$true] %s607
          %610 = dma.hbm_to_vmem [thread:$0]  %s605, 32, %s608, %s596
        $region28: #{vitseg_forward.3} parent=15 // pred_fallthru
          _
        // Predicated region
        $region29: #{vitseg_forward.3} parent=15 // pred_check
          %p611 = pneg %p163
        $region30: #{vitseg_forward.3} parent=15 // pred_check_branch
          %613 = sbr.rel (%p611) target = $region32
        $region31: #{vitseg_forward.3} parent=15 // pred_region
          %s614 = sand.u32 %s53, 1
          %s615 = scalar_lea.sflag [#allocation11], %s614
          %s616 = sand.u32 %s153, 1
          %s617 = smul.addr %s616, 768
          %s618 = scalar_lea.vmem [#allocation10], %s617
          %s620 = ssub.s32 12288, 12288
          %621 = vsyncadd %s615, %s620
          %s622 = smul.addr %s61, 192
          %s623 = smul.addr %s622, 64
          %s624 = scalar_lea.hbm %s3, %s623
          %s625 = sshll.u32 %s618, 4
          %s626 = int_to_ptr.vmem [resolvable:$true] %s625
          %631 = dma.hbm_to_vmem [thread:$0]  %s624, 12288, %s626, %s615, 384, 384, 24
        $region32: #{vitseg_forward.3} parent=15 // pred_fallthru
          _
        // Predicated region
        $region33: #{vitseg_forward.3} parent=15 // pred_check
          %p632 = pneg %p189
        $region34: #{vitseg_forward.3} parent=15 // pred_check_branch
          %634 = sbr.rel (%p632) target = $region36
        $region35: #{vitseg_forward.3} parent=15 // pred_region
          %s635 = sand.u32 %s53, 1
          %s636 = scalar_lea.sflag [#allocation11], %s635
          %s637 = sand.u32 %s179, 1
          %s638 = smul.addr %s637, 6
          %s639 = scalar_lea.vmem [#allocation12], %s638
          %s641 = ssub.s32 96, 96
          %642 = vsyncadd %s636, %s641
          %s643 = smul.addr %s61, 6
          %s644 = smul.addr %s643, 16
          %s645 = scalar_lea.hbm %s4, %s644
          %s647 = sshll.u32 %s639, 4
          %s648 = int_to_ptr.vmem [resolvable:$true] %s647
          %650 = dma.hbm_to_vmem [thread:$0]  %s645, 96, %s648, %s636
        $region36: #{vitseg_forward.3} parent=15 // pred_fallthru
          _
        // Predicated region
        $region37: #{vitseg_forward.3} parent=15 // pred_check
          %p651 = pneg %p215
        $region38: #{vitseg_forward.3} parent=15 // pred_check_branch
          %653 = sbr.rel (%p651) target = $region40
        $region39: #{vitseg_forward.3} parent=15 // pred_region
          %s654 = sand.u32 %s53, 1
          %s655 = scalar_lea.sflag [#allocation14], %s654
          %s656 = sand.u32 %s205, 1
          %s657 = smul.addr %s656, 256
          %s658 = scalar_lea.vmem [#allocation13], %s657
          %s660 = ssub.s32 4096, 4096
          %661 = vsyncadd %s655, %s660
          %s662 = smul.addr %s61, 64
          %s663 = smul.addr %s662, 64
          %s664 = scalar_lea.hbm %s5, %s663
          %s665 = sshll.u32 %s658, 4
          %s666 = int_to_ptr.vmem [resolvable:$true] %s665
          %671 = dma.hbm_to_vmem [thread:$0]  %s664, 4096, %s666, %s655, 128, 128, 8
        $region40: #{vitseg_forward.3} parent=15 // pred_fallthru
          _
        // Predicated region
        $region41: #{vitseg_forward.3} parent=15 // pred_check
          %p672 = pneg %p241
        $region42: #{vitseg_forward.3} parent=15 // pred_check_branch
          %674 = sbr.rel (%p672) target = $region44
        $region43: #{vitseg_forward.3} parent=15 // pred_region
          %s675 = sand.u32 %s53, 1
          %s676 = scalar_lea.sflag [#allocation14], %s675
          %s677 = sand.u32 %s231, 1
          %s678 = smul.addr %s677, 2
          %s679 = scalar_lea.vmem [#allocation15], %s678
          %s681 = ssub.s32 32, 32
          %682 = vsyncadd %s676, %s681
          %s683 = smul.addr %s61, 2
          %s684 = smul.addr %s683, 16
          %s685 = scalar_lea.hbm %s6, %s684
          %s687 = sshll.u32 %s679, 4
          %s688 = int_to_ptr.vmem [resolvable:$true] %s687
          %690 = dma.hbm_to_vmem [thread:$0]  %s685, 32, %s688, %s676
        $region44: #{vitseg_forward.3} parent=15 // pred_fallthru
          _
        // Predicated region
        $region45: #{vitseg_forward.3} parent=15 // pred_check
          %p691 = pneg %p267
        $region46: #{vitseg_forward.3} parent=15 // pred_check_branch
          %693 = sbr.rel (%p691) target = $region48
        $region47: #{vitseg_forward.3} parent=15 // pred_region
          %s694 = sand.u32 %s53, 1
          %s695 = scalar_lea.sflag [#allocation17], %s694
          %s696 = sand.u32 %s257, 1
          %s697 = smul.addr %s696, 128
          %s698 = scalar_lea.vmem [#allocation16], %s697
          %s700 = ssub.s32 2048, 2048
          %701 = vsyncadd %s695, %s700
          %s702 = smul.addr %s61, 32
          %s703 = smul.addr %s702, 64
          %s704 = scalar_lea.hbm %s7, %s703
          %s705 = sshll.u32 %s698, 4
          %s706 = int_to_ptr.vmem [resolvable:$true] %s705
          %711 = dma.hbm_to_vmem [thread:$0]  %s704, 2048, %s706, %s695, 64, 64, 4
        $region48: #{vitseg_forward.3} parent=15 // pred_fallthru
          _
        // Predicated region
        $region49: #{vitseg_forward.3} parent=15 // pred_check
          %p712 = pneg %p293
        $region50: #{vitseg_forward.3} parent=15 // pred_check_branch
          %714 = sbr.rel (%p712) target = $region52
        $region51: #{vitseg_forward.3} parent=15 // pred_region
          %s715 = sand.u32 %s53, 1
          %s716 = scalar_lea.sflag [#allocation17], %s715
          %s717 = sand.u32 %s283, 1
          %s718 = scalar_lea.vmem [#allocation18], %s717
          %s720 = ssub.s32 16, 16
          %721 = vsyncadd %s716, %s720
          %s722 = smul.addr %s61, 16
          %s723 = scalar_lea.hbm %s8, %s722
          %s725 = sshll.u32 %s718, 4
          %s726 = int_to_ptr.vmem [resolvable:$true] %s725
          %728 = dma.hbm_to_vmem [thread:$0]  %s723, 16, %s726, %s716
        $region52: #{vitseg_forward.3} parent=15 // pred_fallthru
          _
        // Predicated region
        $region53: #{vitseg_forward.3} parent=15 // pred_check
          %p729 = pneg %p319
        $region54: #{vitseg_forward.3} parent=15 // pred_check_branch
          %731 = sbr.rel (%p729) target = $region56
        $region55: #{vitseg_forward.3} parent=15 // pred_region
          %s732 = sand.u32 %s53, 1
          %s733 = scalar_lea.sflag [#allocation20], %s732
          %s734 = sand.u32 %s309, 1
          %s735 = smul.addr %s734, 128
          %s736 = scalar_lea.vmem [#allocation19], %s735
          %s738 = ssub.s32 2048, 2048
          %739 = vsyncadd %s733, %s738
          %s740 = smul.addr %s61, 32
          %s741 = smul.addr %s740, 64
          %s742 = scalar_lea.hbm %s9, %s741
          %s743 = sshll.u32 %s736, 4
          %s744 = int_to_ptr.vmem [resolvable:$true] %s743
          %749 = dma.hbm_to_vmem [thread:$0]  %s742, 2048, %s744, %s733, 128, 128, 8
        $region56: #{vitseg_forward.3} parent=15 // pred_fallthru
          _
        // Predicated region
        $region57: #{vitseg_forward.3} parent=15 // pred_check
          %p750 = pneg %p345
        $region58: #{vitseg_forward.3} parent=15 // pred_check_branch
          %752 = sbr.rel (%p750) target = $region60
        $region59: #{vitseg_forward.3} parent=15 // pred_region
          %s753 = sand.u32 %s53, 1
          %s754 = scalar_lea.sflag [#allocation20], %s753
          %s755 = sand.u32 %s335, 1
          %s756 = smul.addr %s755, 2
          %s757 = scalar_lea.vmem [#allocation21], %s756
          %s759 = ssub.s32 32, 32
          %760 = vsyncadd %s754, %s759
          %s761 = smul.addr %s61, 2
          %s762 = smul.addr %s761, 16
          %s763 = scalar_lea.hbm %s10, %s762
          %s765 = sshll.u32 %s757, 4
          %s766 = int_to_ptr.vmem [resolvable:$true] %s765
          %768 = dma.hbm_to_vmem [thread:$0]  %s763, 32, %s766, %s754
        $region60: #{vitseg_forward.3} parent=15 // pred_fallthru
          _
        // Predicated region
        $region61: #{vitseg_forward.3} parent=15 // pred_check
          %p769 = pneg %p371
        $region62: #{vitseg_forward.3} parent=15 // pred_check_branch
          %771 = sbr.rel (%p769) target = $region64
        $region63: #{vitseg_forward.3} parent=15 // pred_region
          %s772 = sand.u32 %s53, 1
          %s773 = scalar_lea.sflag [#allocation23], %s772
          %s774 = sand.u32 %s361, 1
          %s775 = smul.addr %s774, 2
          %s776 = scalar_lea.vmem [#allocation22], %s775
          %s778 = ssub.s32 32, 32
          %779 = vsyncadd %s773, %s778
          %s780 = smul.addr %s61, 2
          %s781 = smul.addr %s780, 16
          %s782 = scalar_lea.hbm %s11, %s781
          %s784 = sshll.u32 %s776, 4
          %s785 = int_to_ptr.vmem [resolvable:$true] %s784
          %787 = dma.hbm_to_vmem [thread:$0]  %s782, 32, %s785, %s773
        $region64: #{vitseg_forward.3} parent=15 // pred_fallthru
          _
        // Predicated region
        $region65: #{vitseg_forward.3} parent=15 // pred_check
          %p788 = pneg %p397
        $region66: #{vitseg_forward.3} parent=15 // pred_check_branch
          %790 = sbr.rel (%p788) target = $region68
        $region67: #{vitseg_forward.3} parent=15 // pred_region
          %s791 = sand.u32 %s53, 1
          %s792 = scalar_lea.sflag [#allocation23], %s791
          %s793 = sand.u32 %s387, 1
          %s794 = smul.addr %s793, 2
          %s795 = scalar_lea.vmem [#allocation24], %s794
          %s797 = ssub.s32 32, 32
          %798 = vsyncadd %s792, %s797
          %s799 = smul.addr %s61, 2
          %s800 = smul.addr %s799, 16
          %s801 = scalar_lea.hbm %s12, %s800
          %s803 = sshll.u32 %s795, 4
          %s804 = int_to_ptr.vmem [resolvable:$true] %s803
          %806 = dma.hbm_to_vmem [thread:$0]  %s801, 32, %s804, %s792
        $region68: #{vitseg_forward.3} parent=15 // pred_fallthru
          _
        // Predicated region
        $region69: #{vitseg_forward.3} parent=15 // pred_check
          %p807 = pneg %p423
        $region70: #{vitseg_forward.3} parent=15 // pred_check_branch
          %809 = sbr.rel (%p807) target = $region72
        $region71: #{vitseg_forward.3} parent=15 // pred_region
          %s810 = sand.u32 %s53, 1
          %s811 = scalar_lea.sflag [#allocation26], %s810
          %s812 = sand.u32 %s413, 1
          %s813 = smul.addr %s812, 1024
          %s814 = scalar_lea.vmem [#allocation25], %s813
          %s816 = ssub.s32 16384, 16384
          %817 = vsyncadd %s811, %s816
          %s818 = smul.addr %s61, 256
          %s819 = smul.addr %s818, 64
          %s820 = scalar_lea.hbm %s13, %s819
          %s821 = sshll.u32 %s814, 4
          %s822 = int_to_ptr.vmem [resolvable:$true] %s821
          %827 = dma.hbm_to_vmem [thread:$0]  %s820, 16384, %s822, %s811, 512, 512, 32
        $region72: #{vitseg_forward.3} parent=15 // pred_fallthru
          _
        // Predicated region
        $region73: #{vitseg_forward.3} parent=15 // pred_check
          %p828 = pneg %p449
        $region74: #{vitseg_forward.3} parent=15 // pred_check_branch
          %830 = sbr.rel (%p828) target = $region76
        $region75: #{vitseg_forward.3} parent=15 // pred_region
          %s831 = sand.u32 %s53, 1
          %s832 = scalar_lea.sflag [#allocation26], %s831
          %s833 = sand.u32 %s439, 1
          %s834 = smul.addr %s833, 8
          %s835 = scalar_lea.vmem [#allocation27], %s834
          %s837 = ssub.s32 128, 128
          %838 = vsyncadd %s832, %s837
          %s839 = smul.addr %s61, 8
          %s840 = smul.addr %s839, 16
          %s841 = scalar_lea.hbm %s14, %s840
          %s843 = sshll.u32 %s835, 4
          %s844 = int_to_ptr.vmem [resolvable:$true] %s843
          %846 = dma.hbm_to_vmem [thread:$0]  %s841, 128, %s844, %s832
        $region76: #{vitseg_forward.3} parent=15 // pred_fallthru
          _
        // Predicated region
        $region77: #{vitseg_forward.3} parent=15 // pred_check
          %p847 = pneg %p475
        $region78: #{vitseg_forward.3} parent=15 // pred_check_branch
          %849 = sbr.rel (%p847) target = $region80
        $region79: #{vitseg_forward.3} parent=15 // pred_region
          %s850 = sand.u32 %s53, 1
          %s851 = scalar_lea.sflag [#allocation29], %s850
          %s852 = sand.u32 %s465, 1
          %s853 = smul.addr %s852, 1024
          %s854 = scalar_lea.vmem [#allocation28], %s853
          %s856 = ssub.s32 16384, 16384
          %857 = vsyncadd %s851, %s856
          %s858 = smul.addr %s61, 256
          %s859 = smul.addr %s858, 64
          %s860 = scalar_lea.hbm %s15, %s859
          %s861 = sshll.u32 %s854, 4
          %s862 = int_to_ptr.vmem [resolvable:$true] %s861
          %867 = dma.hbm_to_vmem [thread:$0]  %s860, 16384, %s862, %s851, 128, 128, 8
        $region80: #{vitseg_forward.3} parent=15 // pred_fallthru
          _
        // Predicated region
        $region81: #{vitseg_forward.3} parent=15 // pred_check
          %p868 = pneg %p501
        $region82: #{vitseg_forward.3} parent=15 // pred_check_branch
          %870 = sbr.rel (%p868) target = $region84
        $region83: #{vitseg_forward.3} parent=15 // pred_region
          %s871 = sand.u32 %s53, 1
          %s872 = scalar_lea.sflag [#allocation29], %s871
          %s873 = sand.u32 %s491, 1
          %s874 = smul.addr %s873, 2
          %s875 = scalar_lea.vmem [#allocation30], %s874
          %s877 = ssub.s32 32, 32
          %878 = vsyncadd %s872, %s877
          %s879 = smul.addr %s61, 2
          %s880 = smul.addr %s879, 16
          %s881 = scalar_lea.hbm %s16, %s880
          %s883 = sshll.u32 %s875, 4
          %s884 = int_to_ptr.vmem [resolvable:$true] %s883
          %886 = dma.hbm_to_vmem [thread:$0]  %s881, 32, %s884, %s872
        $region84: #{vitseg_forward.3} parent=15 // pred_fallthru
          _
      $region16: #{vitseg_forward.3} parent=5 // pred_fallthru
        _
      %p887 = scmp.le.s32.totalorder 1, %s53
      %p888 = scmp.lt.s32.totalorder %s53, 5
      %p889 = pnand %p887, %p888
      %p890 = pneg %p889
      // Predicated region
      $region85: #{vitseg_forward.3} parent=5 // pred_check
        _
      $region86: #{vitseg_forward.3} parent=5 // pred_check_branch
        %892 = sbr.rel (%p889) target = $region88
      $region87: #{vitseg_forward.3} parent=5 // pred_region
        %s893 = ssub.s32 %s53, 1
        %s894 = sand.u32 %s78, 1
        %s895 = scalar_lea.sflag [#allocation5], %s894
        %s896 = sand.u32 %s78, 1
        %s897 = smul.addr %s896, 128
        %s898 = scalar_lea.vmem [#allocation4], %s897
        // Predicated region
        $region89: #{vitseg_forward.3} parent=87 // pred_check
          %p899 = pneg %p91
        $region90: #{vitseg_forward.3} parent=87 // pred_check_branch
          %901 = sbr.rel (%p899) target = $region92
        $region91: #{vitseg_forward.3} parent=87 // pred_region
          %902 = dma.done %s895, 2048
        $region92: #{vitseg_forward.3} parent=87 // pred_fallthru
          _
        %s903 = sand.u32 %s58, 1
        %s904 = scalar_lea.sflag [#allocation8], %s903
        %s905 = sand.u32 %s104, 1
        %s906 = smul.addr %s905, 2
        %s907 = scalar_lea.vmem [#allocation7], %s906
        // Predicated region
        $region93: #{vitseg_forward.3} parent=87 // pred_check
          %p908 = pneg %p117
        $region94: #{vitseg_forward.3} parent=87 // pred_check_branch
          %910 = sbr.rel (%p908) target = $region96
        $region95: #{vitseg_forward.3} parent=87 // pred_region
          %911 = dma.done %s904, 32
        $region96: #{vitseg_forward.3} parent=87 // pred_fallthru
          _
        %s912 = sand.u32 %s58, 1
        %s913 = scalar_lea.sflag [#allocation8], %s912
        %s914 = sand.u32 %s130, 1
        %s915 = smul.addr %s914, 2
        %s916 = scalar_lea.vmem [#allocation9], %s915
        // Predicated region
        $region97: #{vitseg_forward.3} parent=87 // pred_check
          %p917 = pneg %p143
        $region98: #{vitseg_forward.3} parent=87 // pred_check_branch
          %919 = sbr.rel (%p917) target = $region100
        $region99: #{vitseg_forward.3} parent=87 // pred_region
          %920 = dma.done %s913, 32
        $region100: #{vitseg_forward.3} parent=87 // pred_fallthru
          _
        %s921 = sand.u32 %s58, 1
        %s922 = scalar_lea.sflag [#allocation11], %s921
        %s923 = sand.u32 %s156, 1
        %s924 = smul.addr %s923, 768
        %s925 = scalar_lea.vmem [#allocation10], %s924
        // Predicated region
        $region101: #{vitseg_forward.3} parent=87 // pred_check
          %p926 = pneg %p169
        $region102: #{vitseg_forward.3} parent=87 // pred_check_branch
          %928 = sbr.rel (%p926) target = $region104
        $region103: #{vitseg_forward.3} parent=87 // pred_region
          %929 = dma.done %s922, 12288
        $region104: #{vitseg_forward.3} parent=87 // pred_fallthru
          _
        %s930 = sand.u32 %s58, 1
        %s931 = scalar_lea.sflag [#allocation11], %s930
        %s932 = sand.u32 %s182, 1
        %s933 = smul.addr %s932, 6
        %s934 = scalar_lea.vmem [#allocation12], %s933
        // Predicated region
        $region105: #{vitseg_forward.3} parent=87 // pred_check
          %p935 = pneg %p195
        $region106: #{vitseg_forward.3} parent=87 // pred_check_branch
          %937 = sbr.rel (%p935) target = $region108
        $region107: #{vitseg_forward.3} parent=87 // pred_region
          %938 = dma.done %s931, 96
        $region108: #{vitseg_forward.3} parent=87 // pred_fallthru
          _
        %s939 = sand.u32 %s58, 1
        %s940 = scalar_lea.sflag [#allocation14], %s939
        %s941 = sand.u32 %s208, 1
        %s942 = smul.addr %s941, 256
        %s943 = scalar_lea.vmem [#allocation13], %s942
        // Predicated region
        $region109: #{vitseg_forward.3} parent=87 // pred_check
          %p944 = pneg %p221
        $region110: #{vitseg_forward.3} parent=87 // pred_check_branch
          %946 = sbr.rel (%p944) target = $region112
        $region111: #{vitseg_forward.3} parent=87 // pred_region
          %947 = dma.done %s940, 4096
        $region112: #{vitseg_forward.3} parent=87 // pred_fallthru
          _
        %s948 = sand.u32 %s58, 1
        %s949 = scalar_lea.sflag [#allocation14], %s948
        %s950 = sand.u32 %s234, 1
        %s951 = smul.addr %s950, 2
        %s952 = scalar_lea.vmem [#allocation15], %s951
        // Predicated region
        $region113: #{vitseg_forward.3} parent=87 // pred_check
          %p953 = pneg %p247
        $region114: #{vitseg_forward.3} parent=87 // pred_check_branch
          %955 = sbr.rel (%p953) target = $region116
        $region115: #{vitseg_forward.3} parent=87 // pred_region
          %956 = dma.done %s949, 32
        $region116: #{vitseg_forward.3} parent=87 // pred_fallthru
          _
        %s957 = sand.u32 %s58, 1
        %s958 = scalar_lea.sflag [#allocation17], %s957
        %s959 = sand.u32 %s260, 1
        %s960 = smul.addr %s959, 128
        %s961 = scalar_lea.vmem [#allocation16], %s960
        // Predicated region
        $region117: #{vitseg_forward.3} parent=87 // pred_check
          %p962 = pneg %p273
        $region118: #{vitseg_forward.3} parent=87 // pred_check_branch
          %964 = sbr.rel (%p962) target = $region120
        $region119: #{vitseg_forward.3} parent=87 // pred_region
          %965 = dma.done %s958, 2048
        $region120: #{vitseg_forward.3} parent=87 // pred_fallthru
          _
        %s966 = sand.u32 %s58, 1
        %s967 = scalar_lea.sflag [#allocation17], %s966
        %s968 = sand.u32 %s286, 1
        %s969 = scalar_lea.vmem [#allocation18], %s968
        // Predicated region
        $region121: #{vitseg_forward.3} parent=87 // pred_check
          %p970 = pneg %p299
        $region122: #{vitseg_forward.3} parent=87 // pred_check_branch
          %972 = sbr.rel (%p970) target = $region124
        $region123: #{vitseg_forward.3} parent=87 // pred_region
          %973 = dma.done %s967, 16
        $region124: #{vitseg_forward.3} parent=87 // pred_fallthru
          _
        %s974 = sand.u32 %s58, 1
        %s975 = scalar_lea.sflag [#allocation20], %s974
        %s976 = sand.u32 %s312, 1
        %s977 = smul.addr %s976, 128
        %s978 = scalar_lea.vmem [#allocation19], %s977
        // Predicated region
        $region125: #{vitseg_forward.3} parent=87 // pred_check
          %p979 = pneg %p325
        $region126: #{vitseg_forward.3} parent=87 // pred_check_branch
          %981 = sbr.rel (%p979) target = $region128
        $region127: #{vitseg_forward.3} parent=87 // pred_region
          %982 = dma.done %s975, 2048
        $region128: #{vitseg_forward.3} parent=87 // pred_fallthru
          _
        %s983 = sand.u32 %s58, 1
        %s984 = scalar_lea.sflag [#allocation20], %s983
        %s985 = sand.u32 %s338, 1
        %s986 = smul.addr %s985, 2
        %s987 = scalar_lea.vmem [#allocation21], %s986
        // Predicated region
        $region129: #{vitseg_forward.3} parent=87 // pred_check
          %p988 = pneg %p351
        $region130: #{vitseg_forward.3} parent=87 // pred_check_branch
          %990 = sbr.rel (%p988) target = $region132
        $region131: #{vitseg_forward.3} parent=87 // pred_region
          %991 = dma.done %s984, 32
        $region132: #{vitseg_forward.3} parent=87 // pred_fallthru
          _
        %s992 = sand.u32 %s58, 1
        %s993 = scalar_lea.sflag [#allocation23], %s992
        %s994 = sand.u32 %s364, 1
        %s995 = smul.addr %s994, 2
        %s996 = scalar_lea.vmem [#allocation22], %s995
        // Predicated region
        $region133: #{vitseg_forward.3} parent=87 // pred_check
          %p997 = pneg %p377
        $region134: #{vitseg_forward.3} parent=87 // pred_check_branch
          %999 = sbr.rel (%p997) target = $region136
        $region135: #{vitseg_forward.3} parent=87 // pred_region
          %1000 = dma.done %s993, 32
        $region136: #{vitseg_forward.3} parent=87 // pred_fallthru
          _
        %s1001 = sand.u32 %s58, 1
        %s1002 = scalar_lea.sflag [#allocation23], %s1001
        %s1003 = sand.u32 %s390, 1
        %s1004 = smul.addr %s1003, 2
        %s1005 = scalar_lea.vmem [#allocation24], %s1004
        // Predicated region
        $region137: #{vitseg_forward.3} parent=87 // pred_check
          %p1006 = pneg %p403
        $region138: #{vitseg_forward.3} parent=87 // pred_check_branch
          %1008 = sbr.rel (%p1006) target = $region140
        $region139: #{vitseg_forward.3} parent=87 // pred_region
          %1009 = dma.done %s1002, 32
        $region140: #{vitseg_forward.3} parent=87 // pred_fallthru
          _
        %s1010 = sand.u32 %s58, 1
        %s1011 = scalar_lea.sflag [#allocation26], %s1010
        %s1012 = sand.u32 %s416, 1
        %s1013 = smul.addr %s1012, 1024
        %s1014 = scalar_lea.vmem [#allocation25], %s1013
        // Predicated region
        $region141: #{vitseg_forward.3} parent=87 // pred_check
          %p1015 = pneg %p429
        $region142: #{vitseg_forward.3} parent=87 // pred_check_branch
          %1017 = sbr.rel (%p1015) target = $region144
        $region143: #{vitseg_forward.3} parent=87 // pred_region
          %1018 = dma.done %s1011, 16384
        $region144: #{vitseg_forward.3} parent=87 // pred_fallthru
          _
        %s1019 = sand.u32 %s58, 1
        %s1020 = scalar_lea.sflag [#allocation26], %s1019
        %s1021 = sand.u32 %s442, 1
        %s1022 = smul.addr %s1021, 8
        %s1023 = scalar_lea.vmem [#allocation27], %s1022
        // Predicated region
        $region145: #{vitseg_forward.3} parent=87 // pred_check
          %p1024 = pneg %p455
        $region146: #{vitseg_forward.3} parent=87 // pred_check_branch
          %1026 = sbr.rel (%p1024) target = $region148
        $region147: #{vitseg_forward.3} parent=87 // pred_region
          %1027 = dma.done %s1020, 128
        $region148: #{vitseg_forward.3} parent=87 // pred_fallthru
          _
        %s1028 = sand.u32 %s58, 1
        %s1029 = scalar_lea.sflag [#allocation29], %s1028
        %s1030 = sand.u32 %s468, 1
        %s1031 = smul.addr %s1030, 1024
        %s1032 = scalar_lea.vmem [#allocation28], %s1031
        // Predicated region
        $region149: #{vitseg_forward.3} parent=87 // pred_check
          %p1033 = pneg %p481
        $region150: #{vitseg_forward.3} parent=87 // pred_check_branch
          %1035 = sbr.rel (%p1033) target = $region152
        $region151: #{vitseg_forward.3} parent=87 // pred_region
          %1036 = dma.done %s1029, 16384
        $region152: #{vitseg_forward.3} parent=87 // pred_fallthru
          _
        %s1037 = sand.u32 %s58, 1
        %s1038 = scalar_lea.sflag [#allocation29], %s1037
        %s1039 = sand.u32 %s494, 1
        %s1040 = smul.addr %s1039, 2
        %s1041 = scalar_lea.vmem [#allocation30], %s1040
        // Predicated region
        $region153: #{vitseg_forward.3} parent=87 // pred_check
          %p1042 = pneg %p507
        $region154: #{vitseg_forward.3} parent=87 // pred_check_branch
          %1044 = sbr.rel (%p1042) target = $region156
        $region155: #{vitseg_forward.3} parent=87 // pred_region
          %1045 = dma.done %s1038, 32
        $region156: #{vitseg_forward.3} parent=87 // pred_fallthru
          _
        %s1046 = sand.u32 %s78, 1
        %s1047 = scalar_lea.sflag [#allocation5], %s1046
        %s1048 = sand.u32 %s78, 1
        %s1049 = smul.addr %s1048, 128
        %s1050 = scalar_lea.vmem [#allocation4], %s1049
        %p1051 = pneg %p91
        %p1052 = pneg %p88
        %s1053 = sand.u32 %s58, 1
        %s1054 = scalar_lea.sflag [#allocation8], %s1053
        %s1055 = sand.u32 %s104, 1
        %s1056 = smul.addr %s1055, 2
        %s1057 = scalar_lea.vmem [#allocation7], %s1056
        %p1058 = pneg %p117
        %p1059 = pneg %p114
        %s1060 = sand.u32 %s58, 1
        %s1061 = scalar_lea.sflag [#allocation8], %s1060
        %s1062 = sand.u32 %s130, 1
        %s1063 = smul.addr %s1062, 2
        %s1064 = scalar_lea.vmem [#allocation9], %s1063
        %p1065 = pneg %p143
        %p1066 = pneg %p140
        %s1067 = sand.u32 %s58, 1
        %s1068 = scalar_lea.sflag [#allocation11], %s1067
        %s1069 = sand.u32 %s156, 1
        %s1070 = smul.addr %s1069, 768
        %s1071 = scalar_lea.vmem [#allocation10], %s1070
        %p1072 = pneg %p169
        %p1073 = pneg %p166
        %s1074 = sand.u32 %s58, 1
        %s1075 = scalar_lea.sflag [#allocation11], %s1074
        %s1076 = sand.u32 %s182, 1
        %s1077 = smul.addr %s1076, 6
        %s1078 = scalar_lea.vmem [#allocation12], %s1077
        %p1079 = pneg %p195
        %p1080 = pneg %p192
        %s1081 = sand.u32 %s58, 1
        %s1082 = scalar_lea.sflag [#allocation14], %s1081
        %s1083 = sand.u32 %s208, 1
        %s1084 = smul.addr %s1083, 256
        %s1085 = scalar_lea.vmem [#allocation13], %s1084
        %p1086 = pneg %p221
        %p1087 = pneg %p218
        %s1088 = sand.u32 %s58, 1
        %s1089 = scalar_lea.sflag [#allocation14], %s1088
        %s1090 = sand.u32 %s234, 1
        %s1091 = smul.addr %s1090, 2
        %s1092 = scalar_lea.vmem [#allocation15], %s1091
        %p1093 = pneg %p247
        %p1094 = pneg %p244
        %s1095 = sand.u32 %s58, 1
        %s1096 = scalar_lea.sflag [#allocation17], %s1095
        %s1097 = sand.u32 %s260, 1
        %s1098 = smul.addr %s1097, 128
        %s1099 = scalar_lea.vmem [#allocation16], %s1098
        %p1100 = pneg %p273
        %p1101 = pneg %p270
        %s1102 = sand.u32 %s58, 1
        %s1103 = scalar_lea.sflag [#allocation17], %s1102
        %s1104 = sand.u32 %s286, 1
        %s1105 = scalar_lea.vmem [#allocation18], %s1104
        %p1106 = pneg %p299
        %p1107 = pneg %p296
        %s1108 = sand.u32 %s58, 1
        %s1109 = scalar_lea.sflag [#allocation20], %s1108
        %s1110 = sand.u32 %s312, 1
        %s1111 = smul.addr %s1110, 128
        %s1112 = scalar_lea.vmem [#allocation19], %s1111
        %p1113 = pneg %p325
        %p1114 = pneg %p322
        %s1115 = sand.u32 %s58, 1
        %s1116 = scalar_lea.sflag [#allocation20], %s1115
        %s1117 = sand.u32 %s338, 1
        %s1118 = smul.addr %s1117, 2
        %s1119 = scalar_lea.vmem [#allocation21], %s1118
        %p1120 = pneg %p351
        %p1121 = pneg %p348
        %s1122 = sand.u32 %s58, 1
        %s1123 = scalar_lea.sflag [#allocation23], %s1122
        %s1124 = sand.u32 %s364, 1
        %s1125 = smul.addr %s1124, 2
        %s1126 = scalar_lea.vmem [#allocation22], %s1125
        %p1127 = pneg %p377
        %p1128 = pneg %p374
        %s1129 = sand.u32 %s58, 1
        %s1130 = scalar_lea.sflag [#allocation23], %s1129
        %s1131 = sand.u32 %s390, 1
        %s1132 = smul.addr %s1131, 2
        %s1133 = scalar_lea.vmem [#allocation24], %s1132
        %p1134 = pneg %p403
        %p1135 = pneg %p400
        %s1136 = sand.u32 %s58, 1
        %s1137 = scalar_lea.sflag [#allocation26], %s1136
        %s1138 = sand.u32 %s416, 1
        %s1139 = smul.addr %s1138, 1024
        %s1140 = scalar_lea.vmem [#allocation25], %s1139
        %p1141 = pneg %p429
        %p1142 = pneg %p426
        %s1143 = sand.u32 %s58, 1
        %s1144 = scalar_lea.sflag [#allocation26], %s1143
        %s1145 = sand.u32 %s442, 1
        %s1146 = smul.addr %s1145, 8
        %s1147 = scalar_lea.vmem [#allocation27], %s1146
        %p1148 = pneg %p455
        %p1149 = pneg %p452
        %s1150 = sand.u32 %s58, 1
        %s1151 = scalar_lea.sflag [#allocation29], %s1150
        %s1152 = sand.u32 %s468, 1
        %s1153 = smul.addr %s1152, 1024
        %s1154 = scalar_lea.vmem [#allocation28], %s1153
        %p1155 = pneg %p481
        %p1156 = pneg %p478
        %s1157 = sand.u32 %s58, 1
        %s1158 = scalar_lea.sflag [#allocation29], %s1157
        %s1159 = sand.u32 %s494, 1
        %s1160 = smul.addr %s1159, 2
        %s1161 = scalar_lea.vmem [#allocation30], %s1160
        %p1162 = pneg %p507
        %p1163 = pneg %p504
        %p1164 = pneg %p533
        %p1165 = pneg %p530
        %s1166 = sand.u32 %s520, 1
        %s1167 = scalar_lea.sflag [#allocation6], %s1166
        %s1168 = sand.u32 %s520, 1
        %s1169 = smul.addr %s1168, 2
        %s1170 = scalar_lea.vmem [#allocation31], %s1169
        %p1172 = scmp.eq.s32.totalorder %s63, 0
        // Predicated region
        $region157: #{vitseg_forward.3} parent=87 // pred_check
          %p1173 = pneg %p1172
        $region158: #{vitseg_forward.3} parent=87 // pred_check_branch
          %1175 = sbr.rel (%p1173) target = $region160
        $region159: #{vitseg_forward.3} parent=87 // pred_region
          %v1176 = vld [vmem:[%s898] sm:$0xff]
          %v1177 = vld [vmem:[%s898 + $0x8] sm:$0xff]
          %v1178 = vld [vmem:[%s898 + $0x10] sm:$0xff]
          %v1179 = vld [vmem:[%s898 + $0x18] sm:$0xff]
          %v1180 = vld [vmem:[%s898 + $0x20] sm:$0xff]
          %v1181 = vld [vmem:[%s898 + $0x28] sm:$0xff]
          %v1182 = vld [vmem:[%s898 + $0x30] sm:$0xff]
          %v1183 = vld [vmem:[%s898 + $0x38] sm:$0xff]
          %v1184 = vld [vmem:[%s898 + $0x40] sm:$0xff]
          %v1185 = vld [vmem:[%s898 + $0x48] sm:$0xff]
          %v1186 = vld [vmem:[%s898 + $0x50] sm:$0xff]
          %v1187 = vld [vmem:[%s898 + $0x58] sm:$0xff]
          %v1188 = vld [vmem:[%s898 + $0x60] sm:$0xff]
          %v1189 = vld [vmem:[%s898 + $0x68] sm:$0xff]
          %v1190 = vld [vmem:[%s898 + $0x70] sm:$0xff]
          %v1191 = vld [vmem:[%s898 + $0x78] sm:$0xff]
          %v1192 = vunpack.c.l.bf16 %v1176
          %v1193 = vunpack.c.h.bf16 %v1176
          %v1194 = vunpack.c.l.bf16 %v1177
          %v1195 = vunpack.c.h.bf16 %v1177
          %v1196 = vunpack.c.l.bf16 %v1178
          %v1197 = vunpack.c.h.bf16 %v1178
          %v1198 = vunpack.c.l.bf16 %v1179
          %v1199 = vunpack.c.h.bf16 %v1179
          %v1200 = vunpack.c.l.bf16 %v1180
          %v1201 = vunpack.c.h.bf16 %v1180
          %v1202 = vunpack.c.l.bf16 %v1181
          %v1203 = vunpack.c.h.bf16 %v1181
          %v1204 = vunpack.c.l.bf16 %v1182
          %v1205 = vunpack.c.h.bf16 %v1182
          %v1206 = vunpack.c.l.bf16 %v1183
          %v1207 = vunpack.c.h.bf16 %v1183
          %v1208 = vunpack.c.l.bf16 %v1184
          %v1209 = vunpack.c.h.bf16 %v1184
          %v1210 = vunpack.c.l.bf16 %v1185
          %v1211 = vunpack.c.h.bf16 %v1185
          %v1212 = vunpack.c.l.bf16 %v1186
          %v1213 = vunpack.c.h.bf16 %v1186
          %v1214 = vunpack.c.l.bf16 %v1187
          %v1215 = vunpack.c.h.bf16 %v1187
          %v1216 = vunpack.c.l.bf16 %v1188
          %v1217 = vunpack.c.h.bf16 %v1188
          %v1218 = vunpack.c.l.bf16 %v1189
          %v1219 = vunpack.c.h.bf16 %v1189
          %v1220 = vunpack.c.l.bf16 %v1190
          %v1221 = vunpack.c.h.bf16 %v1190
          %v1222 = vunpack.c.l.bf16 %v1191
          %v1223 = vunpack.c.h.bf16 %v1191
          %1224 = vst [vmem:[#allocation2] sm:$0xff] %v1192
          %1225 = vst [vmem:[#allocation2 + $0x8] sm:$0xff] %v1193
          %1226 = vst [vmem:[#allocation2 + $0x10] sm:$0xff] %v1194
          %1227 = vst [vmem:[#allocation2 + $0x18] sm:$0xff] %v1195
          %1228 = vst [vmem:[#allocation2 + $0x20] sm:$0xff] %v1196
          %1229 = vst [vmem:[#allocation2 + $0x28] sm:$0xff] %v1197
          %1230 = vst [vmem:[#allocation2 + $0x30] sm:$0xff] %v1198
          %1231 = vst [vmem:[#allocation2 + $0x38] sm:$0xff] %v1199
          %1232 = vst [vmem:[#allocation2 + $0x40] sm:$0xff] %v1200
          %1233 = vst [vmem:[#allocation2 + $0x48] sm:$0xff] %v1201
          %1234 = vst [vmem:[#allocation2 + $0x50] sm:$0xff] %v1202
          %1235 = vst [vmem:[#allocation2 + $0x58] sm:$0xff] %v1203
          %1236 = vst [vmem:[#allocation2 + $0x60] sm:$0xff] %v1204
          %1237 = vst [vmem:[#allocation2 + $0x68] sm:$0xff] %v1205
          %1238 = vst [vmem:[#allocation2 + $0x70] sm:$0xff] %v1206
          %1239 = vst [vmem:[#allocation2 + $0x78] sm:$0xff] %v1207
          %1240 = vst [vmem:[#allocation2 + $0x80] sm:$0xff] %v1208
          %1241 = vst [vmem:[#allocation2 + $0x88] sm:$0xff] %v1209
          %1242 = vst [vmem:[#allocation2 + $0x90] sm:$0xff] %v1210
          %1243 = vst [vmem:[#allocation2 + $0x98] sm:$0xff] %v1211
          %1244 = vst [vmem:[#allocation2 + $0xa0] sm:$0xff] %v1212
          %1245 = vst [vmem:[#allocation2 + $0xa8] sm:$0xff] %v1213
          %1246 = vst [vmem:[#allocation2 + $0xb0] sm:$0xff] %v1214
          %1247 = vst [vmem:[#allocation2 + $0xb8] sm:$0xff] %v1215
          %1248 = vst [vmem:[#allocation2 + $0xc0] sm:$0xff] %v1216
          %1249 = vst [vmem:[#allocation2 + $0xc8] sm:$0xff] %v1217
          %1250 = vst [vmem:[#allocation2 + $0xd0] sm:$0xff] %v1218
          %1251 = vst [vmem:[#allocation2 + $0xd8] sm:$0xff] %v1219
          %1252 = vst [vmem:[#allocation2 + $0xe0] sm:$0xff] %v1220
          %1253 = vst [vmem:[#allocation2 + $0xe8] sm:$0xff] %v1221
          %1254 = vst [vmem:[#allocation2 + $0xf0] sm:$0xff] %v1222
          %1255 = vst [vmem:[#allocation2 + $0xf8] sm:$0xff] %v1223
        $region160: #{vitseg_forward.3} parent=87 // pred_fallthru
          _
        %v1256 = vld [vmem:[#allocation2] sm:$0xff]
        %v1257 = vld [vmem:[#allocation2 + $0x8] sm:$0xff]
        %v1258 = vld [vmem:[#allocation2 + $0x10] sm:$0xff]
        %v1259 = vld [vmem:[#allocation2 + $0x18] sm:$0xff]
        %v1260 = vld [vmem:[#allocation2 + $0x20] sm:$0xff]
        %v1261 = vld [vmem:[#allocation2 + $0x28] sm:$0xff]
        %v1262 = vld [vmem:[#allocation2 + $0x30] sm:$0xff]
        %v1263 = vld [vmem:[#allocation2 + $0x38] sm:$0xff]
        %v1264 = vld [vmem:[#allocation2 + $0x40] sm:$0xff]
        %v1265 = vld [vmem:[#allocation2 + $0x48] sm:$0xff]
        %v1266 = vld [vmem:[#allocation2 + $0x50] sm:$0xff]
        %v1267 = vld [vmem:[#allocation2 + $0x58] sm:$0xff]
        %v1268 = vld [vmem:[#allocation2 + $0x60] sm:$0xff]
        %v1269 = vld [vmem:[#allocation2 + $0x68] sm:$0xff]
        %v1270 = vld [vmem:[#allocation2 + $0x70] sm:$0xff]
        %v1271 = vld [vmem:[#allocation2 + $0x78] sm:$0xff]
        %v1272 = vld [vmem:[#allocation2 + $0x80] sm:$0xff]
        %v1273 = vld [vmem:[#allocation2 + $0x88] sm:$0xff]
        %v1274 = vld [vmem:[#allocation2 + $0x90] sm:$0xff]
        %v1275 = vld [vmem:[#allocation2 + $0x98] sm:$0xff]
        %v1276 = vld [vmem:[#allocation2 + $0xa0] sm:$0xff]
        %v1277 = vld [vmem:[#allocation2 + $0xa8] sm:$0xff]
        %v1278 = vld [vmem:[#allocation2 + $0xb0] sm:$0xff]
        %v1279 = vld [vmem:[#allocation2 + $0xb8] sm:$0xff]
        %v1280 = vld [vmem:[#allocation2 + $0xc0] sm:$0xff]
        %v1281 = vld [vmem:[#allocation2 + $0xc8] sm:$0xff]
        %v1282 = vld [vmem:[#allocation2 + $0xd0] sm:$0xff]
        %v1283 = vld [vmem:[#allocation2 + $0xd8] sm:$0xff]
        %v1284 = vld [vmem:[#allocation2 + $0xe0] sm:$0xff]
        %v1285 = vld [vmem:[#allocation2 + $0xe8] sm:$0xff]
        %v1286 = vld [vmem:[#allocation2 + $0xf0] sm:$0xff]
        %v1287 = vld [vmem:[#allocation2 + $0xf8] sm:$0xff]
        %v1288 = vadd.f32 %v1256, %v1257
        %1289 = vadd.xlane.f32.xlu0 %v1288
        %v1290 = vpop.xlane.xlu0 %1289
        %v1291 = vadd.f32 %v1258, %v1259
        %1292 = vadd.xlane.f32.xlu0 %v1291
        %v1293 = vpop.xlane.xlu0 %1292
        %v1294 = vadd.f32 %v1260, %v1261
        %1295 = vadd.xlane.f32.xlu0 %v1294
        %v1296 = vpop.xlane.xlu0 %1295
        %v1297 = vadd.f32 %v1262, %v1263
        %1298 = vadd.xlane.f32.xlu0 %v1297
        %v1299 = vpop.xlane.xlu0 %1298
        %v1300 = vadd.f32 %v1264, %v1265
        %1301 = vadd.xlane.f32.xlu0 %v1300
        %v1302 = vpop.xlane.xlu0 %1301
        %v1303 = vadd.f32 %v1266, %v1267
        %1304 = vadd.xlane.f32.xlu0 %v1303
        %v1305 = vpop.xlane.xlu0 %1304
        %v1306 = vadd.f32 %v1268, %v1269
        %1307 = vadd.xlane.f32.xlu0 %v1306
        %v1308 = vpop.xlane.xlu0 %1307
        %v1309 = vadd.f32 %v1270, %v1271
        %1310 = vadd.xlane.f32.xlu0 %v1309
        %v1311 = vpop.xlane.xlu0 %1310
        %v1312 = vadd.f32 %v1272, %v1273
        %1313 = vadd.xlane.f32.xlu0 %v1312
        %v1314 = vpop.xlane.xlu0 %1313
        %v1315 = vadd.f32 %v1274, %v1275
        %1316 = vadd.xlane.f32.xlu0 %v1315
        %v1317 = vpop.xlane.xlu0 %1316
        %v1318 = vadd.f32 %v1276, %v1277
        %1319 = vadd.xlane.f32.xlu0 %v1318
        %v1320 = vpop.xlane.xlu0 %1319
        %v1321 = vadd.f32 %v1278, %v1279
        %1322 = vadd.xlane.f32.xlu0 %v1321
        %v1323 = vpop.xlane.xlu0 %1322
        %v1324 = vadd.f32 %v1280, %v1281
        %1325 = vadd.xlane.f32.xlu0 %v1324
        %v1326 = vpop.xlane.xlu0 %1325
        %v1327 = vadd.f32 %v1282, %v1283
        %1328 = vadd.xlane.f32.xlu0 %v1327
        %v1329 = vpop.xlane.xlu0 %1328
        %v1330 = vadd.f32 %v1284, %v1285
        %1331 = vadd.xlane.f32.xlu0 %v1330
        %v1332 = vpop.xlane.xlu0 %1331
        %v1333 = vadd.f32 %v1286, %v1287
        %1334 = vadd.xlane.f32.xlu0 %v1333
        %v1335 = vpop.xlane.xlu0 %1334
        %v1336 = vrcp.pop 256.0
        %v1337 = vmul.f32 %v1290, %v1336
        %v1338 = vmul.f32 %v1293, %v1336
        %v1339 = vmul.f32 %v1296, %v1336
        %v1340 = vmul.f32 %v1299, %v1336
        %v1341 = vmul.f32 %v1302, %v1336
        %v1342 = vmul.f32 %v1305, %v1336
        %v1343 = vmul.f32 %v1308, %v1336
        %v1344 = vmul.f32 %v1311, %v1336
        %v1345 = vmul.f32 %v1314, %v1336
        %v1346 = vmul.f32 %v1317, %v1336
        %v1347 = vmul.f32 %v1320, %v1336
        %v1348 = vmul.f32 %v1323, %v1336
        %v1349 = vmul.f32 %v1326, %v1336
        %v1350 = vmul.f32 %v1329, %v1336
        %v1351 = vmul.f32 %v1332, %v1336
        %v1352 = vmul.f32 %v1335, %v1336
        %v1353 = vsub.f32 %v1256, %v1337
        %v1354 = vsub.f32 %v1257, %v1337
        %v1355 = vsub.f32 %v1258, %v1338
        %v1356 = vsub.f32 %v1259, %v1338
        %v1357 = vsub.f32 %v1260, %v1339
        %v1358 = vsub.f32 %v1261, %v1339
        %v1359 = vsub.f32 %v1262, %v1340
        %v1360 = vsub.f32 %v1263, %v1340
        %v1361 = vsub.f32 %v1264, %v1341
        %v1362 = vsub.f32 %v1265, %v1341
        %v1363 = vsub.f32 %v1266, %v1342
        %v1364 = vsub.f32 %v1267, %v1342
        %v1365 = vsub.f32 %v1268, %v1343
        %v1366 = vsub.f32 %v1269, %v1343
        %v1367 = vsub.f32 %v1270, %v1344
        %v1368 = vsub.f32 %v1271, %v1344
        %v1369 = vsub.f32 %v1272, %v1345
        %v1370 = vsub.f32 %v1273, %v1345
        %v1371 = vsub.f32 %v1274, %v1346
        %v1372 = vsub.f32 %v1275, %v1346
        %v1373 = vsub.f32 %v1276, %v1347
        %v1374 = vsub.f32 %v1277, %v1347
        %v1375 = vsub.f32 %v1278, %v1348
        %v1376 = vsub.f32 %v1279, %v1348
        %v1377 = vsub.f32 %v1280, %v1349
        %v1378 = vsub.f32 %v1281, %v1349
        %v1379 = vsub.f32 %v1282, %v1350
        %v1380 = vsub.f32 %v1283, %v1350
        %v1381 = vsub.f32 %v1284, %v1351
        %v1382 = vsub.f32 %v1285, %v1351
        %v1383 = vsub.f32 %v1286, %v1352
        %v1384 = vsub.f32 %v1287, %v1352
        %v1385 = vmul.f32 %v1353, %v1353
        %v1386 = vmul.f32 %v1354, %v1354
        %v1387 = vmul.f32 %v1355, %v1355
        %v1388 = vmul.f32 %v1356, %v1356
        %v1389 = vmul.f32 %v1357, %v1357
        %v1390 = vmul.f32 %v1358, %v1358
        %v1391 = vmul.f32 %v1359, %v1359
        %v1392 = vmul.f32 %v1360, %v1360
        %v1393 = vmul.f32 %v1361, %v1361
        %v1394 = vmul.f32 %v1362, %v1362
        %v1395 = vmul.f32 %v1363, %v1363
        %v1396 = vmul.f32 %v1364, %v1364
        %v1397 = vmul.f32 %v1365, %v1365
        %v1398 = vmul.f32 %v1366, %v1366
        %v1399 = vmul.f32 %v1367, %v1367
        %v1400 = vmul.f32 %v1368, %v1368
        %v1401 = vmul.f32 %v1369, %v1369
        %v1402 = vmul.f32 %v1370, %v1370
        %v1403 = vmul.f32 %v1371, %v1371
        %v1404 = vmul.f32 %v1372, %v1372
        %v1405 = vmul.f32 %v1373, %v1373
        %v1406 = vmul.f32 %v1374, %v1374
        %v1407 = vmul.f32 %v1375, %v1375
        %v1408 = vmul.f32 %v1376, %v1376
        %v1409 = vmul.f32 %v1377, %v1377
        %v1410 = vmul.f32 %v1378, %v1378
        %v1411 = vmul.f32 %v1379, %v1379
        %v1412 = vmul.f32 %v1380, %v1380
        %v1413 = vmul.f32 %v1381, %v1381
        %v1414 = vmul.f32 %v1382, %v1382
        %v1415 = vmul.f32 %v1383, %v1383
        %v1416 = vmul.f32 %v1384, %v1384
        %v1417 = vadd.f32 %v1385, %v1386
        %1418 = vadd.xlane.f32.xlu0 %v1417
        %v1419 = vpop.xlane.xlu0 %1418
        %v1420 = vadd.f32 %v1387, %v1388
        %1421 = vadd.xlane.f32.xlu0 %v1420
        %v1422 = vpop.xlane.xlu0 %1421
        %v1423 = vadd.f32 %v1389, %v1390
        %1424 = vadd.xlane.f32.xlu0 %v1423
        %v1425 = vpop.xlane.xlu0 %1424
        %v1426 = vadd.f32 %v1391, %v1392
        %1427 = vadd.xlane.f32.xlu0 %v1426
        %v1428 = vpop.xlane.xlu0 %1427
        %v1429 = vadd.f32 %v1393, %v1394
        %1430 = vadd.xlane.f32.xlu0 %v1429
        %v1431 = vpop.xlane.xlu0 %1430
        %v1432 = vadd.f32 %v1395, %v1396
        %1433 = vadd.xlane.f32.xlu0 %v1432
        %v1434 = vpop.xlane.xlu0 %1433
        %v1435 = vadd.f32 %v1397, %v1398
        %1436 = vadd.xlane.f32.xlu0 %v1435
        %v1437 = vpop.xlane.xlu0 %1436
        %v1438 = vadd.f32 %v1399, %v1400
        %1439 = vadd.xlane.f32.xlu0 %v1438
        %v1440 = vpop.xlane.xlu0 %1439
        %v1441 = vadd.f32 %v1401, %v1402
        %1442 = vadd.xlane.f32.xlu0 %v1441
        %v1443 = vpop.xlane.xlu0 %1442
        %v1444 = vadd.f32 %v1403, %v1404
        %1445 = vadd.xlane.f32.xlu0 %v1444
        %v1446 = vpop.xlane.xlu0 %1445
        %v1447 = vadd.f32 %v1405, %v1406
        %1448 = vadd.xlane.f32.xlu0 %v1447
        %v1449 = vpop.xlane.xlu0 %1448
        %v1450 = vadd.f32 %v1407, %v1408
        %1451 = vadd.xlane.f32.xlu0 %v1450
        %v1452 = vpop.xlane.xlu0 %1451
        %v1453 = vadd.f32 %v1409, %v1410
        %1454 = vadd.xlane.f32.xlu0 %v1453
        %v1455 = vpop.xlane.xlu0 %1454
        %v1456 = vadd.f32 %v1411, %v1412
        %1457 = vadd.xlane.f32.xlu0 %v1456
        %v1458 = vpop.xlane.xlu0 %1457
        %v1459 = vadd.f32 %v1413, %v1414
        %1460 = vadd.xlane.f32.xlu0 %v1459
        %v1461 = vpop.xlane.xlu0 %1460
        %v1462 = vadd.f32 %v1415, %v1416
        %1463 = vadd.xlane.f32.xlu0 %v1462
        %v1464 = vpop.xlane.xlu0 %1463
        %v1465 = vmul.f32 %v1419, %v1336
        %v1466 = vmul.f32 %v1422, %v1336
        %v1467 = vmul.f32 %v1425, %v1336
        %v1468 = vmul.f32 %v1428, %v1336
        %v1469 = vmul.f32 %v1431, %v1336
        %v1470 = vmul.f32 %v1434, %v1336
        %v1471 = vmul.f32 %v1437, %v1336
        %v1472 = vmul.f32 %v1440, %v1336
        %v1473 = vmul.f32 %v1443, %v1336
        %v1474 = vmul.f32 %v1446, %v1336
        %v1475 = vmul.f32 %v1449, %v1336
        %v1476 = vmul.f32 %v1452, %v1336
        %v1477 = vmul.f32 %v1455, %v1336
        %v1478 = vmul.f32 %v1458, %v1336
        %v1479 = vmul.f32 %v1461, %v1336
        %v1480 = vmul.f32 %v1464, %v1336
        %v1481 = vadd.f32 %v1465, 1e-06
        %v1482 = vadd.f32 %v1466, 1e-06
        %v1483 = vadd.f32 %v1467, 1e-06
        %v1484 = vadd.f32 %v1468, 1e-06
        %v1485 = vadd.f32 %v1469, 1e-06
        %v1486 = vadd.f32 %v1470, 1e-06
        %v1487 = vadd.f32 %v1471, 1e-06
        %v1488 = vadd.f32 %v1472, 1e-06
        %v1489 = vadd.f32 %v1473, 1e-06
        %v1490 = vadd.f32 %v1474, 1e-06
        %v1491 = vadd.f32 %v1475, 1e-06
        %v1492 = vadd.f32 %v1476, 1e-06
        %v1493 = vadd.f32 %v1477, 1e-06
        %v1494 = vadd.f32 %v1478, 1e-06
        %v1495 = vadd.f32 %v1479, 1e-06
        %v1496 = vadd.f32 %v1480, 1e-06
        %v1497 = vrsqrt.pop %v1481
        %v1498 = vrsqrt.pop %v1482
        %v1499 = vrsqrt.pop %v1483
        %v1500 = vrsqrt.pop %v1484
        %v1501 = vrsqrt.pop %v1485
        %v1502 = vrsqrt.pop %v1486
        %v1503 = vrsqrt.pop %v1487
        %v1504 = vrsqrt.pop %v1488
        %v1505 = vrsqrt.pop %v1489
        %v1506 = vrsqrt.pop %v1490
        %v1507 = vrsqrt.pop %v1491
        %v1508 = vrsqrt.pop %v1492
        %v1509 = vrsqrt.pop %v1493
        %v1510 = vrsqrt.pop %v1494
        %v1511 = vrsqrt.pop %v1495
        %v1512 = vrsqrt.pop %v1496
        %v1513 = vmul.f32 %v1353, %v1497
        %v1514 = vmul.f32 %v1354, %v1497
        %v1515 = vmul.f32 %v1355, %v1498
        %v1516 = vmul.f32 %v1356, %v1498
        %v1517 = vmul.f32 %v1357, %v1499
        %v1518 = vmul.f32 %v1358, %v1499
        %v1519 = vmul.f32 %v1359, %v1500
        %v1520 = vmul.f32 %v1360, %v1500
        %v1521 = vmul.f32 %v1361, %v1501
        %v1522 = vmul.f32 %v1362, %v1501
        %v1523 = vmul.f32 %v1363, %v1502
        %v1524 = vmul.f32 %v1364, %v1502
        %v1525 = vmul.f32 %v1365, %v1503
        %v1526 = vmul.f32 %v1366, %v1503
        %v1527 = vmul.f32 %v1367, %v1504
        %v1528 = vmul.f32 %v1368, %v1504
        %v1529 = vmul.f32 %v1369, %v1505
        %v1530 = vmul.f32 %v1370, %v1505
        %v1531 = vmul.f32 %v1371, %v1506
        %v1532 = vmul.f32 %v1372, %v1506
        %v1533 = vmul.f32 %v1373, %v1507
        %v1534 = vmul.f32 %v1374, %v1507
        %v1535 = vmul.f32 %v1375, %v1508
        %v1536 = vmul.f32 %v1376, %v1508
        %v1537 = vmul.f32 %v1377, %v1509
        %v1538 = vmul.f32 %v1378, %v1509
        %v1539 = vmul.f32 %v1379, %v1510
        %v1540 = vmul.f32 %v1380, %v1510
        %v1541 = vmul.f32 %v1381, %v1511
        %v1542 = vmul.f32 %v1382, %v1511
        %v1543 = vmul.f32 %v1383, %v1512
        %v1544 = vmul.f32 %v1384, %v1512
        %v1545 = vld [vmem:[%s907] sm:$0x3]
        %v1547 = vlaneseq
        %v1548 = vshrl.u32 %v1547, 7
        %v1549 = vsub.s32 0, %v1548
        %v1550 = vrot.slane %v1545, %v1549
        %v1551 = vlaneseq
        %v1552 = vshrl.u32 %v1551, 7
        %v1553 = vsub.s32 1, %v1552
        %v1554 = vrot.slane %v1545, %v1553
        %v1557 = vmul.f32 %v1513, %v1550
        %v1558 = vmul.f32 %v1514, %v1554
        %v1559 = vmul.f32 %v1515, %v1550
        %v1560 = vmul.f32 %v1516, %v1554
        %v1561 = vmul.f32 %v1517, %v1550
        %v1562 = vmul.f32 %v1518, %v1554
        %v1563 = vmul.f32 %v1519, %v1550
        %v1564 = vmul.f32 %v1520, %v1554
        %v1565 = vmul.f32 %v1521, %v1550
        %v1566 = vmul.f32 %v1522, %v1554
        %v1567 = vmul.f32 %v1523, %v1550
        %v1568 = vmul.f32 %v1524, %v1554
        %v1569 = vmul.f32 %v1525, %v1550
        %v1570 = vmul.f32 %v1526, %v1554
        %v1571 = vmul.f32 %v1527, %v1550
        %v1572 = vmul.f32 %v1528, %v1554
        %v1573 = vmul.f32 %v1529, %v1550
        %v1574 = vmul.f32 %v1530, %v1554
        %v1575 = vmul.f32 %v1531, %v1550
        %v1576 = vmul.f32 %v1532, %v1554
        %v1577 = vmul.f32 %v1533, %v1550
        %v1578 = vmul.f32 %v1534, %v1554
        %v1579 = vmul.f32 %v1535, %v1550
        %v1580 = vmul.f32 %v1536, %v1554
        %v1581 = vmul.f32 %v1537, %v1550
        %v1582 = vmul.f32 %v1538, %v1554
        %v1583 = vmul.f32 %v1539, %v1550
        %v1584 = vmul.f32 %v1540, %v1554
        %v1585 = vmul.f32 %v1541, %v1550
        %v1586 = vmul.f32 %v1542, %v1554
        %v1587 = vmul.f32 %v1543, %v1550
        %v1588 = vmul.f32 %v1544, %v1554
        %v1589 = vld [vmem:[%s916] sm:$0x3]
        %v1591 = vlaneseq
        %v1592 = vshrl.u32 %v1591, 7
        %v1593 = vsub.s32 0, %v1592
        %v1594 = vrot.slane %v1589, %v1593
        %v1595 = vlaneseq
        %v1596 = vshrl.u32 %v1595, 7
        %v1597 = vsub.s32 1, %v1596
        %v1598 = vrot.slane %v1589, %v1597
        %v1601 = vadd.f32 %v1557, %v1594
        %v1602 = vadd.f32 %v1558, %v1598
        %v1603 = vadd.f32 %v1559, %v1594
        %v1604 = vadd.f32 %v1560, %v1598
        %v1605 = vadd.f32 %v1561, %v1594
        %v1606 = vadd.f32 %v1562, %v1598
        %v1607 = vadd.f32 %v1563, %v1594
        %v1608 = vadd.f32 %v1564, %v1598
        %v1609 = vadd.f32 %v1565, %v1594
        %v1610 = vadd.f32 %v1566, %v1598
        %v1611 = vadd.f32 %v1567, %v1594
        %v1612 = vadd.f32 %v1568, %v1598
        %v1613 = vadd.f32 %v1569, %v1594
        %v1614 = vadd.f32 %v1570, %v1598
        %v1615 = vadd.f32 %v1571, %v1594
        %v1616 = vadd.f32 %v1572, %v1598
        %v1617 = vadd.f32 %v1573, %v1594
        %v1618 = vadd.f32 %v1574, %v1598
        %v1619 = vadd.f32 %v1575, %v1594
        %v1620 = vadd.f32 %v1576, %v1598
        %v1621 = vadd.f32 %v1577, %v1594
        %v1622 = vadd.f32 %v1578, %v1598
        %v1623 = vadd.f32 %v1579, %v1594
        %v1624 = vadd.f32 %v1580, %v1598
        %v1625 = vadd.f32 %v1581, %v1594
        %v1626 = vadd.f32 %v1582, %v1598
        %v1627 = vadd.f32 %v1583, %v1594
        %v1628 = vadd.f32 %v1584, %v1598
        %v1629 = vadd.f32 %v1585, %v1594
        %v1630 = vadd.f32 %v1586, %v1598
        %v1631 = vadd.f32 %v1587, %v1594
        %v1632 = vadd.f32 %v1588, %v1598
        %v1633 = vpack.c.bf16 %v1603, %v1601
        %v1634 = vpack.c.bf16 %v1604, %v1602
        %v1635 = vpack.c.bf16 %v1607, %v1605
        %v1636 = vpack.c.bf16 %v1608, %v1606
        %v1637 = vpack.c.bf16 %v1611, %v1609
        %v1638 = vpack.c.bf16 %v1612, %v1610
        %v1639 = vpack.c.bf16 %v1615, %v1613
        %v1640 = vpack.c.bf16 %v1616, %v1614
        %v1641 = vpack.c.bf16 %v1619, %v1617
        %v1642 = vpack.c.bf16 %v1620, %v1618
        %v1643 = vpack.c.bf16 %v1623, %v1621
        %v1644 = vpack.c.bf16 %v1624, %v1622
        %v1645 = vpack.c.bf16 %v1627, %v1625
        %v1646 = vpack.c.bf16 %v1628, %v1626
        %v1647 = vpack.c.bf16 %v1631, %v1629
        %v1648 = vpack.c.bf16 %v1632, %v1630
        %v1649 = vld [vmem:[%s925] sm:$0xff]
        %v1650 = vld [vmem:[%s925 + $0x8] sm:$0xff]
        %v1651 = vld [vmem:[%s925 + $0x10] sm:$0xff]
        %v1652 = vld [vmem:[%s925 + $0x18] sm:$0xff]
        %v1653 = vld [vmem:[%s925 + $0x20] sm:$0xff]
        %v1654 = vld [vmem:[%s925 + $0x28] sm:$0xff]
        %v1655 = vld [vmem:[%s925 + $0x30] sm:$0xff]
        %v1656 = vld [vmem:[%s925 + $0x38] sm:$0xff]
        %v1657 = vld [vmem:[%s925 + $0x40] sm:$0xff]
        %v1658 = vld [vmem:[%s925 + $0x48] sm:$0xff]
        %v1659 = vld [vmem:[%s925 + $0x50] sm:$0xff]
        %v1660 = vld [vmem:[%s925 + $0x58] sm:$0xff]
        %v1661 = vld [vmem:[%s925 + $0x60] sm:$0xff]
        %v1662 = vld [vmem:[%s925 + $0x68] sm:$0xff]
        %v1663 = vld [vmem:[%s925 + $0x70] sm:$0xff]
        %v1664 = vld [vmem:[%s925 + $0x78] sm:$0xff]
        %v1665 = vld [vmem:[%s925 + $0x80] sm:$0xff]
        %v1666 = vld [vmem:[%s925 + $0x88] sm:$0xff]
        %v1667 = vld [vmem:[%s925 + $0x90] sm:$0xff]
        %v1668 = vld [vmem:[%s925 + $0x98] sm:$0xff]
        %v1669 = vld [vmem:[%s925 + $0xa0] sm:$0xff]
        %v1670 = vld [vmem:[%s925 + $0xa8] sm:$0xff]
        %v1671 = vld [vmem:[%s925 + $0xb0] sm:$0xff]
        %v1672 = vld [vmem:[%s925 + $0xb8] sm:$0xff]
        %v1673 = vld [vmem:[%s925 + $0xc0] sm:$0xff]
        %v1674 = vld [vmem:[%s925 + $0xc8] sm:$0xff]
        %v1675 = vld [vmem:[%s925 + $0xd0] sm:$0xff]
        %v1676 = vld [vmem:[%s925 + $0xd8] sm:$0xff]
        %v1677 = vld [vmem:[%s925 + $0xe0] sm:$0xff]
        %v1678 = vld [vmem:[%s925 + $0xe8] sm:$0xff]
        %v1679 = vld [vmem:[%s925 + $0xf0] sm:$0xff]
        %v1680 = vld [vmem:[%s925 + $0xf8] sm:$0xff]
        %v1681 = vld [vmem:[%s925 + $0x100] sm:$0xff]
        %v1682 = vld [vmem:[%s925 + $0x108] sm:$0xff]
        %v1683 = vld [vmem:[%s925 + $0x110] sm:$0xff]
        %v1684 = vld [vmem:[%s925 + $0x118] sm:$0xff]
        %v1685 = vld [vmem:[%s925 + $0x120] sm:$0xff]
        %v1686 = vld [vmem:[%s925 + $0x128] sm:$0xff]
        %v1687 = vld [vmem:[%s925 + $0x130] sm:$0xff]
        %v1688 = vld [vmem:[%s925 + $0x138] sm:$0xff]
        %v1689 = vld [vmem:[%s925 + $0x140] sm:$0xff]
        %v1690 = vld [vmem:[%s925 + $0x148] sm:$0xff]
        %v1691 = vld [vmem:[%s925 + $0x150] sm:$0xff]
        %v1692 = vld [vmem:[%s925 + $0x158] sm:$0xff]
        %v1693 = vld [vmem:[%s925 + $0x160] sm:$0xff]
        %v1694 = vld [vmem:[%s925 + $0x168] sm:$0xff]
        %v1695 = vld [vmem:[%s925 + $0x170] sm:$0xff]
        %v1696 = vld [vmem:[%s925 + $0x178] sm:$0xff]
        %v1697 = vld [vmem:[%s925 + $0x180] sm:$0xff]
        %v1698 = vld [vmem:[%s925 + $0x188] sm:$0xff]
        %v1699 = vld [vmem:[%s925 + $0x190] sm:$0xff]
        %v1700 = vld [vmem:[%s925 + $0x198] sm:$0xff]
        %v1701 = vld [vmem:[%s925 + $0x1a0] sm:$0xff]
        %v1702 = vld [vmem:[%s925 + $0x1a8] sm:$0xff]
        %v1703 = vld [vmem:[%s925 + $0x1b0] sm:$0xff]
        %v1704 = vld [vmem:[%s925 + $0x1b8] sm:$0xff]
        %v1705 = vld [vmem:[%s925 + $0x1c0] sm:$0xff]
        %v1706 = vld [vmem:[%s925 + $0x1c8] sm:$0xff]
        %v1707 = vld [vmem:[%s925 + $0x1d0] sm:$0xff]
        %v1708 = vld [vmem:[%s925 + $0x1d8] sm:$0xff]
        %v1709 = vld [vmem:[%s925 + $0x1e0] sm:$0xff]
        %v1710 = vld [vmem:[%s925 + $0x1e8] sm:$0xff]
        %v1711 = vld [vmem:[%s925 + $0x1f0] sm:$0xff]
        %v1712 = vld [vmem:[%s925 + $0x1f8] sm:$0xff]
        %v1713 = vld [vmem:[%s925 + $0x200] sm:$0xff]
        %v1714 = vld [vmem:[%s925 + $0x208] sm:$0xff]
        %v1715 = vld [vmem:[%s925 + $0x210] sm:$0xff]
        %v1716 = vld [vmem:[%s925 + $0x218] sm:$0xff]
        %v1717 = vld [vmem:[%s925 + $0x220] sm:$0xff]
        %v1718 = vld [vmem:[%s925 + $0x228] sm:$0xff]
        %v1719 = vld [vmem:[%s925 + $0x230] sm:$0xff]
        %v1720 = vld [vmem:[%s925 + $0x238] sm:$0xff]
        %v1721 = vld [vmem:[%s925 + $0x240] sm:$0xff]
        %v1722 = vld [vmem:[%s925 + $0x248] sm:$0xff]
        %v1723 = vld [vmem:[%s925 + $0x250] sm:$0xff]
        %v1724 = vld [vmem:[%s925 + $0x258] sm:$0xff]
        %v1725 = vld [vmem:[%s925 + $0x260] sm:$0xff]
        %v1726 = vld [vmem:[%s925 + $0x268] sm:$0xff]
        %v1727 = vld [vmem:[%s925 + $0x270] sm:$0xff]
        %v1728 = vld [vmem:[%s925 + $0x278] sm:$0xff]
        %v1729 = vld [vmem:[%s925 + $0x280] sm:$0xff]
        %v1730 = vld [vmem:[%s925 + $0x288] sm:$0xff]
        %v1731 = vld [vmem:[%s925 + $0x290] sm:$0xff]
        %v1732 = vld [vmem:[%s925 + $0x298] sm:$0xff]
        %v1733 = vld [vmem:[%s925 + $0x2a0] sm:$0xff]
        %v1734 = vld [vmem:[%s925 + $0x2a8] sm:$0xff]
        %v1735 = vld [vmem:[%s925 + $0x2b0] sm:$0xff]
        %v1736 = vld [vmem:[%s925 + $0x2b8] sm:$0xff]
        %v1737 = vld [vmem:[%s925 + $0x2c0] sm:$0xff]
        %v1738 = vld [vmem:[%s925 + $0x2c8] sm:$0xff]
        %v1739 = vld [vmem:[%s925 + $0x2d0] sm:$0xff]
        %v1740 = vld [vmem:[%s925 + $0x2d8] sm:$0xff]
        %v1741 = vld [vmem:[%s925 + $0x2e0] sm:$0xff]
        %v1742 = vld [vmem:[%s925 + $0x2e8] sm:$0xff]
        %v1743 = vld [vmem:[%s925 + $0x2f0] sm:$0xff]
        %v1744 = vld [vmem:[%s925 + $0x2f8] sm:$0xff]
        %v1745 = vld [vmem:[%s934] sm:$0x3f]
        %v1747 = vlaneseq
        %v1748 = vshrl.u32 %v1747, 7
        %v1749 = vsub.s32 0, %v1748
        %v1750 = vrot.slane %v1745, %v1749
        %v1751 = vlaneseq
        %v1752 = vshrl.u32 %v1751, 7
        %v1753 = vsub.s32 1, %v1752
        %v1754 = vrot.slane %v1745, %v1753
        %v1755 = vlaneseq
        %v1756 = vshrl.u32 %v1755, 7
        %v1757 = vsub.s32 2, %v1756
        %v1758 = vrot.slane %v1745, %v1757
        %v1759 = vlaneseq
        %v1760 = vshrl.u32 %v1759, 7
        %v1761 = vsub.s32 3, %v1760
        %v1762 = vrot.slane %v1745, %v1761
        %v1763 = vlaneseq
        %v1764 = vshrl.u32 %v1763, 7
        %v1765 = vsub.s32 4, %v1764
        %v1766 = vrot.slane %v1745, %v1765
        %v1767 = vlaneseq
        %v1768 = vshrl.u32 %v1767, 7
        %v1769 = vsub.s32 5, %v1768
        %v1770 = vrot.slane %v1745, %v1769
        %v1873 = vunpack.c.l.b16 %v1649
        %v1874 = vunpack.c.h.b16 %v1649
        %v1875 = vunpack.c.l.b16 %v1650
        %v1876 = vunpack.c.h.b16 %v1650
        %v1877 = vunpack.c.l.b16 %v1651
        %v1878 = vunpack.c.h.b16 %v1651
        %v1879 = vunpack.c.l.b16 %v1652
        %v1880 = vunpack.c.h.b16 %v1652
        %v1881 = vunpack.c.l.b16 %v1653
        %v1882 = vunpack.c.h.b16 %v1653
        %v1883 = vunpack.c.l.b16 %v1654
        %v1884 = vunpack.c.h.b16 %v1654
        %v1885 = vunpack.c.l.b16 %v1655
        %v1886 = vunpack.c.h.b16 %v1655
        %v1887 = vunpack.c.l.b16 %v1656
        %v1888 = vunpack.c.h.b16 %v1656
        %v1889 = vunpack.c.l.b16 %v1657
        %v1890 = vunpack.c.h.b16 %v1657
        %v1891 = vunpack.c.l.b16 %v1658
        %v1892 = vunpack.c.h.b16 %v1658
        %v1893 = vunpack.c.l.b16 %v1659
        %v1894 = vunpack.c.h.b16 %v1659
        %v1895 = vunpack.c.l.b16 %v1660
        %v1896 = vunpack.c.h.b16 %v1660
        %v1897 = vunpack.c.l.b16 %v1661
        %v1898 = vunpack.c.h.b16 %v1661
        %v1899 = vunpack.c.l.b16 %v1662
        %v1900 = vunpack.c.h.b16 %v1662
        %v1901 = vunpack.c.l.b16 %v1663
        %v1902 = vunpack.c.h.b16 %v1663
        %v1903 = vunpack.c.l.b16 %v1664
        %v1904 = vunpack.c.h.b16 %v1664
        %v1905 = vunpack.c.l.b16 %v1665
        %v1906 = vunpack.c.h.b16 %v1665
        %v1907 = vunpack.c.l.b16 %v1666
        %v1908 = vunpack.c.h.b16 %v1666
        %v1909 = vunpack.c.l.b16 %v1667
        %v1910 = vunpack.c.h.b16 %v1667
        %v1911 = vunpack.c.l.b16 %v1668
        %v1912 = vunpack.c.h.b16 %v1668
        %v1913 = vunpack.c.l.b16 %v1669
        %v1914 = vunpack.c.h.b16 %v1669
        %v1915 = vunpack.c.l.b16 %v1670
        %v1916 = vunpack.c.h.b16 %v1670
        %v1917 = vunpack.c.l.b16 %v1671
        %v1918 = vunpack.c.h.b16 %v1671
        %v1919 = vunpack.c.l.b16 %v1672
        %v1920 = vunpack.c.h.b16 %v1672
        %v1921 = vunpack.c.l.b16 %v1673
        %v1922 = vunpack.c.h.b16 %v1673
        %v1923 = vunpack.c.l.b16 %v1674
        %v1924 = vunpack.c.h.b16 %v1674
        %v1925 = vunpack.c.l.b16 %v1675
        %v1926 = vunpack.c.h.b16 %v1675
        %v1927 = vunpack.c.l.b16 %v1676
        %v1928 = vunpack.c.h.b16 %v1676
        %v1929 = vunpack.c.l.b16 %v1677
        %v1930 = vunpack.c.h.b16 %v1677
        %v1931 = vunpack.c.l.b16 %v1678
        %v1932 = vunpack.c.h.b16 %v1678
        %v1933 = vunpack.c.l.b16 %v1679
        %v1934 = vunpack.c.h.b16 %v1679
        %v1935 = vunpack.c.l.b16 %v1680
        %v1936 = vunpack.c.h.b16 %v1680
        %v1937 = vunpack.c.l.b16 %v1681
        %v1938 = vunpack.c.h.b16 %v1681
        %v1939 = vunpack.c.l.b16 %v1682
        %v1940 = vunpack.c.h.b16 %v1682
        %v1941 = vunpack.c.l.b16 %v1683
        %v1942 = vunpack.c.h.b16 %v1683
        %v1943 = vunpack.c.l.b16 %v1684
        %v1944 = vunpack.c.h.b16 %v1684
        %v1945 = vunpack.c.l.b16 %v1685
        %v1946 = vunpack.c.h.b16 %v1685
        %v1947 = vunpack.c.l.b16 %v1686
        %v1948 = vunpack.c.h.b16 %v1686
        %v1949 = vunpack.c.l.b16 %v1687
        %v1950 = vunpack.c.h.b16 %v1687
        %v1951 = vunpack.c.l.b16 %v1688
        %v1952 = vunpack.c.h.b16 %v1688
        %v1953 = vunpack.c.l.b16 %v1689
        %v1954 = vunpack.c.h.b16 %v1689
        %v1955 = vunpack.c.l.b16 %v1690
        %v1956 = vunpack.c.h.b16 %v1690
        %v1957 = vunpack.c.l.b16 %v1691
        %v1958 = vunpack.c.h.b16 %v1691
        %v1959 = vunpack.c.l.b16 %v1692
        %v1960 = vunpack.c.h.b16 %v1692
        %v1961 = vunpack.c.l.b16 %v1693
        %v1962 = vunpack.c.h.b16 %v1693
        %v1963 = vunpack.c.l.b16 %v1694
        %v1964 = vunpack.c.h.b16 %v1694
        %v1965 = vunpack.c.l.b16 %v1695
        %v1966 = vunpack.c.h.b16 %v1695
        %v1967 = vunpack.c.l.b16 %v1696
        %v1968 = vunpack.c.h.b16 %v1696
        %v1969 = vunpack.c.l.b16 %v1697
        %v1970 = vunpack.c.h.b16 %v1697
        %v1971 = vunpack.c.l.b16 %v1698
        %v1972 = vunpack.c.h.b16 %v1698
        %v1973 = vunpack.c.l.b16 %v1699
        %v1974 = vunpack.c.h.b16 %v1699
        %v1975 = vunpack.c.l.b16 %v1700
        %v1976 = vunpack.c.h.b16 %v1700
        %v1977 = vunpack.c.l.b16 %v1701
        %v1978 = vunpack.c.h.b16 %v1701
        %v1979 = vunpack.c.l.b16 %v1702
        %v1980 = vunpack.c.h.b16 %v1702
        %v1981 = vunpack.c.l.b16 %v1703
        %v1982 = vunpack.c.h.b16 %v1703
        %v1983 = vunpack.c.l.b16 %v1704
        %v1984 = vunpack.c.h.b16 %v1704
        %v1985 = vunpack.c.l.b16 %v1705
        %v1986 = vunpack.c.h.b16 %v1705
        %v1987 = vunpack.c.l.b16 %v1706
        %v1988 = vunpack.c.h.b16 %v1706
        %v1989 = vunpack.c.l.b16 %v1707
        %v1990 = vunpack.c.h.b16 %v1707
        %v1991 = vunpack.c.l.b16 %v1708
        %v1992 = vunpack.c.h.b16 %v1708
        %v1993 = vunpack.c.l.b16 %v1709
        %v1994 = vunpack.c.h.b16 %v1709
        %v1995 = vunpack.c.l.b16 %v1710
        %v1996 = vunpack.c.h.b16 %v1710
        %v1997 = vunpack.c.l.b16 %v1711
        %v1998 = vunpack.c.h.b16 %v1711
        %v1999 = vunpack.c.l.b16 %v1712
        %v2000 = vunpack.c.h.b16 %v1712
        %v2001 = vunpack.c.l.b16 %v1713
        %v2002 = vunpack.c.h.b16 %v1713
        %v2003 = vunpack.c.l.b16 %v1714
        %v2004 = vunpack.c.h.b16 %v1714
        %v2005 = vunpack.c.l.b16 %v1715
        %v2006 = vunpack.c.h.b16 %v1715
        %v2007 = vunpack.c.l.b16 %v1716
        %v2008 = vunpack.c.h.b16 %v1716
        %v2009 = vunpack.c.l.b16 %v1717
        %v2010 = vunpack.c.h.b16 %v1717
        %v2011 = vunpack.c.l.b16 %v1718
        %v2012 = vunpack.c.h.b16 %v1718
        %v2013 = vunpack.c.l.b16 %v1719
        %v2014 = vunpack.c.h.b16 %v1719
        %v2015 = vunpack.c.l.b16 %v1720
        %v2016 = vunpack.c.h.b16 %v1720
        %v2017 = vunpack.c.l.b16 %v1721
        %v2018 = vunpack.c.h.b16 %v1721
        %v2019 = vunpack.c.l.b16 %v1722
        %v2020 = vunpack.c.h.b16 %v1722
        %v2021 = vunpack.c.l.b16 %v1723
        %v2022 = vunpack.c.h.b16 %v1723
        %v2023 = vunpack.c.l.b16 %v1724
        %v2024 = vunpack.c.h.b16 %v1724
        %v2025 = vunpack.c.l.b16 %v1725
        %v2026 = vunpack.c.h.b16 %v1725
        %v2027 = vunpack.c.l.b16 %v1726
        %v2028 = vunpack.c.h.b16 %v1726
        %v2029 = vunpack.c.l.b16 %v1727
        %v2030 = vunpack.c.h.b16 %v1727
        %v2031 = vunpack.c.l.b16 %v1728
        %v2032 = vunpack.c.h.b16 %v1728
        %v2033 = vunpack.c.l.b16 %v1729
        %v2034 = vunpack.c.h.b16 %v1729
        %v2035 = vunpack.c.l.b16 %v1730
        %v2036 = vunpack.c.h.b16 %v1730
        %v2037 = vunpack.c.l.b16 %v1731
        %v2038 = vunpack.c.h.b16 %v1731
        %v2039 = vunpack.c.l.b16 %v1732
        %v2040 = vunpack.c.h.b16 %v1732
        %v2041 = vunpack.c.l.b16 %v1733
        %v2042 = vunpack.c.h.b16 %v1733
        %v2043 = vunpack.c.l.b16 %v1734
        %v2044 = vunpack.c.h.b16 %v1734
        %v2045 = vunpack.c.l.b16 %v1735
        %v2046 = vunpack.c.h.b16 %v1735
        %v2047 = vunpack.c.l.b16 %v1736
        %v2048 = vunpack.c.h.b16 %v1736
        %v2049 = vunpack.c.l.b16 %v1737
        %v2050 = vunpack.c.h.b16 %v1737
        %v2051 = vunpack.c.l.b16 %v1738
        %v2052 = vunpack.c.h.b16 %v1738
        %v2053 = vunpack.c.l.b16 %v1739
        %v2054 = vunpack.c.h.b16 %v1739
        %v2055 = vunpack.c.l.b16 %v1740
        %v2056 = vunpack.c.h.b16 %v1740
        %v2057 = vunpack.c.l.b16 %v1741
        %v2058 = vunpack.c.h.b16 %v1741
        %v2059 = vunpack.c.l.b16 %v1742
        %v2060 = vunpack.c.h.b16 %v1742
        %v2061 = vunpack.c.l.b16 %v1743
        %v2062 = vunpack.c.h.b16 %v1743
        %v2063 = vunpack.c.l.b16 %v1744
        %v2064 = vunpack.c.h.b16 %v1744
        %v2065 = vpack.c.b16 %v1879, %v1873
        %v2066 = vpack.c.b16 %v1880, %v1874
        %v2067 = vpack.c.b16 %v1881, %v1875
        %v2068 = vpack.c.b16 %v1882, %v1876
        %v2069 = vpack.c.b16 %v1883, %v1877
        %v2070 = vpack.c.b16 %v1884, %v1878
        %v2071 = vpack.c.b16 %v1891, %v1885
        %v2072 = vpack.c.b16 %v1892, %v1886
        %v2073 = vpack.c.b16 %v1893, %v1887
        %v2074 = vpack.c.b16 %v1894, %v1888
        %v2075 = vpack.c.b16 %v1895, %v1889
        %v2076 = vpack.c.b16 %v1896, %v1890
        %v2077 = vpack.c.b16 %v1903, %v1897
        %v2078 = vpack.c.b16 %v1904, %v1898
        %v2079 = vpack.c.b16 %v1905, %v1899
        %v2080 = vpack.c.b16 %v1906, %v1900
        %v2081 = vpack.c.b16 %v1907, %v1901
        %v2082 = vpack.c.b16 %v1908, %v1902
        %v2083 = vpack.c.b16 %v1915, %v1909
        %v2084 = vpack.c.b16 %v1916, %v1910
        %v2085 = vpack.c.b16 %v1917, %v1911
        %v2086 = vpack.c.b16 %v1918, %v1912
        %v2087 = vpack.c.b16 %v1919, %v1913
        %v2088 = vpack.c.b16 %v1920, %v1914
        %v2089 = vpack.c.b16 %v1927, %v1921
        %v2090 = vpack.c.b16 %v1928, %v1922
        %v2091 = vpack.c.b16 %v1929, %v1923
        %v2092 = vpack.c.b16 %v1930, %v1924
        %v2093 = vpack.c.b16 %v1931, %v1925
        %v2094 = vpack.c.b16 %v1932, %v1926
        %v2095 = vpack.c.b16 %v1939, %v1933
        %v2096 = vpack.c.b16 %v1940, %v1934
        %v2097 = vpack.c.b16 %v1941, %v1935
        %v2098 = vpack.c.b16 %v1942, %v1936
        %v2099 = vpack.c.b16 %v1943, %v1937
        %v2100 = vpack.c.b16 %v1944, %v1938
        %v2101 = vpack.c.b16 %v1951, %v1945
        %v2102 = vpack.c.b16 %v1952, %v1946
        %v2103 = vpack.c.b16 %v1953, %v1947
        %v2104 = vpack.c.b16 %v1954, %v1948
        %v2105 = vpack.c.b16 %v1955, %v1949
        %v2106 = vpack.c.b16 %v1956, %v1950
        %v2107 = vpack.c.b16 %v1963, %v1957
        %v2108 = vpack.c.b16 %v1964, %v1958
        %v2109 = vpack.c.b16 %v1965, %v1959
        %v2110 = vpack.c.b16 %v1966, %v1960
        %v2111 = vpack.c.b16 %v1967, %v1961
        %v2112 = vpack.c.b16 %v1968, %v1962
        %v2113 = vpack.c.b16 %v1975, %v1969
        %v2114 = vpack.c.b16 %v1976, %v1970
        %v2115 = vpack.c.b16 %v1977, %v1971
        %v2116 = vpack.c.b16 %v1978, %v1972
        %v2117 = vpack.c.b16 %v1979, %v1973
        %v2118 = vpack.c.b16 %v1980, %v1974
        %v2119 = vpack.c.b16 %v1987, %v1981
        %v2120 = vpack.c.b16 %v1988, %v1982
        %v2121 = vpack.c.b16 %v1989, %v1983
        %v2122 = vpack.c.b16 %v1990, %v1984
        %v2123 = vpack.c.b16 %v1991, %v1985
        %v2124 = vpack.c.b16 %v1992, %v1986
        %v2125 = vpack.c.b16 %v1999, %v1993
        %v2126 = vpack.c.b16 %v2000, %v1994
        %v2127 = vpack.c.b16 %v2001, %v1995
        %v2128 = vpack.c.b16 %v2002, %v1996
        %v2129 = vpack.c.b16 %v2003, %v1997
        %v2130 = vpack.c.b16 %v2004, %v1998
        %v2131 = vpack.c.b16 %v2011, %v2005
        %v2132 = vpack.c.b16 %v2012, %v2006
        %v2133 = vpack.c.b16 %v2013, %v2007
        %v2134 = vpack.c.b16 %v2014, %v2008
        %v2135 = vpack.c.b16 %v2015, %v2009
        %v2136 = vpack.c.b16 %v2016, %v2010
        %v2137 = vpack.c.b16 %v2023, %v2017
        %v2138 = vpack.c.b16 %v2024, %v2018
        %v2139 = vpack.c.b16 %v2025, %v2019
        %v2140 = vpack.c.b16 %v2026, %v2020
        %v2141 = vpack.c.b16 %v2027, %v2021
        %v2142 = vpack.c.b16 %v2028, %v2022
        %v2143 = vpack.c.b16 %v2035, %v2029
        %v2144 = vpack.c.b16 %v2036, %v2030
        %v2145 = vpack.c.b16 %v2037, %v2031
        %v2146 = vpack.c.b16 %v2038, %v2032
        %v2147 = vpack.c.b16 %v2039, %v2033
        %v2148 = vpack.c.b16 %v2040, %v2034
        %v2149 = vpack.c.b16 %v2047, %v2041
        %v2150 = vpack.c.b16 %v2048, %v2042
        %v2151 = vpack.c.b16 %v2049, %v2043
        %v2152 = vpack.c.b16 %v2050, %v2044
        %v2153 = vpack.c.b16 %v2051, %v2045
        %v2154 = vpack.c.b16 %v2052, %v2046
        %v2155 = vpack.c.b16 %v2059, %v2053
        %v2156 = vpack.c.b16 %v2060, %v2054
        %v2157 = vpack.c.b16 %v2061, %v2055
        %v2158 = vpack.c.b16 %v2062, %v2056
        %v2159 = vpack.c.b16 %v2063, %v2057
        %v2160 = vpack.c.b16 %v2064, %v2058
        %2257 = vmatprep.subr.bf16.mxu0 %v2066
        %2258 = vmatpush1.bf16.msra.mxu0 %v2065
        %2259 = vmatprep.subr.bf16.mxu0 %v2072
        %2260 = vmatpush1.bf16.msra.mxu0 %v2071
        %2261 = vmatprep.subr.bf16.mxu0 %v2078
        %2262 = vmatpush1.bf16.msra.mxu0 %v2077
        %2263 = vmatprep.subr.bf16.mxu0 %v2084
        %2264 = vmatpush1.bf16.msra.mxu0 %v2083
        %2265 = vmatprep.subr.bf16.mxu0 %v2090
        %2266 = vmatpush1.bf16.msra.mxu0 %v2089
        %2267 = vmatprep.subr.bf16.mxu0 %v2096
        %2268 = vmatpush1.bf16.msra.mxu0 %v2095
        %2269 = vmatprep.subr.bf16.mxu0 %v2102
        %2270 = vmatpush1.bf16.msra.mxu0 %v2101
        %2271 = vmatprep.subr.bf16.mxu0 %v2108
        %2272 = vmatpush1.bf16.msra.mxu0 %v2107
        %2273 = vmatprep.subr.bf16.mxu0 %v2114
        %2274 = vmatpush1.bf16.msra.mxu0 %v2113
        %2275 = vmatprep.subr.bf16.mxu0 %v2120
        %2276 = vmatpush1.bf16.msra.mxu0 %v2119
        %2277 = vmatprep.subr.bf16.mxu0 %v2126
        %2278 = vmatpush1.bf16.msra.mxu0 %v2125
        %2279 = vmatprep.subr.bf16.mxu0 %v2132
        %2280 = vmatpush1.bf16.msra.mxu0 %v2131
        %2281 = vmatprep.subr.bf16.mxu0 %v2138
        %2282 = vmatpush1.bf16.msra.mxu0 %v2137
        %2283 = vmatprep.subr.bf16.mxu0 %v2144
        %2284 = vmatpush1.bf16.msra.mxu0 %v2143
        %2285 = vmatprep.subr.bf16.mxu0 %v2150
        %2286 = vmatpush1.bf16.msra.mxu0 %v2149
        %2287 = vmatprep.subr.bf16.mxu0 %v2156
        %2288 = vmatpush1.bf16.msra.mxu0 %v2155
        %2289 = vmatprep.mubr.bf16.mxu0 %v1634
        %2290 = vmatmul.mubr.bf16.gmra.mrb[0].mxu0 %v1633
        %v2291 = vpop.f32.mrb[0].mxu0
        %v2292 = vadd.f32 %v1750, %v2291
        %v2293 = vpop.f32.mrb[0].mxu0
        %v2294 = vadd.f32 %v1754, %v2293
        %v2295 = vpop.f32.mrb[0].mxu0
        %v2296 = vadd.f32 %v1750, %v2295
        %v2297 = vpop.f32.mrb[0].mxu0
        %v2298 = vadd.f32 %v1754, %v2297
        %2299 = vmatprep.mubr.bf16.mxu0 %v1636
        %2300 = vmatmul.mubr.bf16.gmra.mrb[0].mxu0 %v1635
        %v2301 = vpop.f32.mrb[0].mxu0
        %v2302 = vadd.f32 %v1750, %v2301
        %v2303 = vpop.f32.mrb[0].mxu0
        %v2304 = vadd.f32 %v1754, %v2303
        %v2305 = vpop.f32.mrb[0].mxu0
        %v2306 = vadd.f32 %v1750, %v2305
        %v2307 = vpop.f32.mrb[0].mxu0
        %v2308 = vadd.f32 %v1754, %v2307
        %2309 = vmatprep.mubr.bf16.mxu0 %v1638
        %2310 = vmatmul.mubr.bf16.gmra.mrb[0].mxu0 %v1637
        %v2311 = vpop.f32.mrb[0].mxu0
        %v2312 = vadd.f32 %v1750, %v2311
        %v2313 = vpop.f32.mrb[0].mxu0
        %v2314 = vadd.f32 %v1754, %v2313
        %v2315 = vpop.f32.mrb[0].mxu0
        %v2316 = vadd.f32 %v1750, %v2315
        %v2317 = vpop.f32.mrb[0].mxu0
        %v2318 = vadd.f32 %v1754, %v2317
        %2319 = vmatprep.mubr.bf16.mxu0 %v1640
        %2320 = vmatmul.mubr.bf16.gmra.mrb[0].mxu0 %v1639
        %v2321 = vpop.f32.mrb[0].mxu0
        %v2322 = vadd.f32 %v1750, %v2321
        %v2323 = vpop.f32.mrb[0].mxu0
        %v2324 = vadd.f32 %v1754, %v2323
        %v2325 = vpop.f32.mrb[0].mxu0
        %v2326 = vadd.f32 %v1750, %v2325
        %v2327 = vpop.f32.mrb[0].mxu0
        %v2328 = vadd.f32 %v1754, %v2327
        %2329 = vmatprep.mubr.bf16.mxu0 %v1642
        %2330 = vmatmul.mubr.bf16.gmra.mrb[0].mxu0 %v1641
        %v2331 = vpop.f32.mrb[0].mxu0
        %v2332 = vadd.f32 %v1750, %v2331
        %v2333 = vpop.f32.mrb[0].mxu0
        %v2334 = vadd.f32 %v1754, %v2333
        %v2335 = vpop.f32.mrb[0].mxu0
        %v2336 = vadd.f32 %v1750, %v2335
        %v2337 = vpop.f32.mrb[0].mxu0
        %v2338 = vadd.f32 %v1754, %v2337
        %2339 = vmatprep.mubr.bf16.mxu0 %v1644
        %2340 = vmatmul.mubr.bf16.gmra.mrb[0].mxu0 %v1643
        %v2341 = vpop.f32.mrb[0].mxu0
        %v2342 = vadd.f32 %v1750, %v2341
        %v2343 = vpop.f32.mrb[0].mxu0
        %v2344 = vadd.f32 %v1754, %v2343
        %v2345 = vpop.f32.mrb[0].mxu0
        %v2346 = vadd.f32 %v1750, %v2345
        %v2347 = vpop.f32.mrb[0].mxu0
        %v2348 = vadd.f32 %v1754, %v2347
        %2349 = vmatprep.mubr.bf16.mxu0 %v1646
        %2350 = vmatmul.mubr.bf16.gmra.mrb[0].mxu0 %v1645
        %v2351 = vpop.f32.mrb[0].mxu0
        %v2352 = vadd.f32 %v1750, %v2351
        %v2353 = vpop.f32.mrb[0].mxu0
        %v2354 = vadd.f32 %v1754, %v2353
        %v2355 = vpop.f32.mrb[0].mxu0
        %v2356 = vadd.f32 %v1750, %v2355
        %v2357 = vpop.f32.mrb[0].mxu0
        %v2358 = vadd.f32 %v1754, %v2357
        %2359 = vmatprep.mubr.bf16.mxu0 %v1648
        %2360 = vmatmul.mubr.bf16.gmra.mrb[0].mxu0 %v1647
        %v2361 = vpop.f32.mrb[0].mxu0
        %v2362 = vadd.f32 %v1750, %v2361
        %v2363 = vpop.f32.mrb[0].mxu0
        %v2364 = vadd.f32 %v1754, %v2363
        %v2365 = vpop.f32.mrb[0].mxu0
        %v2366 = vadd.f32 %v1750, %v2365
        %v2367 = vpop.f32.mrb[0].mxu0
        %v2368 = vadd.f32 %v1754, %v2367
        %2369 = vdwg.mxu0
        %2370 = vmatprep.subr.bf16.mxu0 %v2068
        %2371 = vmatpush1.bf16.msra.mxu0 %v2067
        %2372 = vmatprep.subr.bf16.mxu0 %v2074
        %2373 = vmatpush1.bf16.msra.mxu0 %v2073
        %2374 = vmatprep.subr.bf16.mxu0 %v2080
        %2375 = vmatpush1.bf16.msra.mxu0 %v2079
        %2376 = vmatprep.subr.bf16.mxu0 %v2086
        %2377 = vmatpush1.bf16.msra.mxu0 %v2085
        %2378 = vmatprep.subr.bf16.mxu0 %v2092
        %2379 = vmatpush1.bf16.msra.mxu0 %v2091
        %2380 = vmatprep.subr.bf16.mxu0 %v2098
        %2381 = vmatpush1.bf16.msra.mxu0 %v2097
        %2382 = vmatprep.subr.bf16.mxu0 %v2104
        %2383 = vmatpush1.bf16.msra.mxu0 %v2103
        %2384 = vmatprep.subr.bf16.mxu0 %v2110
        %2385 = vmatpush1.bf16.msra.mxu0 %v2109
        %2386 = vmatprep.subr.bf16.mxu0 %v2116
        %2387 = vmatpush1.bf16.msra.mxu0 %v2115
        %2388 = vmatprep.subr.bf16.mxu0 %v2122
        %2389 = vmatpush1.bf16.msra.mxu0 %v2121
        %2390 = vmatprep.subr.bf16.mxu0 %v2128
        %2391 = vmatpush1.bf16.msra.mxu0 %v2127
        %2392 = vmatprep.subr.bf16.mxu0 %v2134
        %2393 = vmatpush1.bf16.msra.mxu0 %v2133
        %2394 = vmatprep.subr.bf16.mxu0 %v2140
        %2395 = vmatpush1.bf16.msra.mxu0 %v2139
        %2396 = vmatprep.subr.bf16.mxu0 %v2146
        %2397 = vmatpush1.bf16.msra.mxu0 %v2145
        %2398 = vmatprep.subr.bf16.mxu0 %v2152
        %2399 = vmatpush1.bf16.msra.mxu0 %v2151
        %2400 = vmatprep.subr.bf16.mxu0 %v2158
        %2401 = vmatpush1.bf16.msra.mxu0 %v2157
        %2402 = vmatprep.mubr.bf16.mxu0 %v1634
        %2403 = vmatmul.mubr.bf16.gmra.mrb[0].mxu0 %v1633
        %v2404 = vpop.f32.mrb[0].mxu0
        %v2405 = vadd.f32 %v1758, %v2404
        %v2406 = vpop.f32.mrb[0].mxu0
        %v2407 = vadd.f32 %v1762, %v2406
        %v2408 = vpop.f32.mrb[0].mxu0
        %v2409 = vadd.f32 %v1758, %v2408
        %v2410 = vpop.f32.mrb[0].mxu0
        %v2411 = vadd.f32 %v1762, %v2410
        %2412 = vmatprep.mubr.bf16.mxu0 %v1636
        %2413 = vmatmul.mubr.bf16.gmra.mrb[0].mxu0 %v1635
        %v2414 = vpop.f32.mrb[0].mxu0
        %v2415 = vadd.f32 %v1758, %v2414
        %v2416 = vpop.f32.mrb[0].mxu0
        %v2417 = vadd.f32 %v1762, %v2416
        %v2418 = vpop.f32.mrb[0].mxu0
        %v2419 = vadd.f32 %v1758, %v2418
        %v2420 = vpop.f32.mrb[0].mxu0
        %v2421 = vadd.f32 %v1762, %v2420
        %2422 = vmatprep.mubr.bf16.mxu0 %v1638
        %2423 = vmatmul.mubr.bf16.gmra.mrb[0].mxu0 %v1637
        %v2424 = vpop.f32.mrb[0].mxu0
        %v2425 = vadd.f32 %v1758, %v2424
        %v2426 = vpop.f32.mrb[0].mxu0
        %v2427 = vadd.f32 %v1762, %v2426
        %v2428 = vpop.f32.mrb[0].mxu0
        %v2429 = vadd.f32 %v1758, %v2428
        %v2430 = vpop.f32.mrb[0].mxu0
        %v2431 = vadd.f32 %v1762, %v2430
        %2432 = vmatprep.mubr.bf16.mxu0 %v1640
        %2433 = vmatmul.mubr.bf16.gmra.mrb[0].mxu0 %v1639
        %v2434 = vpop.f32.mrb[0].mxu0
        %v2435 = vadd.f32 %v1758, %v2434
        %v2436 = vpop.f32.mrb[0].mxu0
        %v2437 = vadd.f32 %v1762, %v2436
        %v2438 = vpop.f32.mrb[0].mxu0
        %v2439 = vadd.f32 %v1758, %v2438
        %v2440 = vpop.f32.mrb[0].mxu0
        %v2441 = vadd.f32 %v1762, %v2440
        %2442 = vmatprep.mubr.bf16.mxu0 %v1642
        %2443 = vmatmul.mubr.bf16.gmra.mrb[0].mxu0 %v1641
        %v2444 = vpop.f32.mrb[0].mxu0
        %v2445 = vadd.f32 %v1758, %v2444
        %v2446 = vpop.f32.mrb[0].mxu0
        %v2447 = vadd.f32 %v1762, %v2446
        %v2448 = vpop.f32.mrb[0].mxu0
        %v2449 = vadd.f32 %v1758, %v2448
        %v2450 = vpop.f32.mrb[0].mxu0
        %v2451 = vadd.f32 %v1762, %v2450
        %2452 = vmatprep.mubr.bf16.mxu0 %v1644
        %2453 = vmatmul.mubr.bf16.gmra.mrb[0].mxu0 %v1643
        %v2454 = vpop.f32.mrb[0].mxu0
        %v2455 = vadd.f32 %v1758, %v2454
        %v2456 = vpop.f32.mrb[0].mxu0
        %v2457 = vadd.f32 %v1762, %v2456
        %v2458 = vpop.f32.mrb[0].mxu0
        %v2459 = vadd.f32 %v1758, %v2458
        %v2460 = vpop.f32.mrb[0].mxu0
        %v2461 = vadd.f32 %v1762, %v2460
        %2462 = vmatprep.mubr.bf16.mxu0 %v1646
        %2463 = vmatmul.mubr.bf16.gmra.mrb[0].mxu0 %v1645
        %v2464 = vpop.f32.mrb[0].mxu0
        %v2465 = vadd.f32 %v1758, %v2464
        %v2466 = vpop.f32.mrb[0].mxu0
        %v2467 = vadd.f32 %v1762, %v2466
        %v2468 = vpop.f32.mrb[0].mxu0
        %v2469 = vadd.f32 %v1758, %v2468
        %v2470 = vpop.f32.mrb[0].mxu0
        %v2471 = vadd.f32 %v1762, %v2470
        %2472 = vmatprep.mubr.bf16.mxu0 %v1648
        %2473 = vmatmul.mubr.bf16.gmra.mrb[0].mxu0 %v1647
        %v2474 = vpop.f32.mrb[0].mxu0
        %v2475 = vadd.f32 %v1758, %v2474
        %v2476 = vpop.f32.mrb[0].mxu0
        %v2477 = vadd.f32 %v1762, %v2476
        %v2478 = vpop.f32.mrb[0].mxu0
        %v2479 = vadd.f32 %v1758, %v2478
        %v2480 = vpop.f32.mrb[0].mxu0
        %v2481 = vadd.f32 %v1762, %v2480
        %2482 = vdwg.mxu0
        %2483 = vmatprep.subr.bf16.mxu0 %v2070
        %2484 = vmatpush1.bf16.msra.mxu0 %v2069
        %2485 = vmatprep.subr.bf16.mxu0 %v2076
        %2486 = vmatpush1.bf16.msra.mxu0 %v2075
        %2487 = vmatprep.subr.bf16.mxu0 %v2082
        %2488 = vmatpush1.bf16.msra.mxu0 %v2081
        %2489 = vmatprep.subr.bf16.mxu0 %v2088
        %2490 = vmatpush1.bf16.msra.mxu0 %v2087
        %2491 = vmatprep.subr.bf16.mxu0 %v2094
        %2492 = vmatpush1.bf16.msra.mxu0 %v2093
        %2493 = vmatprep.subr.bf16.mxu0 %v2100
        %2494 = vmatpush1.bf16.msra.mxu0 %v2099
        %2495 = vmatprep.subr.bf16.mxu0 %v2106
        %2496 = vmatpush1.bf16.msra.mxu0 %v2105
        %2497 = vmatprep.subr.bf16.mxu0 %v2112
        %2498 = vmatpush1.bf16.msra.mxu0 %v2111
        %2499 = vmatprep.subr.bf16.mxu0 %v2118
        %2500 = vmatpush1.bf16.msra.mxu0 %v2117
        %2501 = vmatprep.subr.bf16.mxu0 %v2124
        %2502 = vmatpush1.bf16.msra.mxu0 %v2123
        %2503 = vmatprep.subr.bf16.mxu0 %v2130
        %2504 = vmatpush1.bf16.msra.mxu0 %v2129
        %2505 = vmatprep.subr.bf16.mxu0 %v2136
        %2506 = vmatpush1.bf16.msra.mxu0 %v2135
        %2507 = vmatprep.subr.bf16.mxu0 %v2142
        %2508 = vmatpush1.bf16.msra.mxu0 %v2141
        %2509 = vmatprep.subr.bf16.mxu0 %v2148
        %2510 = vmatpush1.bf16.msra.mxu0 %v2147
        %2511 = vmatprep.subr.bf16.mxu0 %v2154
        %2512 = vmatpush1.bf16.msra.mxu0 %v2153
        %2513 = vmatprep.subr.bf16.mxu0 %v2160
        %2514 = vmatpush1.bf16.msra.mxu0 %v2159
        %2515 = vmatprep.mubr.bf16.mxu0 %v1634
        %2516 = vmatmul.mubr.bf16.gmra.mrb[0].mxu0 %v1633
        %v2517 = vpop.f32.mrb[0].mxu0
        %v2518 = vadd.f32 %v1766, %v2517
        %v2519 = vpop.f32.mrb[0].mxu0
        %v2520 = vadd.f32 %v1770, %v2519
        %v2521 = vpop.f32.mrb[0].mxu0
        %v2522 = vadd.f32 %v1766, %v2521
        %v2523 = vpop.f32.mrb[0].mxu0
        %v2524 = vadd.f32 %v1770, %v2523
        %2525 = vmatprep.mubr.bf16.mxu0 %v1636
        %2526 = vmatmul.mubr.bf16.gmra.mrb[0].mxu0 %v1635
        %v2527 = vpop.f32.mrb[0].mxu0
        %v2528 = vadd.f32 %v1766, %v2527
        %v2529 = vpop.f32.mrb[0].mxu0
        %v2530 = vadd.f32 %v1770, %v2529
        %v2531 = vpop.f32.mrb[0].mxu0
        %v2532 = vadd.f32 %v1766, %v2531
        %v2533 = vpop.f32.mrb[0].mxu0
        %v2534 = vadd.f32 %v1770, %v2533
        %2535 = vmatprep.mubr.bf16.mxu0 %v1638
        %2536 = vmatmul.mubr.bf16.gmra.mrb[0].mxu0 %v1637
        %v2537 = vpop.f32.mrb[0].mxu0
        %v2538 = vadd.f32 %v1766, %v2537
        %v2539 = vpop.f32.mrb[0].mxu0
        %v2540 = vadd.f32 %v1770, %v2539
        %v2541 = vpop.f32.mrb[0].mxu0
        %v2542 = vadd.f32 %v1766, %v2541
        %v2543 = vpop.f32.mrb[0].mxu0
        %v2544 = vadd.f32 %v1770, %v2543
        %2545 = vmatprep.mubr.bf16.mxu0 %v1640
        %2546 = vmatmul.mubr.bf16.gmra.mrb[0].mxu0 %v1639
        %v2547 = vpop.f32.mrb[0].mxu0
        %v2548 = vadd.f32 %v1766, %v2547
        %v2549 = vpop.f32.mrb[0].mxu0
        %v2550 = vadd.f32 %v1770, %v2549
        %v2551 = vpop.f32.mrb[0].mxu0
        %v2552 = vadd.f32 %v1766, %v2551
        %v2553 = vpop.f32.mrb[0].mxu0
        %v2554 = vadd.f32 %v1770, %v2553
        %2555 = vmatprep.mubr.bf16.mxu0 %v1642
        %2556 = vmatmul.mubr.bf16.gmra.mrb[0].mxu0 %v1641
        %v2557 = vpop.f32.mrb[0].mxu0
        %v2558 = vadd.f32 %v1766, %v2557
        %v2559 = vpop.f32.mrb[0].mxu0
        %v2560 = vadd.f32 %v1770, %v2559
        %v2561 = vpop.f32.mrb[0].mxu0
        %v2562 = vadd.f32 %v1766, %v2561
        %v2563 = vpop.f32.mrb[0].mxu0
        %v2564 = vadd.f32 %v1770, %v2563
        %2565 = vmatprep.mubr.bf16.mxu0 %v1644
        %2566 = vmatmul.mubr.bf16.gmra.mrb[0].mxu0 %v1643
        %v2567 = vpop.f32.mrb[0].mxu0
        %v2568 = vadd.f32 %v1766, %v2567
        %v2569 = vpop.f32.mrb[0].mxu0
        %v2570 = vadd.f32 %v1770, %v2569
        %v2571 = vpop.f32.mrb[0].mxu0
        %v2572 = vadd.f32 %v1766, %v2571
        %v2573 = vpop.f32.mrb[0].mxu0
        %v2574 = vadd.f32 %v1770, %v2573
        %2575 = vmatprep.mubr.bf16.mxu0 %v1646
        %2576 = vmatmul.mubr.bf16.gmra.mrb[0].mxu0 %v1645
        %v2577 = vpop.f32.mrb[0].mxu0
        %v2578 = vadd.f32 %v1766, %v2577
        %v2579 = vpop.f32.mrb[0].mxu0
        %v2580 = vadd.f32 %v1770, %v2579
        %v2581 = vpop.f32.mrb[0].mxu0
        %v2582 = vadd.f32 %v1766, %v2581
        %v2583 = vpop.f32.mrb[0].mxu0
        %v2584 = vadd.f32 %v1770, %v2583
        %2585 = vmatprep.mubr.bf16.mxu0 %v1648
        %2586 = vmatmul.mubr.bf16.gmra.mrb[0].mxu0 %v1647
        %v2587 = vpop.f32.mrb[0].mxu0
        %v2588 = vadd.f32 %v1766, %v2587
        %v2589 = vpop.f32.mrb[0].mxu0
        %v2590 = vadd.f32 %v1770, %v2589
        %v2591 = vpop.f32.mrb[0].mxu0
        %v2592 = vadd.f32 %v1766, %v2591
        %v2593 = vpop.f32.mrb[0].mxu0
        %v2594 = vadd.f32 %v1770, %v2593
        %2595 = vdwg.mxu0
        %v2596 = vpack.c.bf16 %v2296, %v2292
        %v2597 = vpack.c.bf16 %v2298, %v2294
        %v2598 = vpack.c.bf16 %v2409, %v2405
        %v2599 = vpack.c.bf16 %v2411, %v2407
        %v2600 = vpack.c.bf16 %v2522, %v2518
        %v2601 = vpack.c.bf16 %v2524, %v2520
        %v2602 = vpack.c.bf16 %v2306, %v2302
        %v2603 = vpack.c.bf16 %v2308, %v2304
        %v2604 = vpack.c.bf16 %v2419, %v2415
        %v2605 = vpack.c.bf16 %v2421, %v2417
        %v2606 = vpack.c.bf16 %v2532, %v2528
        %v2607 = vpack.c.bf16 %v2534, %v2530
        %v2608 = vpack.c.bf16 %v2316, %v2312
        %v2609 = vpack.c.bf16 %v2318, %v2314
        %v2610 = vpack.c.bf16 %v2429, %v2425
        %v2611 = vpack.c.bf16 %v2431, %v2427
        %v2612 = vpack.c.bf16 %v2542, %v2538
        %v2613 = vpack.c.bf16 %v2544, %v2540
        %v2614 = vpack.c.bf16 %v2326, %v2322
        %v2615 = vpack.c.bf16 %v2328, %v2324
        %v2616 = vpack.c.bf16 %v2439, %v2435
        %v2617 = vpack.c.bf16 %v2441, %v2437
        %v2618 = vpack.c.bf16 %v2552, %v2548
        %v2619 = vpack.c.bf16 %v2554, %v2550
        %v2620 = vpack.c.bf16 %v2336, %v2332
        %v2621 = vpack.c.bf16 %v2338, %v2334
        %v2622 = vpack.c.bf16 %v2449, %v2445
        %v2623 = vpack.c.bf16 %v2451, %v2447
        %v2624 = vpack.c.bf16 %v2562, %v2558
        %v2625 = vpack.c.bf16 %v2564, %v2560
        %v2626 = vpack.c.bf16 %v2346, %v2342
        %v2627 = vpack.c.bf16 %v2348, %v2344
        %v2628 = vpack.c.bf16 %v2459, %v2455
        %v2629 = vpack.c.bf16 %v2461, %v2457
        %v2630 = vpack.c.bf16 %v2572, %v2568
        %v2631 = vpack.c.bf16 %v2574, %v2570
        %v2632 = vpack.c.bf16 %v2356, %v2352
        %v2633 = vpack.c.bf16 %v2358, %v2354
        %v2634 = vpack.c.bf16 %v2469, %v2465
        %v2635 = vpack.c.bf16 %v2471, %v2467
        %v2636 = vpack.c.bf16 %v2582, %v2578
        %v2637 = vpack.c.bf16 %v2584, %v2580
        %v2638 = vpack.c.bf16 %v2366, %v2362
        %v2639 = vpack.c.bf16 %v2368, %v2364
        %v2640 = vpack.c.bf16 %v2479, %v2475
        %v2641 = vpack.c.bf16 %v2481, %v2477
        %v2642 = vpack.c.bf16 %v2592, %v2588
        %v2643 = vpack.c.bf16 %v2594, %v2590
        %v2644 = vlaneseq
        %v2645 = vand.u32 %v2644, 127
        %vm2646 = vcmp.lt.s32.totalorder %v2645, 5
        %2647 = vmatprep.subr.bf16.mxu0 0
        %2648 = vmatpush1.bf16.xpose.msra.mxu0 %v2598
        %2649 = vmatprep.subr.bf16.mxu0 0
        %2650 = vmatpush1.bf16.xpose.msra.mxu0 %v2604
        %2651 = vmatprep.subr.bf16.mxu0 0
        %2652 = vmatpush1.bf16.xpose.msra.mxu0 %v2610
        %2653 = vmatprep.subr.bf16.mxu0 0
        %2654 = vmatpush1.bf16.xpose.msra.mxu0 %v2616
        %2655 = vmatprep.subr.bf16.mxu0 0
        %2656 = vmatpush1.bf16.xpose.msra.mxu0 %v2622
        %2657 = vmatprep.subr.bf16.mxu0 0
        %2658 = vmatpush1.bf16.xpose.msra.mxu0 %v2628
        %2659 = vmatprep.subr.bf16.mxu0 0
        %2660 = vmatpush1.bf16.xpose.msra.mxu0 %v2634
        %2661 = vmatprep.subr.bf16.mxu0 0
        %2662 = vmatpush1.bf16.xpose.msra.mxu0 %v2640
        %2663 = vmatprep.subr.bf16.mxu0 0
        %2664 = vmatpush1.bf16.xpose.msra.mxu0 0
        %2665 = vmatprep.subr.bf16.mxu0 0
        %2666 = vmatpush1.bf16.xpose.msra.mxu0 0
        %2667 = vmatprep.subr.bf16.mxu0 0
        %2668 = vmatpush1.bf16.xpose.msra.mxu0 0
        %2669 = vmatprep.subr.bf16.mxu0 0
        %2670 = vmatpush1.bf16.xpose.msra.mxu0 0
        %2671 = vmatprep.subr.bf16.mxu0 0
        %2672 = vmatpush1.bf16.xpose.msra.mxu0 0
        %2673 = vmatprep.subr.bf16.mxu0 0
        %2674 = vmatpush1.bf16.xpose.msra.mxu0 0
        %2675 = vmatprep.subr.bf16.mxu0 0
        %2676 = vmatpush1.bf16.xpose.msra.mxu0 0
        %2677 = vmatprep.subr.bf16.mxu0 0
        %2678 = vmatpush1.bf16.xpose.msra.mxu0 0
        %2679 = vmatprep.mubr.bf16.mxu0 0
        %2680 = vmatmul.mubr.bf16.gmra.mrb[0].mxu0 %v2596
        %v2681 = vpop.f32.mrb[0].mxu0
        %v2682 = vadd.f32 0.0, %v2681
        %v2683 = vpop.f32.mrb[0].mxu0
        %v2684 = vpop.f32.mrb[0].mxu0
        %v2685 = vadd.f32 0.0, %v2684
        %v2686 = vpop.f32.mrb[0].mxu0
        %2687 = vmatprep.mubr.bf16.mxu0 0
        %2688 = vmatmul.mubr.bf16.gmra.mrb[0].mxu0 %v2602
        %v2689 = vpop.f32.mrb[0].mxu0
        %v2690 = vadd.f32 0.0, %v2689
        %v2691 = vpop.f32.mrb[0].mxu0
        %v2692 = vpop.f32.mrb[0].mxu0
        %v2693 = vadd.f32 0.0, %v2692
        %v2694 = vpop.f32.mrb[0].mxu0
        %2695 = vmatprep.mubr.bf16.mxu0 0
        %2696 = vmatmul.mubr.bf16.gmra.mrb[0].mxu0 %v2608
        %v2697 = vpop.f32.mrb[0].mxu0
        %v2698 = vadd.f32 0.0, %v2697
        %v2699 = vpop.f32.mrb[0].mxu0
        %v2700 = vpop.f32.mrb[0].mxu0
        %v2701 = vadd.f32 0.0, %v2700
        %v2702 = vpop.f32.mrb[0].mxu0
        %2703 = vmatprep.mubr.bf16.mxu0 0
        %2704 = vmatmul.mubr.bf16.gmra.mrb[0].mxu0 %v2614
        %v2705 = vpop.f32.mrb[0].mxu0
        %v2706 = vadd.f32 0.0, %v2705
        %v2707 = vpop.f32.mrb[0].mxu0
        %v2708 = vpop.f32.mrb[0].mxu0
        %v2709 = vadd.f32 0.0, %v2708
        %v2710 = vpop.f32.mrb[0].mxu0
        %2711 = vmatprep.mubr.bf16.mxu0 0
        %2712 = vmatmul.mubr.bf16.gmra.mrb[0].mxu0 %v2620
        %v2713 = vpop.f32.mrb[0].mxu0
        %v2714 = vadd.f32 0.0, %v2713
        %v2715 = vpop.f32.mrb[0].mxu0
        %v2716 = vpop.f32.mrb[0].mxu0
        %v2717 = vadd.f32 0.0, %v2716
        %v2718 = vpop.f32.mrb[0].mxu0
        %2719 = vmatprep.mubr.bf16.mxu0 0
        %2720 = vmatmul.mubr.bf16.gmra.mrb[0].mxu0 %v2626
        %v2721 = vpop.f32.mrb[0].mxu0
        %v2722 = vadd.f32 0.0, %v2721
        %v2723 = vpop.f32.mrb[0].mxu0
        %v2724 = vpop.f32.mrb[0].mxu0
        %v2725 = vadd.f32 0.0, %v2724
        %v2726 = vpop.f32.mrb[0].mxu0
        %2727 = vmatprep.mubr.bf16.mxu0 0
        %2728 = vmatmul.mubr.bf16.gmra.mrb[0].mxu0 %v2632
        %v2729 = vpop.f32.mrb[0].mxu0
        %v2730 = vadd.f32 0.0, %v2729
        %v2731 = vpop.f32.mrb[0].mxu0
        %v2732 = vpop.f32.mrb[0].mxu0
        %v2733 = vadd.f32 0.0, %v2732
        %v2734 = vpop.f32.mrb[0].mxu0
        %2735 = vmatprep.mubr.bf16.mxu0 0
        %2736 = vmatmul.mubr.bf16.gmra.mrb[0].mxu0 %v2638
        %v2737 = vpop.f32.mrb[0].mxu0
        %v2738 = vadd.f32 0.0, %v2737
        %v2739 = vpop.f32.mrb[0].mxu0
        %v2740 = vpop.f32.mrb[0].mxu0
        %v2741 = vadd.f32 0.0, %v2740
        %v2742 = vpop.f32.mrb[0].mxu0
        %2743 = vdwg.mxu0
        %v2744 = vsel %vm2646, %v2682, -1e+30
        %v2745 = vsel %vm2646, %v2685, -1e+30
        %v2746 = vsel %vm2646, %v2690, -1e+30
        %v2747 = vsel %vm2646, %v2693, -1e+30
        %v2748 = vsel %vm2646, %v2698, -1e+30
        %v2749 = vsel %vm2646, %v2701, -1e+30
        %v2750 = vsel %vm2646, %v2706, -1e+30
        %v2751 = vsel %vm2646, %v2709, -1e+30
        %v2752 = vsel %vm2646, %v2714, -1e+30
        %v2753 = vsel %vm2646, %v2717, -1e+30
        %v2754 = vsel %vm2646, %v2722, -1e+30
        %v2755 = vsel %vm2646, %v2725, -1e+30
        %v2756 = vsel %vm2646, %v2730, -1e+30
        %v2757 = vsel %vm2646, %v2733, -1e+30
        %v2758 = vsel %vm2646, %v2738, -1e+30
        %v2759 = vsel %vm2646, %v2741, -1e+30
        %2760 = vmax.xlane.f32.xlu0 %v2744
        %v2761 = vpop.xlane.xlu0 %2760
        %2762 = vmax.xlane.f32.xlu0 %v2745
        %v2763 = vpop.xlane.xlu0 %2762
        %2764 = vmax.xlane.f32.xlu0 %v2746
        %v2765 = vpop.xlane.xlu0 %2764
        %2766 = vmax.xlane.f32.xlu0 %v2747
        %v2767 = vpop.xlane.xlu0 %2766
        %2768 = vmax.xlane.f32.xlu0 %v2748
        %v2769 = vpop.xlane.xlu0 %2768
        %2770 = vmax.xlane.f32.xlu0 %v2749
        %v2771 = vpop.xlane.xlu0 %2770
        %2772 = vmax.xlane.f32.xlu0 %v2750
        %v2773 = vpop.xlane.xlu0 %2772
        %2774 = vmax.xlane.f32.xlu0 %v2751
        %v2775 = vpop.xlane.xlu0 %2774
        %2776 = vmax.xlane.f32.xlu0 %v2752
        %v2777 = vpop.xlane.xlu0 %2776
        %2778 = vmax.xlane.f32.xlu0 %v2753
        %v2779 = vpop.xlane.xlu0 %2778
        %2780 = vmax.xlane.f32.xlu0 %v2754
        %v2781 = vpop.xlane.xlu0 %2780
        %2782 = vmax.xlane.f32.xlu0 %v2755
        %v2783 = vpop.xlane.xlu0 %2782
        %2784 = vmax.xlane.f32.xlu0 %v2756
        %v2785 = vpop.xlane.xlu0 %2784
        %2786 = vmax.xlane.f32.xlu0 %v2757
        %v2787 = vpop.xlane.xlu0 %2786
        %2788 = vmax.xlane.f32.xlu0 %v2758
        %v2789 = vpop.xlane.xlu0 %2788
        %2790 = vmax.xlane.f32.xlu0 %v2759
        %v2791 = vpop.xlane.xlu0 %2790
        %v2792 = vsub.f32 %v2744, %v2761
        %v2793 = vsub.f32 %v2745, %v2763
        %v2794 = vsub.f32 %v2746, %v2765
        %v2795 = vsub.f32 %v2747, %v2767
        %v2796 = vsub.f32 %v2748, %v2769
        %v2797 = vsub.f32 %v2749, %v2771
        %v2798 = vsub.f32 %v2750, %v2773
        %v2799 = vsub.f32 %v2751, %v2775
        %v2800 = vsub.f32 %v2752, %v2777
        %v2801 = vsub.f32 %v2753, %v2779
        %v2802 = vsub.f32 %v2754, %v2781
        %v2803 = vsub.f32 %v2755, %v2783
        %v2804 = vsub.f32 %v2756, %v2785
        %v2805 = vsub.f32 %v2757, %v2787
        %v2806 = vsub.f32 %v2758, %v2789
        %v2807 = vsub.f32 %v2759, %v2791
        %v2808 = vmul.f32 %v2792, 1.442695
        %v2809 = vpow.pop %v2808
        %v2810 = vmul.f32 %v2793, 1.442695
        %v2811 = vpow.pop %v2810
        %v2812 = vmul.f32 %v2794, 1.442695
        %v2813 = vpow.pop %v2812
        %v2814 = vmul.f32 %v2795, 1.442695
        %v2815 = vpow.pop %v2814
        %v2816 = vmul.f32 %v2796, 1.442695
        %v2817 = vpow.pop %v2816
        %v2818 = vmul.f32 %v2797, 1.442695
        %v2819 = vpow.pop %v2818
        %v2820 = vmul.f32 %v2798, 1.442695
        %v2821 = vpow.pop %v2820
        %v2822 = vmul.f32 %v2799, 1.442695
        %v2823 = vpow.pop %v2822
        %v2824 = vmul.f32 %v2800, 1.442695
        %v2825 = vpow.pop %v2824
        %v2826 = vmul.f32 %v2801, 1.442695
        %v2827 = vpow.pop %v2826
        %v2828 = vmul.f32 %v2802, 1.442695
        %v2829 = vpow.pop %v2828
        %v2830 = vmul.f32 %v2803, 1.442695
        %v2831 = vpow.pop %v2830
        %v2832 = vmul.f32 %v2804, 1.442695
        %v2833 = vpow.pop %v2832
        %v2834 = vmul.f32 %v2805, 1.442695
        %v2835 = vpow.pop %v2834
        %v2836 = vmul.f32 %v2806, 1.442695
        %v2837 = vpow.pop %v2836
        %v2838 = vmul.f32 %v2807, 1.442695
        %v2839 = vpow.pop %v2838
        %2840 = vadd.xlane.f32.xlu0 %v2809
        %v2841 = vpop.xlane.xlu0 %2840
        %2842 = vadd.xlane.f32.xlu0 %v2811
        %v2843 = vpop.xlane.xlu0 %2842
        %2844 = vadd.xlane.f32.xlu0 %v2813
        %v2845 = vpop.xlane.xlu0 %2844
        %2846 = vadd.xlane.f32.xlu0 %v2815
        %v2847 = vpop.xlane.xlu0 %2846
        %2848 = vadd.xlane.f32.xlu0 %v2817
        %v2849 = vpop.xlane.xlu0 %2848
        %2850 = vadd.xlane.f32.xlu0 %v2819
        %v2851 = vpop.xlane.xlu0 %2850
        %2852 = vadd.xlane.f32.xlu0 %v2821
        %v2853 = vpop.xlane.xlu0 %2852
        %2854 = vadd.xlane.f32.xlu0 %v2823
        %v2855 = vpop.xlane.xlu0 %2854
        %2856 = vadd.xlane.f32.xlu0 %v2825
        %v2857 = vpop.xlane.xlu0 %2856
        %2858 = vadd.xlane.f32.xlu0 %v2827
        %v2859 = vpop.xlane.xlu0 %2858
        %2860 = vadd.xlane.f32.xlu0 %v2829
        %v2861 = vpop.xlane.xlu0 %2860
        %2862 = vadd.xlane.f32.xlu0 %v2831
        %v2863 = vpop.xlane.xlu0 %2862
        %2864 = vadd.xlane.f32.xlu0 %v2833
        %v2865 = vpop.xlane.xlu0 %2864
        %2866 = vadd.xlane.f32.xlu0 %v2835
        %v2867 = vpop.xlane.xlu0 %2866
        %2868 = vadd.xlane.f32.xlu0 %v2837
        %v2869 = vpop.xlane.xlu0 %2868
        %2870 = vadd.xlane.f32.xlu0 %v2839
        %v2871 = vpop.xlane.xlu0 %2870
        %v2872 = vrcp.pop %v2841
        %v2873 = vrcp.pop %v2843
        %v2874 = vrcp.pop %v2845
        %v2875 = vrcp.pop %v2847
        %v2876 = vrcp.pop %v2849
        %v2877 = vrcp.pop %v2851
        %v2878 = vrcp.pop %v2853
        %v2879 = vrcp.pop %v2855
        %v2880 = vrcp.pop %v2857
        %v2881 = vrcp.pop %v2859
        %v2882 = vrcp.pop %v2861
        %v2883 = vrcp.pop %v2863
        %v2884 = vrcp.pop %v2865
        %v2885 = vrcp.pop %v2867
        %v2886 = vrcp.pop %v2869
        %v2887 = vrcp.pop %v2871
        %v2888 = vmul.f32 %v2809, %v2872
        %v2889 = vmul.f32 %v2811, %v2873
        %v2890 = vmul.f32 %v2813, %v2874
        %v2891 = vmul.f32 %v2815, %v2875
        %v2892 = vmul.f32 %v2817, %v2876
        %v2893 = vmul.f32 %v2819, %v2877
        %v2894 = vmul.f32 %v2821, %v2878
        %v2895 = vmul.f32 %v2823, %v2879
        %v2896 = vmul.f32 %v2825, %v2880
        %v2897 = vmul.f32 %v2827, %v2881
        %v2898 = vmul.f32 %v2829, %v2882
        %v2899 = vmul.f32 %v2831, %v2883
        %v2900 = vmul.f32 %v2833, %v2884
        %v2901 = vmul.f32 %v2835, %v2885
        %v2902 = vmul.f32 %v2837, %v2886
        %v2903 = vmul.f32 %v2839, %v2887
        %v2904 = vpack.c.bf16 %v2889, %v2888
        %v2905 = vpack.c.bf16 %v2891, %v2890
        %v2906 = vpack.c.bf16 %v2893, %v2892
        %v2907 = vpack.c.bf16 %v2895, %v2894
        %v2908 = vpack.c.bf16 %v2897, %v2896
        %v2909 = vpack.c.bf16 %v2899, %v2898
        %v2910 = vpack.c.bf16 %v2901, %v2900
        %v2911 = vpack.c.bf16 %v2903, %v2902
        %2912 = vmatprep.subr.bf16.mxu0 0
        %2913 = vmatpush1.bf16.msra.mxu0 %v2600
        %2914 = vmatprep.subr.bf16.mxu0 0
        %2915 = vmatpush1.bf16.msra.mxu0 %v2606
        %2916 = vmatprep.subr.bf16.mxu0 0
        %2917 = vmatpush1.bf16.msra.mxu0 %v2612
        %2918 = vmatprep.subr.bf16.mxu0 0
        %2919 = vmatpush1.bf16.msra.mxu0 %v2618
        %2920 = vmatprep.subr.bf16.mxu0 0
        %2921 = vmatpush1.bf16.msra.mxu0 %v2624
        %2922 = vmatprep.subr.bf16.mxu0 0
        %2923 = vmatpush1.bf16.msra.mxu0 %v2630
        %2924 = vmatprep.subr.bf16.mxu0 0
        %2925 = vmatpush1.bf16.msra.mxu0 %v2636
        %2926 = vmatprep.subr.bf16.mxu0 0
        %2927 = vmatpush1.bf16.msra.mxu0 %v2642
        %2928 = vmatprep.subr.bf16.mxu0 0
        %2929 = vmatpush1.bf16.msra.mxu0 0
        %2930 = vmatprep.subr.bf16.mxu0 0
        %2931 = vmatpush1.bf16.msra.mxu0 0
        %2932 = vmatprep.subr.bf16.mxu0 0
        %2933 = vmatpush1.bf16.msra.mxu0 0
        %2934 = vmatprep.subr.bf16.mxu0 0
        %2935 = vmatpush1.bf16.msra.mxu0 0
        %2936 = vmatprep.subr.bf16.mxu0 0
        %2937 = vmatpush1.bf16.msra.mxu0 0
        %2938 = vmatprep.subr.bf16.mxu0 0
        %2939 = vmatpush1.bf16.msra.mxu0 0
        %2940 = vmatprep.subr.bf16.mxu0 0
        %2941 = vmatpush1.bf16.msra.mxu0 0
        %2942 = vmatprep.subr.bf16.mxu0 0
        %2943 = vmatpush1.bf16.msra.mxu0 0
        %2944 = vmatprep.mubr.bf16.mxu0 0
        %2945 = vmatmul.mubr.bf16.gmra.mrb[0].mxu0 %v2904
        %v2946 = vpop.f32.mrb[0].mxu0
        %v2947 = vadd.f32 0.0, %v2946
        %v2948 = vpop.f32.mrb[0].mxu0
        %v2949 = vpop.f32.mrb[0].mxu0
        %v2950 = vadd.f32 0.0, %v2949
        %v2951 = vpop.f32.mrb[0].mxu0
        %2952 = vmatprep.mubr.bf16.mxu0 0
        %2953 = vmatmul.mubr.bf16.gmra.mrb[0].mxu0 %v2905
        %v2954 = vpop.f32.mrb[0].mxu0
        %v2955 = vadd.f32 0.0, %v2954
        %v2956 = vpop.f32.mrb[0].mxu0
        %v2957 = vpop.f32.mrb[0].mxu0
        %v2958 = vadd.f32 0.0, %v2957
        %v2959 = vpop.f32.mrb[0].mxu0
        %2960 = vmatprep.mubr.bf16.mxu0 0
        %2961 = vmatmul.mubr.bf16.gmra.mrb[0].mxu0 %v2906
        %v2962 = vpop.f32.mrb[0].mxu0
        %v2963 = vadd.f32 0.0, %v2962
        %v2964 = vpop.f32.mrb[0].mxu0
        %v2965 = vpop.f32.mrb[0].mxu0
        %v2966 = vadd.f32 0.0, %v2965
        %v2967 = vpop.f32.mrb[0].mxu0
        %2968 = vmatprep.mubr.bf16.mxu0 0
        %2969 = vmatmul.mubr.bf16.gmra.mrb[0].mxu0 %v2907
        %v2970 = vpop.f32.mrb[0].mxu0
        %v2971 = vadd.f32 0.0, %v2970
        %v2972 = vpop.f32.mrb[0].mxu0
        %v2973 = vpop.f32.mrb[0].mxu0
        %v2974 = vadd.f32 0.0, %v2973
        %v2975 = vpop.f32.mrb[0].mxu0
        %2976 = vmatprep.mubr.bf16.mxu0 0
        %2977 = vmatmul.mubr.bf16.gmra.mrb[0].mxu0 %v2908
        %v2978 = vpop.f32.mrb[0].mxu0
        %v2979 = vadd.f32 0.0, %v2978
        %v2980 = vpop.f32.mrb[0].mxu0
        %v2981 = vpop.f32.mrb[0].mxu0
        %v2982 = vadd.f32 0.0, %v2981
        %v2983 = vpop.f32.mrb[0].mxu0
        %2984 = vmatprep.mubr.bf16.mxu0 0
        %2985 = vmatmul.mubr.bf16.gmra.mrb[0].mxu0 %v2909
        %v2986 = vpop.f32.mrb[0].mxu0
        %v2987 = vadd.f32 0.0, %v2986
        %v2988 = vpop.f32.mrb[0].mxu0
        %v2989 = vpop.f32.mrb[0].mxu0
        %v2990 = vadd.f32 0.0, %v2989
        %v2991 = vpop.f32.mrb[0].mxu0
        %2992 = vmatprep.mubr.bf16.mxu0 0
        %2993 = vmatmul.mubr.bf16.gmra.mrb[0].mxu0 %v2910
        %v2994 = vpop.f32.mrb[0].mxu0
        %v2995 = vadd.f32 0.0, %v2994
        %v2996 = vpop.f32.mrb[0].mxu0
        %v2997 = vpop.f32.mrb[0].mxu0
        %v2998 = vadd.f32 0.0, %v2997
        %v2999 = vpop.f32.mrb[0].mxu0
        %3000 = vmatprep.mubr.bf16.mxu0 0
        %3001 = vmatmul.mubr.bf16.gmra.mrb[0].mxu0 %v2911
        %v3002 = vpop.f32.mrb[0].mxu0
        %v3003 = vadd.f32 0.0, %v3002
        %v3004 = vpop.f32.mrb[0].mxu0
        %v3005 = vpop.f32.mrb[0].mxu0
        %v3006 = vadd.f32 0.0, %v3005
        %v3007 = vpop.f32.mrb[0].mxu0
        %3008 = vdwg.mxu0
        %v3009 = vpack.c.bf16 %v2950, %v2947
        %v3010 = vpack.c.bf16 %v2958, %v2955
        %v3011 = vpack.c.bf16 %v2966, %v2963
        %v3012 = vpack.c.bf16 %v2974, %v2971
        %v3013 = vpack.c.bf16 %v2982, %v2979
        %v3014 = vpack.c.bf16 %v2990, %v2987
        %v3015 = vpack.c.bf16 %v2998, %v2995
        %v3016 = vpack.c.bf16 %v3006, %v3003
        %3017 = vst [vmem:[#allocation3] sm:$0xff] %v3009
        %3018 = vst [vmem:[#allocation3 + $0x10] sm:$0xff] %v3010
        %3019 = vst [vmem:[#allocation3 + $0x20] sm:$0xff] %v3011
        %3020 = vst [vmem:[#allocation3 + $0x30] sm:$0xff] %v3012
        %3021 = vst [vmem:[#allocation3 + $0x40] sm:$0xff] %v3013
        %3022 = vst [vmem:[#allocation3 + $0x50] sm:$0xff] %v3014
        %3023 = vst [vmem:[#allocation3 + $0x60] sm:$0xff] %v3015
        %3024 = vst [vmem:[#allocation3 + $0x70] sm:$0xff] %v3016
        %3025 = vmatprep.subr.bf16.mxu0 0
        %3026 = vmatpush1.bf16.xpose.msra.mxu0 %v2599
        %3027 = vmatprep.subr.bf16.mxu0 0
        %3028 = vmatpush1.bf16.xpose.msra.mxu0 %v2605
        %3029 = vmatprep.subr.bf16.mxu0 0
        %3030 = vmatpush1.bf16.xpose.msra.mxu0 %v2611
        %3031 = vmatprep.subr.bf16.mxu0 0
        %3032 = vmatpush1.bf16.xpose.msra.mxu0 %v2617
        %3033 = vmatprep.subr.bf16.mxu0 0
        %3034 = vmatpush1.bf16.xpose.msra.mxu0 %v2623
        %3035 = vmatprep.subr.bf16.mxu0 0
        %3036 = vmatpush1.bf16.xpose.msra.mxu0 %v2629
        %3037 = vmatprep.subr.bf16.mxu0 0
        %3038 = vmatpush1.bf16.xpose.msra.mxu0 %v2635
        %3039 = vmatprep.subr.bf16.mxu0 0
        %3040 = vmatpush1.bf16.xpose.msra.mxu0 %v2641
        %3041 = vmatprep.subr.bf16.mxu0 0
        %3042 = vmatpush1.bf16.xpose.msra.mxu0 0
        %3043 = vmatprep.subr.bf16.mxu0 0
        %3044 = vmatpush1.bf16.xpose.msra.mxu0 0
        %3045 = vmatprep.subr.bf16.mxu0 0
        %3046 = vmatpush1.bf16.xpose.msra.mxu0 0
        %3047 = vmatprep.subr.bf16.mxu0 0
        %3048 = vmatpush1.bf16.xpose.msra.mxu0 0
        %3049 = vmatprep.subr.bf16.mxu0 0
        %3050 = vmatpush1.bf16.xpose.msra.mxu0 0
        %3051 = vmatprep.subr.bf16.mxu0 0
        %3052 = vmatpush1.bf16.xpose.msra.mxu0 0
        %3053 = vmatprep.subr.bf16.mxu0 0
        %3054 = vmatpush1.bf16.xpose.msra.mxu0 0
        %3055 = vmatprep.subr.bf16.mxu0 0
        %3056 = vmatpush1.bf16.xpose.msra.mxu0 0
        %3057 = vmatprep.mubr.bf16.mxu0 0
        %3058 = vmatmul.mubr.bf16.gmra.mrb[0].mxu0 %v2597
        %v3059 = vpop.f32.mrb[0].mxu0
        %v3060 = vadd.f32 0.0, %v3059
        %v3061 = vpop.f32.mrb[0].mxu0
        %v3062 = vpop.f32.mrb[0].mxu0
        %v3063 = vadd.f32 0.0, %v3062
        %v3064 = vpop.f32.mrb[0].mxu0
        %3065 = vmatprep.mubr.bf16.mxu0 0
        %3066 = vmatmul.mubr.bf16.gmra.mrb[0].mxu0 %v2603
        %v3067 = vpop.f32.mrb[0].mxu0
        %v3068 = vadd.f32 0.0, %v3067
        %v3069 = vpop.f32.mrb[0].mxu0
        %v3070 = vpop.f32.mrb[0].mxu0
        %v3071 = vadd.f32 0.0, %v3070
        %v3072 = vpop.f32.mrb[0].mxu0
        %3073 = vmatprep.mubr.bf16.mxu0 0
        %3074 = vmatmul.mubr.bf16.gmra.mrb[0].mxu0 %v2609
        %v3075 = vpop.f32.mrb[0].mxu0
        %v3076 = vadd.f32 0.0, %v3075
        %v3077 = vpop.f32.mrb[0].mxu0
        %v3078 = vpop.f32.mrb[0].mxu0
        %v3079 = vadd.f32 0.0, %v3078
        %v3080 = vpop.f32.mrb[0].mxu0
        %3081 = vmatprep.mubr.bf16.mxu0 0
        %3082 = vmatmul.mubr.bf16.gmra.mrb[0].mxu0 %v2615
        %v3083 = vpop.f32.mrb[0].mxu0
        %v3084 = vadd.f32 0.0, %v3083
        %v3085 = vpop.f32.mrb[0].mxu0
        %v3086 = vpop.f32.mrb[0].mxu0
        %v3087 = vadd.f32 0.0, %v3086
        %v3088 = vpop.f32.mrb[0].mxu0
        %3089 = vmatprep.mubr.bf16.mxu0 0
        %3090 = vmatmul.mubr.bf16.gmra.mrb[0].mxu0 %v2621
        %v3091 = vpop.f32.mrb[0].mxu0
        %v3092 = vadd.f32 0.0, %v3091
        %v3093 = vpop.f32.mrb[0].mxu0
        %v3094 = vpop.f32.mrb[0].mxu0
        %v3095 = vadd.f32 0.0, %v3094
        %v3096 = vpop.f32.mrb[0].mxu0
        %3097 = vmatprep.mubr.bf16.mxu0 0
        %3098 = vmatmul.mubr.bf16.gmra.mrb[0].mxu0 %v2627
        %v3099 = vpop.f32.mrb[0].mxu0
        %v3100 = vadd.f32 0.0, %v3099
        %v3101 = vpop.f32.mrb[0].mxu0
        %v3102 = vpop.f32.mrb[0].mxu0
        %v3103 = vadd.f32 0.0, %v3102
        %v3104 = vpop.f32.mrb[0].mxu0
        %3105 = vmatprep.mubr.bf16.mxu0 0
        %3106 = vmatmul.mubr.bf16.gmra.mrb[0].mxu0 %v2633
        %v3107 = vpop.f32.mrb[0].mxu0
        %v3108 = vadd.f32 0.0, %v3107
        %v3109 = vpop.f32.mrb[0].mxu0
        %v3110 = vpop.f32.mrb[0].mxu0
        %v3111 = vadd.f32 0.0, %v3110
        %v3112 = vpop.f32.mrb[0].mxu0
        %3113 = vmatprep.mubr.bf16.mxu0 0
        %3114 = vmatmul.mubr.bf16.gmra.mrb[0].mxu0 %v2639
        %v3115 = vpop.f32.mrb[0].mxu0
        %v3116 = vadd.f32 0.0, %v3115
        %v3117 = vpop.f32.mrb[0].mxu0
        %v3118 = vpop.f32.mrb[0].mxu0
        %v3119 = vadd.f32 0.0, %v3118
        %v3120 = vpop.f32.mrb[0].mxu0
        %3121 = vdwg.mxu0
        %v3122 = vsel %vm2646, %v3060, -1e+30
        %v3123 = vsel %vm2646, %v3063, -1e+30
        %v3124 = vsel %vm2646, %v3068, -1e+30
        %v3125 = vsel %vm2646, %v3071, -1e+30
        %v3126 = vsel %vm2646, %v3076, -1e+30
        %v3127 = vsel %vm2646, %v3079, -1e+30
        %v3128 = vsel %vm2646, %v3084, -1e+30
        %v3129 = vsel %vm2646, %v3087, -1e+30
        %v3130 = vsel %vm2646, %v3092, -1e+30
        %v3131 = vsel %vm2646, %v3095, -1e+30
        %v3132 = vsel %vm2646, %v3100, -1e+30
        %v3133 = vsel %vm2646, %v3103, -1e+30
        %v3134 = vsel %vm2646, %v3108, -1e+30
        %v3135 = vsel %vm2646, %v3111, -1e+30
        %v3136 = vsel %vm2646, %v3116, -1e+30
        %v3137 = vsel %vm2646, %v3119, -1e+30
        %3138 = vmax.xlane.f32.xlu0 %v3122
        %v3139 = vpop.xlane.xlu0 %3138
        %3140 = vmax.xlane.f32.xlu0 %v3123
        %v3141 = vpop.xlane.xlu0 %3140
        %3142 = vmax.xlane.f32.xlu0 %v3124
        %v3143 = vpop.xlane.xlu0 %3142
        %3144 = vmax.xlane.f32.xlu0 %v3125
        %v3145 = vpop.xlane.xlu0 %3144
        %3146 = vmax.xlane.f32.xlu0 %v3126
        %v3147 = vpop.xlane.xlu0 %3146
        %3148 = vmax.xlane.f32.xlu0 %v3127
        %v3149 = vpop.xlane.xlu0 %3148
        %3150 = vmax.xlane.f32.xlu0 %v3128
        %v3151 = vpop.xlane.xlu0 %3150
        %3152 = vmax.xlane.f32.xlu0 %v3129
        %v3153 = vpop.xlane.xlu0 %3152
        %3154 = vmax.xlane.f32.xlu0 %v3130
        %v3155 = vpop.xlane.xlu0 %3154
        %3156 = vmax.xlane.f32.xlu0 %v3131
        %v3157 = vpop.xlane.xlu0 %3156
        %3158 = vmax.xlane.f32.xlu0 %v3132
        %v3159 = vpop.xlane.xlu0 %3158
        %3160 = vmax.xlane.f32.xlu0 %v3133
        %v3161 = vpop.xlane.xlu0 %3160
        %3162 = vmax.xlane.f32.xlu0 %v3134
        %v3163 = vpop.xlane.xlu0 %3162
        %3164 = vmax.xlane.f32.xlu0 %v3135
        %v3165 = vpop.xlane.xlu0 %3164
        %3166 = vmax.xlane.f32.xlu0 %v3136
        %v3167 = vpop.xlane.xlu0 %3166
        %3168 = vmax.xlane.f32.xlu0 %v3137
        %v3169 = vpop.xlane.xlu0 %3168
        %v3170 = vsub.f32 %v3122, %v3139
        %v3171 = vsub.f32 %v3123, %v3141
        %v3172 = vsub.f32 %v3124, %v3143
        %v3173 = vsub.f32 %v3125, %v3145
        %v3174 = vsub.f32 %v3126, %v3147
        %v3175 = vsub.f32 %v3127, %v3149
        %v3176 = vsub.f32 %v3128, %v3151
        %v3177 = vsub.f32 %v3129, %v3153
        %v3178 = vsub.f32 %v3130, %v3155
        %v3179 = vsub.f32 %v3131, %v3157
        %v3180 = vsub.f32 %v3132, %v3159
        %v3181 = vsub.f32 %v3133, %v3161
        %v3182 = vsub.f32 %v3134, %v3163
        %v3183 = vsub.f32 %v3135, %v3165
        %v3184 = vsub.f32 %v3136, %v3167
        %v3185 = vsub.f32 %v3137, %v3169
        %v3186 = vmul.f32 %v3170, 1.442695
        %v3187 = vpow.pop %v3186
        %v3188 = vmul.f32 %v3171, 1.442695
        %v3189 = vpow.pop %v3188
        %v3190 = vmul.f32 %v3172, 1.442695
        %v3191 = vpow.pop %v3190
        %v3192 = vmul.f32 %v3173, 1.442695
        %v3193 = vpow.pop %v3192
        %v3194 = vmul.f32 %v3174, 1.442695
        %v3195 = vpow.pop %v3194
        %v3196 = vmul.f32 %v3175, 1.442695
        %v3197 = vpow.pop %v3196
        %v3198 = vmul.f32 %v3176, 1.442695
        %v3199 = vpow.pop %v3198
        %v3200 = vmul.f32 %v3177, 1.442695
        %v3201 = vpow.pop %v3200
        %v3202 = vmul.f32 %v3178, 1.442695
        %v3203 = vpow.pop %v3202
        %v3204 = vmul.f32 %v3179, 1.442695
        %v3205 = vpow.pop %v3204
        %v3206 = vmul.f32 %v3180, 1.442695
        %v3207 = vpow.pop %v3206
        %v3208 = vmul.f32 %v3181, 1.442695
        %v3209 = vpow.pop %v3208
        %v3210 = vmul.f32 %v3182, 1.442695
        %v3211 = vpow.pop %v3210
        %v3212 = vmul.f32 %v3183, 1.442695
        %v3213 = vpow.pop %v3212
        %v3214 = vmul.f32 %v3184, 1.442695
        %v3215 = vpow.pop %v3214
        %v3216 = vmul.f32 %v3185, 1.442695
        %v3217 = vpow.pop %v3216
        %3218 = vadd.xlane.f32.xlu0 %v3187
        %v3219 = vpop.xlane.xlu0 %3218
        %3220 = vadd.xlane.f32.xlu0 %v3189
        %v3221 = vpop.xlane.xlu0 %3220
        %3222 = vadd.xlane.f32.xlu0 %v3191
        %v3223 = vpop.xlane.xlu0 %3222
        %3224 = vadd.xlane.f32.xlu0 %v3193
        %v3225 = vpop.xlane.xlu0 %3224
        %3226 = vadd.xlane.f32.xlu0 %v3195
        %v3227 = vpop.xlane.xlu0 %3226
        %3228 = vadd.xlane.f32.xlu0 %v3197
        %v3229 = vpop.xlane.xlu0 %3228
        %3230 = vadd.xlane.f32.xlu0 %v3199
        %v3231 = vpop.xlane.xlu0 %3230
        %3232 = vadd.xlane.f32.xlu0 %v3201
        %v3233 = vpop.xlane.xlu0 %3232
        %3234 = vadd.xlane.f32.xlu0 %v3203
        %v3235 = vpop.xlane.xlu0 %3234
        %3236 = vadd.xlane.f32.xlu0 %v3205
        %v3237 = vpop.xlane.xlu0 %3236
        %3238 = vadd.xlane.f32.xlu0 %v3207
        %v3239 = vpop.xlane.xlu0 %3238
        %3240 = vadd.xlane.f32.xlu0 %v3209
        %v3241 = vpop.xlane.xlu0 %3240
        %3242 = vadd.xlane.f32.xlu0 %v3211
        %v3243 = vpop.xlane.xlu0 %3242
        %3244 = vadd.xlane.f32.xlu0 %v3213
        %v3245 = vpop.xlane.xlu0 %3244
        %3246 = vadd.xlane.f32.xlu0 %v3215
        %v3247 = vpop.xlane.xlu0 %3246
        %3248 = vadd.xlane.f32.xlu0 %v3217
        %v3249 = vpop.xlane.xlu0 %3248
        %v3250 = vrcp.pop %v3219
        %v3251 = vrcp.pop %v3221
        %v3252 = vrcp.pop %v3223
        %v3253 = vrcp.pop %v3225
        %v3254 = vrcp.pop %v3227
        %v3255 = vrcp.pop %v3229
        %v3256 = vrcp.pop %v3231
        %v3257 = vrcp.pop %v3233
        %v3258 = vrcp.pop %v3235
        %v3259 = vrcp.pop %v3237
        %v3260 = vrcp.pop %v3239
        %v3261 = vrcp.pop %v3241
        %v3262 = vrcp.pop %v3243
        %v3263 = vrcp.pop %v3245
        %v3264 = vrcp.pop %v3247
        %v3265 = vrcp.pop %v3249
        %v3266 = vmul.f32 %v3187, %v3250
        %v3267 = vmul.f32 %v3189, %v3251
        %v3268 = vmul.f32 %v3191, %v3252
        %v3269 = vmul.f32 %v3193, %v3253
        %v3270 = vmul.f32 %v3195, %v3254
        %v3271 = vmul.f32 %v3197, %v3255
        %v3272 = vmul.f32 %v3199, %v3256
        %v3273 = vmul.f32 %v3201, %v3257
        %v3274 = vmul.f32 %v3203, %v3258
        %v3275 = vmul.f32 %v3205, %v3259
        %v3276 = vmul.f32 %v3207, %v3260
        %v3277 = vmul.f32 %v3209, %v3261
        %v3278 = vmul.f32 %v3211, %v3262
        %v3279 = vmul.f32 %v3213, %v3263
        %v3280 = vmul.f32 %v3215, %v3264
        %v3281 = vmul.f32 %v3217, %v3265
        %v3282 = vpack.c.bf16 %v3267, %v3266
        %v3283 = vpack.c.bf16 %v3269, %v3268
        %v3284 = vpack.c.bf16 %v3271, %v3270
        %v3285 = vpack.c.bf16 %v3273, %v3272
        %v3286 = vpack.c.bf16 %v3275, %v3274
        %v3287 = vpack.c.bf16 %v3277, %v3276
        %v3288 = vpack.c.bf16 %v3279, %v3278
        %v3289 = vpack.c.bf16 %v3281, %v3280
        %3290 = vmatprep.subr.bf16.mxu0 0
        %3291 = vmatpush1.bf16.msra.mxu0 %v2601
        %3292 = vmatprep.subr.bf16.mxu0 0
        %3293 = vmatpush1.bf16.msra.mxu0 %v2607
        %3294 = vmatprep.subr.bf16.mxu0 0
        %3295 = vmatpush1.bf16.msra.mxu0 %v2613
        %3296 = vmatprep.subr.bf16.mxu0 0
        %3297 = vmatpush1.bf16.msra.mxu0 %v2619
        %3298 = vmatprep.subr.bf16.mxu0 0
        %3299 = vmatpush1.bf16.msra.mxu0 %v2625
        %3300 = vmatprep.subr.bf16.mxu0 0
        %3301 = vmatpush1.bf16.msra.mxu0 %v2631
        %3302 = vmatprep.subr.bf16.mxu0 0
        %3303 = vmatpush1.bf16.msra.mxu0 %v2637
        %3304 = vmatprep.subr.bf16.mxu0 0
        %3305 = vmatpush1.bf16.msra.mxu0 %v2643
        %3306 = vmatprep.subr.bf16.mxu0 0
        %3307 = vmatpush1.bf16.msra.mxu0 0
        %3308 = vmatprep.subr.bf16.mxu0 0
        %3309 = vmatpush1.bf16.msra.mxu0 0
        %3310 = vmatprep.subr.bf16.mxu0 0
        %3311 = vmatpush1.bf16.msra.mxu0 0
        %3312 = vmatprep.subr.bf16.mxu0 0
        %3313 = vmatpush1.bf16.msra.mxu0 0
        %3314 = vmatprep.subr.bf16.mxu0 0
        %3315 = vmatpush1.bf16.msra.mxu0 0
        %3316 = vmatprep.subr.bf16.mxu0 0
        %3317 = vmatpush1.bf16.msra.mxu0 0
        %3318 = vmatprep.subr.bf16.mxu0 0
        %3319 = vmatpush1.bf16.msra.mxu0 0
        %3320 = vmatprep.subr.bf16.mxu0 0
        %3321 = vmatpush1.bf16.msra.mxu0 0
        %3322 = vmatprep.mubr.bf16.mxu0 0
        %3323 = vmatmul.mubr.bf16.gmra.mrb[0].mxu0 %v3282
        %v3324 = vpop.f32.mrb[0].mxu0
        %v3325 = vadd.f32 0.0, %v3324
        %v3326 = vpop.f32.mrb[0].mxu0
        %v3327 = vpop.f32.mrb[0].mxu0
        %v3328 = vadd.f32 0.0, %v3327
        %v3329 = vpop.f32.mrb[0].mxu0
        %3330 = vmatprep.mubr.bf16.mxu0 0
        %3331 = vmatmul.mubr.bf16.gmra.mrb[0].mxu0 %v3283
        %v3332 = vpop.f32.mrb[0].mxu0
        %v3333 = vadd.f32 0.0, %v3332
        %v3334 = vpop.f32.mrb[0].mxu0
        %v3335 = vpop.f32.mrb[0].mxu0
        %v3336 = vadd.f32 0.0, %v3335
        %v3337 = vpop.f32.mrb[0].mxu0
        %3338 = vmatprep.mubr.bf16.mxu0 0
        %3339 = vmatmul.mubr.bf16.gmra.mrb[0].mxu0 %v3284
        %v3340 = vpop.f32.mrb[0].mxu0
        %v3341 = vadd.f32 0.0, %v3340
        %v3342 = vpop.f32.mrb[0].mxu0
        %v3343 = vpop.f32.mrb[0].mxu0
        %v3344 = vadd.f32 0.0, %v3343
        %v3345 = vpop.f32.mrb[0].mxu0
        %3346 = vmatprep.mubr.bf16.mxu0 0
        %3347 = vmatmul.mubr.bf16.gmra.mrb[0].mxu0 %v3285
        %v3348 = vpop.f32.mrb[0].mxu0
        %v3349 = vadd.f32 0.0, %v3348
        %v3350 = vpop.f32.mrb[0].mxu0
        %v3351 = vpop.f32.mrb[0].mxu0
        %v3352 = vadd.f32 0.0, %v3351
        %v3353 = vpop.f32.mrb[0].mxu0
        %3354 = vmatprep.mubr.bf16.mxu0 0
        %3355 = vmatmul.mubr.bf16.gmra.mrb[0].mxu0 %v3286
        %v3356 = vpop.f32.mrb[0].mxu0
        %v3357 = vadd.f32 0.0, %v3356
        %v3358 = vpop.f32.mrb[0].mxu0
        %v3359 = vpop.f32.mrb[0].mxu0
        %v3360 = vadd.f32 0.0, %v3359
        %v3361 = vpop.f32.mrb[0].mxu0
        %3362 = vmatprep.mubr.bf16.mxu0 0
        %3363 = vmatmul.mubr.bf16.gmra.mrb[0].mxu0 %v3287
        %v3364 = vpop.f32.mrb[0].mxu0
        %v3365 = vadd.f32 0.0, %v3364
        %v3366 = vpop.f32.mrb[0].mxu0
        %v3367 = vpop.f32.mrb[0].mxu0
        %v3368 = vadd.f32 0.0, %v3367
        %v3369 = vpop.f32.mrb[0].mxu0
        %3370 = vmatprep.mubr.bf16.mxu0 0
        %3371 = vmatmul.mubr.bf16.gmra.mrb[0].mxu0 %v3288
        %v3372 = vpop.f32.mrb[0].mxu0
        %v3373 = vadd.f32 0.0, %v3372
        %v3374 = vpop.f32.mrb[0].mxu0
        %v3375 = vpop.f32.mrb[0].mxu0
        %v3376 = vadd.f32 0.0, %v3375
        %v3377 = vpop.f32.mrb[0].mxu0
        %3378 = vmatprep.mubr.bf16.mxu0 0
        %3379 = vmatmul.mubr.bf16.gmra.mrb[0].mxu0 %v3289
        %v3380 = vpop.f32.mrb[0].mxu0
        %v3381 = vadd.f32 0.0, %v3380
        %v3382 = vpop.f32.mrb[0].mxu0
        %v3383 = vpop.f32.mrb[0].mxu0
        %v3384 = vadd.f32 0.0, %v3383
        %v3385 = vpop.f32.mrb[0].mxu0
        %3386 = vdwg.mxu0
        %v3387 = vpack.c.bf16 %v3328, %v3325
        %v3388 = vpack.c.bf16 %v3336, %v3333
        %v3389 = vpack.c.bf16 %v3344, %v3341
        %v3390 = vpack.c.bf16 %v3352, %v3349
        %v3391 = vpack.c.bf16 %v3360, %v3357
        %v3392 = vpack.c.bf16 %v3368, %v3365
        %v3393 = vpack.c.bf16 %v3376, %v3373
        %v3394 = vpack.c.bf16 %v3384, %v3381
        %3395 = vst [vmem:[#allocation3 + $0x8] sm:$0xff] %v3387
        %3396 = vst [vmem:[#allocation3 + $0x18] sm:$0xff] %v3388
        %3397 = vst [vmem:[#allocation3 + $0x28] sm:$0xff] %v3389
        %3398 = vst [vmem:[#allocation3 + $0x38] sm:$0xff] %v3390
        %3399 = vst [vmem:[#allocation3 + $0x48] sm:$0xff] %v3391
        %3400 = vst [vmem:[#allocation3 + $0x58] sm:$0xff] %v3392
        %3401 = vst [vmem:[#allocation3 + $0x68] sm:$0xff] %v3393
        %3402 = vst [vmem:[#allocation3 + $0x78] sm:$0xff] %v3394
        %v3403 = vld [vmem:[#allocation3] sm:$0xff]
        %v3404 = vld [vmem:[#allocation3 + $0x8] sm:$0xff]
        %v3405 = vld [vmem:[#allocation3 + $0x10] sm:$0xff]
        %v3406 = vld [vmem:[#allocation3 + $0x18] sm:$0xff]
        %v3407 = vld [vmem:[#allocation3 + $0x20] sm:$0xff]
        %v3408 = vld [vmem:[#allocation3 + $0x28] sm:$0xff]
        %v3409 = vld [vmem:[#allocation3 + $0x30] sm:$0xff]
        %v3410 = vld [vmem:[#allocation3 + $0x38] sm:$0xff]
        %v3411 = vld [vmem:[#allocation3 + $0x40] sm:$0xff]
        %v3412 = vld [vmem:[#allocation3 + $0x48] sm:$0xff]
        %v3413 = vld [vmem:[#allocation3 + $0x50] sm:$0xff]
        %v3414 = vld [vmem:[#allocation3 + $0x58] sm:$0xff]
        %v3415 = vld [vmem:[#allocation3 + $0x60] sm:$0xff]
        %v3416 = vld [vmem:[#allocation3 + $0x68] sm:$0xff]
        %v3417 = vld [vmem:[#allocation3 + $0x70] sm:$0xff]
        %v3418 = vld [vmem:[#allocation3 + $0x78] sm:$0xff]
        %v3419 = vld [vmem:[%s943] sm:$0xff]
        %v3420 = vld [vmem:[%s943 + $0x8] sm:$0xff]
        %v3421 = vld [vmem:[%s943 + $0x10] sm:$0xff]
        %v3422 = vld [vmem:[%s943 + $0x18] sm:$0xff]
        %v3423 = vld [vmem:[%s943 + $0x20] sm:$0xff]
        %v3424 = vld [vmem:[%s943 + $0x28] sm:$0xff]
        %v3425 = vld [vmem:[%s943 + $0x30] sm:$0xff]
        %v3426 = vld [vmem:[%s943 + $0x38] sm:$0xff]
        %v3427 = vld [vmem:[%s943 + $0x40] sm:$0xff]
        %v3428 = vld [vmem:[%s943 + $0x48] sm:$0xff]
        %v3429 = vld [vmem:[%s943 + $0x50] sm:$0xff]
        %v3430 = vld [vmem:[%s943 + $0x58] sm:$0xff]
        %v3431 = vld [vmem:[%s943 + $0x60] sm:$0xff]
        %v3432 = vld [vmem:[%s943 + $0x68] sm:$0xff]
        %v3433 = vld [vmem:[%s943 + $0x70] sm:$0xff]
        %v3434 = vld [vmem:[%s943 + $0x78] sm:$0xff]
        %v3435 = vld [vmem:[%s943 + $0x80] sm:$0xff]
        %v3436 = vld [vmem:[%s943 + $0x88] sm:$0xff]
        %v3437 = vld [vmem:[%s943 + $0x90] sm:$0xff]
        %v3438 = vld [vmem:[%s943 + $0x98] sm:$0xff]
        %v3439 = vld [vmem:[%s943 + $0xa0] sm:$0xff]
        %v3440 = vld [vmem:[%s943 + $0xa8] sm:$0xff]
        %v3441 = vld [vmem:[%s943 + $0xb0] sm:$0xff]
        %v3442 = vld [vmem:[%s943 + $0xb8] sm:$0xff]
        %v3443 = vld [vmem:[%s943 + $0xc0] sm:$0xff]
        %v3444 = vld [vmem:[%s943 + $0xc8] sm:$0xff]
        %v3445 = vld [vmem:[%s943 + $0xd0] sm:$0xff]
        %v3446 = vld [vmem:[%s943 + $0xd8] sm:$0xff]
        %v3447 = vld [vmem:[%s943 + $0xe0] sm:$0xff]
        %v3448 = vld [vmem:[%s943 + $0xe8] sm:$0xff]
        %v3449 = vld [vmem:[%s943 + $0xf0] sm:$0xff]
        %v3450 = vld [vmem:[%s943 + $0xf8] sm:$0xff]
        %v3451 = vld [vmem:[%s952] sm:$0x3]
        %v3453 = vlaneseq
        %v3454 = vshrl.u32 %v3453, 7
        %v3455 = vsub.s32 0, %v3454
        %v3456 = vrot.slane %v3451, %v3455
        %v3457 = vlaneseq
        %v3458 = vshrl.u32 %v3457, 7
        %v3459 = vsub.s32 1, %v3458
        %v3460 = vrot.slane %v3451, %v3459
        %v3495 = vunpack.c.l.b16 %v3419
        %v3496 = vunpack.c.h.b16 %v3419
        %v3497 = vunpack.c.l.b16 %v3420
        %v3498 = vunpack.c.h.b16 %v3420
        %v3499 = vunpack.c.l.b16 %v3421
        %v3500 = vunpack.c.h.b16 %v3421
        %v3501 = vunpack.c.l.b16 %v3422
        %v3502 = vunpack.c.h.b16 %v3422
        %v3503 = vunpack.c.l.b16 %v3423
        %v3504 = vunpack.c.h.b16 %v3423
        %v3505 = vunpack.c.l.b16 %v3424
        %v3506 = vunpack.c.h.b16 %v3424
        %v3507 = vunpack.c.l.b16 %v3425
        %v3508 = vunpack.c.h.b16 %v3425
        %v3509 = vunpack.c.l.b16 %v3426
        %v3510 = vunpack.c.h.b16 %v3426
        %v3511 = vunpack.c.l.b16 %v3427
        %v3512 = vunpack.c.h.b16 %v3427
        %v3513 = vunpack.c.l.b16 %v3428
        %v3514 = vunpack.c.h.b16 %v3428
        %v3515 = vunpack.c.l.b16 %v3429
        %v3516 = vunpack.c.h.b16 %v3429
        %v3517 = vunpack.c.l.b16 %v3430
        %v3518 = vunpack.c.h.b16 %v3430
        %v3519 = vunpack.c.l.b16 %v3431
        %v3520 = vunpack.c.h.b16 %v3431
        %v3521 = vunpack.c.l.b16 %v3432
        %v3522 = vunpack.c.h.b16 %v3432
        %v3523 = vunpack.c.l.b16 %v3433
        %v3524 = vunpack.c.h.b16 %v3433
        %v3525 = vunpack.c.l.b16 %v3434
        %v3526 = vunpack.c.h.b16 %v3434
        %v3527 = vunpack.c.l.b16 %v3435
        %v3528 = vunpack.c.h.b16 %v3435
        %v3529 = vunpack.c.l.b16 %v3436
        %v3530 = vunpack.c.h.b16 %v3436
        %v3531 = vunpack.c.l.b16 %v3437
        %v3532 = vunpack.c.h.b16 %v3437
        %v3533 = vunpack.c.l.b16 %v3438
        %v3534 = vunpack.c.h.b16 %v3438
        %v3535 = vunpack.c.l.b16 %v3439
        %v3536 = vunpack.c.h.b16 %v3439
        %v3537 = vunpack.c.l.b16 %v3440
        %v3538 = vunpack.c.h.b16 %v3440
        %v3539 = vunpack.c.l.b16 %v3441
        %v3540 = vunpack.c.h.b16 %v3441
        %v3541 = vunpack.c.l.b16 %v3442
        %v3542 = vunpack.c.h.b16 %v3442
        %v3543 = vunpack.c.l.b16 %v3443
        %v3544 = vunpack.c.h.b16 %v3443
        %v3545 = vunpack.c.l.b16 %v3444
        %v3546 = vunpack.c.h.b16 %v3444
        %v3547 = vunpack.c.l.b16 %v3445
        %v3548 = vunpack.c.h.b16 %v3445
        %v3549 = vunpack.c.l.b16 %v3446
        %v3550 = vunpack.c.h.b16 %v3446
        %v3551 = vunpack.c.l.b16 %v3447
        %v3552 = vunpack.c.h.b16 %v3447
        %v3553 = vunpack.c.l.b16 %v3448
        %v3554 = vunpack.c.h.b16 %v3448
        %v3555 = vunpack.c.l.b16 %v3449
        %v3556 = vunpack.c.h.b16 %v3449
        %v3557 = vunpack.c.l.b16 %v3450
        %v3558 = vunpack.c.h.b16 %v3450
        %v3559 = vpack.c.b16 %v3497, %v3495
        %v3560 = vpack.c.b16 %v3498, %v3496
        %v3561 = vpack.c.b16 %v3501, %v3499
        %v3562 = vpack.c.b16 %v3502, %v3500
        %v3563 = vpack.c.b16 %v3505, %v3503
        %v3564 = vpack.c.b16 %v3506, %v3504
        %v3565 = vpack.c.b16 %v3509, %v3507
        %v3566 = vpack.c.b16 %v3510, %v3508
        %v3567 = vpack.c.b16 %v3513, %v3511
        %v3568 = vpack.c.b16 %v3514, %v3512
        %v3569 = vpack.c.b16 %v3517, %v3515
        %v3570 = vpack.c.b16 %v3518, %v3516
        %v3571 = vpack.c.b16 %v3521, %v3519
        %v3572 = vpack.c.b16 %v3522, %v3520
        %v3573 = vpack.c.b16 %v3525, %v3523
        %v3574 = vpack.c.b16 %v3526, %v3524
        %v3575 = vpack.c.b16 %v3529, %v3527
        %v3576 = vpack.c.b16 %v3530, %v3528
        %v3577 = vpack.c.b16 %v3533, %v3531
        %v3578 = vpack.c.b16 %v3534, %v3532
        %v3579 = vpack.c.b16 %v3537, %v3535
        %v3580 = vpack.c.b16 %v3538, %v3536
        %v3581 = vpack.c.b16 %v3541, %v3539
        %v3582 = vpack.c.b16 %v3542, %v3540
        %v3583 = vpack.c.b16 %v3545, %v3543
        %v3584 = vpack.c.b16 %v3546, %v3544
        %v3585 = vpack.c.b16 %v3549, %v3547
        %v3586 = vpack.c.b16 %v3550, %v3548
        %v3587 = vpack.c.b16 %v3553, %v3551
        %v3588 = vpack.c.b16 %v3554, %v3552
        %v3589 = vpack.c.b16 %v3557, %v3555
        %v3590 = vpack.c.b16 %v3558, %v3556
        %3623 = vmatprep.subr.bf16.mxu0 %v3560
        %3624 = vmatpush1.bf16.msra.mxu0 %v3559
        %3625 = vmatprep.subr.bf16.mxu0 %v3562
        %3626 = vmatpush1.bf16.msra.mxu0 %v3561
        %3627 = vmatprep.subr.bf16.mxu0 %v3564
        %3628 = vmatpush1.bf16.msra.mxu0 %v3563
        %3629 = vmatprep.subr.bf16.mxu0 %v3566
        %3630 = vmatpush1.bf16.msra.mxu0 %v3565
        %3631 = vmatprep.subr.bf16.mxu0 %v3568
        %3632 = vmatpush1.bf16.msra.mxu0 %v3567
        %3633 = vmatprep.subr.bf16.mxu0 %v3570
        %3634 = vmatpush1.bf16.msra.mxu0 %v3569
        %3635 = vmatprep.subr.bf16.mxu0 %v3572
        %3636 = vmatpush1.bf16.msra.mxu0 %v3571
        %3637 = vmatprep.subr.bf16.mxu0 %v3574
        %3638 = vmatpush1.bf16.msra.mxu0 %v3573
        %3639 = vmatprep.subr.bf16.mxu0 %v3576
        %3640 = vmatpush1.bf16.msra.mxu0 %v3575
        %3641 = vmatprep.subr.bf16.mxu0 %v3578
        %3642 = vmatpush1.bf16.msra.mxu0 %v3577
        %3643 = vmatprep.subr.bf16.mxu0 %v3580
        %3644 = vmatpush1.bf16.msra.mxu0 %v3579
        %3645 = vmatprep.subr.bf16.mxu0 %v3582
        %3646 = vmatpush1.bf16.msra.mxu0 %v3581
        %3647 = vmatprep.subr.bf16.mxu0 %v3584
        %3648 = vmatpush1.bf16.msra.mxu0 %v3583
        %3649 = vmatprep.subr.bf16.mxu0 %v3586
        %3650 = vmatpush1.bf16.msra.mxu0 %v3585
        %3651 = vmatprep.subr.bf16.mxu0 %v3588
        %3652 = vmatpush1.bf16.msra.mxu0 %v3587
        %3653 = vmatprep.subr.bf16.mxu0 %v3590
        %3654 = vmatpush1.bf16.msra.mxu0 %v3589
        %3655 = vmatprep.mubr.bf16.mxu0 %v3404
        %3656 = vmatmul.mubr.bf16.gmra.mrb[0].mxu0 %v3403
        %v3657 = vpop.f32.mrb[0].mxu0
        %v3658 = vadd.f32 %v3456, %v3657
        %v3659 = vpop.f32.mrb[0].mxu0
        %v3660 = vadd.f32 %v3460, %v3659
        %v3661 = vpop.f32.mrb[0].mxu0
        %v3662 = vadd.f32 %v3456, %v3661
        %v3663 = vpop.f32.mrb[0].mxu0
        %v3664 = vadd.f32 %v3460, %v3663
        %3665 = vmatprep.mubr.bf16.mxu0 %v3406
        %3666 = vmatmul.mubr.bf16.gmra.mrb[0].mxu0 %v3405
        %v3667 = vpop.f32.mrb[0].mxu0
        %v3668 = vadd.f32 %v3456, %v3667
        %v3669 = vpop.f32.mrb[0].mxu0
        %v3670 = vadd.f32 %v3460, %v3669
        %v3671 = vpop.f32.mrb[0].mxu0
        %v3672 = vadd.f32 %v3456, %v3671
        %v3673 = vpop.f32.mrb[0].mxu0
        %v3674 = vadd.f32 %v3460, %v3673
        %3675 = vmatprep.mubr.bf16.mxu0 %v3408
        %3676 = vmatmul.mubr.bf16.gmra.mrb[0].mxu0 %v3407
        %v3677 = vpop.f32.mrb[0].mxu0
        %v3678 = vadd.f32 %v3456, %v3677
        %v3679 = vpop.f32.mrb[0].mxu0
        %v3680 = vadd.f32 %v3460, %v3679
        %v3681 = vpop.f32.mrb[0].mxu0
        %v3682 = vadd.f32 %v3456, %v3681
        %v3683 = vpop.f32.mrb[0].mxu0
        %v3684 = vadd.f32 %v3460, %v3683
        %3685 = vmatprep.mubr.bf16.mxu0 %v3410
        %3686 = vmatmul.mubr.bf16.gmra.mrb[0].mxu0 %v3409
        %v3687 = vpop.f32.mrb[0].mxu0
        %v3688 = vadd.f32 %v3456, %v3687
        %v3689 = vpop.f32.mrb[0].mxu0
        %v3690 = vadd.f32 %v3460, %v3689
        %v3691 = vpop.f32.mrb[0].mxu0
        %v3692 = vadd.f32 %v3456, %v3691
        %v3693 = vpop.f32.mrb[0].mxu0
        %v3694 = vadd.f32 %v3460, %v3693
        %3695 = vmatprep.mubr.bf16.mxu0 %v3412
        %3696 = vmatmul.mubr.bf16.gmra.mrb[0].mxu0 %v3411
        %v3697 = vpop.f32.mrb[0].mxu0
        %v3698 = vadd.f32 %v3456, %v3697
        %v3699 = vpop.f32.mrb[0].mxu0
        %v3700 = vadd.f32 %v3460, %v3699
        %v3701 = vpop.f32.mrb[0].mxu0
        %v3702 = vadd.f32 %v3456, %v3701
        %v3703 = vpop.f32.mrb[0].mxu0
        %v3704 = vadd.f32 %v3460, %v3703
        %3705 = vmatprep.mubr.bf16.mxu0 %v3414
        %3706 = vmatmul.mubr.bf16.gmra.mrb[0].mxu0 %v3413
        %v3707 = vpop.f32.mrb[0].mxu0
        %v3708 = vadd.f32 %v3456, %v3707
        %v3709 = vpop.f32.mrb[0].mxu0
        %v3710 = vadd.f32 %v3460, %v3709
        %v3711 = vpop.f32.mrb[0].mxu0
        %v3712 = vadd.f32 %v3456, %v3711
        %v3713 = vpop.f32.mrb[0].mxu0
        %v3714 = vadd.f32 %v3460, %v3713
        %3715 = vmatprep.mubr.bf16.mxu0 %v3416
        %3716 = vmatmul.mubr.bf16.gmra.mrb[0].mxu0 %v3415
        %v3717 = vpop.f32.mrb[0].mxu0
        %v3718 = vadd.f32 %v3456, %v3717
        %v3719 = vpop.f32.mrb[0].mxu0
        %v3720 = vadd.f32 %v3460, %v3719
        %v3721 = vpop.f32.mrb[0].mxu0
        %v3722 = vadd.f32 %v3456, %v3721
        %v3723 = vpop.f32.mrb[0].mxu0
        %v3724 = vadd.f32 %v3460, %v3723
        %3725 = vmatprep.mubr.bf16.mxu0 %v3418
        %3726 = vmatmul.mubr.bf16.gmra.mrb[0].mxu0 %v3417
        %v3727 = vpop.f32.mrb[0].mxu0
        %v3728 = vadd.f32 %v3456, %v3727
        %v3729 = vpop.f32.mrb[0].mxu0
        %v3730 = vadd.f32 %v3460, %v3729
        %v3731 = vpop.f32.mrb[0].mxu0
        %v3732 = vadd.f32 %v3456, %v3731
        %v3733 = vpop.f32.mrb[0].mxu0
        %v3734 = vadd.f32 %v3460, %v3733
        %3735 = vdwg.mxu0
        %v3736 = vadd.f32 %v1256, %v3658
        %v3737 = vadd.f32 %v1257, %v3660
        %v3738 = vadd.f32 %v1258, %v3662
        %v3739 = vadd.f32 %v1259, %v3664
        %v3740 = vadd.f32 %v1260, %v3668
        %v3741 = vadd.f32 %v1261, %v3670
        %v3742 = vadd.f32 %v1262, %v3672
        %v3743 = vadd.f32 %v1263, %v3674
        %v3744 = vadd.f32 %v1264, %v3678
        %v3745 = vadd.f32 %v1265, %v3680
        %v3746 = vadd.f32 %v1266, %v3682
        %v3747 = vadd.f32 %v1267, %v3684
        %v3748 = vadd.f32 %v1268, %v3688
        %v3749 = vadd.f32 %v1269, %v3690
        %v3750 = vadd.f32 %v1270, %v3692
        %v3751 = vadd.f32 %v1271, %v3694
        %v3752 = vadd.f32 %v1272, %v3698
        %v3753 = vadd.f32 %v1273, %v3700
        %v3754 = vadd.f32 %v1274, %v3702
        %v3755 = vadd.f32 %v1275, %v3704
        %v3756 = vadd.f32 %v1276, %v3708
        %v3757 = vadd.f32 %v1277, %v3710
        %v3758 = vadd.f32 %v1278, %v3712
        %v3759 = vadd.f32 %v1279, %v3714
        %v3760 = vadd.f32 %v1280, %v3718
        %v3761 = vadd.f32 %v1281, %v3720
        %v3762 = vadd.f32 %v1282, %v3722
        %v3763 = vadd.f32 %v1283, %v3724
        %v3764 = vadd.f32 %v1284, %v3728
        %v3765 = vadd.f32 %v1285, %v3730
        %v3766 = vadd.f32 %v1286, %v3732
        %v3767 = vadd.f32 %v1287, %v3734
        %v3768 = vpack.c.bf16 %v3738, %v3736
        %v3769 = vpack.c.bf16 %v3739, %v3737
        %v3770 = vpack.c.bf16 %v3742, %v3740
        %v3771 = vpack.c.bf16 %v3743, %v3741
        %v3772 = vpack.c.bf16 %v3746, %v3744
        %v3773 = vpack.c.bf16 %v3747, %v3745
        %v3774 = vpack.c.bf16 %v3750, %v3748
        %v3775 = vpack.c.bf16 %v3751, %v3749
        %v3776 = vpack.c.bf16 %v3754, %v3752
        %v3777 = vpack.c.bf16 %v3755, %v3753
        %v3778 = vpack.c.bf16 %v3758, %v3756
        %v3779 = vpack.c.bf16 %v3759, %v3757
        %v3780 = vpack.c.bf16 %v3762, %v3760
        %v3781 = vpack.c.bf16 %v3763, %v3761
        %v3782 = vpack.c.bf16 %v3766, %v3764
        %v3783 = vpack.c.bf16 %v3767, %v3765
        %v3784 = vld [vmem:[%s961] sm:$0xf]
        %v3785 = vld [vmem:[%s961 + $0x4] sm:$0xf]
        %v3786 = vld [vmem:[%s961 + $0x8] sm:$0xf]
        %v3787 = vld [vmem:[%s961 + $0xc] sm:$0xf]
        %v3788 = vld [vmem:[%s961 + $0x10] sm:$0xf]
        %v3789 = vld [vmem:[%s961 + $0x14] sm:$0xf]
        %v3790 = vld [vmem:[%s961 + $0x18] sm:$0xf]
        %v3791 = vld [vmem:[%s961 + $0x1c] sm:$0xf]
        %v3792 = vld [vmem:[%s961 + $0x20] sm:$0xf]
        %v3793 = vld [vmem:[%s961 + $0x24] sm:$0xf]
        %v3794 = vld [vmem:[%s961 + $0x28] sm:$0xf]
        %v3795 = vld [vmem:[%s961 + $0x2c] sm:$0xf]
        %v3796 = vld [vmem:[%s961 + $0x30] sm:$0xf]
        %v3797 = vld [vmem:[%s961 + $0x34] sm:$0xf]
        %v3798 = vld [vmem:[%s961 + $0x38] sm:$0xf]
        %v3799 = vld [vmem:[%s961 + $0x3c] sm:$0xf]
        %v3800 = vld [vmem:[%s961 + $0x40] sm:$0xf]
        %v3801 = vld [vmem:[%s961 + $0x44] sm:$0xf]
        %v3802 = vld [vmem:[%s961 + $0x48] sm:$0xf]
        %v3803 = vld [vmem:[%s961 + $0x4c] sm:$0xf]
        %v3804 = vld [vmem:[%s961 + $0x50] sm:$0xf]
        %v3805 = vld [vmem:[%s961 + $0x54] sm:$0xf]
        %v3806 = vld [vmem:[%s961 + $0x58] sm:$0xf]
        %v3807 = vld [vmem:[%s961 + $0x5c] sm:$0xf]
        %v3808 = vld [vmem:[%s961 + $0x60] sm:$0xf]
        %v3809 = vld [vmem:[%s961 + $0x64] sm:$0xf]
        %v3810 = vld [vmem:[%s961 + $0x68] sm:$0xf]
        %v3811 = vld [vmem:[%s961 + $0x6c] sm:$0xf]
        %v3812 = vld [vmem:[%s961 + $0x70] sm:$0xf]
        %v3813 = vld [vmem:[%s961 + $0x74] sm:$0xf]
        %v3814 = vld [vmem:[%s961 + $0x78] sm:$0xf]
        %v3815 = vld [vmem:[%s961 + $0x7c] sm:$0xf]
        %v3816 = vld [vmem:[%s969] sm:$0x1]
        %v3818 = vlaneseq
        %v3819 = vshrl.u32 %v3818, 7
        %v3820 = vsub.s32 0, %v3819
        %v3821 = vrot.slane %v3816, %v3820
        %v3855 = vunpack.c.l.b16 %v3784
        %v3856 = vunpack.c.l.b16 %v3785
        %v3857 = vunpack.c.l.b16 %v3786
        %v3858 = vunpack.c.l.b16 %v3787
        %v3859 = vunpack.c.l.b16 %v3788
        %v3860 = vunpack.c.l.b16 %v3789
        %v3861 = vunpack.c.l.b16 %v3790
        %v3862 = vunpack.c.l.b16 %v3791
        %v3863 = vunpack.c.l.b16 %v3792
        %v3864 = vunpack.c.l.b16 %v3793
        %v3865 = vunpack.c.l.b16 %v3794
        %v3866 = vunpack.c.l.b16 %v3795
        %v3867 = vunpack.c.l.b16 %v3796
        %v3868 = vunpack.c.l.b16 %v3797
        %v3869 = vunpack.c.l.b16 %v3798
        %v3870 = vunpack.c.l.b16 %v3799
        %v3871 = vunpack.c.l.b16 %v3800
        %v3872 = vunpack.c.l.b16 %v3801
        %v3873 = vunpack.c.l.b16 %v3802
        %v3874 = vunpack.c.l.b16 %v3803
        %v3875 = vunpack.c.l.b16 %v3804
        %v3876 = vunpack.c.l.b16 %v3805
        %v3877 = vunpack.c.l.b16 %v3806
        %v3878 = vunpack.c.l.b16 %v3807
        %v3879 = vunpack.c.l.b16 %v3808
        %v3880 = vunpack.c.l.b16 %v3809
        %v3881 = vunpack.c.l.b16 %v3810
        %v3882 = vunpack.c.l.b16 %v3811
        %v3883 = vunpack.c.l.b16 %v3812
        %v3884 = vunpack.c.l.b16 %v3813
        %v3885 = vunpack.c.l.b16 %v3814
        %v3886 = vunpack.c.l.b16 %v3815
        %v3887 = vpack.c.b16 %v3856, %v3855
        %v3888 = vpack.c.b16 %v3858, %v3857
        %v3889 = vpack.c.b16 %v3860, %v3859
        %v3890 = vpack.c.b16 %v3862, %v3861
        %v3891 = vpack.c.b16 %v3864, %v3863
        %v3892 = vpack.c.b16 %v3866, %v3865
        %v3893 = vpack.c.b16 %v3868, %v3867
        %v3894 = vpack.c.b16 %v3870, %v3869
        %v3895 = vpack.c.b16 %v3872, %v3871
        %v3896 = vpack.c.b16 %v3874, %v3873
        %v3897 = vpack.c.b16 %v3876, %v3875
        %v3898 = vpack.c.b16 %v3878, %v3877
        %v3899 = vpack.c.b16 %v3880, %v3879
        %v3900 = vpack.c.b16 %v3882, %v3881
        %v3901 = vpack.c.b16 %v3884, %v3883
        %v3902 = vpack.c.b16 %v3886, %v3885
        %3919 = vmatprep.subr.bf16.mxu0 0
        %3920 = vmatpush1.bf16.msra.mxu0 %v3887
        %3921 = vmatprep.subr.bf16.mxu0 0
        %3922 = vmatpush1.bf16.msra.mxu0 %v3888
        %3923 = vmatprep.subr.bf16.mxu0 0
        %3924 = vmatpush1.bf16.msra.mxu0 %v3889
        %3925 = vmatprep.subr.bf16.mxu0 0
        %3926 = vmatpush1.bf16.msra.mxu0 %v3890
        %3927 = vmatprep.subr.bf16.mxu0 0
        %3928 = vmatpush1.bf16.msra.mxu0 %v3891
        %3929 = vmatprep.subr.bf16.mxu0 0
        %3930 = vmatpush1.bf16.msra.mxu0 %v3892
        %3931 = vmatprep.subr.bf16.mxu0 0
        %3932 = vmatpush1.bf16.msra.mxu0 %v3893
        %3933 = vmatprep.subr.bf16.mxu0 0
        %3934 = vmatpush1.bf16.msra.mxu0 %v3894
        %3935 = vmatprep.subr.bf16.mxu0 0
        %3936 = vmatpush1.bf16.msra.mxu0 %v3895
        %3937 = vmatprep.subr.bf16.mxu0 0
        %3938 = vmatpush1.bf16.msra.mxu0 %v3896
        %3939 = vmatprep.subr.bf16.mxu0 0
        %3940 = vmatpush1.bf16.msra.mxu0 %v3897
        %3941 = vmatprep.subr.bf16.mxu0 0
        %3942 = vmatpush1.bf16.msra.mxu0 %v3898
        %3943 = vmatprep.subr.bf16.mxu0 0
        %3944 = vmatpush1.bf16.msra.mxu0 %v3899
        %3945 = vmatprep.subr.bf16.mxu0 0
        %3946 = vmatpush1.bf16.msra.mxu0 %v3900
        %3947 = vmatprep.subr.bf16.mxu0 0
        %3948 = vmatpush1.bf16.msra.mxu0 %v3901
        %3949 = vmatprep.subr.bf16.mxu0 0
        %3950 = vmatpush1.bf16.msra.mxu0 %v3902
        %3951 = vmatprep.mubr.bf16.mxu0 %v3769
        %3952 = vmatmul.mubr.bf16.gmra.mrb[0].mxu0 %v3768
        %v3953 = vpop.f32.mrb[0].mxu0
        %v3954 = vadd.f32 %v3821, %v3953
        %v3955 = vpop.f32.mrb[0].mxu0
        %v3956 = vpop.f32.mrb[0].mxu0
        %v3957 = vadd.f32 %v3821, %v3956
        %v3958 = vpop.f32.mrb[0].mxu0
        %3959 = vmatprep.mubr.bf16.mxu0 %v3771
        %3960 = vmatmul.mubr.bf16.gmra.mrb[0].mxu0 %v3770
        %v3961 = vpop.f32.mrb[0].mxu0
        %v3962 = vadd.f32 %v3821, %v3961
        %v3963 = vpop.f32.mrb[0].mxu0
        %v3964 = vpop.f32.mrb[0].mxu0
        %v3965 = vadd.f32 %v3821, %v3964
        %v3966 = vpop.f32.mrb[0].mxu0
        %3967 = vmatprep.mubr.bf16.mxu0 %v3773
        %3968 = vmatmul.mubr.bf16.gmra.mrb[0].mxu0 %v3772
        %v3969 = vpop.f32.mrb[0].mxu0
        %v3970 = vadd.f32 %v3821, %v3969
        %v3971 = vpop.f32.mrb[0].mxu0
        %v3972 = vpop.f32.mrb[0].mxu0
        %v3973 = vadd.f32 %v3821, %v3972
        %v3974 = vpop.f32.mrb[0].mxu0
        %3975 = vmatprep.mubr.bf16.mxu0 %v3775
        %3976 = vmatmul.mubr.bf16.gmra.mrb[0].mxu0 %v3774
        %v3977 = vpop.f32.mrb[0].mxu0
        %v3978 = vadd.f32 %v3821, %v3977
        %v3979 = vpop.f32.mrb[0].mxu0
        %v3980 = vpop.f32.mrb[0].mxu0
        %v3981 = vadd.f32 %v3821, %v3980
        %v3982 = vpop.f32.mrb[0].mxu0
        %3983 = vmatprep.mubr.bf16.mxu0 %v3777
        %3984 = vmatmul.mubr.bf16.gmra.mrb[0].mxu0 %v3776
        %v3985 = vpop.f32.mrb[0].mxu0
        %v3986 = vadd.f32 %v3821, %v3985
        %v3987 = vpop.f32.mrb[0].mxu0
        %v3988 = vpop.f32.mrb[0].mxu0
        %v3989 = vadd.f32 %v3821, %v3988
        %v3990 = vpop.f32.mrb[0].mxu0
        %3991 = vmatprep.mubr.bf16.mxu0 %v3779
        %3992 = vmatmul.mubr.bf16.gmra.mrb[0].mxu0 %v3778
        %v3993 = vpop.f32.mrb[0].mxu0
        %v3994 = vadd.f32 %v3821, %v3993
        %v3995 = vpop.f32.mrb[0].mxu0
        %v3996 = vpop.f32.mrb[0].mxu0
        %v3997 = vadd.f32 %v3821, %v3996
        %v3998 = vpop.f32.mrb[0].mxu0
        %3999 = vmatprep.mubr.bf16.mxu0 %v3781
        %4000 = vmatmul.mubr.bf16.gmra.mrb[0].mxu0 %v3780
        %v4001 = vpop.f32.mrb[0].mxu0
        %v4002 = vadd.f32 %v3821, %v4001
        %v4003 = vpop.f32.mrb[0].mxu0
        %v4004 = vpop.f32.mrb[0].mxu0
        %v4005 = vadd.f32 %v3821, %v4004
        %v4006 = vpop.f32.mrb[0].mxu0
        %4007 = vmatprep.mubr.bf16.mxu0 %v3783
        %4008 = vmatmul.mubr.bf16.gmra.mrb[0].mxu0 %v3782
        %v4009 = vpop.f32.mrb[0].mxu0
        %v4010 = vadd.f32 %v3821, %v4009
        %v4011 = vpop.f32.mrb[0].mxu0
        %v4012 = vpop.f32.mrb[0].mxu0
        %v4013 = vadd.f32 %v3821, %v4012
        %v4014 = vpop.f32.mrb[0].mxu0
        %4015 = vdwg.mxu0
        %v4016 = vmax.f32 %v3954, 0.0
        %v4017 = vmax.f32 %v3957, 0.0
        %v4018 = vmax.f32 %v3962, 0.0
        %v4019 = vmax.f32 %v3965, 0.0
        %v4020 = vmax.f32 %v3970, 0.0
        %v4021 = vmax.f32 %v3973, 0.0
        %v4022 = vmax.f32 %v3978, 0.0
        %v4023 = vmax.f32 %v3981, 0.0
        %v4024 = vmax.f32 %v3986, 0.0
        %v4025 = vmax.f32 %v3989, 0.0
        %v4026 = vmax.f32 %v3994, 0.0
        %v4027 = vmax.f32 %v3997, 0.0
        %v4028 = vmax.f32 %v4002, 0.0
        %v4029 = vmax.f32 %v4005, 0.0
        %v4030 = vmax.f32 %v4010, 0.0
        %v4031 = vmax.f32 %v4013, 0.0
        %v4032 = vpack.c.bf16 %v4017, %v4016
        %v4033 = vpack.c.bf16 %v4019, %v4018
        %v4034 = vpack.c.bf16 %v4021, %v4020
        %v4035 = vpack.c.bf16 %v4023, %v4022
        %v4036 = vpack.c.bf16 %v4025, %v4024
        %v4037 = vpack.c.bf16 %v4027, %v4026
        %v4038 = vpack.c.bf16 %v4029, %v4028
        %v4039 = vpack.c.bf16 %v4031, %v4030
        %v4040 = vld [vmem:[%s978] sm:$0xff]
        %v4041 = vld [vmem:[%s978 + $0x8] sm:$0xff]
        %v4042 = vld [vmem:[%s978 + $0x10] sm:$0xff]
        %v4043 = vld [vmem:[%s978 + $0x18] sm:$0xff]
        %v4044 = vld [vmem:[%s978 + $0x20] sm:$0xff]
        %v4045 = vld [vmem:[%s978 + $0x28] sm:$0xff]
        %v4046 = vld [vmem:[%s978 + $0x30] sm:$0xff]
        %v4047 = vld [vmem:[%s978 + $0x38] sm:$0xff]
        %v4048 = vld [vmem:[%s978 + $0x40] sm:$0xff]
        %v4049 = vld [vmem:[%s978 + $0x48] sm:$0xff]
        %v4050 = vld [vmem:[%s978 + $0x50] sm:$0xff]
        %v4051 = vld [vmem:[%s978 + $0x58] sm:$0xff]
        %v4052 = vld [vmem:[%s978 + $0x60] sm:$0xff]
        %v4053 = vld [vmem:[%s978 + $0x68] sm:$0xff]
        %v4054 = vld [vmem:[%s978 + $0x70] sm:$0xff]
        %v4055 = vld [vmem:[%s978 + $0x78] sm:$0xff]
        %v4056 = vld [vmem:[%s987] sm:$0x3]
        %v4058 = vlaneseq
        %v4059 = vshrl.u32 %v4058, 7
        %v4060 = vsub.s32 0, %v4059
        %v4061 = vrot.slane %v4056, %v4060
        %v4062 = vlaneseq
        %v4063 = vshrl.u32 %v4062, 7
        %v4064 = vsub.s32 1, %v4063
        %v4065 = vrot.slane %v4056, %v4064
        %v4084 = vunpack.c.l.b16 %v4040
        %v4085 = vunpack.c.h.b16 %v4040
        %v4086 = vunpack.c.l.b16 %v4041
        %v4087 = vunpack.c.h.b16 %v4041
        %v4088 = vunpack.c.l.b16 %v4042
        %v4089 = vunpack.c.h.b16 %v4042
        %v4090 = vunpack.c.l.b16 %v4043
        %v4091 = vunpack.c.h.b16 %v4043
        %v4092 = vunpack.c.l.b16 %v4044
        %v4093 = vunpack.c.h.b16 %v4044
        %v4094 = vunpack.c.l.b16 %v4045
        %v4095 = vunpack.c.h.b16 %v4045
        %v4096 = vunpack.c.l.b16 %v4046
        %v4097 = vunpack.c.h.b16 %v4046
        %v4098 = vunpack.c.l.b16 %v4047
        %v4099 = vunpack.c.h.b16 %v4047
        %v4100 = vunpack.c.l.b16 %v4048
        %v4101 = vunpack.c.h.b16 %v4048
        %v4102 = vunpack.c.l.b16 %v4049
        %v4103 = vunpack.c.h.b16 %v4049
        %v4104 = vunpack.c.l.b16 %v4050
        %v4105 = vunpack.c.h.b16 %v4050
        %v4106 = vunpack.c.l.b16 %v4051
        %v4107 = vunpack.c.h.b16 %v4051
        %v4108 = vunpack.c.l.b16 %v4052
        %v4109 = vunpack.c.h.b16 %v4052
        %v4110 = vunpack.c.l.b16 %v4053
        %v4111 = vunpack.c.h.b16 %v4053
        %v4112 = vunpack.c.l.b16 %v4054
        %v4113 = vunpack.c.h.b16 %v4054
        %v4114 = vunpack.c.l.b16 %v4055
        %v4115 = vunpack.c.h.b16 %v4055
        %v4116 = vpack.c.b16 %v4086, %v4084
        %v4117 = vpack.c.b16 %v4087, %v4085
        %v4118 = vpack.c.b16 %v4090, %v4088
        %v4119 = vpack.c.b16 %v4091, %v4089
        %v4120 = vpack.c.b16 %v4094, %v4092
        %v4121 = vpack.c.b16 %v4095, %v4093
        %v4122 = vpack.c.b16 %v4098, %v4096
        %v4123 = vpack.c.b16 %v4099, %v4097
        %v4124 = vpack.c.b16 %v4102, %v4100
        %v4125 = vpack.c.b16 %v4103, %v4101
        %v4126 = vpack.c.b16 %v4106, %v4104
        %v4127 = vpack.c.b16 %v4107, %v4105
        %v4128 = vpack.c.b16 %v4110, %v4108
        %v4129 = vpack.c.b16 %v4111, %v4109
        %v4130 = vpack.c.b16 %v4114, %v4112
        %v4131 = vpack.c.b16 %v4115, %v4113
        %4148 = vmatprep.subr.bf16.mxu0 %v4117
        %4149 = vmatpush1.bf16.msra.mxu0 %v4116
        %4150 = vmatprep.subr.bf16.mxu0 %v4119
        %4151 = vmatpush1.bf16.msra.mxu0 %v4118
        %4152 = vmatprep.subr.bf16.mxu0 %v4121
        %4153 = vmatpush1.bf16.msra.mxu0 %v4120
        %4154 = vmatprep.subr.bf16.mxu0 %v4123
        %4155 = vmatpush1.bf16.msra.mxu0 %v4122
        %4156 = vmatprep.subr.bf16.mxu0 %v4125
        %4157 = vmatpush1.bf16.msra.mxu0 %v4124
        %4158 = vmatprep.subr.bf16.mxu0 %v4127
        %4159 = vmatpush1.bf16.msra.mxu0 %v4126
        %4160 = vmatprep.subr.bf16.mxu0 %v4129
        %4161 = vmatpush1.bf16.msra.mxu0 %v4128
        %4162 = vmatprep.subr.bf16.mxu0 %v4131
        %4163 = vmatpush1.bf16.msra.mxu0 %v4130
        %4164 = vmatprep.subr.bf16.mxu0 0
        %4165 = vmatpush1.bf16.msra.mxu0 0
        %4166 = vmatprep.subr.bf16.mxu0 0
        %4167 = vmatpush1.bf16.msra.mxu0 0
        %4168 = vmatprep.subr.bf16.mxu0 0
        %4169 = vmatpush1.bf16.msra.mxu0 0
        %4170 = vmatprep.subr.bf16.mxu0 0
        %4171 = vmatpush1.bf16.msra.mxu0 0
        %4172 = vmatprep.subr.bf16.mxu0 0
        %4173 = vmatpush1.bf16.msra.mxu0 0
        %4174 = vmatprep.subr.bf16.mxu0 0
        %4175 = vmatpush1.bf16.msra.mxu0 0
        %4176 = vmatprep.subr.bf16.mxu0 0
        %4177 = vmatpush1.bf16.msra.mxu0 0
        %4178 = vmatprep.subr.bf16.mxu0 0
        %4179 = vmatpush1.bf16.msra.mxu0 0
        %4180 = vmatprep.mubr.bf16.mxu0 0
        %4181 = vmatmul.mubr.bf16.gmra.mrb[0].mxu0 %v4032
        %v4182 = vpop.f32.mrb[0].mxu0
        %v4183 = vadd.f32 %v4061, %v4182
        %v4184 = vpop.f32.mrb[0].mxu0
        %v4185 = vadd.f32 %v4065, %v4184
        %v4186 = vpop.f32.mrb[0].mxu0
        %v4187 = vadd.f32 %v4061, %v4186
        %v4188 = vpop.f32.mrb[0].mxu0
        %v4189 = vadd.f32 %v4065, %v4188
        %4190 = vmatprep.mubr.bf16.mxu0 0
        %4191 = vmatmul.mubr.bf16.gmra.mrb[0].mxu0 %v4033
        %v4192 = vpop.f32.mrb[0].mxu0
        %v4193 = vadd.f32 %v4061, %v4192
        %v4194 = vpop.f32.mrb[0].mxu0
        %v4195 = vadd.f32 %v4065, %v4194
        %v4196 = vpop.f32.mrb[0].mxu0
        %v4197 = vadd.f32 %v4061, %v4196
        %v4198 = vpop.f32.mrb[0].mxu0
        %v4199 = vadd.f32 %v4065, %v4198
        %4200 = vmatprep.mubr.bf16.mxu0 0
        %4201 = vmatmul.mubr.bf16.gmra.mrb[0].mxu0 %v4034
        %v4202 = vpop.f32.mrb[0].mxu0
        %v4203 = vadd.f32 %v4061, %v4202
        %v4204 = vpop.f32.mrb[0].mxu0
        %v4205 = vadd.f32 %v4065, %v4204
        %v4206 = vpop.f32.mrb[0].mxu0
        %v4207 = vadd.f32 %v4061, %v4206
        %v4208 = vpop.f32.mrb[0].mxu0
        %v4209 = vadd.f32 %v4065, %v4208
        %4210 = vmatprep.mubr.bf16.mxu0 0
        %4211 = vmatmul.mubr.bf16.gmra.mrb[0].mxu0 %v4035
        %v4212 = vpop.f32.mrb[0].mxu0
        %v4213 = vadd.f32 %v4061, %v4212
        %v4214 = vpop.f32.mrb[0].mxu0
        %v4215 = vadd.f32 %v4065, %v4214
        %v4216 = vpop.f32.mrb[0].mxu0
        %v4217 = vadd.f32 %v4061, %v4216
        %v4218 = vpop.f32.mrb[0].mxu0
        %v4219 = vadd.f32 %v4065, %v4218
        %4220 = vmatprep.mubr.bf16.mxu0 0
        %4221 = vmatmul.mubr.bf16.gmra.mrb[0].mxu0 %v4036
        %v4222 = vpop.f32.mrb[0].mxu0
        %v4223 = vadd.f32 %v4061, %v4222
        %v4224 = vpop.f32.mrb[0].mxu0
        %v4225 = vadd.f32 %v4065, %v4224
        %v4226 = vpop.f32.mrb[0].mxu0
        %v4227 = vadd.f32 %v4061, %v4226
        %v4228 = vpop.f32.mrb[0].mxu0
        %v4229 = vadd.f32 %v4065, %v4228
        %4230 = vmatprep.mubr.bf16.mxu0 0
        %4231 = vmatmul.mubr.bf16.gmra.mrb[0].mxu0 %v4037
        %v4232 = vpop.f32.mrb[0].mxu0
        %v4233 = vadd.f32 %v4061, %v4232
        %v4234 = vpop.f32.mrb[0].mxu0
        %v4235 = vadd.f32 %v4065, %v4234
        %v4236 = vpop.f32.mrb[0].mxu0
        %v4237 = vadd.f32 %v4061, %v4236
        %v4238 = vpop.f32.mrb[0].mxu0
        %v4239 = vadd.f32 %v4065, %v4238
        %4240 = vmatprep.mubr.bf16.mxu0 0
        %4241 = vmatmul.mubr.bf16.gmra.mrb[0].mxu0 %v4038
        %v4242 = vpop.f32.mrb[0].mxu0
        %v4243 = vadd.f32 %v4061, %v4242
        %v4244 = vpop.f32.mrb[0].mxu0
        %v4245 = vadd.f32 %v4065, %v4244
        %v4246 = vpop.f32.mrb[0].mxu0
        %v4247 = vadd.f32 %v4061, %v4246
        %v4248 = vpop.f32.mrb[0].mxu0
        %v4249 = vadd.f32 %v4065, %v4248
        %4250 = vmatprep.mubr.bf16.mxu0 0
        %4251 = vmatmul.mubr.bf16.gmra.mrb[0].mxu0 %v4039
        %v4252 = vpop.f32.mrb[0].mxu0
        %v4253 = vadd.f32 %v4061, %v4252
        %v4254 = vpop.f32.mrb[0].mxu0
        %v4255 = vadd.f32 %v4065, %v4254
        %v4256 = vpop.f32.mrb[0].mxu0
        %v4257 = vadd.f32 %v4061, %v4256
        %v4258 = vpop.f32.mrb[0].mxu0
        %v4259 = vadd.f32 %v4065, %v4258
        %4260 = vdwg.mxu0
        %v4261 = vadd.f32 %v3736, %v3737
        %4262 = vadd.xlane.f32.xlu0 %v4261
        %v4263 = vpop.xlane.xlu0 %4262
        %v4264 = vadd.f32 %v3738, %v3739
        %4265 = vadd.xlane.f32.xlu0 %v4264
        %v4266 = vpop.xlane.xlu0 %4265
        %v4267 = vadd.f32 %v3740, %v3741
        %4268 = vadd.xlane.f32.xlu0 %v4267
        %v4269 = vpop.xlane.xlu0 %4268
        %v4270 = vadd.f32 %v3742, %v3743
        %4271 = vadd.xlane.f32.xlu0 %v4270
        %v4272 = vpop.xlane.xlu0 %4271
        %v4273 = vadd.f32 %v3744, %v3745
        %4274 = vadd.xlane.f32.xlu0 %v4273
        %v4275 = vpop.xlane.xlu0 %4274
        %v4276 = vadd.f32 %v3746, %v3747
        %4277 = vadd.xlane.f32.xlu0 %v4276
        %v4278 = vpop.xlane.xlu0 %4277
        %v4279 = vadd.f32 %v3748, %v3749
        %4280 = vadd.xlane.f32.xlu0 %v4279
        %v4281 = vpop.xlane.xlu0 %4280
        %v4282 = vadd.f32 %v3750, %v3751
        %4283 = vadd.xlane.f32.xlu0 %v4282
        %v4284 = vpop.xlane.xlu0 %4283
        %v4285 = vadd.f32 %v3752, %v3753
        %4286 = vadd.xlane.f32.xlu0 %v4285
        %v4287 = vpop.xlane.xlu0 %4286
        %v4288 = vadd.f32 %v3754, %v3755
        %4289 = vadd.xlane.f32.xlu0 %v4288
        %v4290 = vpop.xlane.xlu0 %4289
        %v4291 = vadd.f32 %v3756, %v3757
        %4292 = vadd.xlane.f32.xlu0 %v4291
        %v4293 = vpop.xlane.xlu0 %4292
        %v4294 = vadd.f32 %v3758, %v3759
        %4295 = vadd.xlane.f32.xlu0 %v4294
        %v4296 = vpop.xlane.xlu0 %4295
        %v4297 = vadd.f32 %v3760, %v3761
        %4298 = vadd.xlane.f32.xlu0 %v4297
        %v4299 = vpop.xlane.xlu0 %4298
        %v4300 = vadd.f32 %v3762, %v3763
        %4301 = vadd.xlane.f32.xlu0 %v4300
        %v4302 = vpop.xlane.xlu0 %4301
        %v4303 = vadd.f32 %v3764, %v3765
        %4304 = vadd.xlane.f32.xlu0 %v4303
        %v4305 = vpop.xlane.xlu0 %4304
        %v4306 = vadd.f32 %v3766, %v3767
        %4307 = vadd.xlane.f32.xlu0 %v4306
        %v4308 = vpop.xlane.xlu0 %4307
        %v4309 = vmul.f32 %v4263, %v1336
        %v4310 = vmul.f32 %v4266, %v1336
        %v4311 = vmul.f32 %v4269, %v1336
        %v4312 = vmul.f32 %v4272, %v1336
        %v4313 = vmul.f32 %v4275, %v1336
        %v4314 = vmul.f32 %v4278, %v1336
        %v4315 = vmul.f32 %v4281, %v1336
        %v4316 = vmul.f32 %v4284, %v1336
        %v4317 = vmul.f32 %v4287, %v1336
        %v4318 = vmul.f32 %v4290, %v1336
        %v4319 = vmul.f32 %v4293, %v1336
        %v4320 = vmul.f32 %v4296, %v1336
        %v4321 = vmul.f32 %v4299, %v1336
        %v4322 = vmul.f32 %v4302, %v1336
        %v4323 = vmul.f32 %v4305, %v1336
        %v4324 = vmul.f32 %v4308, %v1336
        %v4325 = vsub.f32 %v3736, %v4309
        %v4326 = vsub.f32 %v3737, %v4309
        %v4327 = vsub.f32 %v3738, %v4310
        %v4328 = vsub.f32 %v3739, %v4310
        %v4329 = vsub.f32 %v3740, %v4311
        %v4330 = vsub.f32 %v3741, %v4311
        %v4331 = vsub.f32 %v3742, %v4312
        %v4332 = vsub.f32 %v3743, %v4312
        %v4333 = vsub.f32 %v3744, %v4313
        %v4334 = vsub.f32 %v3745, %v4313
        %v4335 = vsub.f32 %v3746, %v4314
        %v4336 = vsub.f32 %v3747, %v4314
        %v4337 = vsub.f32 %v3748, %v4315
        %v4338 = vsub.f32 %v3749, %v4315
        %v4339 = vsub.f32 %v3750, %v4316
        %v4340 = vsub.f32 %v3751, %v4316
        %v4341 = vsub.f32 %v3752, %v4317
        %v4342 = vsub.f32 %v3753, %v4317
        %v4343 = vsub.f32 %v3754, %v4318
        %v4344 = vsub.f32 %v3755, %v4318
        %v4345 = vsub.f32 %v3756, %v4319
        %v4346 = vsub.f32 %v3757, %v4319
        %v4347 = vsub.f32 %v3758, %v4320
        %v4348 = vsub.f32 %v3759, %v4320
        %v4349 = vsub.f32 %v3760, %v4321
        %v4350 = vsub.f32 %v3761, %v4321
        %v4351 = vsub.f32 %v3762, %v4322
        %v4352 = vsub.f32 %v3763, %v4322
        %v4353 = vsub.f32 %v3764, %v4323
        %v4354 = vsub.f32 %v3765, %v4323
        %v4355 = vsub.f32 %v3766, %v4324
        %v4356 = vsub.f32 %v3767, %v4324
        %v4357 = vmul.f32 %v4325, %v4325
        %v4358 = vmul.f32 %v4326, %v4326
        %v4359 = vmul.f32 %v4327, %v4327
        %v4360 = vmul.f32 %v4328, %v4328
        %v4361 = vmul.f32 %v4329, %v4329
        %v4362 = vmul.f32 %v4330, %v4330
        %v4363 = vmul.f32 %v4331, %v4331
        %v4364 = vmul.f32 %v4332, %v4332
        %v4365 = vmul.f32 %v4333, %v4333
        %v4366 = vmul.f32 %v4334, %v4334
        %v4367 = vmul.f32 %v4335, %v4335
        %v4368 = vmul.f32 %v4336, %v4336
        %v4369 = vmul.f32 %v4337, %v4337
        %v4370 = vmul.f32 %v4338, %v4338
        %v4371 = vmul.f32 %v4339, %v4339
        %v4372 = vmul.f32 %v4340, %v4340
        %v4373 = vmul.f32 %v4341, %v4341
        %v4374 = vmul.f32 %v4342, %v4342
        %v4375 = vmul.f32 %v4343, %v4343
        %v4376 = vmul.f32 %v4344, %v4344
        %v4377 = vmul.f32 %v4345, %v4345
        %v4378 = vmul.f32 %v4346, %v4346
        %v4379 = vmul.f32 %v4347, %v4347
        %v4380 = vmul.f32 %v4348, %v4348
        %v4381 = vmul.f32 %v4349, %v4349
        %v4382 = vmul.f32 %v4350, %v4350
        %v4383 = vmul.f32 %v4351, %v4351
        %v4384 = vmul.f32 %v4352, %v4352
        %v4385 = vmul.f32 %v4353, %v4353
        %v4386 = vmul.f32 %v4354, %v4354
        %v4387 = vmul.f32 %v4355, %v4355
        %v4388 = vmul.f32 %v4356, %v4356
        %v4389 = vadd.f32 %v4357, %v4358
        %4390 = vadd.xlane.f32.xlu0 %v4389
        %v4391 = vpop.xlane.xlu0 %4390
        %v4392 = vadd.f32 %v4359, %v4360
        %4393 = vadd.xlane.f32.xlu0 %v4392
        %v4394 = vpop.xlane.xlu0 %4393
        %v4395 = vadd.f32 %v4361, %v4362
        %4396 = vadd.xlane.f32.xlu0 %v4395
        %v4397 = vpop.xlane.xlu0 %4396
        %v4398 = vadd.f32 %v4363, %v4364
        %4399 = vadd.xlane.f32.xlu0 %v4398
        %v4400 = vpop.xlane.xlu0 %4399
        %v4401 = vadd.f32 %v4365, %v4366
        %4402 = vadd.xlane.f32.xlu0 %v4401
        %v4403 = vpop.xlane.xlu0 %4402
        %v4404 = vadd.f32 %v4367, %v4368
        %4405 = vadd.xlane.f32.xlu0 %v4404
        %v4406 = vpop.xlane.xlu0 %4405
        %v4407 = vadd.f32 %v4369, %v4370
        %4408 = vadd.xlane.f32.xlu0 %v4407
        %v4409 = vpop.xlane.xlu0 %4408
        %v4410 = vadd.f32 %v4371, %v4372
        %4411 = vadd.xlane.f32.xlu0 %v4410
        %v4412 = vpop.xlane.xlu0 %4411
        %v4413 = vadd.f32 %v4373, %v4374
        %4414 = vadd.xlane.f32.xlu0 %v4413
        %v4415 = vpop.xlane.xlu0 %4414
        %v4416 = vadd.f32 %v4375, %v4376
        %4417 = vadd.xlane.f32.xlu0 %v4416
        %v4418 = vpop.xlane.xlu0 %4417
        %v4419 = vadd.f32 %v4377, %v4378
        %4420 = vadd.xlane.f32.xlu0 %v4419
        %v4421 = vpop.xlane.xlu0 %4420
        %v4422 = vadd.f32 %v4379, %v4380
        %4423 = vadd.xlane.f32.xlu0 %v4422
        %v4424 = vpop.xlane.xlu0 %4423
        %v4425 = vadd.f32 %v4381, %v4382
        %4426 = vadd.xlane.f32.xlu0 %v4425
        %v4427 = vpop.xlane.xlu0 %4426
        %v4428 = vadd.f32 %v4383, %v4384
        %4429 = vadd.xlane.f32.xlu0 %v4428
        %v4430 = vpop.xlane.xlu0 %4429
        %v4431 = vadd.f32 %v4385, %v4386
        %4432 = vadd.xlane.f32.xlu0 %v4431
        %v4433 = vpop.xlane.xlu0 %4432
        %v4434 = vadd.f32 %v4387, %v4388
        %4435 = vadd.xlane.f32.xlu0 %v4434
        %v4436 = vpop.xlane.xlu0 %4435
        %v4437 = vmul.f32 %v4391, %v1336
        %v4438 = vmul.f32 %v4394, %v1336
        %v4439 = vmul.f32 %v4397, %v1336
        %v4440 = vmul.f32 %v4400, %v1336
        %v4441 = vmul.f32 %v4403, %v1336
        %v4442 = vmul.f32 %v4406, %v1336
        %v4443 = vmul.f32 %v4409, %v1336
        %v4444 = vmul.f32 %v4412, %v1336
        %v4445 = vmul.f32 %v4415, %v1336
        %v4446 = vmul.f32 %v4418, %v1336
        %v4447 = vmul.f32 %v4421, %v1336
        %v4448 = vmul.f32 %v4424, %v1336
        %v4449 = vmul.f32 %v4427, %v1336
        %v4450 = vmul.f32 %v4430, %v1336
        %v4451 = vmul.f32 %v4433, %v1336
        %v4452 = vmul.f32 %v4436, %v1336
        %v4453 = vadd.f32 %v4437, 1e-06
        %v4454 = vadd.f32 %v4438, 1e-06
        %v4455 = vadd.f32 %v4439, 1e-06
        %v4456 = vadd.f32 %v4440, 1e-06
        %v4457 = vadd.f32 %v4441, 1e-06
        %v4458 = vadd.f32 %v4442, 1e-06
        %v4459 = vadd.f32 %v4443, 1e-06
        %v4460 = vadd.f32 %v4444, 1e-06
        %v4461 = vadd.f32 %v4445, 1e-06
        %v4462 = vadd.f32 %v4446, 1e-06
        %v4463 = vadd.f32 %v4447, 1e-06
        %v4464 = vadd.f32 %v4448, 1e-06
        %v4465 = vadd.f32 %v4449, 1e-06
        %v4466 = vadd.f32 %v4450, 1e-06
        %v4467 = vadd.f32 %v4451, 1e-06
        %v4468 = vadd.f32 %v4452, 1e-06
        %v4469 = vrsqrt.pop %v4453
        %v4470 = vrsqrt.pop %v4454
        %v4471 = vrsqrt.pop %v4455
        %v4472 = vrsqrt.pop %v4456
        %v4473 = vrsqrt.pop %v4457
        %v4474 = vrsqrt.pop %v4458
        %v4475 = vrsqrt.pop %v4459
        %v4476 = vrsqrt.pop %v4460
        %v4477 = vrsqrt.pop %v4461
        %v4478 = vrsqrt.pop %v4462
        %v4479 = vrsqrt.pop %v4463
        %v4480 = vrsqrt.pop %v4464
        %v4481 = vrsqrt.pop %v4465
        %v4482 = vrsqrt.pop %v4466
        %v4483 = vrsqrt.pop %v4467
        %v4484 = vrsqrt.pop %v4468
        %v4485 = vmul.f32 %v4325, %v4469
        %v4486 = vmul.f32 %v4326, %v4469
        %v4487 = vmul.f32 %v4327, %v4470
        %v4488 = vmul.f32 %v4328, %v4470
        %v4489 = vmul.f32 %v4329, %v4471
        %v4490 = vmul.f32 %v4330, %v4471
        %v4491 = vmul.f32 %v4331, %v4472
        %v4492 = vmul.f32 %v4332, %v4472
        %v4493 = vmul.f32 %v4333, %v4473
        %v4494 = vmul.f32 %v4334, %v4473
        %v4495 = vmul.f32 %v4335, %v4474
        %v4496 = vmul.f32 %v4336, %v4474
        %v4497 = vmul.f32 %v4337, %v4475
        %v4498 = vmul.f32 %v4338, %v4475
        %v4499 = vmul.f32 %v4339, %v4476
        %v4500 = vmul.f32 %v4340, %v4476
        %v4501 = vmul.f32 %v4341, %v4477
        %v4502 = vmul.f32 %v4342, %v4477
        %v4503 = vmul.f32 %v4343, %v4478
        %v4504 = vmul.f32 %v4344, %v4478
        %v4505 = vmul.f32 %v4345, %v4479
        %v4506 = vmul.f32 %v4346, %v4479
        %v4507 = vmul.f32 %v4347, %v4480
        %v4508 = vmul.f32 %v4348, %v4480
        %v4509 = vmul.f32 %v4349, %v4481
        %v4510 = vmul.f32 %v4350, %v4481
        %v4511 = vmul.f32 %v4351, %v4482
        %v4512 = vmul.f32 %v4352, %v4482
        %v4513 = vmul.f32 %v4353, %v4483
        %v4514 = vmul.f32 %v4354, %v4483
        %v4515 = vmul.f32 %v4355, %v4484
        %v4516 = vmul.f32 %v4356, %v4484
        %v4517 = vld [vmem:[%s996] sm:$0x3]
        %v4519 = vlaneseq
        %v4520 = vshrl.u32 %v4519, 7
        %v4521 = vsub.s32 0, %v4520
        %v4522 = vrot.slane %v4517, %v4521
        %v4523 = vlaneseq
        %v4524 = vshrl.u32 %v4523, 7
        %v4525 = vsub.s32 1, %v4524
        %v4526 = vrot.slane %v4517, %v4525
        %v4529 = vmul.f32 %v4485, %v4522
        %v4530 = vmul.f32 %v4486, %v4526
        %v4531 = vmul.f32 %v4487, %v4522
        %v4532 = vmul.f32 %v4488, %v4526
        %v4533 = vmul.f32 %v4489, %v4522
        %v4534 = vmul.f32 %v4490, %v4526
        %v4535 = vmul.f32 %v4491, %v4522
        %v4536 = vmul.f32 %v4492, %v4526
        %v4537 = vmul.f32 %v4493, %v4522
        %v4538 = vmul.f32 %v4494, %v4526
        %v4539 = vmul.f32 %v4495, %v4522
        %v4540 = vmul.f32 %v4496, %v4526
        %v4541 = vmul.f32 %v4497, %v4522
        %v4542 = vmul.f32 %v4498, %v4526
        %v4543 = vmul.f32 %v4499, %v4522
        %v4544 = vmul.f32 %v4500, %v4526
        %v4545 = vmul.f32 %v4501, %v4522
        %v4546 = vmul.f32 %v4502, %v4526
        %v4547 = vmul.f32 %v4503, %v4522
        %v4548 = vmul.f32 %v4504, %v4526
        %v4549 = vmul.f32 %v4505, %v4522
        %v4550 = vmul.f32 %v4506, %v4526
        %v4551 = vmul.f32 %v4507, %v4522
        %v4552 = vmul.f32 %v4508, %v4526
        %v4553 = vmul.f32 %v4509, %v4522
        %v4554 = vmul.f32 %v4510, %v4526
        %v4555 = vmul.f32 %v4511, %v4522
        %v4556 = vmul.f32 %v4512, %v4526
        %v4557 = vmul.f32 %v4513, %v4522
        %v4558 = vmul.f32 %v4514, %v4526
        %v4559 = vmul.f32 %v4515, %v4522
        %v4560 = vmul.f32 %v4516, %v4526
        %v4561 = vld [vmem:[%s1005] sm:$0x3]
        %v4563 = vlaneseq
        %v4564 = vshrl.u32 %v4563, 7
        %v4565 = vsub.s32 0, %v4564
        %v4566 = vrot.slane %v4561, %v4565
        %v4567 = vlaneseq
        %v4568 = vshrl.u32 %v4567, 7
        %v4569 = vsub.s32 1, %v4568
        %v4570 = vrot.slane %v4561, %v4569
        %v4573 = vadd.f32 %v4529, %v4566
        %v4574 = vadd.f32 %v4530, %v4570
        %v4575 = vadd.f32 %v4531, %v4566
        %v4576 = vadd.f32 %v4532, %v4570
        %v4577 = vadd.f32 %v4533, %v4566
        %v4578 = vadd.f32 %v4534, %v4570
        %v4579 = vadd.f32 %v4535, %v4566
        %v4580 = vadd.f32 %v4536, %v4570
        %v4581 = vadd.f32 %v4537, %v4566
        %v4582 = vadd.f32 %v4538, %v4570
        %v4583 = vadd.f32 %v4539, %v4566
        %v4584 = vadd.f32 %v4540, %v4570
        %v4585 = vadd.f32 %v4541, %v4566
        %v4586 = vadd.f32 %v4542, %v4570
        %v4587 = vadd.f32 %v4543, %v4566
        %v4588 = vadd.f32 %v4544, %v4570
        %v4589 = vadd.f32 %v4545, %v4566
        %v4590 = vadd.f32 %v4546, %v4570
        %v4591 = vadd.f32 %v4547, %v4566
        %v4592 = vadd.f32 %v4548, %v4570
        %v4593 = vadd.f32 %v4549, %v4566
        %v4594 = vadd.f32 %v4550, %v4570
        %v4595 = vadd.f32 %v4551, %v4566
        %v4596 = vadd.f32 %v4552, %v4570
        %v4597 = vadd.f32 %v4553, %v4566
        %v4598 = vadd.f32 %v4554, %v4570
        %v4599 = vadd.f32 %v4555, %v4566
        %v4600 = vadd.f32 %v4556, %v4570
        %v4601 = vadd.f32 %v4557, %v4566
        %v4602 = vadd.f32 %v4558, %v4570
        %v4603 = vadd.f32 %v4559, %v4566
        %v4604 = vadd.f32 %v4560, %v4570
        %v4605 = vpack.c.bf16 %v4575, %v4573
        %v4606 = vpack.c.bf16 %v4576, %v4574
        %v4607 = vpack.c.bf16 %v4579, %v4577
        %v4608 = vpack.c.bf16 %v4580, %v4578
        %v4609 = vpack.c.bf16 %v4583, %v4581
        %v4610 = vpack.c.bf16 %v4584, %v4582
        %v4611 = vpack.c.bf16 %v4587, %v4585
        %v4612 = vpack.c.bf16 %v4588, %v4586
        %v4613 = vpack.c.bf16 %v4591, %v4589
        %v4614 = vpack.c.bf16 %v4592, %v4590
        %v4615 = vpack.c.bf16 %v4595, %v4593
        %v4616 = vpack.c.bf16 %v4596, %v4594
        %v4617 = vpack.c.bf16 %v4599, %v4597
        %v4618 = vpack.c.bf16 %v4600, %v4598
        %v4619 = vpack.c.bf16 %v4603, %v4601
        %v4620 = vpack.c.bf16 %v4604, %v4602
        %v4621 = vld [vmem:[%s1014] sm:$0xff]
        %v4622 = vld [vmem:[%s1014 + $0x8] sm:$0xff]
        %v4623 = vld [vmem:[%s1014 + $0x10] sm:$0xff]
        %v4624 = vld [vmem:[%s1014 + $0x18] sm:$0xff]
        %v4625 = vld [vmem:[%s1014 + $0x20] sm:$0xff]
        %v4626 = vld [vmem:[%s1014 + $0x28] sm:$0xff]
        %v4627 = vld [vmem:[%s1014 + $0x30] sm:$0xff]
        %v4628 = vld [vmem:[%s1014 + $0x38] sm:$0xff]
        %v4629 = vld [vmem:[%s1014 + $0x40] sm:$0xff]
        %v4630 = vld [vmem:[%s1014 + $0x48] sm:$0xff]
        %v4631 = vld [vmem:[%s1014 + $0x50] sm:$0xff]
        %v4632 = vld [vmem:[%s1014 + $0x58] sm:$0xff]
        %v4633 = vld [vmem:[%s1014 + $0x60] sm:$0xff]
        %v4634 = vld [vmem:[%s1014 + $0x68] sm:$0xff]
        %v4635 = vld [vmem:[%s1014 + $0x70] sm:$0xff]
        %v4636 = vld [vmem:[%s1014 + $0x78] sm:$0xff]
        %v4637 = vld [vmem:[%s1014 + $0x80] sm:$0xff]
        %v4638 = vld [vmem:[%s1014 + $0x88] sm:$0xff]
        %v4639 = vld [vmem:[%s1014 + $0x90] sm:$0xff]
        %v4640 = vld [vmem:[%s1014 + $0x98] sm:$0xff]
        %v4641 = vld [vmem:[%s1014 + $0xa0] sm:$0xff]
        %v4642 = vld [vmem:[%s1014 + $0xa8] sm:$0xff]
        %v4643 = vld [vmem:[%s1014 + $0xb0] sm:$0xff]
        %v4644 = vld [vmem:[%s1014 + $0xb8] sm:$0xff]
        %v4645 = vld [vmem:[%s1014 + $0xc0] sm:$0xff]
        %v4646 = vld [vmem:[%s1014 + $0xc8] sm:$0xff]
        %v4647 = vld [vmem:[%s1014 + $0xd0] sm:$0xff]
        %v4648 = vld [vmem:[%s1014 + $0xd8] sm:$0xff]
        %v4649 = vld [vmem:[%s1014 + $0xe0] sm:$0xff]
        %v4650 = vld [vmem:[%s1014 + $0xe8] sm:$0xff]
        %v4651 = vld [vmem:[%s1014 + $0xf0] sm:$0xff]
        %v4652 = vld [vmem:[%s1014 + $0xf8] sm:$0xff]
        %v4653 = vld [vmem:[%s1014 + $0x100] sm:$0xff]
        %v4654 = vld [vmem:[%s1014 + $0x108] sm:$0xff]
        %v4655 = vld [vmem:[%s1014 + $0x110] sm:$0xff]
        %v4656 = vld [vmem:[%s1014 + $0x118] sm:$0xff]
        %v4657 = vld [vmem:[%s1014 + $0x120] sm:$0xff]
        %v4658 = vld [vmem:[%s1014 + $0x128] sm:$0xff]
        %v4659 = vld [vmem:[%s1014 + $0x130] sm:$0xff]
        %v4660 = vld [vmem:[%s1014 + $0x138] sm:$0xff]
        %v4661 = vld [vmem:[%s1014 + $0x140] sm:$0xff]
        %v4662 = vld [vmem:[%s1014 + $0x148] sm:$0xff]
        %v4663 = vld [vmem:[%s1014 + $0x150] sm:$0xff]
        %v4664 = vld [vmem:[%s1014 + $0x158] sm:$0xff]
        %v4665 = vld [vmem:[%s1014 + $0x160] sm:$0xff]
        %v4666 = vld [vmem:[%s1014 + $0x168] sm:$0xff]
        %v4667 = vld [vmem:[%s1014 + $0x170] sm:$0xff]
        %v4668 = vld [vmem:[%s1014 + $0x178] sm:$0xff]
        %v4669 = vld [vmem:[%s1014 + $0x180] sm:$0xff]
        %v4670 = vld [vmem:[%s1014 + $0x188] sm:$0xff]
        %v4671 = vld [vmem:[%s1014 + $0x190] sm:$0xff]
        %v4672 = vld [vmem:[%s1014 + $0x198] sm:$0xff]
        %v4673 = vld [vmem:[%s1014 + $0x1a0] sm:$0xff]
        %v4674 = vld [vmem:[%s1014 + $0x1a8] sm:$0xff]
        %v4675 = vld [vmem:[%s1014 + $0x1b0] sm:$0xff]
        %v4676 = vld [vmem:[%s1014 + $0x1b8] sm:$0xff]
        %v4677 = vld [vmem:[%s1014 + $0x1c0] sm:$0xff]
        %v4678 = vld [vmem:[%s1014 + $0x1c8] sm:$0xff]
        %v4679 = vld [vmem:[%s1014 + $0x1d0] sm:$0xff]
        %v4680 = vld [vmem:[%s1014 + $0x1d8] sm:$0xff]
        %v4681 = vld [vmem:[%s1014 + $0x1e0] sm:$0xff]
        %v4682 = vld [vmem:[%s1014 + $0x1e8] sm:$0xff]
        %v4683 = vld [vmem:[%s1014 + $0x1f0] sm:$0xff]
        %v4684 = vld [vmem:[%s1014 + $0x1f8] sm:$0xff]
        %v4685 = vld [vmem:[%s1014 + $0x200] sm:$0xff]
        %v4686 = vld [vmem:[%s1014 + $0x208] sm:$0xff]
        %v4687 = vld [vmem:[%s1014 + $0x210] sm:$0xff]
        %v4688 = vld [vmem:[%s1014 + $0x218] sm:$0xff]
        %v4689 = vld [vmem:[%s1014 + $0x220] sm:$0xff]
        %v4690 = vld [vmem:[%s1014 + $0x228] sm:$0xff]
        %v4691 = vld [vmem:[%s1014 + $0x230] sm:$0xff]
        %v4692 = vld [vmem:[%s1014 + $0x238] sm:$0xff]
        %v4693 = vld [vmem:[%s1014 + $0x240] sm:$0xff]
        %v4694 = vld [vmem:[%s1014 + $0x248] sm:$0xff]
        %v4695 = vld [vmem:[%s1014 + $0x250] sm:$0xff]
        %v4696 = vld [vmem:[%s1014 + $0x258] sm:$0xff]
        %v4697 = vld [vmem:[%s1014 + $0x260] sm:$0xff]
        %v4698 = vld [vmem:[%s1014 + $0x268] sm:$0xff]
        %v4699 = vld [vmem:[%s1014 + $0x270] sm:$0xff]
        %v4700 = vld [vmem:[%s1014 + $0x278] sm:$0xff]
        %v4701 = vld [vmem:[%s1014 + $0x280] sm:$0xff]
        %v4702 = vld [vmem:[%s1014 + $0x288] sm:$0xff]
        %v4703 = vld [vmem:[%s1014 + $0x290] sm:$0xff]
        %v4704 = vld [vmem:[%s1014 + $0x298] sm:$0xff]
        %v4705 = vld [vmem:[%s1014 + $0x2a0] sm:$0xff]
        %v4706 = vld [vmem:[%s1014 + $0x2a8] sm:$0xff]
        %v4707 = vld [vmem:[%s1014 + $0x2b0] sm:$0xff]
        %v4708 = vld [vmem:[%s1014 + $0x2b8] sm:$0xff]
        %v4709 = vld [vmem:[%s1014 + $0x2c0] sm:$0xff]
        %v4710 = vld [vmem:[%s1014 + $0x2c8] sm:$0xff]
        %v4711 = vld [vmem:[%s1014 + $0x2d0] sm:$0xff]
        %v4712 = vld [vmem:[%s1014 + $0x2d8] sm:$0xff]
        %v4713 = vld [vmem:[%s1014 + $0x2e0] sm:$0xff]
        %v4714 = vld [vmem:[%s1014 + $0x2e8] sm:$0xff]
        %v4715 = vld [vmem:[%s1014 + $0x2f0] sm:$0xff]
        %v4716 = vld [vmem:[%s1014 + $0x2f8] sm:$0xff]
        %v4717 = vld [vmem:[%s1014 + $0x300] sm:$0xff]
        %v4718 = vld [vmem:[%s1014 + $0x308] sm:$0xff]
        %v4719 = vld [vmem:[%s1014 + $0x310] sm:$0xff]
        %v4720 = vld [vmem:[%s1014 + $0x318] sm:$0xff]
        %v4721 = vld [vmem:[%s1014 + $0x320] sm:$0xff]
        %v4722 = vld [vmem:[%s1014 + $0x328] sm:$0xff]
        %v4723 = vld [vmem:[%s1014 + $0x330] sm:$0xff]
        %v4724 = vld [vmem:[%s1014 + $0x338] sm:$0xff]
        %v4725 = vld [vmem:[%s1014 + $0x340] sm:$0xff]
        %v4726 = vld [vmem:[%s1014 + $0x348] sm:$0xff]
        %v4727 = vld [vmem:[%s1014 + $0x350] sm:$0xff]
        %v4728 = vld [vmem:[%s1014 + $0x358] sm:$0xff]
        %v4729 = vld [vmem:[%s1014 + $0x360] sm:$0xff]
        %v4730 = vld [vmem:[%s1014 + $0x368] sm:$0xff]
        %v4731 = vld [vmem:[%s1014 + $0x370] sm:$0xff]
        %v4732 = vld [vmem:[%s1014 + $0x378] sm:$0xff]
        %v4733 = vld [vmem:[%s1014 + $0x380] sm:$0xff]
        %v4734 = vld [vmem:[%s1014 + $0x388] sm:$0xff]
        %v4735 = vld [vmem:[%s1014 + $0x390] sm:$0xff]
        %v4736 = vld [vmem:[%s1014 + $0x398] sm:$0xff]
        %v4737 = vld [vmem:[%s1014 + $0x3a0] sm:$0xff]
        %v4738 = vld [vmem:[%s1014 + $0x3a8] sm:$0xff]
        %v4739 = vld [vmem:[%s1014 + $0x3b0] sm:$0xff]
        %v4740 = vld [vmem:[%s1014 + $0x3b8] sm:$0xff]
        %v4741 = vld [vmem:[%s1014 + $0x3c0] sm:$0xff]
        %v4742 = vld [vmem:[%s1014 + $0x3c8] sm:$0xff]
        %v4743 = vld [vmem:[%s1014 + $0x3d0] sm:$0xff]
        %v4744 = vld [vmem:[%s1014 + $0x3d8] sm:$0xff]
        %v4745 = vld [vmem:[%s1014 + $0x3e0] sm:$0xff]
        %v4746 = vld [vmem:[%s1014 + $0x3e8] sm:$0xff]
        %v4747 = vld [vmem:[%s1014 + $0x3f0] sm:$0xff]
        %v4748 = vld [vmem:[%s1014 + $0x3f8] sm:$0xff]
        %v4749 = vld [vmem:[%s1023] sm:$0xff]
        %v4751 = vlaneseq
        %v4752 = vshrl.u32 %v4751, 7
        %v4753 = vsub.s32 0, %v4752
        %v4754 = vrot.slane %v4749, %v4753
        %v4755 = vlaneseq
        %v4756 = vshrl.u32 %v4755, 7
        %v4757 = vsub.s32 1, %v4756
        %v4758 = vrot.slane %v4749, %v4757
        %v4759 = vlaneseq
        %v4760 = vshrl.u32 %v4759, 7
        %v4761 = vsub.s32 2, %v4760
        %v4762 = vrot.slane %v4749, %v4761
        %v4763 = vlaneseq
        %v4764 = vshrl.u32 %v4763, 7
        %v4765 = vsub.s32 3, %v4764
        %v4766 = vrot.slane %v4749, %v4765
        %v4767 = vlaneseq
        %v4768 = vshrl.u32 %v4767, 7
        %v4769 = vsub.s32 4, %v4768
        %v4770 = vrot.slane %v4749, %v4769
        %v4771 = vlaneseq
        %v4772 = vshrl.u32 %v4771, 7
        %v4773 = vsub.s32 5, %v4772
        %v4774 = vrot.slane %v4749, %v4773
        %v4775 = vlaneseq
        %v4776 = vshrl.u32 %v4775, 7
        %v4777 = vsub.s32 6, %v4776
        %v4778 = vrot.slane %v4749, %v4777
        %v4779 = vlaneseq
        %v4780 = vshrl.u32 %v4779, 7
        %v4781 = vsub.s32 7, %v4780
        %v4782 = vrot.slane %v4749, %v4781
        %v4919 = vunpack.c.l.b16 %v4621
        %v4920 = vunpack.c.h.b16 %v4621
        %v4921 = vunpack.c.l.b16 %v4622
        %v4922 = vunpack.c.h.b16 %v4622
        %v4923 = vunpack.c.l.b16 %v4623
        %v4924 = vunpack.c.h.b16 %v4623
        %v4925 = vunpack.c.l.b16 %v4624
        %v4926 = vunpack.c.h.b16 %v4624
        %v4927 = vunpack.c.l.b16 %v4625
        %v4928 = vunpack.c.h.b16 %v4625
        %v4929 = vunpack.c.l.b16 %v4626
        %v4930 = vunpack.c.h.b16 %v4626
        %v4931 = vunpack.c.l.b16 %v4627
        %v4932 = vunpack.c.h.b16 %v4627
        %v4933 = vunpack.c.l.b16 %v4628
        %v4934 = vunpack.c.h.b16 %v4628
        %v4935 = vunpack.c.l.b16 %v4629
        %v4936 = vunpack.c.h.b16 %v4629
        %v4937 = vunpack.c.l.b16 %v4630
        %v4938 = vunpack.c.h.b16 %v4630
        %v4939 = vunpack.c.l.b16 %v4631
        %v4940 = vunpack.c.h.b16 %v4631
        %v4941 = vunpack.c.l.b16 %v4632
        %v4942 = vunpack.c.h.b16 %v4632
        %v4943 = vunpack.c.l.b16 %v4633
        %v4944 = vunpack.c.h.b16 %v4633
        %v4945 = vunpack.c.l.b16 %v4634
        %v4946 = vunpack.c.h.b16 %v4634
        %v4947 = vunpack.c.l.b16 %v4635
        %v4948 = vunpack.c.h.b16 %v4635
        %v4949 = vunpack.c.l.b16 %v4636
        %v4950 = vunpack.c.h.b16 %v4636
        %v4951 = vunpack.c.l.b16 %v4637
        %v4952 = vunpack.c.h.b16 %v4637
        %v4953 = vunpack.c.l.b16 %v4638
        %v4954 = vunpack.c.h.b16 %v4638
        %v4955 = vunpack.c.l.b16 %v4639
        %v4956 = vunpack.c.h.b16 %v4639
        %v4957 = vunpack.c.l.b16 %v4640
        %v4958 = vunpack.c.h.b16 %v4640
        %v4959 = vunpack.c.l.b16 %v4641
        %v4960 = vunpack.c.h.b16 %v4641
        %v4961 = vunpack.c.l.b16 %v4642
        %v4962 = vunpack.c.h.b16 %v4642
        %v4963 = vunpack.c.l.b16 %v4643
        %v4964 = vunpack.c.h.b16 %v4643
        %v4965 = vunpack.c.l.b16 %v4644
        %v4966 = vunpack.c.h.b16 %v4644
        %v4967 = vunpack.c.l.b16 %v4645
        %v4968 = vunpack.c.h.b16 %v4645
        %v4969 = vunpack.c.l.b16 %v4646
        %v4970 = vunpack.c.h.b16 %v4646
        %v4971 = vunpack.c.l.b16 %v4647
        %v4972 = vunpack.c.h.b16 %v4647
        %v4973 = vunpack.c.l.b16 %v4648
        %v4974 = vunpack.c.h.b16 %v4648
        %v4975 = vunpack.c.l.b16 %v4649
        %v4976 = vunpack.c.h.b16 %v4649
        %v4977 = vunpack.c.l.b16 %v4650
        %v4978 = vunpack.c.h.b16 %v4650
        %v4979 = vunpack.c.l.b16 %v4651
        %v4980 = vunpack.c.h.b16 %v4651
        %v4981 = vunpack.c.l.b16 %v4652
        %v4982 = vunpack.c.h.b16 %v4652
        %v4983 = vunpack.c.l.b16 %v4653
        %v4984 = vunpack.c.h.b16 %v4653
        %v4985 = vunpack.c.l.b16 %v4654
        %v4986 = vunpack.c.h.b16 %v4654
        %v4987 = vunpack.c.l.b16 %v4655
        %v4988 = vunpack.c.h.b16 %v4655
        %v4989 = vunpack.c.l.b16 %v4656
        %v4990 = vunpack.c.h.b16 %v4656
        %v4991 = vunpack.c.l.b16 %v4657
        %v4992 = vunpack.c.h.b16 %v4657
        %v4993 = vunpack.c.l.b16 %v4658
        %v4994 = vunpack.c.h.b16 %v4658
        %v4995 = vunpack.c.l.b16 %v4659
        %v4996 = vunpack.c.h.b16 %v4659
        %v4997 = vunpack.c.l.b16 %v4660
        %v4998 = vunpack.c.h.b16 %v4660
        %v4999 = vunpack.c.l.b16 %v4661
        %v5000 = vunpack.c.h.b16 %v4661
        %v5001 = vunpack.c.l.b16 %v4662
        %v5002 = vunpack.c.h.b16 %v4662
        %v5003 = vunpack.c.l.b16 %v4663
        %v5004 = vunpack.c.h.b16 %v4663
        %v5005 = vunpack.c.l.b16 %v4664
        %v5006 = vunpack.c.h.b16 %v4664
        %v5007 = vunpack.c.l.b16 %v4665
        %v5008 = vunpack.c.h.b16 %v4665
        %v5009 = vunpack.c.l.b16 %v4666
        %v5010 = vunpack.c.h.b16 %v4666
        %v5011 = vunpack.c.l.b16 %v4667
        %v5012 = vunpack.c.h.b16 %v4667
        %v5013 = vunpack.c.l.b16 %v4668
        %v5014 = vunpack.c.h.b16 %v4668
        %v5015 = vunpack.c.l.b16 %v4669
        %v5016 = vunpack.c.h.b16 %v4669
        %v5017 = vunpack.c.l.b16 %v4670
        %v5018 = vunpack.c.h.b16 %v4670
        %v5019 = vunpack.c.l.b16 %v4671
        %v5020 = vunpack.c.h.b16 %v4671
        %v5021 = vunpack.c.l.b16 %v4672
        %v5022 = vunpack.c.h.b16 %v4672
        %v5023 = vunpack.c.l.b16 %v4673
        %v5024 = vunpack.c.h.b16 %v4673
        %v5025 = vunpack.c.l.b16 %v4674
        %v5026 = vunpack.c.h.b16 %v4674
        %v5027 = vunpack.c.l.b16 %v4675
        %v5028 = vunpack.c.h.b16 %v4675
        %v5029 = vunpack.c.l.b16 %v4676
        %v5030 = vunpack.c.h.b16 %v4676
        %v5031 = vunpack.c.l.b16 %v4677
        %v5032 = vunpack.c.h.b16 %v4677
        %v5033 = vunpack.c.l.b16 %v4678
        %v5034 = vunpack.c.h.b16 %v4678
        %v5035 = vunpack.c.l.b16 %v4679
        %v5036 = vunpack.c.h.b16 %v4679
        %v5037 = vunpack.c.l.b16 %v4680
        %v5038 = vunpack.c.h.b16 %v4680
        %v5039 = vunpack.c.l.b16 %v4681
        %v5040 = vunpack.c.h.b16 %v4681
        %v5041 = vunpack.c.l.b16 %v4682
        %v5042 = vunpack.c.h.b16 %v4682
        %v5043 = vunpack.c.l.b16 %v4683
        %v5044 = vunpack.c.h.b16 %v4683
        %v5045 = vunpack.c.l.b16 %v4684
        %v5046 = vunpack.c.h.b16 %v4684
        %v5047 = vunpack.c.l.b16 %v4685
        %v5048 = vunpack.c.h.b16 %v4685
        %v5049 = vunpack.c.l.b16 %v4686
        %v5050 = vunpack.c.h.b16 %v4686
        %v5051 = vunpack.c.l.b16 %v4687
        %v5052 = vunpack.c.h.b16 %v4687
        %v5053 = vunpack.c.l.b16 %v4688
        %v5054 = vunpack.c.h.b16 %v4688
        %v5055 = vunpack.c.l.b16 %v4689
        %v5056 = vunpack.c.h.b16 %v4689
        %v5057 = vunpack.c.l.b16 %v4690
        %v5058 = vunpack.c.h.b16 %v4690
        %v5059 = vunpack.c.l.b16 %v4691
        %v5060 = vunpack.c.h.b16 %v4691
        %v5061 = vunpack.c.l.b16 %v4692
        %v5062 = vunpack.c.h.b16 %v4692
        %v5063 = vunpack.c.l.b16 %v4693
        %v5064 = vunpack.c.h.b16 %v4693
        %v5065 = vunpack.c.l.b16 %v4694
        %v5066 = vunpack.c.h.b16 %v4694
        %v5067 = vunpack.c.l.b16 %v4695
        %v5068 = vunpack.c.h.b16 %v4695
        %v5069 = vunpack.c.l.b16 %v4696
        %v5070 = vunpack.c.h.b16 %v4696
        %v5071 = vunpack.c.l.b16 %v4697
        %v5072 = vunpack.c.h.b16 %v4697
        %v5073 = vunpack.c.l.b16 %v4698
        %v5074 = vunpack.c.h.b16 %v4698
        %v5075 = vunpack.c.l.b16 %v4699
        %v5076 = vunpack.c.h.b16 %v4699
        %v5077 = vunpack.c.l.b16 %v4700
        %v5078 = vunpack.c.h.b16 %v4700
        %v5079 = vunpack.c.l.b16 %v4701
        %v5080 = vunpack.c.h.b16 %v4701
        %v5081 = vunpack.c.l.b16 %v4702
        %v5082 = vunpack.c.h.b16 %v4702
        %v5083 = vunpack.c.l.b16 %v4703
        %v5084 = vunpack.c.h.b16 %v4703
        %v5085 = vunpack.c.l.b16 %v4704
        %v5086 = vunpack.c.h.b16 %v4704
        %v5087 = vunpack.c.l.b16 %v4705
        %v5088 = vunpack.c.h.b16 %v4705
        %v5089 = vunpack.c.l.b16 %v4706
        %v5090 = vunpack.c.h.b16 %v4706
        %v5091 = vunpack.c.l.b16 %v4707
        %v5092 = vunpack.c.h.b16 %v4707
        %v5093 = vunpack.c.l.b16 %v4708
        %v5094 = vunpack.c.h.b16 %v4708
        %v5095 = vunpack.c.l.b16 %v4709
        %v5096 = vunpack.c.h.b16 %v4709
        %v5097 = vunpack.c.l.b16 %v4710
        %v5098 = vunpack.c.h.b16 %v4710
        %v5099 = vunpack.c.l.b16 %v4711
        %v5100 = vunpack.c.h.b16 %v4711
        %v5101 = vunpack.c.l.b16 %v4712
        %v5102 = vunpack.c.h.b16 %v4712
        %v5103 = vunpack.c.l.b16 %v4713
        %v5104 = vunpack.c.h.b16 %v4713
        %v5105 = vunpack.c.l.b16 %v4714
        %v5106 = vunpack.c.h.b16 %v4714
        %v5107 = vunpack.c.l.b16 %v4715
        %v5108 = vunpack.c.h.b16 %v4715
        %v5109 = vunpack.c.l.b16 %v4716
        %v5110 = vunpack.c.h.b16 %v4716
        %v5111 = vunpack.c.l.b16 %v4717
        %v5112 = vunpack.c.h.b16 %v4717
        %v5113 = vunpack.c.l.b16 %v4718
        %v5114 = vunpack.c.h.b16 %v4718
        %v5115 = vunpack.c.l.b16 %v4719
        %v5116 = vunpack.c.h.b16 %v4719
        %v5117 = vunpack.c.l.b16 %v4720
        %v5118 = vunpack.c.h.b16 %v4720
        %v5119 = vunpack.c.l.b16 %v4721
        %v5120 = vunpack.c.h.b16 %v4721
        %v5121 = vunpack.c.l.b16 %v4722
        %v5122 = vunpack.c.h.b16 %v4722
        %v5123 = vunpack.c.l.b16 %v4723
        %v5124 = vunpack.c.h.b16 %v4723
        %v5125 = vunpack.c.l.b16 %v4724
        %v5126 = vunpack.c.h.b16 %v4724
        %v5127 = vunpack.c.l.b16 %v4725
        %v5128 = vunpack.c.h.b16 %v4725
        %v5129 = vunpack.c.l.b16 %v4726
        %v5130 = vunpack.c.h.b16 %v4726
        %v5131 = vunpack.c.l.b16 %v4727
        %v5132 = vunpack.c.h.b16 %v4727
        %v5133 = vunpack.c.l.b16 %v4728
        %v5134 = vunpack.c.h.b16 %v4728
        %v5135 = vunpack.c.l.b16 %v4729
        %v5136 = vunpack.c.h.b16 %v4729
        %v5137 = vunpack.c.l.b16 %v4730
        %v5138 = vunpack.c.h.b16 %v4730
        %v5139 = vunpack.c.l.b16 %v4731
        %v5140 = vunpack.c.h.b16 %v4731
        %v5141 = vunpack.c.l.b16 %v4732
        %v5142 = vunpack.c.h.b16 %v4732
        %v5143 = vunpack.c.l.b16 %v4733
        %v5144 = vunpack.c.h.b16 %v4733
        %v5145 = vunpack.c.l.b16 %v4734
        %v5146 = vunpack.c.h.b16 %v4734
        %v5147 = vunpack.c.l.b16 %v4735
        %v5148 = vunpack.c.h.b16 %v4735
        %v5149 = vunpack.c.l.b16 %v4736
        %v5150 = vunpack.c.h.b16 %v4736
        %v5151 = vunpack.c.l.b16 %v4737
        %v5152 = vunpack.c.h.b16 %v4737
        %v5153 = vunpack.c.l.b16 %v4738
        %v5154 = vunpack.c.h.b16 %v4738
        %v5155 = vunpack.c.l.b16 %v4739
        %v5156 = vunpack.c.h.b16 %v4739
        %v5157 = vunpack.c.l.b16 %v4740
        %v5158 = vunpack.c.h.b16 %v4740
        %v5159 = vunpack.c.l.b16 %v4741
        %v5160 = vunpack.c.h.b16 %v4741
        %v5161 = vunpack.c.l.b16 %v4742
        %v5162 = vunpack.c.h.b16 %v4742
        %v5163 = vunpack.c.l.b16 %v4743
        %v5164 = vunpack.c.h.b16 %v4743
        %v5165 = vunpack.c.l.b16 %v4744
        %v5166 = vunpack.c.h.b16 %v4744
        %v5167 = vunpack.c.l.b16 %v4745
        %v5168 = vunpack.c.h.b16 %v4745
        %v5169 = vunpack.c.l.b16 %v4746
        %v5170 = vunpack.c.h.b16 %v4746
        %v5171 = vunpack.c.l.b16 %v4747
        %v5172 = vunpack.c.h.b16 %v4747
        %v5173 = vunpack.c.l.b16 %v4748
        %v5174 = vunpack.c.h.b16 %v4748
        %v5175 = vpack.c.b16 %v4927, %v4919
        %v5176 = vpack.c.b16 %v4928, %v4920
        %v5177 = vpack.c.b16 %v4929, %v4921
        %v5178 = vpack.c.b16 %v4930, %v4922
        %v5179 = vpack.c.b16 %v4931, %v4923
        %v5180 = vpack.c.b16 %v4932, %v4924
        %v5181 = vpack.c.b16 %v4933, %v4925
        %v5182 = vpack.c.b16 %v4934, %v4926
        %v5183 = vpack.c.b16 %v4943, %v4935
        %v5184 = vpack.c.b16 %v4944, %v4936
        %v5185 = vpack.c.b16 %v4945, %v4937
        %v5186 = vpack.c.b16 %v4946, %v4938
        %v5187 = vpack.c.b16 %v4947, %v4939
        %v5188 = vpack.c.b16 %v4948, %v4940
        %v5189 = vpack.c.b16 %v4949, %v4941
        %v5190 = vpack.c.b16 %v4950, %v4942
        %v5191 = vpack.c.b16 %v4959, %v4951
        %v5192 = vpack.c.b16 %v4960, %v4952
        %v5193 = vpack.c.b16 %v4961, %v4953
        %v5194 = vpack.c.b16 %v4962, %v4954
        %v5195 = vpack.c.b16 %v4963, %v4955
        %v5196 = vpack.c.b16 %v4964, %v4956
        %v5197 = vpack.c.b16 %v4965, %v4957
        %v5198 = vpack.c.b16 %v4966, %v4958
        %v5199 = vpack.c.b16 %v4975, %v4967
        %v5200 = vpack.c.b16 %v4976, %v4968
        %v5201 = vpack.c.b16 %v4977, %v4969
        %v5202 = vpack.c.b16 %v4978, %v4970
        %v5203 = vpack.c.b16 %v4979, %v4971
        %v5204 = vpack.c.b16 %v4980, %v4972
        %v5205 = vpack.c.b16 %v4981, %v4973
        %v5206 = vpack.c.b16 %v4982, %v4974
        %v5207 = vpack.c.b16 %v4991, %v4983
        %v5208 = vpack.c.b16 %v4992, %v4984
        %v5209 = vpack.c.b16 %v4993, %v4985
        %v5210 = vpack.c.b16 %v4994, %v4986
        %v5211 = vpack.c.b16 %v4995, %v4987
        %v5212 = vpack.c.b16 %v4996, %v4988
        %v5213 = vpack.c.b16 %v4997, %v4989
        %v5214 = vpack.c.b16 %v4998, %v4990
        %v5215 = vpack.c.b16 %v5007, %v4999
        %v5216 = vpack.c.b16 %v5008, %v5000
        %v5217 = vpack.c.b16 %v5009, %v5001
        %v5218 = vpack.c.b16 %v5010, %v5002
        %v5219 = vpack.c.b16 %v5011, %v5003
        %v5220 = vpack.c.b16 %v5012, %v5004
        %v5221 = vpack.c.b16 %v5013, %v5005
        %v5222 = vpack.c.b16 %v5014, %v5006
        %v5223 = vpack.c.b16 %v5023, %v5015
        %v5224 = vpack.c.b16 %v5024, %v5016
        %v5225 = vpack.c.b16 %v5025, %v5017
        %v5226 = vpack.c.b16 %v5026, %v5018
        %v5227 = vpack.c.b16 %v5027, %v5019
        %v5228 = vpack.c.b16 %v5028, %v5020
        %v5229 = vpack.c.b16 %v5029, %v5021
        %v5230 = vpack.c.b16 %v5030, %v5022
        %v5231 = vpack.c.b16 %v5039, %v5031
        %v5232 = vpack.c.b16 %v5040, %v5032
        %v5233 = vpack.c.b16 %v5041, %v5033
        %v5234 = vpack.c.b16 %v5042, %v5034
        %v5235 = vpack.c.b16 %v5043, %v5035
        %v5236 = vpack.c.b16 %v5044, %v5036
        %v5237 = vpack.c.b16 %v5045, %v5037
        %v5238 = vpack.c.b16 %v5046, %v5038
        %v5239 = vpack.c.b16 %v5055, %v5047
        %v5240 = vpack.c.b16 %v5056, %v5048
        %v5241 = vpack.c.b16 %v5057, %v5049
        %v5242 = vpack.c.b16 %v5058, %v5050
        %v5243 = vpack.c.b16 %v5059, %v5051
        %v5244 = vpack.c.b16 %v5060, %v5052
        %v5245 = vpack.c.b16 %v5061, %v5053
        %v5246 = vpack.c.b16 %v5062, %v5054
        %v5247 = vpack.c.b16 %v5071, %v5063
        %v5248 = vpack.c.b16 %v5072, %v5064
        %v5249 = vpack.c.b16 %v5073, %v5065
        %v5250 = vpack.c.b16 %v5074, %v5066
        %v5251 = vpack.c.b16 %v5075, %v5067
        %v5252 = vpack.c.b16 %v5076, %v5068
        %v5253 = vpack.c.b16 %v5077, %v5069
        %v5254 = vpack.c.b16 %v5078, %v5070
        %v5255 = vpack.c.b16 %v5087, %v5079
        %v5256 = vpack.c.b16 %v5088, %v5080
        %v5257 = vpack.c.b16 %v5089, %v5081
        %v5258 = vpack.c.b16 %v5090, %v5082
        %v5259 = vpack.c.b16 %v5091, %v5083
        %v5260 = vpack.c.b16 %v5092, %v5084
        %v5261 = vpack.c.b16 %v5093, %v5085
        %v5262 = vpack.c.b16 %v5094, %v5086
        %v5263 = vpack.c.b16 %v5103, %v5095
        %v5264 = vpack.c.b16 %v5104, %v5096
        %v5265 = vpack.c.b16 %v5105, %v5097
        %v5266 = vpack.c.b16 %v5106, %v5098
        %v5267 = vpack.c.b16 %v5107, %v5099
        %v5268 = vpack.c.b16 %v5108, %v5100
        %v5269 = vpack.c.b16 %v5109, %v5101
        %v5270 = vpack.c.b16 %v5110, %v5102
        %v5271 = vpack.c.b16 %v5119, %v5111
        %v5272 = vpack.c.b16 %v5120, %v5112
        %v5273 = vpack.c.b16 %v5121, %v5113
        %v5274 = vpack.c.b16 %v5122, %v5114
        %v5275 = vpack.c.b16 %v5123, %v5115
        %v5276 = vpack.c.b16 %v5124, %v5116
        %v5277 = vpack.c.b16 %v5125, %v5117
        %v5278 = vpack.c.b16 %v5126, %v5118
        %v5279 = vpack.c.b16 %v5135, %v5127
        %v5280 = vpack.c.b16 %v5136, %v5128
        %v5281 = vpack.c.b16 %v5137, %v5129
        %v5282 = vpack.c.b16 %v5138, %v5130
        %v5283 = vpack.c.b16 %v5139, %v5131
        %v5284 = vpack.c.b16 %v5140, %v5132
        %v5285 = vpack.c.b16 %v5141, %v5133
        %v5286 = vpack.c.b16 %v5142, %v5134
        %v5287 = vpack.c.b16 %v5151, %v5143
        %v5288 = vpack.c.b16 %v5152, %v5144
        %v5289 = vpack.c.b16 %v5153, %v5145
        %v5290 = vpack.c.b16 %v5154, %v5146
        %v5291 = vpack.c.b16 %v5155, %v5147
        %v5292 = vpack.c.b16 %v5156, %v5148
        %v5293 = vpack.c.b16 %v5157, %v5149
        %v5294 = vpack.c.b16 %v5158, %v5150
        %v5295 = vpack.c.b16 %v5167, %v5159
        %v5296 = vpack.c.b16 %v5168, %v5160
        %v5297 = vpack.c.b16 %v5169, %v5161
        %v5298 = vpack.c.b16 %v5170, %v5162
        %v5299 = vpack.c.b16 %v5171, %v5163
        %v5300 = vpack.c.b16 %v5172, %v5164
        %v5301 = vpack.c.b16 %v5173, %v5165
        %v5302 = vpack.c.b16 %v5174, %v5166
        %5431 = vmatprep.subr.bf16.mxu0 %v5176
        %5432 = vmatpush1.bf16.msra.mxu0 %v5175
        %5433 = vmatprep.subr.bf16.mxu0 %v5184
        %5434 = vmatpush1.bf16.msra.mxu0 %v5183
        %5435 = vmatprep.subr.bf16.mxu0 %v5192
        %5436 = vmatpush1.bf16.msra.mxu0 %v5191
        %5437 = vmatprep.subr.bf16.mxu0 %v5200
        %5438 = vmatpush1.bf16.msra.mxu0 %v5199
        %5439 = vmatprep.subr.bf16.mxu0 %v5208
        %5440 = vmatpush1.bf16.msra.mxu0 %v5207
        %5441 = vmatprep.subr.bf16.mxu0 %v5216
        %5442 = vmatpush1.bf16.msra.mxu0 %v5215
        %5443 = vmatprep.subr.bf16.mxu0 %v5224
        %5444 = vmatpush1.bf16.msra.mxu0 %v5223
        %5445 = vmatprep.subr.bf16.mxu0 %v5232
        %5446 = vmatpush1.bf16.msra.mxu0 %v5231
        %5447 = vmatprep.subr.bf16.mxu0 %v5240
        %5448 = vmatpush1.bf16.msra.mxu0 %v5239
        %5449 = vmatprep.subr.bf16.mxu0 %v5248
        %5450 = vmatpush1.bf16.msra.mxu0 %v5247
        %5451 = vmatprep.subr.bf16.mxu0 %v5256
        %5452 = vmatpush1.bf16.msra.mxu0 %v5255
        %5453 = vmatprep.subr.bf16.mxu0 %v5264
        %5454 = vmatpush1.bf16.msra.mxu0 %v5263
        %5455 = vmatprep.subr.bf16.mxu0 %v5272
        %5456 = vmatpush1.bf16.msra.mxu0 %v5271
        %5457 = vmatprep.subr.bf16.mxu0 %v5280
        %5458 = vmatpush1.bf16.msra.mxu0 %v5279
        %5459 = vmatprep.subr.bf16.mxu0 %v5288
        %5460 = vmatpush1.bf16.msra.mxu0 %v5287
        %5461 = vmatprep.subr.bf16.mxu0 %v5296
        %5462 = vmatpush1.bf16.msra.mxu0 %v5295
        %5463 = vmatprep.mubr.bf16.mxu0 %v4606
        %5464 = vmatmul.mubr.bf16.gmra.mrb[0].mxu0 %v4605
        %v5465 = vpop.f32.mrb[0].mxu0
        %v5466 = vadd.f32 %v4754, %v5465
        %v5467 = vpop.f32.mrb[0].mxu0
        %v5468 = vadd.f32 %v4758, %v5467
        %v5469 = vpop.f32.mrb[0].mxu0
        %v5470 = vadd.f32 %v4754, %v5469
        %v5471 = vpop.f32.mrb[0].mxu0
        %v5472 = vadd.f32 %v4758, %v5471
        %5473 = vmatprep.mubr.bf16.mxu0 %v4608
        %5474 = vmatmul.mubr.bf16.gmra.mrb[0].mxu0 %v4607
        %v5475 = vpop.f32.mrb[0].mxu0
        %v5476 = vadd.f32 %v4754, %v5475
        %v5477 = vpop.f32.mrb[0].mxu0
        %v5478 = vadd.f32 %v4758, %v5477
        %v5479 = vpop.f32.mrb[0].mxu0
        %v5480 = vadd.f32 %v4754, %v5479
        %v5481 = vpop.f32.mrb[0].mxu0
        %v5482 = vadd.f32 %v4758, %v5481
        %5483 = vmatprep.mubr.bf16.mxu0 %v4610
        %5484 = vmatmul.mubr.bf16.gmra.mrb[0].mxu0 %v4609
        %v5485 = vpop.f32.mrb[0].mxu0
        %v5486 = vadd.f32 %v4754, %v5485
        %v5487 = vpop.f32.mrb[0].mxu0
        %v5488 = vadd.f32 %v4758, %v5487
        %v5489 = vpop.f32.mrb[0].mxu0
        %v5490 = vadd.f32 %v4754, %v5489
        %v5491 = vpop.f32.mrb[0].mxu0
        %v5492 = vadd.f32 %v4758, %v5491
        %5493 = vmatprep.mubr.bf16.mxu0 %v4612
        %5494 = vmatmul.mubr.bf16.gmra.mrb[0].mxu0 %v4611
        %v5495 = vpop.f32.mrb[0].mxu0
        %v5496 = vadd.f32 %v4754, %v5495
        %v5497 = vpop.f32.mrb[0].mxu0
        %v5498 = vadd.f32 %v4758, %v5497
        %v5499 = vpop.f32.mrb[0].mxu0
        %v5500 = vadd.f32 %v4754, %v5499
        %v5501 = vpop.f32.mrb[0].mxu0
        %v5502 = vadd.f32 %v4758, %v5501
        %5503 = vmatprep.mubr.bf16.mxu0 %v4614
        %5504 = vmatmul.mubr.bf16.gmra.mrb[0].mxu0 %v4613
        %v5505 = vpop.f32.mrb[0].mxu0
        %v5506 = vadd.f32 %v4754, %v5505
        %v5507 = vpop.f32.mrb[0].mxu0
        %v5508 = vadd.f32 %v4758, %v5507
        %v5509 = vpop.f32.mrb[0].mxu0
        %v5510 = vadd.f32 %v4754, %v5509
        %v5511 = vpop.f32.mrb[0].mxu0
        %v5512 = vadd.f32 %v4758, %v5511
        %5513 = vmatprep.mubr.bf16.mxu0 %v4616
        %5514 = vmatmul.mubr.bf16.gmra.mrb[0].mxu0 %v4615
        %v5515 = vpop.f32.mrb[0].mxu0
        %v5516 = vadd.f32 %v4754, %v5515
        %v5517 = vpop.f32.mrb[0].mxu0
        %v5518 = vadd.f32 %v4758, %v5517
        %v5519 = vpop.f32.mrb[0].mxu0
        %v5520 = vadd.f32 %v4754, %v5519
        %v5521 = vpop.f32.mrb[0].mxu0
        %v5522 = vadd.f32 %v4758, %v5521
        %5523 = vmatprep.mubr.bf16.mxu0 %v4618
        %5524 = vmatmul.mubr.bf16.gmra.mrb[0].mxu0 %v4617
        %v5525 = vpop.f32.mrb[0].mxu0
        %v5526 = vadd.f32 %v4754, %v5525
        %v5527 = vpop.f32.mrb[0].mxu0
        %v5528 = vadd.f32 %v4758, %v5527
        %v5529 = vpop.f32.mrb[0].mxu0
        %v5530 = vadd.f32 %v4754, %v5529
        %v5531 = vpop.f32.mrb[0].mxu0
        %v5532 = vadd.f32 %v4758, %v5531
        %5533 = vmatprep.mubr.bf16.mxu0 %v4620
        %5534 = vmatmul.mubr.bf16.gmra.mrb[0].mxu0 %v4619
        %v5535 = vpop.f32.mrb[0].mxu0
        %v5536 = vadd.f32 %v4754, %v5535
        %v5537 = vpop.f32.mrb[0].mxu0
        %v5538 = vadd.f32 %v4758, %v5537
        %v5539 = vpop.f32.mrb[0].mxu0
        %v5540 = vadd.f32 %v4754, %v5539
        %v5541 = vpop.f32.mrb[0].mxu0
        %v5542 = vadd.f32 %v4758, %v5541
        %5543 = vdwg.mxu0
        %5544 = vmatprep.subr.bf16.mxu0 %v5178
        %5545 = vmatpush1.bf16.msra.mxu0 %v5177
        %5546 = vmatprep.subr.bf16.mxu0 %v5186
        %5547 = vmatpush1.bf16.msra.mxu0 %v5185
        %5548 = vmatprep.subr.bf16.mxu0 %v5194
        %5549 = vmatpush1.bf16.msra.mxu0 %v5193
        %5550 = vmatprep.subr.bf16.mxu0 %v5202
        %5551 = vmatpush1.bf16.msra.mxu0 %v5201
        %5552 = vmatprep.subr.bf16.mxu0 %v5210
        %5553 = vmatpush1.bf16.msra.mxu0 %v5209
        %5554 = vmatprep.subr.bf16.mxu0 %v5218
        %5555 = vmatpush1.bf16.msra.mxu0 %v5217
        %5556 = vmatprep.subr.bf16.mxu0 %v5226
        %5557 = vmatpush1.bf16.msra.mxu0 %v5225
        %5558 = vmatprep.subr.bf16.mxu0 %v5234
        %5559 = vmatpush1.bf16.msra.mxu0 %v5233
        %5560 = vmatprep.subr.bf16.mxu0 %v5242
        %5561 = vmatpush1.bf16.msra.mxu0 %v5241
        %5562 = vmatprep.subr.bf16.mxu0 %v5250
        %5563 = vmatpush1.bf16.msra.mxu0 %v5249
        %5564 = vmatprep.subr.bf16.mxu0 %v5258
        %5565 = vmatpush1.bf16.msra.mxu0 %v5257
        %5566 = vmatprep.subr.bf16.mxu0 %v5266
        %5567 = vmatpush1.bf16.msra.mxu0 %v5265
        %5568 = vmatprep.subr.bf16.mxu0 %v5274
        %5569 = vmatpush1.bf16.msra.mxu0 %v5273
        %5570 = vmatprep.subr.bf16.mxu0 %v5282
        %5571 = vmatpush1.bf16.msra.mxu0 %v5281
        %5572 = vmatprep.subr.bf16.mxu0 %v5290
        %5573 = vmatpush1.bf16.msra.mxu0 %v5289
        %5574 = vmatprep.subr.bf16.mxu0 %v5298
        %5575 = vmatpush1.bf16.msra.mxu0 %v5297
        %5576 = vmatprep.mubr.bf16.mxu0 %v4606
        %5577 = vmatmul.mubr.bf16.gmra.mrb[0].mxu0 %v4605
        %v5578 = vpop.f32.mrb[0].mxu0
        %v5579 = vadd.f32 %v4762, %v5578
        %v5580 = vpop.f32.mrb[0].mxu0
        %v5581 = vadd.f32 %v4766, %v5580
        %v5582 = vpop.f32.mrb[0].mxu0
        %v5583 = vadd.f32 %v4762, %v5582
        %v5584 = vpop.f32.mrb[0].mxu0
        %v5585 = vadd.f32 %v4766, %v5584
        %5586 = vmatprep.mubr.bf16.mxu0 %v4608
        %5587 = vmatmul.mubr.bf16.gmra.mrb[0].mxu0 %v4607
        %v5588 = vpop.f32.mrb[0].mxu0
        %v5589 = vadd.f32 %v4762, %v5588
        %v5590 = vpop.f32.mrb[0].mxu0
        %v5591 = vadd.f32 %v4766, %v5590
        %v5592 = vpop.f32.mrb[0].mxu0
        %v5593 = vadd.f32 %v4762, %v5592
        %v5594 = vpop.f32.mrb[0].mxu0
        %v5595 = vadd.f32 %v4766, %v5594
        %5596 = vmatprep.mubr.bf16.mxu0 %v4610
        %5597 = vmatmul.mubr.bf16.gmra.mrb[0].mxu0 %v4609
        %v5598 = vpop.f32.mrb[0].mxu0
        %v5599 = vadd.f32 %v4762, %v5598
        %v5600 = vpop.f32.mrb[0].mxu0
        %v5601 = vadd.f32 %v4766, %v5600
        %v5602 = vpop.f32.mrb[0].mxu0
        %v5603 = vadd.f32 %v4762, %v5602
        %v5604 = vpop.f32.mrb[0].mxu0
        %v5605 = vadd.f32 %v4766, %v5604
        %5606 = vmatprep.mubr.bf16.mxu0 %v4612
        %5607 = vmatmul.mubr.bf16.gmra.mrb[0].mxu0 %v4611
        %v5608 = vpop.f32.mrb[0].mxu0
        %v5609 = vadd.f32 %v4762, %v5608
        %v5610 = vpop.f32.mrb[0].mxu0
        %v5611 = vadd.f32 %v4766, %v5610
        %v5612 = vpop.f32.mrb[0].mxu0
        %v5613 = vadd.f32 %v4762, %v5612
        %v5614 = vpop.f32.mrb[0].mxu0
        %v5615 = vadd.f32 %v4766, %v5614
        %5616 = vmatprep.mubr.bf16.mxu0 %v4614
        %5617 = vmatmul.mubr.bf16.gmra.mrb[0].mxu0 %v4613
        %v5618 = vpop.f32.mrb[0].mxu0
        %v5619 = vadd.f32 %v4762, %v5618
        %v5620 = vpop.f32.mrb[0].mxu0
        %v5621 = vadd.f32 %v4766, %v5620
        %v5622 = vpop.f32.mrb[0].mxu0
        %v5623 = vadd.f32 %v4762, %v5622
        %v5624 = vpop.f32.mrb[0].mxu0
        %v5625 = vadd.f32 %v4766, %v5624
        %5626 = vmatprep.mubr.bf16.mxu0 %v4616
        %5627 = vmatmul.mubr.bf16.gmra.mrb[0].mxu0 %v4615
        %v5628 = vpop.f32.mrb[0].mxu0
        %v5629 = vadd.f32 %v4762, %v5628
        %v5630 = vpop.f32.mrb[0].mxu0
        %v5631 = vadd.f32 %v4766, %v5630
        %v5632 = vpop.f32.mrb[0].mxu0
        %v5633 = vadd.f32 %v4762, %v5632
        %v5634 = vpop.f32.mrb[0].mxu0
        %v5635 = vadd.f32 %v4766, %v5634
        %5636 = vmatprep.mubr.bf16.mxu0 %v4618
        %5637 = vmatmul.mubr.bf16.gmra.mrb[0].mxu0 %v4617
        %v5638 = vpop.f32.mrb[0].mxu0
        %v5639 = vadd.f32 %v4762, %v5638
        %v5640 = vpop.f32.mrb[0].mxu0
        %v5641 = vadd.f32 %v4766, %v5640
        %v5642 = vpop.f32.mrb[0].mxu0
        %v5643 = vadd.f32 %v4762, %v5642
        %v5644 = vpop.f32.mrb[0].mxu0
        %v5645 = vadd.f32 %v4766, %v5644
        %5646 = vmatprep.mubr.bf16.mxu0 %v4620
        %5647 = vmatmul.mubr.bf16.gmra.mrb[0].mxu0 %v4619
        %v5648 = vpop.f32.mrb[0].mxu0
        %v5649 = vadd.f32 %v4762, %v5648
        %v5650 = vpop.f32.mrb[0].mxu0
        %v5651 = vadd.f32 %v4766, %v5650
        %v5652 = vpop.f32.mrb[0].mxu0
        %v5653 = vadd.f32 %v4762, %v5652
        %v5654 = vpop.f32.mrb[0].mxu0
        %v5655 = vadd.f32 %v4766, %v5654
        %5656 = vdwg.mxu0
        %5657 = vmatprep.subr.bf16.mxu0 %v5180
        %5658 = vmatpush1.bf16.msra.mxu0 %v5179
        %5659 = vmatprep.subr.bf16.mxu0 %v5188
        %5660 = vmatpush1.bf16.msra.mxu0 %v5187
        %5661 = vmatprep.subr.bf16.mxu0 %v5196
        %5662 = vmatpush1.bf16.msra.mxu0 %v5195
        %5663 = vmatprep.subr.bf16.mxu0 %v5204
        %5664 = vmatpush1.bf16.msra.mxu0 %v5203
        %5665 = vmatprep.subr.bf16.mxu0 %v5212
        %5666 = vmatpush1.bf16.msra.mxu0 %v5211
        %5667 = vmatprep.subr.bf16.mxu0 %v5220
        %5668 = vmatpush1.bf16.msra.mxu0 %v5219
        %5669 = vmatprep.subr.bf16.mxu0 %v5228
        %5670 = vmatpush1.bf16.msra.mxu0 %v5227
        %5671 = vmatprep.subr.bf16.mxu0 %v5236
        %5672 = vmatpush1.bf16.msra.mxu0 %v5235
        %5673 = vmatprep.subr.bf16.mxu0 %v5244
        %5674 = vmatpush1.bf16.msra.mxu0 %v5243
        %5675 = vmatprep.subr.bf16.mxu0 %v5252
        %5676 = vmatpush1.bf16.msra.mxu0 %v5251
        %5677 = vmatprep.subr.bf16.mxu0 %v5260
        %5678 = vmatpush1.bf16.msra.mxu0 %v5259
        %5679 = vmatprep.subr.bf16.mxu0 %v5268
        %5680 = vmatpush1.bf16.msra.mxu0 %v5267
        %5681 = vmatprep.subr.bf16.mxu0 %v5276
        %5682 = vmatpush1.bf16.msra.mxu0 %v5275
        %5683 = vmatprep.subr.bf16.mxu0 %v5284
        %5684 = vmatpush1.bf16.msra.mxu0 %v5283
        %5685 = vmatprep.subr.bf16.mxu0 %v5292
        %5686 = vmatpush1.bf16.msra.mxu0 %v5291
        %5687 = vmatprep.subr.bf16.mxu0 %v5300
        %5688 = vmatpush1.bf16.msra.mxu0 %v5299
        %5689 = vmatprep.mubr.bf16.mxu0 %v4606
        %5690 = vmatmul.mubr.bf16.gmra.mrb[0].mxu0 %v4605
        %v5691 = vpop.f32.mrb[0].mxu0
        %v5692 = vadd.f32 %v4770, %v5691
        %v5693 = vpop.f32.mrb[0].mxu0
        %v5694 = vadd.f32 %v4774, %v5693
        %v5695 = vpop.f32.mrb[0].mxu0
        %v5696 = vadd.f32 %v4770, %v5695
        %v5697 = vpop.f32.mrb[0].mxu0
        %v5698 = vadd.f32 %v4774, %v5697
        %5699 = vmatprep.mubr.bf16.mxu0 %v4608
        %5700 = vmatmul.mubr.bf16.gmra.mrb[0].mxu0 %v4607
        %v5701 = vpop.f32.mrb[0].mxu0
        %v5702 = vadd.f32 %v4770, %v5701
        %v5703 = vpop.f32.mrb[0].mxu0
        %v5704 = vadd.f32 %v4774, %v5703
        %v5705 = vpop.f32.mrb[0].mxu0
        %v5706 = vadd.f32 %v4770, %v5705
        %v5707 = vpop.f32.mrb[0].mxu0
        %v5708 = vadd.f32 %v4774, %v5707
        %5709 = vmatprep.mubr.bf16.mxu0 %v4610
        %5710 = vmatmul.mubr.bf16.gmra.mrb[0].mxu0 %v4609
        %v5711 = vpop.f32.mrb[0].mxu0
        %v5712 = vadd.f32 %v4770, %v5711
        %v5713 = vpop.f32.mrb[0].mxu0
        %v5714 = vadd.f32 %v4774, %v5713
        %v5715 = vpop.f32.mrb[0].mxu0
        %v5716 = vadd.f32 %v4770, %v5715
        %v5717 = vpop.f32.mrb[0].mxu0
        %v5718 = vadd.f32 %v4774, %v5717
        %5719 = vmatprep.mubr.bf16.mxu0 %v4612
        %5720 = vmatmul.mubr.bf16.gmra.mrb[0].mxu0 %v4611
        %v5721 = vpop.f32.mrb[0].mxu0
        %v5722 = vadd.f32 %v4770, %v5721
        %v5723 = vpop.f32.mrb[0].mxu0
        %v5724 = vadd.f32 %v4774, %v5723
        %v5725 = vpop.f32.mrb[0].mxu0
        %v5726 = vadd.f32 %v4770, %v5725
        %v5727 = vpop.f32.mrb[0].mxu0
        %v5728 = vadd.f32 %v4774, %v5727
        %5729 = vmatprep.mubr.bf16.mxu0 %v4614
        %5730 = vmatmul.mubr.bf16.gmra.mrb[0].mxu0 %v4613
        %v5731 = vpop.f32.mrb[0].mxu0
        %v5732 = vadd.f32 %v4770, %v5731
        %v5733 = vpop.f32.mrb[0].mxu0
        %v5734 = vadd.f32 %v4774, %v5733
        %v5735 = vpop.f32.mrb[0].mxu0
        %v5736 = vadd.f32 %v4770, %v5735
        %v5737 = vpop.f32.mrb[0].mxu0
        %v5738 = vadd.f32 %v4774, %v5737
        %5739 = vmatprep.mubr.bf16.mxu0 %v4616
        %5740 = vmatmul.mubr.bf16.gmra.mrb[0].mxu0 %v4615
        %v5741 = vpop.f32.mrb[0].mxu0
        %v5742 = vadd.f32 %v4770, %v5741
        %v5743 = vpop.f32.mrb[0].mxu0
        %v5744 = vadd.f32 %v4774, %v5743
        %v5745 = vpop.f32.mrb[0].mxu0
        %v5746 = vadd.f32 %v4770, %v5745
        %v5747 = vpop.f32.mrb[0].mxu0
        %v5748 = vadd.f32 %v4774, %v5747
        %5749 = vmatprep.mubr.bf16.mxu0 %v4618
        %5750 = vmatmul.mubr.bf16.gmra.mrb[0].mxu0 %v4617
        %v5751 = vpop.f32.mrb[0].mxu0
        %v5752 = vadd.f32 %v4770, %v5751
        %v5753 = vpop.f32.mrb[0].mxu0
        %v5754 = vadd.f32 %v4774, %v5753
        %v5755 = vpop.f32.mrb[0].mxu0
        %v5756 = vadd.f32 %v4770, %v5755
        %v5757 = vpop.f32.mrb[0].mxu0
        %v5758 = vadd.f32 %v4774, %v5757
        %5759 = vmatprep.mubr.bf16.mxu0 %v4620
        %5760 = vmatmul.mubr.bf16.gmra.mrb[0].mxu0 %v4619
        %v5761 = vpop.f32.mrb[0].mxu0
        %v5762 = vadd.f32 %v4770, %v5761
        %v5763 = vpop.f32.mrb[0].mxu0
        %v5764 = vadd.f32 %v4774, %v5763
        %v5765 = vpop.f32.mrb[0].mxu0
        %v5766 = vadd.f32 %v4770, %v5765
        %v5767 = vpop.f32.mrb[0].mxu0
        %v5768 = vadd.f32 %v4774, %v5767
        %5769 = vdwg.mxu0
        %5770 = vmatprep.subr.bf16.mxu0 %v5182
        %5771 = vmatpush1.bf16.msra.mxu0 %v5181
        %5772 = vmatprep.subr.bf16.mxu0 %v5190
        %5773 = vmatpush1.bf16.msra.mxu0 %v5189
        %5774 = vmatprep.subr.bf16.mxu0 %v5198
        %5775 = vmatpush1.bf16.msra.mxu0 %v5197
        %5776 = vmatprep.subr.bf16.mxu0 %v5206
        %5777 = vmatpush1.bf16.msra.mxu0 %v5205
        %5778 = vmatprep.subr.bf16.mxu0 %v5214
        %5779 = vmatpush1.bf16.msra.mxu0 %v5213
        %5780 = vmatprep.subr.bf16.mxu0 %v5222
        %5781 = vmatpush1.bf16.msra.mxu0 %v5221
        %5782 = vmatprep.subr.bf16.mxu0 %v5230
        %5783 = vmatpush1.bf16.msra.mxu0 %v5229
        %5784 = vmatprep.subr.bf16.mxu0 %v5238
        %5785 = vmatpush1.bf16.msra.mxu0 %v5237
        %5786 = vmatprep.subr.bf16.mxu0 %v5246
        %5787 = vmatpush1.bf16.msra.mxu0 %v5245
        %5788 = vmatprep.subr.bf16.mxu0 %v5254
        %5789 = vmatpush1.bf16.msra.mxu0 %v5253
        %5790 = vmatprep.subr.bf16.mxu0 %v5262
        %5791 = vmatpush1.bf16.msra.mxu0 %v5261
        %5792 = vmatprep.subr.bf16.mxu0 %v5270
        %5793 = vmatpush1.bf16.msra.mxu0 %v5269
        %5794 = vmatprep.subr.bf16.mxu0 %v5278
        %5795 = vmatpush1.bf16.msra.mxu0 %v5277
        %5796 = vmatprep.subr.bf16.mxu0 %v5286
        %5797 = vmatpush1.bf16.msra.mxu0 %v5285
        %5798 = vmatprep.subr.bf16.mxu0 %v5294
        %5799 = vmatpush1.bf16.msra.mxu0 %v5293
        %5800 = vmatprep.subr.bf16.mxu0 %v5302
        %5801 = vmatpush1.bf16.msra.mxu0 %v5301
        %5802 = vmatprep.mubr.bf16.mxu0 %v4606
        %5803 = vmatmul.mubr.bf16.gmra.mrb[0].mxu0 %v4605
        %v5804 = vpop.f32.mrb[0].mxu0
        %v5805 = vadd.f32 %v4778, %v5804
        %v5806 = vpop.f32.mrb[0].mxu0
        %v5807 = vadd.f32 %v4782, %v5806
        %v5808 = vpop.f32.mrb[0].mxu0
        %v5809 = vadd.f32 %v4778, %v5808
        %v5810 = vpop.f32.mrb[0].mxu0
        %v5811 = vadd.f32 %v4782, %v5810
        %5812 = vmatprep.mubr.bf16.mxu0 %v4608
        %5813 = vmatmul.mubr.bf16.gmra.mrb[0].mxu0 %v4607
        %v5814 = vpop.f32.mrb[0].mxu0
        %v5815 = vadd.f32 %v4778, %v5814
        %v5816 = vpop.f32.mrb[0].mxu0
        %v5817 = vadd.f32 %v4782, %v5816
        %v5818 = vpop.f32.mrb[0].mxu0
        %v5819 = vadd.f32 %v4778, %v5818
        %v5820 = vpop.f32.mrb[0].mxu0
        %v5821 = vadd.f32 %v4782, %v5820
        %5822 = vmatprep.mubr.bf16.mxu0 %v4610
        %5823 = vmatmul.mubr.bf16.gmra.mrb[0].mxu0 %v4609
        %v5824 = vpop.f32.mrb[0].mxu0
        %v5825 = vadd.f32 %v4778, %v5824
        %v5826 = vpop.f32.mrb[0].mxu0
        %v5827 = vadd.f32 %v4782, %v5826
        %v5828 = vpop.f32.mrb[0].mxu0
        %v5829 = vadd.f32 %v4778, %v5828
        %v5830 = vpop.f32.mrb[0].mxu0
        %v5831 = vadd.f32 %v4782, %v5830
        %5832 = vmatprep.mubr.bf16.mxu0 %v4612
        %5833 = vmatmul.mubr.bf16.gmra.mrb[0].mxu0 %v4611
        %v5834 = vpop.f32.mrb[0].mxu0
        %v5835 = vadd.f32 %v4778, %v5834
        %v5836 = vpop.f32.mrb[0].mxu0
        %v5837 = vadd.f32 %v4782, %v5836
        %v5838 = vpop.f32.mrb[0].mxu0
        %v5839 = vadd.f32 %v4778, %v5838
        %v5840 = vpop.f32.mrb[0].mxu0
        %v5841 = vadd.f32 %v4782, %v5840
        %5842 = vmatprep.mubr.bf16.mxu0 %v4614
        %5843 = vmatmul.mubr.bf16.gmra.mrb[0].mxu0 %v4613
        %v5844 = vpop.f32.mrb[0].mxu0
        %v5845 = vadd.f32 %v4778, %v5844
        %v5846 = vpop.f32.mrb[0].mxu0
        %v5847 = vadd.f32 %v4782, %v5846
        %v5848 = vpop.f32.mrb[0].mxu0
        %v5849 = vadd.f32 %v4778, %v5848
        %v5850 = vpop.f32.mrb[0].mxu0
        %v5851 = vadd.f32 %v4782, %v5850
        %5852 = vmatprep.mubr.bf16.mxu0 %v4616
        %5853 = vmatmul.mubr.bf16.gmra.mrb[0].mxu0 %v4615
        %v5854 = vpop.f32.mrb[0].mxu0
        %v5855 = vadd.f32 %v4778, %v5854
        %v5856 = vpop.f32.mrb[0].mxu0
        %v5857 = vadd.f32 %v4782, %v5856
        %v5858 = vpop.f32.mrb[0].mxu0
        %v5859 = vadd.f32 %v4778, %v5858
        %v5860 = vpop.f32.mrb[0].mxu0
        %v5861 = vadd.f32 %v4782, %v5860
        %5862 = vmatprep.mubr.bf16.mxu0 %v4618
        %5863 = vmatmul.mubr.bf16.gmra.mrb[0].mxu0 %v4617
        %v5864 = vpop.f32.mrb[0].mxu0
        %v5865 = vadd.f32 %v4778, %v5864
        %v5866 = vpop.f32.mrb[0].mxu0
        %v5867 = vadd.f32 %v4782, %v5866
        %v5868 = vpop.f32.mrb[0].mxu0
        %v5869 = vadd.f32 %v4778, %v5868
        %v5870 = vpop.f32.mrb[0].mxu0
        %v5871 = vadd.f32 %v4782, %v5870
        %5872 = vmatprep.mubr.bf16.mxu0 %v4620
        %5873 = vmatmul.mubr.bf16.gmra.mrb[0].mxu0 %v4619
        %v5874 = vpop.f32.mrb[0].mxu0
        %v5875 = vadd.f32 %v4778, %v5874
        %v5876 = vpop.f32.mrb[0].mxu0
        %v5877 = vadd.f32 %v4782, %v5876
        %v5878 = vpop.f32.mrb[0].mxu0
        %v5879 = vadd.f32 %v4778, %v5878
        %v5880 = vpop.f32.mrb[0].mxu0
        %v5881 = vadd.f32 %v4782, %v5880
        %5882 = vdwg.mxu0
        %v5883 = vmul.f32 %v5466, 0.5
        %v5884 = vmul.f32 %v5468, 0.5
        %v5885 = vmul.f32 %v5579, 0.5
        %v5886 = vmul.f32 %v5581, 0.5
        %v5887 = vmul.f32 %v5692, 0.5
        %v5888 = vmul.f32 %v5694, 0.5
        %v5889 = vmul.f32 %v5805, 0.5
        %v5890 = vmul.f32 %v5807, 0.5
        %v5891 = vmul.f32 %v5470, 0.5
        %v5892 = vmul.f32 %v5472, 0.5
        %v5893 = vmul.f32 %v5583, 0.5
        %v5894 = vmul.f32 %v5585, 0.5
        %v5895 = vmul.f32 %v5696, 0.5
        %v5896 = vmul.f32 %v5698, 0.5
        %v5897 = vmul.f32 %v5809, 0.5
        %v5898 = vmul.f32 %v5811, 0.5
        %v5899 = vmul.f32 %v5476, 0.5
        %v5900 = vmul.f32 %v5478, 0.5
        %v5901 = vmul.f32 %v5589, 0.5
        %v5902 = vmul.f32 %v5591, 0.5
        %v5903 = vmul.f32 %v5702, 0.5
        %v5904 = vmul.f32 %v5704, 0.5
        %v5905 = vmul.f32 %v5815, 0.5
        %v5906 = vmul.f32 %v5817, 0.5
        %v5907 = vmul.f32 %v5480, 0.5
        %v5908 = vmul.f32 %v5482, 0.5
        %v5909 = vmul.f32 %v5593, 0.5
        %v5910 = vmul.f32 %v5595, 0.5
        %v5911 = vmul.f32 %v5706, 0.5
        %v5912 = vmul.f32 %v5708, 0.5
        %v5913 = vmul.f32 %v5819, 0.5
        %v5914 = vmul.f32 %v5821, 0.5
        %v5915 = vmul.f32 %v5486, 0.5
        %v5916 = vmul.f32 %v5488, 0.5
        %v5917 = vmul.f32 %v5599, 0.5
        %v5918 = vmul.f32 %v5601, 0.5
        %v5919 = vmul.f32 %v5712, 0.5
        %v5920 = vmul.f32 %v5714, 0.5
        %v5921 = vmul.f32 %v5825, 0.5
        %v5922 = vmul.f32 %v5827, 0.5
        %v5923 = vmul.f32 %v5490, 0.5
        %v5924 = vmul.f32 %v5492, 0.5
        %v5925 = vmul.f32 %v5603, 0.5
        %v5926 = vmul.f32 %v5605, 0.5
        %v5927 = vmul.f32 %v5716, 0.5
        %v5928 = vmul.f32 %v5718, 0.5
        %v5929 = vmul.f32 %v5829, 0.5
        %v5930 = vmul.f32 %v5831, 0.5
        %v5931 = vmul.f32 %v5496, 0.5
        %v5932 = vmul.f32 %v5498, 0.5
        %v5933 = vmul.f32 %v5609, 0.5
        %v5934 = vmul.f32 %v5611, 0.5
        %v5935 = vmul.f32 %v5722, 0.5
        %v5936 = vmul.f32 %v5724, 0.5
        %v5937 = vmul.f32 %v5835, 0.5
        %v5938 = vmul.f32 %v5837, 0.5
        %v5939 = vmul.f32 %v5500, 0.5
        %v5940 = vmul.f32 %v5502, 0.5
        %v5941 = vmul.f32 %v5613, 0.5
        %v5942 = vmul.f32 %v5615, 0.5
        %v5943 = vmul.f32 %v5726, 0.5
        %v5944 = vmul.f32 %v5728, 0.5
        %v5945 = vmul.f32 %v5839, 0.5
        %v5946 = vmul.f32 %v5841, 0.5
        %v5947 = vmul.f32 %v5506, 0.5
        %v5948 = vmul.f32 %v5508, 0.5
        %v5949 = vmul.f32 %v5619, 0.5
        %v5950 = vmul.f32 %v5621, 0.5
        %v5951 = vmul.f32 %v5732, 0.5
        %v5952 = vmul.f32 %v5734, 0.5
        %v5953 = vmul.f32 %v5845, 0.5
        %v5954 = vmul.f32 %v5847, 0.5
        %v5955 = vmul.f32 %v5510, 0.5
        %v5956 = vmul.f32 %v5512, 0.5
        %v5957 = vmul.f32 %v5623, 0.5
        %v5958 = vmul.f32 %v5625, 0.5
        %v5959 = vmul.f32 %v5736, 0.5
        %v5960 = vmul.f32 %v5738, 0.5
        %v5961 = vmul.f32 %v5849, 0.5
        %v5962 = vmul.f32 %v5851, 0.5
        %v5963 = vmul.f32 %v5516, 0.5
        %v5964 = vmul.f32 %v5518, 0.5
        %v5965 = vmul.f32 %v5629, 0.5
        %v5966 = vmul.f32 %v5631, 0.5
        %v5967 = vmul.f32 %v5742, 0.5
        %v5968 = vmul.f32 %v5744, 0.5
        %v5969 = vmul.f32 %v5855, 0.5
        %v5970 = vmul.f32 %v5857, 0.5
        %v5971 = vmul.f32 %v5520, 0.5
        %v5972 = vmul.f32 %v5522, 0.5
        %v5973 = vmul.f32 %v5633, 0.5
        %v5974 = vmul.f32 %v5635, 0.5
        %v5975 = vmul.f32 %v5746, 0.5
        %v5976 = vmul.f32 %v5748, 0.5
        %v5977 = vmul.f32 %v5859, 0.5
        %v5978 = vmul.f32 %v5861, 0.5
        %v5979 = vmul.f32 %v5526, 0.5
        %v5980 = vmul.f32 %v5528, 0.5
        %v5981 = vmul.f32 %v5639, 0.5
        %v5982 = vmul.f32 %v5641, 0.5
        %v5983 = vmul.f32 %v5752, 0.5
        %v5984 = vmul.f32 %v5754, 0.5
        %v5985 = vmul.f32 %v5865, 0.5
        %v5986 = vmul.f32 %v5867, 0.5
        %v5987 = vmul.f32 %v5530, 0.5
        %v5988 = vmul.f32 %v5532, 0.5
        %v5989 = vmul.f32 %v5643, 0.5
        %v5990 = vmul.f32 %v5645, 0.5
        %v5991 = vmul.f32 %v5756, 0.5
        %v5992 = vmul.f32 %v5758, 0.5
        %v5993 = vmul.f32 %v5869, 0.5
        %v5994 = vmul.f32 %v5871, 0.5
        %v5995 = vmul.f32 %v5536, 0.5
        %v5996 = vmul.f32 %v5538, 0.5
        %v5997 = vmul.f32 %v5649, 0.5
        %v5998 = vmul.f32 %v5651, 0.5
        %v5999 = vmul.f32 %v5762, 0.5
        %v6000 = vmul.f32 %v5764, 0.5
        %v6001 = vmul.f32 %v5875, 0.5
        %v6002 = vmul.f32 %v5877, 0.5
        %v6003 = vmul.f32 %v5540, 0.5
        %v6004 = vmul.f32 %v5542, 0.5
        %v6005 = vmul.f32 %v5653, 0.5
        %v6006 = vmul.f32 %v5655, 0.5
        %v6007 = vmul.f32 %v5766, 0.5
        %v6008 = vmul.f32 %v5768, 0.5
        %v6009 = vmul.f32 %v5879, 0.5
        %v6010 = vmul.f32 %v5881, 0.5
        %v6011 = vmul.f32 %v5466, 0.70710677
        %v6012 = vmul.f32 %v5468, 0.70710677
        %v6013 = vmul.f32 %v5579, 0.70710677
        %v6014 = vmul.f32 %v5581, 0.70710677
        %v6015 = vmul.f32 %v5692, 0.70710677
        %v6016 = vmul.f32 %v5694, 0.70710677
        %v6017 = vmul.f32 %v5805, 0.70710677
        %v6018 = vmul.f32 %v5807, 0.70710677
        %v6019 = vmul.f32 %v5470, 0.70710677
        %v6020 = vmul.f32 %v5472, 0.70710677
        %v6021 = vmul.f32 %v5583, 0.70710677
        %v6022 = vmul.f32 %v5585, 0.70710677
        %v6023 = vmul.f32 %v5696, 0.70710677
        %v6024 = vmul.f32 %v5698, 0.70710677
        %v6025 = vmul.f32 %v5809, 0.70710677
        %v6026 = vmul.f32 %v5811, 0.70710677
        %v6027 = vmul.f32 %v5476, 0.70710677
        %v6028 = vmul.f32 %v5478, 0.70710677
        %v6029 = vmul.f32 %v5589, 0.70710677
        %v6030 = vmul.f32 %v5591, 0.70710677
        %v6031 = vmul.f32 %v5702, 0.70710677
        %v6032 = vmul.f32 %v5704, 0.70710677
        %v6033 = vmul.f32 %v5815, 0.70710677
        %v6034 = vmul.f32 %v5817, 0.70710677
        %v6035 = vmul.f32 %v5480, 0.70710677
        %v6036 = vmul.f32 %v5482, 0.70710677
        %v6037 = vmul.f32 %v5593, 0.70710677
        %v6038 = vmul.f32 %v5595, 0.70710677
        %v6039 = vmul.f32 %v5706, 0.70710677
        %v6040 = vmul.f32 %v5708, 0.70710677
        %v6041 = vmul.f32 %v5819, 0.70710677
        %v6042 = vmul.f32 %v5821, 0.70710677
        %v6043 = vmul.f32 %v5486, 0.70710677
        %v6044 = vmul.f32 %v5488, 0.70710677
        %v6045 = vmul.f32 %v5599, 0.70710677
        %v6046 = vmul.f32 %v5601, 0.70710677
        %v6047 = vmul.f32 %v5712, 0.70710677
        %v6048 = vmul.f32 %v5714, 0.70710677
        %v6049 = vmul.f32 %v5825, 0.70710677
        %v6050 = vmul.f32 %v5827, 0.70710677
        %v6051 = vmul.f32 %v5490, 0.70710677
        %v6052 = vmul.f32 %v5492, 0.70710677
        %v6053 = vmul.f32 %v5603, 0.70710677
        %v6054 = vmul.f32 %v5605, 0.70710677
        %v6055 = vmul.f32 %v5716, 0.70710677
        %v6056 = vmul.f32 %v5718, 0.70710677
        %v6057 = vmul.f32 %v5829, 0.70710677
        %v6058 = vmul.f32 %v5831, 0.70710677
        %v6059 = vmul.f32 %v5496, 0.70710677
        %v6060 = vmul.f32 %v5498, 0.70710677
        %v6061 = vmul.f32 %v5609, 0.70710677
        %v6062 = vmul.f32 %v5611, 0.70710677
        %v6063 = vmul.f32 %v5722, 0.70710677
        %v6064 = vmul.f32 %v5724, 0.70710677
        %v6065 = vmul.f32 %v5835, 0.70710677
        %v6066 = vmul.f32 %v5837, 0.70710677
        %v6067 = vmul.f32 %v5500, 0.70710677
        %v6068 = vmul.f32 %v5502, 0.70710677
        %v6069 = vmul.f32 %v5613, 0.70710677
        %v6070 = vmul.f32 %v5615, 0.70710677
        %v6071 = vmul.f32 %v5726, 0.70710677
        %v6072 = vmul.f32 %v5728, 0.70710677
        %v6073 = vmul.f32 %v5839, 0.70710677
        %v6074 = vmul.f32 %v5841, 0.70710677
        %v6075 = vmul.f32 %v5506, 0.70710677
        %v6076 = vmul.f32 %v5508, 0.70710677
        %v6077 = vmul.f32 %v5619, 0.70710677
        %v6078 = vmul.f32 %v5621, 0.70710677
        %v6079 = vmul.f32 %v5732, 0.70710677
        %v6080 = vmul.f32 %v5734, 0.70710677
        %v6081 = vmul.f32 %v5845, 0.70710677
        %v6082 = vmul.f32 %v5847, 0.70710677
        %v6083 = vmul.f32 %v5510, 0.70710677
        %v6084 = vmul.f32 %v5512, 0.70710677
        %v6085 = vmul.f32 %v5623, 0.70710677
        %v6086 = vmul.f32 %v5625, 0.70710677
        %v6087 = vmul.f32 %v5736, 0.70710677
        %v6088 = vmul.f32 %v5738, 0.70710677
        %v6089 = vmul.f32 %v5849, 0.70710677
        %v6090 = vmul.f32 %v5851, 0.70710677
        %v6091 = vmul.f32 %v5516, 0.70710677
        %v6092 = vmul.f32 %v5518, 0.70710677
        %v6093 = vmul.f32 %v5629, 0.70710677
        %v6094 = vmul.f32 %v5631, 0.70710677
        %v6095 = vmul.f32 %v5742, 0.70710677
        %v6096 = vmul.f32 %v5744, 0.70710677
        %v6097 = vmul.f32 %v5855, 0.70710677
        %v6098 = vmul.f32 %v5857, 0.70710677
        %v6099 = vmul.f32 %v5520, 0.70710677
        %v6100 = vmul.f32 %v5522, 0.70710677
        %v6101 = vmul.f32 %v5633, 0.70710677
        %v6102 = vmul.f32 %v5635, 0.70710677
        %v6103 = vmul.f32 %v5746, 0.70710677
        %v6104 = vmul.f32 %v5748, 0.70710677
        %v6105 = vmul.f32 %v5859, 0.70710677
        %v6106 = vmul.f32 %v5861, 0.70710677
        %v6107 = vmul.f32 %v5526, 0.70710677
        %v6108 = vmul.f32 %v5528, 0.70710677
        %v6109 = vmul.f32 %v5639, 0.70710677
        %v6110 = vmul.f32 %v5641, 0.70710677
        %v6111 = vmul.f32 %v5752, 0.70710677
        %v6112 = vmul.f32 %v5754, 0.70710677
        %v6113 = vmul.f32 %v5865, 0.70710677
        %v6114 = vmul.f32 %v5867, 0.70710677
        %v6115 = vmul.f32 %v5530, 0.70710677
        %v6116 = vmul.f32 %v5532, 0.70710677
        %v6117 = vmul.f32 %v5643, 0.70710677
        %v6118 = vmul.f32 %v5645, 0.70710677
        %v6119 = vmul.f32 %v5756, 0.70710677
        %v6120 = vmul.f32 %v5758, 0.70710677
        %v6121 = vmul.f32 %v5869, 0.70710677
        %v6122 = vmul.f32 %v5871, 0.70710677
        %v6123 = vmul.f32 %v5536, 0.70710677
        %v6124 = vmul.f32 %v5538, 0.70710677
        %v6125 = vmul.f32 %v5649, 0.70710677
        %v6126 = vmul.f32 %v5651, 0.70710677
        %v6127 = vmul.f32 %v5762, 0.70710677
        %v6128 = vmul.f32 %v5764, 0.70710677
        %v6129 = vmul.f32 %v5875, 0.70710677
        %v6130 = vmul.f32 %v5877, 0.70710677
        %v6131 = vmul.f32 %v5540, 0.70710677
        %v6132 = vmul.f32 %v5542, 0.70710677
        %v6133 = vmul.f32 %v5653, 0.70710677
        %v6134 = vmul.f32 %v5655, 0.70710677
        %v6135 = vmul.f32 %v5766, 0.70710677
        %v6136 = vmul.f32 %v5768, 0.70710677
        %v6137 = vmul.f32 %v5879, 0.70710677
        %v6138 = vmul.f32 %v5881, 0.70710677
        %v6139 = verf.f32.pop %v6011
        %v6140 = verf.f32.pop %v6012
        %v6141 = verf.f32.pop %v6013
        %v6142 = verf.f32.pop %v6014
        %v6143 = verf.f32.pop %v6015
        %v6144 = verf.f32.pop %v6016
        %v6145 = verf.f32.pop %v6017
        %v6146 = verf.f32.pop %v6018
        %v6147 = verf.f32.pop %v6019
        %v6148 = verf.f32.pop %v6020
        %v6149 = verf.f32.pop %v6021
        %v6150 = verf.f32.pop %v6022
        %v6151 = verf.f32.pop %v6023
        %v6152 = verf.f32.pop %v6024
        %v6153 = verf.f32.pop %v6025
        %v6154 = verf.f32.pop %v6026
        %v6155 = verf.f32.pop %v6027
        %v6156 = verf.f32.pop %v6028
        %v6157 = verf.f32.pop %v6029
        %v6158 = verf.f32.pop %v6030
        %v6159 = verf.f32.pop %v6031
        %v6160 = verf.f32.pop %v6032
        %v6161 = verf.f32.pop %v6033
        %v6162 = verf.f32.pop %v6034
        %v6163 = verf.f32.pop %v6035
        %v6164 = verf.f32.pop %v6036
        %v6165 = verf.f32.pop %v6037
        %v6166 = verf.f32.pop %v6038
        %v6167 = verf.f32.pop %v6039
        %v6168 = verf.f32.pop %v6040
        %v6169 = verf.f32.pop %v6041
        %v6170 = verf.f32.pop %v6042
        %v6171 = verf.f32.pop %v6043
        %v6172 = verf.f32.pop %v6044
        %v6173 = verf.f32.pop %v6045
        %v6174 = verf.f32.pop %v6046
        %v6175 = verf.f32.pop %v6047
        %v6176 = verf.f32.pop %v6048
        %v6177 = verf.f32.pop %v6049
        %v6178 = verf.f32.pop %v6050
        %v6179 = verf.f32.pop %v6051
        %v6180 = verf.f32.pop %v6052
        %v6181 = verf.f32.pop %v6053
        %v6182 = verf.f32.pop %v6054
        %v6183 = verf.f32.pop %v6055
        %v6184 = verf.f32.pop %v6056
        %v6185 = verf.f32.pop %v6057
        %v6186 = verf.f32.pop %v6058
        %v6187 = verf.f32.pop %v6059
        %v6188 = verf.f32.pop %v6060
        %v6189 = verf.f32.pop %v6061
        %v6190 = verf.f32.pop %v6062
        %v6191 = verf.f32.pop %v6063
        %v6192 = verf.f32.pop %v6064
        %v6193 = verf.f32.pop %v6065
        %v6194 = verf.f32.pop %v6066
        %v6195 = verf.f32.pop %v6067
        %v6196 = verf.f32.pop %v6068
        %v6197 = verf.f32.pop %v6069
        %v6198 = verf.f32.pop %v6070
        %v6199 = verf.f32.pop %v6071
        %v6200 = verf.f32.pop %v6072
        %v6201 = verf.f32.pop %v6073
        %v6202 = verf.f32.pop %v6074
        %v6203 = verf.f32.pop %v6075
        %v6204 = verf.f32.pop %v6076
        %v6205 = verf.f32.pop %v6077
        %v6206 = verf.f32.pop %v6078
        %v6207 = verf.f32.pop %v6079
        %v6208 = verf.f32.pop %v6080
        %v6209 = verf.f32.pop %v6081
        %v6210 = verf.f32.pop %v6082
        %v6211 = verf.f32.pop %v6083
        %v6212 = verf.f32.pop %v6084
        %v6213 = verf.f32.pop %v6085
        %v6214 = verf.f32.pop %v6086
        %v6215 = verf.f32.pop %v6087
        %v6216 = verf.f32.pop %v6088
        %v6217 = verf.f32.pop %v6089
        %v6218 = verf.f32.pop %v6090
        %v6219 = verf.f32.pop %v6091
        %v6220 = verf.f32.pop %v6092
        %v6221 = verf.f32.pop %v6093
        %v6222 = verf.f32.pop %v6094
        %v6223 = verf.f32.pop %v6095
        %v6224 = verf.f32.pop %v6096
        %v6225 = verf.f32.pop %v6097
        %v6226 = verf.f32.pop %v6098
        %v6227 = verf.f32.pop %v6099
        %v6228 = verf.f32.pop %v6100
        %v6229 = verf.f32.pop %v6101
        %v6230 = verf.f32.pop %v6102
        %v6231 = verf.f32.pop %v6103
        %v6232 = verf.f32.pop %v6104
        %v6233 = verf.f32.pop %v6105
        %v6234 = verf.f32.pop %v6106
        %v6235 = verf.f32.pop %v6107
        %v6236 = verf.f32.pop %v6108
        %v6237 = verf.f32.pop %v6109
        %v6238 = verf.f32.pop %v6110
        %v6239 = verf.f32.pop %v6111
        %v6240 = verf.f32.pop %v6112
        %v6241 = verf.f32.pop %v6113
        %v6242 = verf.f32.pop %v6114
        %v6243 = verf.f32.pop %v6115
        %v6244 = verf.f32.pop %v6116
        %v6245 = verf.f32.pop %v6117
        %v6246 = verf.f32.pop %v6118
        %v6247 = verf.f32.pop %v6119
        %v6248 = verf.f32.pop %v6120
        %v6249 = verf.f32.pop %v6121
        %v6250 = verf.f32.pop %v6122
        %v6251 = verf.f32.pop %v6123
        %v6252 = verf.f32.pop %v6124
        %v6253 = verf.f32.pop %v6125
        %v6254 = verf.f32.pop %v6126
        %v6255 = verf.f32.pop %v6127
        %v6256 = verf.f32.pop %v6128
        %v6257 = verf.f32.pop %v6129
        %v6258 = verf.f32.pop %v6130
        %v6259 = verf.f32.pop %v6131
        %v6260 = verf.f32.pop %v6132
        %v6261 = verf.f32.pop %v6133
        %v6262 = verf.f32.pop %v6134
        %v6263 = verf.f32.pop %v6135
        %v6264 = verf.f32.pop %v6136
        %v6265 = verf.f32.pop %v6137
        %v6266 = verf.f32.pop %v6138
        %v6267 = vadd.f32 %v6139, 1.0
        %v6268 = vadd.f32 %v6140, 1.0
        %v6269 = vadd.f32 %v6141, 1.0
        %v6270 = vadd.f32 %v6142, 1.0
        %v6271 = vadd.f32 %v6143, 1.0
        %v6272 = vadd.f32 %v6144, 1.0
        %v6273 = vadd.f32 %v6145, 1.0
        %v6274 = vadd.f32 %v6146, 1.0
        %v6275 = vadd.f32 %v6147, 1.0
        %v6276 = vadd.f32 %v6148, 1.0
        %v6277 = vadd.f32 %v6149, 1.0
        %v6278 = vadd.f32 %v6150, 1.0
        %v6279 = vadd.f32 %v6151, 1.0
        %v6280 = vadd.f32 %v6152, 1.0
        %v6281 = vadd.f32 %v6153, 1.0
        %v6282 = vadd.f32 %v6154, 1.0
        %v6283 = vadd.f32 %v6155, 1.0
        %v6284 = vadd.f32 %v6156, 1.0
        %v6285 = vadd.f32 %v6157, 1.0
        %v6286 = vadd.f32 %v6158, 1.0
        %v6287 = vadd.f32 %v6159, 1.0
        %v6288 = vadd.f32 %v6160, 1.0
        %v6289 = vadd.f32 %v6161, 1.0
        %v6290 = vadd.f32 %v6162, 1.0
        %v6291 = vadd.f32 %v6163, 1.0
        %v6292 = vadd.f32 %v6164, 1.0
        %v6293 = vadd.f32 %v6165, 1.0
        %v6294 = vadd.f32 %v6166, 1.0
        %v6295 = vadd.f32 %v6167, 1.0
        %v6296 = vadd.f32 %v6168, 1.0
        %v6297 = vadd.f32 %v6169, 1.0
        %v6298 = vadd.f32 %v6170, 1.0
        %v6299 = vadd.f32 %v6171, 1.0
        %v6300 = vadd.f32 %v6172, 1.0
        %v6301 = vadd.f32 %v6173, 1.0
        %v6302 = vadd.f32 %v6174, 1.0
        %v6303 = vadd.f32 %v6175, 1.0
        %v6304 = vadd.f32 %v6176, 1.0
        %v6305 = vadd.f32 %v6177, 1.0
        %v6306 = vadd.f32 %v6178, 1.0
        %v6307 = vadd.f32 %v6179, 1.0
        %v6308 = vadd.f32 %v6180, 1.0
        %v6309 = vadd.f32 %v6181, 1.0
        %v6310 = vadd.f32 %v6182, 1.0
        %v6311 = vadd.f32 %v6183, 1.0
        %v6312 = vadd.f32 %v6184, 1.0
        %v6313 = vadd.f32 %v6185, 1.0
        %v6314 = vadd.f32 %v6186, 1.0
        %v6315 = vadd.f32 %v6187, 1.0
        %v6316 = vadd.f32 %v6188, 1.0
        %v6317 = vadd.f32 %v6189, 1.0
        %v6318 = vadd.f32 %v6190, 1.0
        %v6319 = vadd.f32 %v6191, 1.0
        %v6320 = vadd.f32 %v6192, 1.0
        %v6321 = vadd.f32 %v6193, 1.0
        %v6322 = vadd.f32 %v6194, 1.0
        %v6323 = vadd.f32 %v6195, 1.0
        %v6324 = vadd.f32 %v6196, 1.0
        %v6325 = vadd.f32 %v6197, 1.0
        %v6326 = vadd.f32 %v6198, 1.0
        %v6327 = vadd.f32 %v6199, 1.0
        %v6328 = vadd.f32 %v6200, 1.0
        %v6329 = vadd.f32 %v6201, 1.0
        %v6330 = vadd.f32 %v6202, 1.0
        %v6331 = vadd.f32 %v6203, 1.0
        %v6332 = vadd.f32 %v6204, 1.0
        %v6333 = vadd.f32 %v6205, 1.0
        %v6334 = vadd.f32 %v6206, 1.0
        %v6335 = vadd.f32 %v6207, 1.0
        %v6336 = vadd.f32 %v6208, 1.0
        %v6337 = vadd.f32 %v6209, 1.0
        %v6338 = vadd.f32 %v6210, 1.0
        %v6339 = vadd.f32 %v6211, 1.0
        %v6340 = vadd.f32 %v6212, 1.0
        %v6341 = vadd.f32 %v6213, 1.0
        %v6342 = vadd.f32 %v6214, 1.0
        %v6343 = vadd.f32 %v6215, 1.0
        %v6344 = vadd.f32 %v6216, 1.0
        %v6345 = vadd.f32 %v6217, 1.0
        %v6346 = vadd.f32 %v6218, 1.0
        %v6347 = vadd.f32 %v6219, 1.0
        %v6348 = vadd.f32 %v6220, 1.0
        %v6349 = vadd.f32 %v6221, 1.0
        %v6350 = vadd.f32 %v6222, 1.0
        %v6351 = vadd.f32 %v6223, 1.0
        %v6352 = vadd.f32 %v6224, 1.0
        %v6353 = vadd.f32 %v6225, 1.0
        %v6354 = vadd.f32 %v6226, 1.0
        %v6355 = vadd.f32 %v6227, 1.0
        %v6356 = vadd.f32 %v6228, 1.0
        %v6357 = vadd.f32 %v6229, 1.0
        %v6358 = vadd.f32 %v6230, 1.0
        %v6359 = vadd.f32 %v6231, 1.0
        %v6360 = vadd.f32 %v6232, 1.0
        %v6361 = vadd.f32 %v6233, 1.0
        %v6362 = vadd.f32 %v6234, 1.0
        %v6363 = vadd.f32 %v6235, 1.0
        %v6364 = vadd.f32 %v6236, 1.0
        %v6365 = vadd.f32 %v6237, 1.0
        %v6366 = vadd.f32 %v6238, 1.0
        %v6367 = vadd.f32 %v6239, 1.0
        %v6368 = vadd.f32 %v6240, 1.0
        %v6369 = vadd.f32 %v6241, 1.0
        %v6370 = vadd.f32 %v6242, 1.0
        %v6371 = vadd.f32 %v6243, 1.0
        %v6372 = vadd.f32 %v6244, 1.0
        %v6373 = vadd.f32 %v6245, 1.0
        %v6374 = vadd.f32 %v6246, 1.0
        %v6375 = vadd.f32 %v6247, 1.0
        %v6376 = vadd.f32 %v6248, 1.0
        %v6377 = vadd.f32 %v6249, 1.0
        %v6378 = vadd.f32 %v6250, 1.0
        %v6379 = vadd.f32 %v6251, 1.0
        %v6380 = vadd.f32 %v6252, 1.0
        %v6381 = vadd.f32 %v6253, 1.0
        %v6382 = vadd.f32 %v6254, 1.0
        %v6383 = vadd.f32 %v6255, 1.0
        %v6384 = vadd.f32 %v6256, 1.0
        %v6385 = vadd.f32 %v6257, 1.0
        %v6386 = vadd.f32 %v6258, 1.0
        %v6387 = vadd.f32 %v6259, 1.0
        %v6388 = vadd.f32 %v6260, 1.0
        %v6389 = vadd.f32 %v6261, 1.0
        %v6390 = vadd.f32 %v6262, 1.0
        %v6391 = vadd.f32 %v6263, 1.0
        %v6392 = vadd.f32 %v6264, 1.0
        %v6393 = vadd.f32 %v6265, 1.0
        %v6394 = vadd.f32 %v6266, 1.0
        %v6395 = vmul.f32 %v5883, %v6267
        %v6396 = vmul.f32 %v5884, %v6268
        %v6397 = vmul.f32 %v5885, %v6269
        %v6398 = vmul.f32 %v5886, %v6270
        %v6399 = vmul.f32 %v5887, %v6271
        %v6400 = vmul.f32 %v5888, %v6272
        %v6401 = vmul.f32 %v5889, %v6273
        %v6402 = vmul.f32 %v5890, %v6274
        %v6403 = vmul.f32 %v5891, %v6275
        %v6404 = vmul.f32 %v5892, %v6276
        %v6405 = vmul.f32 %v5893, %v6277
        %v6406 = vmul.f32 %v5894, %v6278
        %v6407 = vmul.f32 %v5895, %v6279
        %v6408 = vmul.f32 %v5896, %v6280
        %v6409 = vmul.f32 %v5897, %v6281
        %v6410 = vmul.f32 %v5898, %v6282
        %v6411 = vmul.f32 %v5899, %v6283
        %v6412 = vmul.f32 %v5900, %v6284
        %v6413 = vmul.f32 %v5901, %v6285
        %v6414 = vmul.f32 %v5902, %v6286
        %v6415 = vmul.f32 %v5903, %v6287
        %v6416 = vmul.f32 %v5904, %v6288
        %v6417 = vmul.f32 %v5905, %v6289
        %v6418 = vmul.f32 %v5906, %v6290
        %v6419 = vmul.f32 %v5907, %v6291
        %v6420 = vmul.f32 %v5908, %v6292
        %v6421 = vmul.f32 %v5909, %v6293
        %v6422 = vmul.f32 %v5910, %v6294
        %v6423 = vmul.f32 %v5911, %v6295
        %v6424 = vmul.f32 %v5912, %v6296
        %v6425 = vmul.f32 %v5913, %v6297
        %v6426 = vmul.f32 %v5914, %v6298
        %v6427 = vmul.f32 %v5915, %v6299
        %v6428 = vmul.f32 %v5916, %v6300
        %v6429 = vmul.f32 %v5917, %v6301
        %v6430 = vmul.f32 %v5918, %v6302
        %v6431 = vmul.f32 %v5919, %v6303
        %v6432 = vmul.f32 %v5920, %v6304
        %v6433 = vmul.f32 %v5921, %v6305
        %v6434 = vmul.f32 %v5922, %v6306
        %v6435 = vmul.f32 %v5923, %v6307
        %v6436 = vmul.f32 %v5924, %v6308
        %v6437 = vmul.f32 %v5925, %v6309
        %v6438 = vmul.f32 %v5926, %v6310
        %v6439 = vmul.f32 %v5927, %v6311
        %v6440 = vmul.f32 %v5928, %v6312
        %v6441 = vmul.f32 %v5929, %v6313
        %v6442 = vmul.f32 %v5930, %v6314
        %v6443 = vmul.f32 %v5931, %v6315
        %v6444 = vmul.f32 %v5932, %v6316
        %v6445 = vmul.f32 %v5933, %v6317
        %v6446 = vmul.f32 %v5934, %v6318
        %v6447 = vmul.f32 %v5935, %v6319
        %v6448 = vmul.f32 %v5936, %v6320
        %v6449 = vmul.f32 %v5937, %v6321
        %v6450 = vmul.f32 %v5938, %v6322
        %v6451 = vmul.f32 %v5939, %v6323
        %v6452 = vmul.f32 %v5940, %v6324
        %v6453 = vmul.f32 %v5941, %v6325
        %v6454 = vmul.f32 %v5942, %v6326
        %v6455 = vmul.f32 %v5943, %v6327
        %v6456 = vmul.f32 %v5944, %v6328
        %v6457 = vmul.f32 %v5945, %v6329
        %v6458 = vmul.f32 %v5946, %v6330
        %v6459 = vmul.f32 %v5947, %v6331
        %v6460 = vmul.f32 %v5948, %v6332
        %v6461 = vmul.f32 %v5949, %v6333
        %v6462 = vmul.f32 %v5950, %v6334
        %v6463 = vmul.f32 %v5951, %v6335
        %v6464 = vmul.f32 %v5952, %v6336
        %v6465 = vmul.f32 %v5953, %v6337
        %v6466 = vmul.f32 %v5954, %v6338
        %v6467 = vmul.f32 %v5955, %v6339
        %v6468 = vmul.f32 %v5956, %v6340
        %v6469 = vmul.f32 %v5957, %v6341
        %v6470 = vmul.f32 %v5958, %v6342
        %v6471 = vmul.f32 %v5959, %v6343
        %v6472 = vmul.f32 %v5960, %v6344
        %v6473 = vmul.f32 %v5961, %v6345
        %v6474 = vmul.f32 %v5962, %v6346
        %v6475 = vmul.f32 %v5963, %v6347
        %v6476 = vmul.f32 %v5964, %v6348
        %v6477 = vmul.f32 %v5965, %v6349
        %v6478 = vmul.f32 %v5966, %v6350
        %v6479 = vmul.f32 %v5967, %v6351
        %v6480 = vmul.f32 %v5968, %v6352
        %v6481 = vmul.f32 %v5969, %v6353
        %v6482 = vmul.f32 %v5970, %v6354
        %v6483 = vmul.f32 %v5971, %v6355
        %v6484 = vmul.f32 %v5972, %v6356
        %v6485 = vmul.f32 %v5973, %v6357
        %v6486 = vmul.f32 %v5974, %v6358
        %v6487 = vmul.f32 %v5975, %v6359
        %v6488 = vmul.f32 %v5976, %v6360
        %v6489 = vmul.f32 %v5977, %v6361
        %v6490 = vmul.f32 %v5978, %v6362
        %v6491 = vmul.f32 %v5979, %v6363
        %v6492 = vmul.f32 %v5980, %v6364
        %v6493 = vmul.f32 %v5981, %v6365
        %v6494 = vmul.f32 %v5982, %v6366
        %v6495 = vmul.f32 %v5983, %v6367
        %v6496 = vmul.f32 %v5984, %v6368
        %v6497 = vmul.f32 %v5985, %v6369
        %v6498 = vmul.f32 %v5986, %v6370
        %v6499 = vmul.f32 %v5987, %v6371
        %v6500 = vmul.f32 %v5988, %v6372
        %v6501 = vmul.f32 %v5989, %v6373
        %v6502 = vmul.f32 %v5990, %v6374
        %v6503 = vmul.f32 %v5991, %v6375
        %v6504 = vmul.f32 %v5992, %v6376
        %v6505 = vmul.f32 %v5993, %v6377
        %v6506 = vmul.f32 %v5994, %v6378
        %v6507 = vmul.f32 %v5995, %v6379
        %v6508 = vmul.f32 %v5996, %v6380
        %v6509 = vmul.f32 %v5997, %v6381
        %v6510 = vmul.f32 %v5998, %v6382
        %v6511 = vmul.f32 %v5999, %v6383
        %v6512 = vmul.f32 %v6000, %v6384
        %v6513 = vmul.f32 %v6001, %v6385
        %v6514 = vmul.f32 %v6002, %v6386
        %v6515 = vmul.f32 %v6003, %v6387
        %v6516 = vmul.f32 %v6004, %v6388
        %v6517 = vmul.f32 %v6005, %v6389
        %v6518 = vmul.f32 %v6006, %v6390
        %v6519 = vmul.f32 %v6007, %v6391
        %v6520 = vmul.f32 %v6008, %v6392
        %v6521 = vmul.f32 %v6009, %v6393
        %v6522 = vmul.f32 %v6010, %v6394
        %v6523 = vpack.c.bf16 %v6403, %v6395
        %v6524 = vpack.c.bf16 %v6404, %v6396
        %v6525 = vpack.c.bf16 %v6405, %v6397
        %v6526 = vpack.c.bf16 %v6406, %v6398
        %v6527 = vpack.c.bf16 %v6407, %v6399
        %v6528 = vpack.c.bf16 %v6408, %v6400
        %v6529 = vpack.c.bf16 %v6409, %v6401
        %v6530 = vpack.c.bf16 %v6410, %v6402
        %v6531 = vpack.c.bf16 %v6419, %v6411
        %v6532 = vpack.c.bf16 %v6420, %v6412
        %v6533 = vpack.c.bf16 %v6421, %v6413
        %v6534 = vpack.c.bf16 %v6422, %v6414
        %v6535 = vpack.c.bf16 %v6423, %v6415
        %v6536 = vpack.c.bf16 %v6424, %v6416
        %v6537 = vpack.c.bf16 %v6425, %v6417
        %v6538 = vpack.c.bf16 %v6426, %v6418
        %v6539 = vpack.c.bf16 %v6435, %v6427
        %v6540 = vpack.c.bf16 %v6436, %v6428
        %v6541 = vpack.c.bf16 %v6437, %v6429
        %v6542 = vpack.c.bf16 %v6438, %v6430
        %v6543 = vpack.c.bf16 %v6439, %v6431
        %v6544 = vpack.c.bf16 %v6440, %v6432
        %v6545 = vpack.c.bf16 %v6441, %v6433
        %v6546 = vpack.c.bf16 %v6442, %v6434
        %v6547 = vpack.c.bf16 %v6451, %v6443
        %v6548 = vpack.c.bf16 %v6452, %v6444
        %v6549 = vpack.c.bf16 %v6453, %v6445
        %v6550 = vpack.c.bf16 %v6454, %v6446
        %v6551 = vpack.c.bf16 %v6455, %v6447
        %v6552 = vpack.c.bf16 %v6456, %v6448
        %v6553 = vpack.c.bf16 %v6457, %v6449
        %v6554 = vpack.c.bf16 %v6458, %v6450
        %v6555 = vpack.c.bf16 %v6467, %v6459
        %v6556 = vpack.c.bf16 %v6468, %v6460
        %v6557 = vpack.c.bf16 %v6469, %v6461
        %v6558 = vpack.c.bf16 %v6470, %v6462
        %v6559 = vpack.c.bf16 %v6471, %v6463
        %v6560 = vpack.c.bf16 %v6472, %v6464
        %v6561 = vpack.c.bf16 %v6473, %v6465
        %v6562 = vpack.c.bf16 %v6474, %v6466
        %v6563 = vpack.c.bf16 %v6483, %v6475
        %v6564 = vpack.c.bf16 %v6484, %v6476
        %v6565 = vpack.c.bf16 %v6485, %v6477
        %v6566 = vpack.c.bf16 %v6486, %v6478
        %v6567 = vpack.c.bf16 %v6487, %v6479
        %v6568 = vpack.c.bf16 %v6488, %v6480
        %v6569 = vpack.c.bf16 %v6489, %v6481
        %v6570 = vpack.c.bf16 %v6490, %v6482
        %v6571 = vpack.c.bf16 %v6499, %v6491
        %v6572 = vpack.c.bf16 %v6500, %v6492
        %v6573 = vpack.c.bf16 %v6501, %v6493
        %v6574 = vpack.c.bf16 %v6502, %v6494
        %v6575 = vpack.c.bf16 %v6503, %v6495
        %v6576 = vpack.c.bf16 %v6504, %v6496
        %v6577 = vpack.c.bf16 %v6505, %v6497
        %v6578 = vpack.c.bf16 %v6506, %v6498
        %v6579 = vpack.c.bf16 %v6515, %v6507
        %v6580 = vpack.c.bf16 %v6516, %v6508
        %v6581 = vpack.c.bf16 %v6517, %v6509
        %v6582 = vpack.c.bf16 %v6518, %v6510
        %v6583 = vpack.c.bf16 %v6519, %v6511
        %v6584 = vpack.c.bf16 %v6520, %v6512
        %v6585 = vpack.c.bf16 %v6521, %v6513
        %v6586 = vpack.c.bf16 %v6522, %v6514
        %v6587 = vld [vmem:[%s1032] sm:$0xff]
        %v6588 = vld [vmem:[%s1032 + $0x8] sm:$0xff]
        %v6589 = vld [vmem:[%s1032 + $0x10] sm:$0xff]
        %v6590 = vld [vmem:[%s1032 + $0x18] sm:$0xff]
        %v6591 = vld [vmem:[%s1032 + $0x20] sm:$0xff]
        %v6592 = vld [vmem:[%s1032 + $0x28] sm:$0xff]
        %v6593 = vld [vmem:[%s1032 + $0x30] sm:$0xff]
        %v6594 = vld [vmem:[%s1032 + $0x38] sm:$0xff]
        %v6595 = vld [vmem:[%s1032 + $0x40] sm:$0xff]
        %v6596 = vld [vmem:[%s1032 + $0x48] sm:$0xff]
        %v6597 = vld [vmem:[%s1032 + $0x50] sm:$0xff]
        %v6598 = vld [vmem:[%s1032 + $0x58] sm:$0xff]
        %v6599 = vld [vmem:[%s1032 + $0x60] sm:$0xff]
        %v6600 = vld [vmem:[%s1032 + $0x68] sm:$0xff]
        %v6601 = vld [vmem:[%s1032 + $0x70] sm:$0xff]
        %v6602 = vld [vmem:[%s1032 + $0x78] sm:$0xff]
        %v6603 = vld [vmem:[%s1032 + $0x80] sm:$0xff]
        %v6604 = vld [vmem:[%s1032 + $0x88] sm:$0xff]
        %v6605 = vld [vmem:[%s1032 + $0x90] sm:$0xff]
        %v6606 = vld [vmem:[%s1032 + $0x98] sm:$0xff]
        %v6607 = vld [vmem:[%s1032 + $0xa0] sm:$0xff]
        %v6608 = vld [vmem:[%s1032 + $0xa8] sm:$0xff]
        %v6609 = vld [vmem:[%s1032 + $0xb0] sm:$0xff]
        %v6610 = vld [vmem:[%s1032 + $0xb8] sm:$0xff]
        %v6611 = vld [vmem:[%s1032 + $0xc0] sm:$0xff]
        %v6612 = vld [vmem:[%s1032 + $0xc8] sm:$0xff]
        %v6613 = vld [vmem:[%s1032 + $0xd0] sm:$0xff]
        %v6614 = vld [vmem:[%s1032 + $0xd8] sm:$0xff]
        %v6615 = vld [vmem:[%s1032 + $0xe0] sm:$0xff]
        %v6616 = vld [vmem:[%s1032 + $0xe8] sm:$0xff]
        %v6617 = vld [vmem:[%s1032 + $0xf0] sm:$0xff]
        %v6618 = vld [vmem:[%s1032 + $0xf8] sm:$0xff]
        %v6619 = vld [vmem:[%s1032 + $0x100] sm:$0xff]
        %v6620 = vld [vmem:[%s1032 + $0x108] sm:$0xff]
        %v6621 = vld [vmem:[%s1032 + $0x110] sm:$0xff]
        %v6622 = vld [vmem:[%s1032 + $0x118] sm:$0xff]
        %v6623 = vld [vmem:[%s1032 + $0x120] sm:$0xff]
        %v6624 = vld [vmem:[%s1032 + $0x128] sm:$0xff]
        %v6625 = vld [vmem:[%s1032 + $0x130] sm:$0xff]
        %v6626 = vld [vmem:[%s1032 + $0x138] sm:$0xff]
        %v6627 = vld [vmem:[%s1032 + $0x140] sm:$0xff]
        %v6628 = vld [vmem:[%s1032 + $0x148] sm:$0xff]
        %v6629 = vld [vmem:[%s1032 + $0x150] sm:$0xff]
        %v6630 = vld [vmem:[%s1032 + $0x158] sm:$0xff]
        %v6631 = vld [vmem:[%s1032 + $0x160] sm:$0xff]
        %v6632 = vld [vmem:[%s1032 + $0x168] sm:$0xff]
        %v6633 = vld [vmem:[%s1032 + $0x170] sm:$0xff]
        %v6634 = vld [vmem:[%s1032 + $0x178] sm:$0xff]
        %v6635 = vld [vmem:[%s1032 + $0x180] sm:$0xff]
        %v6636 = vld [vmem:[%s1032 + $0x188] sm:$0xff]
        %v6637 = vld [vmem:[%s1032 + $0x190] sm:$0xff]
        %v6638 = vld [vmem:[%s1032 + $0x198] sm:$0xff]
        %v6639 = vld [vmem:[%s1032 + $0x1a0] sm:$0xff]
        %v6640 = vld [vmem:[%s1032 + $0x1a8] sm:$0xff]
        %v6641 = vld [vmem:[%s1032 + $0x1b0] sm:$0xff]
        %v6642 = vld [vmem:[%s1032 + $0x1b8] sm:$0xff]
        %v6643 = vld [vmem:[%s1032 + $0x1c0] sm:$0xff]
        %v6644 = vld [vmem:[%s1032 + $0x1c8] sm:$0xff]
        %v6645 = vld [vmem:[%s1032 + $0x1d0] sm:$0xff]
        %v6646 = vld [vmem:[%s1032 + $0x1d8] sm:$0xff]
        %v6647 = vld [vmem:[%s1032 + $0x1e0] sm:$0xff]
        %v6648 = vld [vmem:[%s1032 + $0x1e8] sm:$0xff]
        %v6649 = vld [vmem:[%s1032 + $0x1f0] sm:$0xff]
        %v6650 = vld [vmem:[%s1032 + $0x1f8] sm:$0xff]
        %v6651 = vld [vmem:[%s1032 + $0x200] sm:$0xff]
        %v6652 = vld [vmem:[%s1032 + $0x208] sm:$0xff]
        %v6653 = vld [vmem:[%s1032 + $0x210] sm:$0xff]
        %v6654 = vld [vmem:[%s1032 + $0x218] sm:$0xff]
        %v6655 = vld [vmem:[%s1032 + $0x220] sm:$0xff]
        %v6656 = vld [vmem:[%s1032 + $0x228] sm:$0xff]
        %v6657 = vld [vmem:[%s1032 + $0x230] sm:$0xff]
        %v6658 = vld [vmem:[%s1032 + $0x238] sm:$0xff]
        %v6659 = vld [vmem:[%s1032 + $0x240] sm:$0xff]
        %v6660 = vld [vmem:[%s1032 + $0x248] sm:$0xff]
        %v6661 = vld [vmem:[%s1032 + $0x250] sm:$0xff]
        %v6662 = vld [vmem:[%s1032 + $0x258] sm:$0xff]
        %v6663 = vld [vmem:[%s1032 + $0x260] sm:$0xff]
        %v6664 = vld [vmem:[%s1032 + $0x268] sm:$0xff]
        %v6665 = vld [vmem:[%s1032 + $0x270] sm:$0xff]
        %v6666 = vld [vmem:[%s1032 + $0x278] sm:$0xff]
        %v6667 = vld [vmem:[%s1032 + $0x280] sm:$0xff]
        %v6668 = vld [vmem:[%s1032 + $0x288] sm:$0xff]
        %v6669 = vld [vmem:[%s1032 + $0x290] sm:$0xff]
        %v6670 = vld [vmem:[%s1032 + $0x298] sm:$0xff]
        %v6671 = vld [vmem:[%s1032 + $0x2a0] sm:$0xff]
        %v6672 = vld [vmem:[%s1032 + $0x2a8] sm:$0xff]
        %v6673 = vld [vmem:[%s1032 + $0x2b0] sm:$0xff]
        %v6674 = vld [vmem:[%s1032 + $0x2b8] sm:$0xff]
        %v6675 = vld [vmem:[%s1032 + $0x2c0] sm:$0xff]
        %v6676 = vld [vmem:[%s1032 + $0x2c8] sm:$0xff]
        %v6677 = vld [vmem:[%s1032 + $0x2d0] sm:$0xff]
        %v6678 = vld [vmem:[%s1032 + $0x2d8] sm:$0xff]
        %v6679 = vld [vmem:[%s1032 + $0x2e0] sm:$0xff]
        %v6680 = vld [vmem:[%s1032 + $0x2e8] sm:$0xff]
        %v6681 = vld [vmem:[%s1032 + $0x2f0] sm:$0xff]
        %v6682 = vld [vmem:[%s1032 + $0x2f8] sm:$0xff]
        %v6683 = vld [vmem:[%s1032 + $0x300] sm:$0xff]
        %v6684 = vld [vmem:[%s1032 + $0x308] sm:$0xff]
        %v6685 = vld [vmem:[%s1032 + $0x310] sm:$0xff]
        %v6686 = vld [vmem:[%s1032 + $0x318] sm:$0xff]
        %v6687 = vld [vmem:[%s1032 + $0x320] sm:$0xff]
        %v6688 = vld [vmem:[%s1032 + $0x328] sm:$0xff]
        %v6689 = vld [vmem:[%s1032 + $0x330] sm:$0xff]
        %v6690 = vld [vmem:[%s1032 + $0x338] sm:$0xff]
        %v6691 = vld [vmem:[%s1032 + $0x340] sm:$0xff]
        %v6692 = vld [vmem:[%s1032 + $0x348] sm:$0xff]
        %v6693 = vld [vmem:[%s1032 + $0x350] sm:$0xff]
        %v6694 = vld [vmem:[%s1032 + $0x358] sm:$0xff]
        %v6695 = vld [vmem:[%s1032 + $0x360] sm:$0xff]
        %v6696 = vld [vmem:[%s1032 + $0x368] sm:$0xff]
        %v6697 = vld [vmem:[%s1032 + $0x370] sm:$0xff]
        %v6698 = vld [vmem:[%s1032 + $0x378] sm:$0xff]
        %v6699 = vld [vmem:[%s1032 + $0x380] sm:$0xff]
        %v6700 = vld [vmem:[%s1032 + $0x388] sm:$0xff]
        %v6701 = vld [vmem:[%s1032 + $0x390] sm:$0xff]
        %v6702 = vld [vmem:[%s1032 + $0x398] sm:$0xff]
        %v6703 = vld [vmem:[%s1032 + $0x3a0] sm:$0xff]
        %v6704 = vld [vmem:[%s1032 + $0x3a8] sm:$0xff]
        %v6705 = vld [vmem:[%s1032 + $0x3b0] sm:$0xff]
        %v6706 = vld [vmem:[%s1032 + $0x3b8] sm:$0xff]
        %v6707 = vld [vmem:[%s1032 + $0x3c0] sm:$0xff]
        %v6708 = vld [vmem:[%s1032 + $0x3c8] sm:$0xff]
        %v6709 = vld [vmem:[%s1032 + $0x3d0] sm:$0xff]
        %v6710 = vld [vmem:[%s1032 + $0x3d8] sm:$0xff]
        %v6711 = vld [vmem:[%s1032 + $0x3e0] sm:$0xff]
        %v6712 = vld [vmem:[%s1032 + $0x3e8] sm:$0xff]
        %v6713 = vld [vmem:[%s1032 + $0x3f0] sm:$0xff]
        %v6714 = vld [vmem:[%s1032 + $0x3f8] sm:$0xff]
        %v6715 = vld [vmem:[%s1041] sm:$0x3]
        %v6717 = vlaneseq
        %v6718 = vshrl.u32 %v6717, 7
        %v6719 = vsub.s32 0, %v6718
        %v6720 = vrot.slane %v6715, %v6719
        %v6721 = vlaneseq
        %v6722 = vshrl.u32 %v6721, 7
        %v6723 = vsub.s32 1, %v6722
        %v6724 = vrot.slane %v6715, %v6723
        %v6855 = vunpack.c.l.b16 %v6587
        %v6856 = vunpack.c.h.b16 %v6587
        %v6857 = vunpack.c.l.b16 %v6588
        %v6858 = vunpack.c.h.b16 %v6588
        %v6859 = vunpack.c.l.b16 %v6589
        %v6860 = vunpack.c.h.b16 %v6589
        %v6861 = vunpack.c.l.b16 %v6590
        %v6862 = vunpack.c.h.b16 %v6590
        %v6863 = vunpack.c.l.b16 %v6591
        %v6864 = vunpack.c.h.b16 %v6591
        %v6865 = vunpack.c.l.b16 %v6592
        %v6866 = vunpack.c.h.b16 %v6592
        %v6867 = vunpack.c.l.b16 %v6593
        %v6868 = vunpack.c.h.b16 %v6593
        %v6869 = vunpack.c.l.b16 %v6594
        %v6870 = vunpack.c.h.b16 %v6594
        %v6871 = vunpack.c.l.b16 %v6595
        %v6872 = vunpack.c.h.b16 %v6595
        %v6873 = vunpack.c.l.b16 %v6596
        %v6874 = vunpack.c.h.b16 %v6596
        %v6875 = vunpack.c.l.b16 %v6597
        %v6876 = vunpack.c.h.b16 %v6597
        %v6877 = vunpack.c.l.b16 %v6598
        %v6878 = vunpack.c.h.b16 %v6598
        %v6879 = vunpack.c.l.b16 %v6599
        %v6880 = vunpack.c.h.b16 %v6599
        %v6881 = vunpack.c.l.b16 %v6600
        %v6882 = vunpack.c.h.b16 %v6600
        %v6883 = vunpack.c.l.b16 %v6601
        %v6884 = vunpack.c.h.b16 %v6601
        %v6885 = vunpack.c.l.b16 %v6602
        %v6886 = vunpack.c.h.b16 %v6602
        %v6887 = vunpack.c.l.b16 %v6603
        %v6888 = vunpack.c.h.b16 %v6603
        %v6889 = vunpack.c.l.b16 %v6604
        %v6890 = vunpack.c.h.b16 %v6604
        %v6891 = vunpack.c.l.b16 %v6605
        %v6892 = vunpack.c.h.b16 %v6605
        %v6893 = vunpack.c.l.b16 %v6606
        %v6894 = vunpack.c.h.b16 %v6606
        %v6895 = vunpack.c.l.b16 %v6607
        %v6896 = vunpack.c.h.b16 %v6607
        %v6897 = vunpack.c.l.b16 %v6608
        %v6898 = vunpack.c.h.b16 %v6608
        %v6899 = vunpack.c.l.b16 %v6609
        %v6900 = vunpack.c.h.b16 %v6609
        %v6901 = vunpack.c.l.b16 %v6610
        %v6902 = vunpack.c.h.b16 %v6610
        %v6903 = vunpack.c.l.b16 %v6611
        %v6904 = vunpack.c.h.b16 %v6611
        %v6905 = vunpack.c.l.b16 %v6612
        %v6906 = vunpack.c.h.b16 %v6612
        %v6907 = vunpack.c.l.b16 %v6613
        %v6908 = vunpack.c.h.b16 %v6613
        %v6909 = vunpack.c.l.b16 %v6614
        %v6910 = vunpack.c.h.b16 %v6614
        %v6911 = vunpack.c.l.b16 %v6615
        %v6912 = vunpack.c.h.b16 %v6615
        %v6913 = vunpack.c.l.b16 %v6616
        %v6914 = vunpack.c.h.b16 %v6616
        %v6915 = vunpack.c.l.b16 %v6617
        %v6916 = vunpack.c.h.b16 %v6617
        %v6917 = vunpack.c.l.b16 %v6618
        %v6918 = vunpack.c.h.b16 %v6618
        %v6919 = vunpack.c.l.b16 %v6619
        %v6920 = vunpack.c.h.b16 %v6619
        %v6921 = vunpack.c.l.b16 %v6620
        %v6922 = vunpack.c.h.b16 %v6620
        %v6923 = vunpack.c.l.b16 %v6621
        %v6924 = vunpack.c.h.b16 %v6621
        %v6925 = vunpack.c.l.b16 %v6622
        %v6926 = vunpack.c.h.b16 %v6622
        %v6927 = vunpack.c.l.b16 %v6623
        %v6928 = vunpack.c.h.b16 %v6623
        %v6929 = vunpack.c.l.b16 %v6624
        %v6930 = vunpack.c.h.b16 %v6624
        %v6931 = vunpack.c.l.b16 %v6625
        %v6932 = vunpack.c.h.b16 %v6625
        %v6933 = vunpack.c.l.b16 %v6626
        %v6934 = vunpack.c.h.b16 %v6626
        %v6935 = vunpack.c.l.b16 %v6627
        %v6936 = vunpack.c.h.b16 %v6627
        %v6937 = vunpack.c.l.b16 %v6628
        %v6938 = vunpack.c.h.b16 %v6628
        %v6939 = vunpack.c.l.b16 %v6629
        %v6940 = vunpack.c.h.b16 %v6629
        %v6941 = vunpack.c.l.b16 %v6630
        %v6942 = vunpack.c.h.b16 %v6630
        %v6943 = vunpack.c.l.b16 %v6631
        %v6944 = vunpack.c.h.b16 %v6631
        %v6945 = vunpack.c.l.b16 %v6632
        %v6946 = vunpack.c.h.b16 %v6632
        %v6947 = vunpack.c.l.b16 %v6633
        %v6948 = vunpack.c.h.b16 %v6633
        %v6949 = vunpack.c.l.b16 %v6634
        %v6950 = vunpack.c.h.b16 %v6634
        %v6951 = vunpack.c.l.b16 %v6635
        %v6952 = vunpack.c.h.b16 %v6635
        %v6953 = vunpack.c.l.b16 %v6636
        %v6954 = vunpack.c.h.b16 %v6636
        %v6955 = vunpack.c.l.b16 %v6637
        %v6956 = vunpack.c.h.b16 %v6637
        %v6957 = vunpack.c.l.b16 %v6638
        %v6958 = vunpack.c.h.b16 %v6638
        %v6959 = vunpack.c.l.b16 %v6639
        %v6960 = vunpack.c.h.b16 %v6639
        %v6961 = vunpack.c.l.b16 %v6640
        %v6962 = vunpack.c.h.b16 %v6640
        %v6963 = vunpack.c.l.b16 %v6641
        %v6964 = vunpack.c.h.b16 %v6641
        %v6965 = vunpack.c.l.b16 %v6642
        %v6966 = vunpack.c.h.b16 %v6642
        %v6967 = vunpack.c.l.b16 %v6643
        %v6968 = vunpack.c.h.b16 %v6643
        %v6969 = vunpack.c.l.b16 %v6644
        %v6970 = vunpack.c.h.b16 %v6644
        %v6971 = vunpack.c.l.b16 %v6645
        %v6972 = vunpack.c.h.b16 %v6645
        %v6973 = vunpack.c.l.b16 %v6646
        %v6974 = vunpack.c.h.b16 %v6646
        %v6975 = vunpack.c.l.b16 %v6647
        %v6976 = vunpack.c.h.b16 %v6647
        %v6977 = vunpack.c.l.b16 %v6648
        %v6978 = vunpack.c.h.b16 %v6648
        %v6979 = vunpack.c.l.b16 %v6649
        %v6980 = vunpack.c.h.b16 %v6649
        %v6981 = vunpack.c.l.b16 %v6650
        %v6982 = vunpack.c.h.b16 %v6650
        %v6983 = vunpack.c.l.b16 %v6651
        %v6984 = vunpack.c.h.b16 %v6651
        %v6985 = vunpack.c.l.b16 %v6652
        %v6986 = vunpack.c.h.b16 %v6652
        %v6987 = vunpack.c.l.b16 %v6653
        %v6988 = vunpack.c.h.b16 %v6653
        %v6989 = vunpack.c.l.b16 %v6654
        %v6990 = vunpack.c.h.b16 %v6654
        %v6991 = vunpack.c.l.b16 %v6655
        %v6992 = vunpack.c.h.b16 %v6655
        %v6993 = vunpack.c.l.b16 %v6656
        %v6994 = vunpack.c.h.b16 %v6656
        %v6995 = vunpack.c.l.b16 %v6657
        %v6996 = vunpack.c.h.b16 %v6657
        %v6997 = vunpack.c.l.b16 %v6658
        %v6998 = vunpack.c.h.b16 %v6658
        %v6999 = vunpack.c.l.b16 %v6659
        %v7000 = vunpack.c.h.b16 %v6659
        %v7001 = vunpack.c.l.b16 %v6660
        %v7002 = vunpack.c.h.b16 %v6660
        %v7003 = vunpack.c.l.b16 %v6661
        %v7004 = vunpack.c.h.b16 %v6661
        %v7005 = vunpack.c.l.b16 %v6662
        %v7006 = vunpack.c.h.b16 %v6662
        %v7007 = vunpack.c.l.b16 %v6663
        %v7008 = vunpack.c.h.b16 %v6663
        %v7009 = vunpack.c.l.b16 %v6664
        %v7010 = vunpack.c.h.b16 %v6664
        %v7011 = vunpack.c.l.b16 %v6665
        %v7012 = vunpack.c.h.b16 %v6665
        %v7013 = vunpack.c.l.b16 %v6666
        %v7014 = vunpack.c.h.b16 %v6666
        %v7015 = vunpack.c.l.b16 %v6667
        %v7016 = vunpack.c.h.b16 %v6667
        %v7017 = vunpack.c.l.b16 %v6668
        %v7018 = vunpack.c.h.b16 %v6668
        %v7019 = vunpack.c.l.b16 %v6669
        %v7020 = vunpack.c.h.b16 %v6669
        %v7021 = vunpack.c.l.b16 %v6670
        %v7022 = vunpack.c.h.b16 %v6670
        %v7023 = vunpack.c.l.b16 %v6671
        %v7024 = vunpack.c.h.b16 %v6671
        %v7025 = vunpack.c.l.b16 %v6672
        %v7026 = vunpack.c.h.b16 %v6672
        %v7027 = vunpack.c.l.b16 %v6673
        %v7028 = vunpack.c.h.b16 %v6673
        %v7029 = vunpack.c.l.b16 %v6674
        %v7030 = vunpack.c.h.b16 %v6674
        %v7031 = vunpack.c.l.b16 %v6675
        %v7032 = vunpack.c.h.b16 %v6675
        %v7033 = vunpack.c.l.b16 %v6676
        %v7034 = vunpack.c.h.b16 %v6676
        %v7035 = vunpack.c.l.b16 %v6677
        %v7036 = vunpack.c.h.b16 %v6677
        %v7037 = vunpack.c.l.b16 %v6678
        %v7038 = vunpack.c.h.b16 %v6678
        %v7039 = vunpack.c.l.b16 %v6679
        %v7040 = vunpack.c.h.b16 %v6679
        %v7041 = vunpack.c.l.b16 %v6680
        %v7042 = vunpack.c.h.b16 %v6680
        %v7043 = vunpack.c.l.b16 %v6681
        %v7044 = vunpack.c.h.b16 %v6681
        %v7045 = vunpack.c.l.b16 %v6682
        %v7046 = vunpack.c.h.b16 %v6682
        %v7047 = vunpack.c.l.b16 %v6683
        %v7048 = vunpack.c.h.b16 %v6683
        %v7049 = vunpack.c.l.b16 %v6684
        %v7050 = vunpack.c.h.b16 %v6684
        %v7051 = vunpack.c.l.b16 %v6685
        %v7052 = vunpack.c.h.b16 %v6685
        %v7053 = vunpack.c.l.b16 %v6686
        %v7054 = vunpack.c.h.b16 %v6686
        %v7055 = vunpack.c.l.b16 %v6687
        %v7056 = vunpack.c.h.b16 %v6687
        %v7057 = vunpack.c.l.b16 %v6688
        %v7058 = vunpack.c.h.b16 %v6688
        %v7059 = vunpack.c.l.b16 %v6689
        %v7060 = vunpack.c.h.b16 %v6689
        %v7061 = vunpack.c.l.b16 %v6690
        %v7062 = vunpack.c.h.b16 %v6690
        %v7063 = vunpack.c.l.b16 %v6691
        %v7064 = vunpack.c.h.b16 %v6691
        %v7065 = vunpack.c.l.b16 %v6692
        %v7066 = vunpack.c.h.b16 %v6692
        %v7067 = vunpack.c.l.b16 %v6693
        %v7068 = vunpack.c.h.b16 %v6693
        %v7069 = vunpack.c.l.b16 %v6694
        %v7070 = vunpack.c.h.b16 %v6694
        %v7071 = vunpack.c.l.b16 %v6695
        %v7072 = vunpack.c.h.b16 %v6695
        %v7073 = vunpack.c.l.b16 %v6696
        %v7074 = vunpack.c.h.b16 %v6696
        %v7075 = vunpack.c.l.b16 %v6697
        %v7076 = vunpack.c.h.b16 %v6697
        %v7077 = vunpack.c.l.b16 %v6698
        %v7078 = vunpack.c.h.b16 %v6698
        %v7079 = vunpack.c.l.b16 %v6699
        %v7080 = vunpack.c.h.b16 %v6699
        %v7081 = vunpack.c.l.b16 %v6700
        %v7082 = vunpack.c.h.b16 %v6700
        %v7083 = vunpack.c.l.b16 %v6701
        %v7084 = vunpack.c.h.b16 %v6701
        %v7085 = vunpack.c.l.b16 %v6702
        %v7086 = vunpack.c.h.b16 %v6702
        %v7087 = vunpack.c.l.b16 %v6703
        %v7088 = vunpack.c.h.b16 %v6703
        %v7089 = vunpack.c.l.b16 %v6704
        %v7090 = vunpack.c.h.b16 %v6704
        %v7091 = vunpack.c.l.b16 %v6705
        %v7092 = vunpack.c.h.b16 %v6705
        %v7093 = vunpack.c.l.b16 %v6706
        %v7094 = vunpack.c.h.b16 %v6706
        %v7095 = vunpack.c.l.b16 %v6707
        %v7096 = vunpack.c.h.b16 %v6707
        %v7097 = vunpack.c.l.b16 %v6708
        %v7098 = vunpack.c.h.b16 %v6708
        %v7099 = vunpack.c.l.b16 %v6709
        %v7100 = vunpack.c.h.b16 %v6709
        %v7101 = vunpack.c.l.b16 %v6710
        %v7102 = vunpack.c.h.b16 %v6710
        %v7103 = vunpack.c.l.b16 %v6711
        %v7104 = vunpack.c.h.b16 %v6711
        %v7105 = vunpack.c.l.b16 %v6712
        %v7106 = vunpack.c.h.b16 %v6712
        %v7107 = vunpack.c.l.b16 %v6713
        %v7108 = vunpack.c.h.b16 %v6713
        %v7109 = vunpack.c.l.b16 %v6714
        %v7110 = vunpack.c.h.b16 %v6714
        %v7111 = vpack.c.b16 %v6857, %v6855
        %v7112 = vpack.c.b16 %v6858, %v6856
        %v7113 = vpack.c.b16 %v6861, %v6859
        %v7114 = vpack.c.b16 %v6862, %v6860
        %v7115 = vpack.c.b16 %v6865, %v6863
        %v7116 = vpack.c.b16 %v6866, %v6864
        %v7117 = vpack.c.b16 %v6869, %v6867
        %v7118 = vpack.c.b16 %v6870, %v6868
        %v7119 = vpack.c.b16 %v6873, %v6871
        %v7120 = vpack.c.b16 %v6874, %v6872
        %v7121 = vpack.c.b16 %v6877, %v6875
        %v7122 = vpack.c.b16 %v6878, %v6876
        %v7123 = vpack.c.b16 %v6881, %v6879
        %v7124 = vpack.c.b16 %v6882, %v6880
        %v7125 = vpack.c.b16 %v6885, %v6883
        %v7126 = vpack.c.b16 %v6886, %v6884
        %v7127 = vpack.c.b16 %v6889, %v6887
        %v7128 = vpack.c.b16 %v6890, %v6888
        %v7129 = vpack.c.b16 %v6893, %v6891
        %v7130 = vpack.c.b16 %v6894, %v6892
        %v7131 = vpack.c.b16 %v6897, %v6895
        %v7132 = vpack.c.b16 %v6898, %v6896
        %v7133 = vpack.c.b16 %v6901, %v6899
        %v7134 = vpack.c.b16 %v6902, %v6900
        %v7135 = vpack.c.b16 %v6905, %v6903
        %v7136 = vpack.c.b16 %v6906, %v6904
        %v7137 = vpack.c.b16 %v6909, %v6907
        %v7138 = vpack.c.b16 %v6910, %v6908
        %v7139 = vpack.c.b16 %v6913, %v6911
        %v7140 = vpack.c.b16 %v6914, %v6912
        %v7141 = vpack.c.b16 %v6917, %v6915
        %v7142 = vpack.c.b16 %v6918, %v6916
        %v7143 = vpack.c.b16 %v6921, %v6919
        %v7144 = vpack.c.b16 %v6922, %v6920
        %v7145 = vpack.c.b16 %v6925, %v6923
        %v7146 = vpack.c.b16 %v6926, %v6924
        %v7147 = vpack.c.b16 %v6929, %v6927
        %v7148 = vpack.c.b16 %v6930, %v6928
        %v7149 = vpack.c.b16 %v6933, %v6931
        %v7150 = vpack.c.b16 %v6934, %v6932
        %v7151 = vpack.c.b16 %v6937, %v6935
        %v7152 = vpack.c.b16 %v6938, %v6936
        %v7153 = vpack.c.b16 %v6941, %v6939
        %v7154 = vpack.c.b16 %v6942, %v6940
        %v7155 = vpack.c.b16 %v6945, %v6943
        %v7156 = vpack.c.b16 %v6946, %v6944
        %v7157 = vpack.c.b16 %v6949, %v6947
        %v7158 = vpack.c.b16 %v6950, %v6948
        %v7159 = vpack.c.b16 %v6953, %v6951
        %v7160 = vpack.c.b16 %v6954, %v6952
        %v7161 = vpack.c.b16 %v6957, %v6955
        %v7162 = vpack.c.b16 %v6958, %v6956
        %v7163 = vpack.c.b16 %v6961, %v6959
        %v7164 = vpack.c.b16 %v6962, %v6960
        %v7165 = vpack.c.b16 %v6965, %v6963
        %v7166 = vpack.c.b16 %v6966, %v6964
        %v7167 = vpack.c.b16 %v6969, %v6967
        %v7168 = vpack.c.b16 %v6970, %v6968
        %v7169 = vpack.c.b16 %v6973, %v6971
        %v7170 = vpack.c.b16 %v6974, %v6972
        %v7171 = vpack.c.b16 %v6977, %v6975
        %v7172 = vpack.c.b16 %v6978, %v6976
        %v7173 = vpack.c.b16 %v6981, %v6979
        %v7174 = vpack.c.b16 %v6982, %v6980
        %v7175 = vpack.c.b16 %v6985, %v6983
        %v7176 = vpack.c.b16 %v6986, %v6984
        %v7177 = vpack.c.b16 %v6989, %v6987
        %v7178 = vpack.c.b16 %v6990, %v6988
        %v7179 = vpack.c.b16 %v6993, %v6991
        %v7180 = vpack.c.b16 %v6994, %v6992
        %v7181 = vpack.c.b16 %v6997, %v6995
        %v7182 = vpack.c.b16 %v6998, %v6996
        %v7183 = vpack.c.b16 %v7001, %v6999
        %v7184 = vpack.c.b16 %v7002, %v7000
        %v7185 = vpack.c.b16 %v7005, %v7003
        %v7186 = vpack.c.b16 %v7006, %v7004
        %v7187 = vpack.c.b16 %v7009, %v7007
        %v7188 = vpack.c.b16 %v7010, %v7008
        %v7189 = vpack.c.b16 %v7013, %v7011
        %v7190 = vpack.c.b16 %v7014, %v7012
        %v7191 = vpack.c.b16 %v7017, %v7015
        %v7192 = vpack.c.b16 %v7018, %v7016
        %v7193 = vpack.c.b16 %v7021, %v7019
        %v7194 = vpack.c.b16 %v7022, %v7020
        %v7195 = vpack.c.b16 %v7025, %v7023
        %v7196 = vpack.c.b16 %v7026, %v7024
        %v7197 = vpack.c.b16 %v7029, %v7027
        %v7198 = vpack.c.b16 %v7030, %v7028
        %v7199 = vpack.c.b16 %v7033, %v7031
        %v7200 = vpack.c.b16 %v7034, %v7032
        %v7201 = vpack.c.b16 %v7037, %v7035
        %v7202 = vpack.c.b16 %v7038, %v7036
        %v7203 = vpack.c.b16 %v7041, %v7039
        %v7204 = vpack.c.b16 %v7042, %v7040
        %v7205 = vpack.c.b16 %v7045, %v7043
        %v7206 = vpack.c.b16 %v7046, %v7044
        %v7207 = vpack.c.b16 %v7049, %v7047
        %v7208 = vpack.c.b16 %v7050, %v7048
        %v7209 = vpack.c.b16 %v7053, %v7051
        %v7210 = vpack.c.b16 %v7054, %v7052
        %v7211 = vpack.c.b16 %v7057, %v7055
        %v7212 = vpack.c.b16 %v7058, %v7056
        %v7213 = vpack.c.b16 %v7061, %v7059
        %v7214 = vpack.c.b16 %v7062, %v7060
        %v7215 = vpack.c.b16 %v7065, %v7063
        %v7216 = vpack.c.b16 %v7066, %v7064
        %v7217 = vpack.c.b16 %v7069, %v7067
        %v7218 = vpack.c.b16 %v7070, %v7068
        %v7219 = vpack.c.b16 %v7073, %v7071
        %v7220 = vpack.c.b16 %v7074, %v7072
        %v7221 = vpack.c.b16 %v7077, %v7075
        %v7222 = vpack.c.b16 %v7078, %v7076
        %v7223 = vpack.c.b16 %v7081, %v7079
        %v7224 = vpack.c.b16 %v7082, %v7080
        %v7225 = vpack.c.b16 %v7085, %v7083
        %v7226 = vpack.c.b16 %v7086, %v7084
        %v7227 = vpack.c.b16 %v7089, %v7087
        %v7228 = vpack.c.b16 %v7090, %v7088
        %v7229 = vpack.c.b16 %v7093, %v7091
        %v7230 = vpack.c.b16 %v7094, %v7092
        %v7231 = vpack.c.b16 %v7097, %v7095
        %v7232 = vpack.c.b16 %v7098, %v7096
        %v7233 = vpack.c.b16 %v7101, %v7099
        %v7234 = vpack.c.b16 %v7102, %v7100
        %v7235 = vpack.c.b16 %v7105, %v7103
        %v7236 = vpack.c.b16 %v7106, %v7104
        %v7237 = vpack.c.b16 %v7109, %v7107
        %v7238 = vpack.c.b16 %v7110, %v7108
        %7367 = vmatprep.subr.bf16.mxu0 %v7112
        %7368 = vmatpush1.bf16.msra.mxu0 %v7111
        %7369 = vmatprep.subr.bf16.mxu0 %v7114
        %7370 = vmatpush1.bf16.msra.mxu0 %v7113
        %7371 = vmatprep.subr.bf16.mxu0 %v7116
        %7372 = vmatpush1.bf16.msra.mxu0 %v7115
        %7373 = vmatprep.subr.bf16.mxu0 %v7118
        %7374 = vmatpush1.bf16.msra.mxu0 %v7117
        %7375 = vmatprep.subr.bf16.mxu0 %v7120
        %7376 = vmatpush1.bf16.msra.mxu0 %v7119
        %7377 = vmatprep.subr.bf16.mxu0 %v7122
        %7378 = vmatpush1.bf16.msra.mxu0 %v7121
        %7379 = vmatprep.subr.bf16.mxu0 %v7124
        %7380 = vmatpush1.bf16.msra.mxu0 %v7123
        %7381 = vmatprep.subr.bf16.mxu0 %v7126
        %7382 = vmatpush1.bf16.msra.mxu0 %v7125
        %7383 = vmatprep.subr.bf16.mxu0 %v7128
        %7384 = vmatpush1.bf16.msra.mxu0 %v7127
        %7385 = vmatprep.subr.bf16.mxu0 %v7130
        %7386 = vmatpush1.bf16.msra.mxu0 %v7129
        %7387 = vmatprep.subr.bf16.mxu0 %v7132
        %7388 = vmatpush1.bf16.msra.mxu0 %v7131
        %7389 = vmatprep.subr.bf16.mxu0 %v7134
        %7390 = vmatpush1.bf16.msra.mxu0 %v7133
        %7391 = vmatprep.subr.bf16.mxu0 %v7136
        %7392 = vmatpush1.bf16.msra.mxu0 %v7135
        %7393 = vmatprep.subr.bf16.mxu0 %v7138
        %7394 = vmatpush1.bf16.msra.mxu0 %v7137
        %7395 = vmatprep.subr.bf16.mxu0 %v7140
        %7396 = vmatpush1.bf16.msra.mxu0 %v7139
        %7397 = vmatprep.subr.bf16.mxu0 %v7142
        %7398 = vmatpush1.bf16.msra.mxu0 %v7141
        %7399 = vmatprep.mubr.bf16.mxu0 %v6524
        %7400 = vmatmul.mubr.bf16.gmra.mrb[0].mxu0 %v6523
        %v7401 = vpop.f32.mrb[0].mxu0
        %v7402 = vadd.f32 %v6720, %v7401
        %v7403 = vpop.f32.mrb[0].mxu0
        %v7404 = vadd.f32 %v6724, %v7403
        %v7405 = vpop.f32.mrb[0].mxu0
        %v7406 = vadd.f32 %v6720, %v7405
        %v7407 = vpop.f32.mrb[0].mxu0
        %v7408 = vadd.f32 %v6724, %v7407
        %7409 = vmatprep.mubr.bf16.mxu0 %v6532
        %7410 = vmatmul.mubr.bf16.gmra.mrb[0].mxu0 %v6531
        %v7411 = vpop.f32.mrb[0].mxu0
        %v7412 = vadd.f32 %v6720, %v7411
        %v7413 = vpop.f32.mrb[0].mxu0
        %v7414 = vadd.f32 %v6724, %v7413
        %v7415 = vpop.f32.mrb[0].mxu0
        %v7416 = vadd.f32 %v6720, %v7415
        %v7417 = vpop.f32.mrb[0].mxu0
        %v7418 = vadd.f32 %v6724, %v7417
        %7419 = vmatprep.mubr.bf16.mxu0 %v6540
        %7420 = vmatmul.mubr.bf16.gmra.mrb[0].mxu0 %v6539
        %v7421 = vpop.f32.mrb[0].mxu0
        %v7422 = vadd.f32 %v6720, %v7421
        %v7423 = vpop.f32.mrb[0].mxu0
        %v7424 = vadd.f32 %v6724, %v7423
        %v7425 = vpop.f32.mrb[0].mxu0
        %v7426 = vadd.f32 %v6720, %v7425
        %v7427 = vpop.f32.mrb[0].mxu0
        %v7428 = vadd.f32 %v6724, %v7427
        %7429 = vmatprep.mubr.bf16.mxu0 %v6548
        %7430 = vmatmul.mubr.bf16.gmra.mrb[0].mxu0 %v6547
        %v7431 = vpop.f32.mrb[0].mxu0
        %v7432 = vadd.f32 %v6720, %v7431
        %v7433 = vpop.f32.mrb[0].mxu0
        %v7434 = vadd.f32 %v6724, %v7433
        %v7435 = vpop.f32.mrb[0].mxu0
        %v7436 = vadd.f32 %v6720, %v7435
        %v7437 = vpop.f32.mrb[0].mxu0
        %v7438 = vadd.f32 %v6724, %v7437
        %7439 = vmatprep.mubr.bf16.mxu0 %v6556
        %7440 = vmatmul.mubr.bf16.gmra.mrb[0].mxu0 %v6555
        %v7441 = vpop.f32.mrb[0].mxu0
        %v7442 = vadd.f32 %v6720, %v7441
        %v7443 = vpop.f32.mrb[0].mxu0
        %v7444 = vadd.f32 %v6724, %v7443
        %v7445 = vpop.f32.mrb[0].mxu0
        %v7446 = vadd.f32 %v6720, %v7445
        %v7447 = vpop.f32.mrb[0].mxu0
        %v7448 = vadd.f32 %v6724, %v7447
        %7449 = vmatprep.mubr.bf16.mxu0 %v6564
        %7450 = vmatmul.mubr.bf16.gmra.mrb[0].mxu0 %v6563
        %v7451 = vpop.f32.mrb[0].mxu0
        %v7452 = vadd.f32 %v6720, %v7451
        %v7453 = vpop.f32.mrb[0].mxu0
        %v7454 = vadd.f32 %v6724, %v7453
        %v7455 = vpop.f32.mrb[0].mxu0
        %v7456 = vadd.f32 %v6720, %v7455
        %v7457 = vpop.f32.mrb[0].mxu0
        %v7458 = vadd.f32 %v6724, %v7457
        %7459 = vmatprep.mubr.bf16.mxu0 %v6572
        %7460 = vmatmul.mubr.bf16.gmra.mrb[0].mxu0 %v6571
        %v7461 = vpop.f32.mrb[0].mxu0
        %v7462 = vadd.f32 %v6720, %v7461
        %v7463 = vpop.f32.mrb[0].mxu0
        %v7464 = vadd.f32 %v6724, %v7463
        %v7465 = vpop.f32.mrb[0].mxu0
        %v7466 = vadd.f32 %v6720, %v7465
        %v7467 = vpop.f32.mrb[0].mxu0
        %v7468 = vadd.f32 %v6724, %v7467
        %7469 = vmatprep.mubr.bf16.mxu0 %v6580
        %7470 = vmatmul.mubr.bf16.gmra.mrb[0].mxu0 %v6579
        %v7471 = vpop.f32.mrb[0].mxu0
        %v7472 = vadd.f32 %v6720, %v7471
        %v7473 = vpop.f32.mrb[0].mxu0
        %v7474 = vadd.f32 %v6724, %v7473
        %v7475 = vpop.f32.mrb[0].mxu0
        %v7476 = vadd.f32 %v6720, %v7475
        %v7477 = vpop.f32.mrb[0].mxu0
        %v7478 = vadd.f32 %v6724, %v7477
        %7479 = vdwg.mxu0
        %7480 = vmatprep.subr.bf16.mxu0 %v7144
        %7481 = vmatpush1.bf16.msra.mxu0 %v7143
        %7482 = vmatprep.subr.bf16.mxu0 %v7146
        %7483 = vmatpush1.bf16.msra.mxu0 %v7145
        %7484 = vmatprep.subr.bf16.mxu0 %v7148
        %7485 = vmatpush1.bf16.msra.mxu0 %v7147
        %7486 = vmatprep.subr.bf16.mxu0 %v7150
        %7487 = vmatpush1.bf16.msra.mxu0 %v7149
        %7488 = vmatprep.subr.bf16.mxu0 %v7152
        %7489 = vmatpush1.bf16.msra.mxu0 %v7151
        %7490 = vmatprep.subr.bf16.mxu0 %v7154
        %7491 = vmatpush1.bf16.msra.mxu0 %v7153
        %7492 = vmatprep.subr.bf16.mxu0 %v7156
        %7493 = vmatpush1.bf16.msra.mxu0 %v7155
        %7494 = vmatprep.subr.bf16.mxu0 %v7158
        %7495 = vmatpush1.bf16.msra.mxu0 %v7157
        %7496 = vmatprep.subr.bf16.mxu0 %v7160
        %7497 = vmatpush1.bf16.msra.mxu0 %v7159
        %7498 = vmatprep.subr.bf16.mxu0 %v7162
        %7499 = vmatpush1.bf16.msra.mxu0 %v7161
        %7500 = vmatprep.subr.bf16.mxu0 %v7164
        %7501 = vmatpush1.bf16.msra.mxu0 %v7163
        %7502 = vmatprep.subr.bf16.mxu0 %v7166
        %7503 = vmatpush1.bf16.msra.mxu0 %v7165
        %7504 = vmatprep.subr.bf16.mxu0 %v7168
        %7505 = vmatpush1.bf16.msra.mxu0 %v7167
        %7506 = vmatprep.subr.bf16.mxu0 %v7170
        %7507 = vmatpush1.bf16.msra.mxu0 %v7169
        %7508 = vmatprep.subr.bf16.mxu0 %v7172
        %7509 = vmatpush1.bf16.msra.mxu0 %v7171
        %7510 = vmatprep.subr.bf16.mxu0 %v7174
        %7511 = vmatpush1.bf16.msra.mxu0 %v7173
        %7512 = vmatprep.mubr.bf16.mxu0 %v6526
        %7513 = vmatmul.mubr.bf16.gmra.mrb[0].mxu0 %v6525
        %v7514 = vpop.f32.mrb[0].mxu0
        %v7515 = vadd.f32 %v7402, %v7514
        %v7516 = vpop.f32.mrb[0].mxu0
        %v7517 = vadd.f32 %v7404, %v7516
        %v7518 = vpop.f32.mrb[0].mxu0
        %v7519 = vadd.f32 %v7406, %v7518
        %v7520 = vpop.f32.mrb[0].mxu0
        %v7521 = vadd.f32 %v7408, %v7520
        %7522 = vmatprep.mubr.bf16.mxu0 %v6534
        %7523 = vmatmul.mubr.bf16.gmra.mrb[0].mxu0 %v6533
        %v7524 = vpop.f32.mrb[0].mxu0
        %v7525 = vadd.f32 %v7412, %v7524
        %v7526 = vpop.f32.mrb[0].mxu0
        %v7527 = vadd.f32 %v7414, %v7526
        %v7528 = vpop.f32.mrb[0].mxu0
        %v7529 = vadd.f32 %v7416, %v7528
        %v7530 = vpop.f32.mrb[0].mxu0
        %v7531 = vadd.f32 %v7418, %v7530
        %7532 = vmatprep.mubr.bf16.mxu0 %v6542
        %7533 = vmatmul.mubr.bf16.gmra.mrb[0].mxu0 %v6541
        %v7534 = vpop.f32.mrb[0].mxu0
        %v7535 = vadd.f32 %v7422, %v7534
        %v7536 = vpop.f32.mrb[0].mxu0
        %v7537 = vadd.f32 %v7424, %v7536
        %v7538 = vpop.f32.mrb[0].mxu0
        %v7539 = vadd.f32 %v7426, %v7538
        %v7540 = vpop.f32.mrb[0].mxu0
        %v7541 = vadd.f32 %v7428, %v7540
        %7542 = vmatprep.mubr.bf16.mxu0 %v6550
        %7543 = vmatmul.mubr.bf16.gmra.mrb[0].mxu0 %v6549
        %v7544 = vpop.f32.mrb[0].mxu0
        %v7545 = vadd.f32 %v7432, %v7544
        %v7546 = vpop.f32.mrb[0].mxu0
        %v7547 = vadd.f32 %v7434, %v7546
        %v7548 = vpop.f32.mrb[0].mxu0
        %v7549 = vadd.f32 %v7436, %v7548
        %v7550 = vpop.f32.mrb[0].mxu0
        %v7551 = vadd.f32 %v7438, %v7550
        %7552 = vmatprep.mubr.bf16.mxu0 %v6558
        %7553 = vmatmul.mubr.bf16.gmra.mrb[0].mxu0 %v6557
        %v7554 = vpop.f32.mrb[0].mxu0
        %v7555 = vadd.f32 %v7442, %v7554
        %v7556 = vpop.f32.mrb[0].mxu0
        %v7557 = vadd.f32 %v7444, %v7556
        %v7558 = vpop.f32.mrb[0].mxu0
        %v7559 = vadd.f32 %v7446, %v7558
        %v7560 = vpop.f32.mrb[0].mxu0
        %v7561 = vadd.f32 %v7448, %v7560
        %7562 = vmatprep.mubr.bf16.mxu0 %v6566
        %7563 = vmatmul.mubr.bf16.gmra.mrb[0].mxu0 %v6565
        %v7564 = vpop.f32.mrb[0].mxu0
        %v7565 = vadd.f32 %v7452, %v7564
        %v7566 = vpop.f32.mrb[0].mxu0
        %v7567 = vadd.f32 %v7454, %v7566
        %v7568 = vpop.f32.mrb[0].mxu0
        %v7569 = vadd.f32 %v7456, %v7568
        %v7570 = vpop.f32.mrb[0].mxu0
        %v7571 = vadd.f32 %v7458, %v7570
        %7572 = vmatprep.mubr.bf16.mxu0 %v6574
        %7573 = vmatmul.mubr.bf16.gmra.mrb[0].mxu0 %v6573
        %v7574 = vpop.f32.mrb[0].mxu0
        %v7575 = vadd.f32 %v7462, %v7574
        %v7576 = vpop.f32.mrb[0].mxu0
        %v7577 = vadd.f32 %v7464, %v7576
        %v7578 = vpop.f32.mrb[0].mxu0
        %v7579 = vadd.f32 %v7466, %v7578
        %v7580 = vpop.f32.mrb[0].mxu0
        %v7581 = vadd.f32 %v7468, %v7580
        %7582 = vmatprep.mubr.bf16.mxu0 %v6582
        %7583 = vmatmul.mubr.bf16.gmra.mrb[0].mxu0 %v6581
        %v7584 = vpop.f32.mrb[0].mxu0
        %v7585 = vadd.f32 %v7472, %v7584
        %v7586 = vpop.f32.mrb[0].mxu0
        %v7587 = vadd.f32 %v7474, %v7586
        %v7588 = vpop.f32.mrb[0].mxu0
        %v7589 = vadd.f32 %v7476, %v7588
        %v7590 = vpop.f32.mrb[0].mxu0
        %v7591 = vadd.f32 %v7478, %v7590
        %7592 = vdwg.mxu0
        %7593 = vmatprep.subr.bf16.mxu0 %v7176
        %7594 = vmatpush1.bf16.msra.mxu0 %v7175
        %7595 = vmatprep.subr.bf16.mxu0 %v7178
        %7596 = vmatpush1.bf16.msra.mxu0 %v7177
        %7597 = vmatprep.subr.bf16.mxu0 %v7180
        %7598 = vmatpush1.bf16.msra.mxu0 %v7179
        %7599 = vmatprep.subr.bf16.mxu0 %v7182
        %7600 = vmatpush1.bf16.msra.mxu0 %v7181
        %7601 = vmatprep.subr.bf16.mxu0 %v7184
        %7602 = vmatpush1.bf16.msra.mxu0 %v7183
        %7603 = vmatprep.subr.bf16.mxu0 %v7186
        %7604 = vmatpush1.bf16.msra.mxu0 %v7185
        %7605 = vmatprep.subr.bf16.mxu0 %v7188
        %7606 = vmatpush1.bf16.msra.mxu0 %v7187
        %7607 = vmatprep.subr.bf16.mxu0 %v7190
        %7608 = vmatpush1.bf16.msra.mxu0 %v7189
        %7609 = vmatprep.subr.bf16.mxu0 %v7192
        %7610 = vmatpush1.bf16.msra.mxu0 %v7191
        %7611 = vmatprep.subr.bf16.mxu0 %v7194
        %7612 = vmatpush1.bf16.msra.mxu0 %v7193
        %7613 = vmatprep.subr.bf16.mxu0 %v7196
        %7614 = vmatpush1.bf16.msra.mxu0 %v7195
        %7615 = vmatprep.subr.bf16.mxu0 %v7198
        %7616 = vmatpush1.bf16.msra.mxu0 %v7197
        %7617 = vmatprep.subr.bf16.mxu0 %v7200
        %7618 = vmatpush1.bf16.msra.mxu0 %v7199
        %7619 = vmatprep.subr.bf16.mxu0 %v7202
        %7620 = vmatpush1.bf16.msra.mxu0 %v7201
        %7621 = vmatprep.subr.bf16.mxu0 %v7204
        %7622 = vmatpush1.bf16.msra.mxu0 %v7203
        %7623 = vmatprep.subr.bf16.mxu0 %v7206
        %7624 = vmatpush1.bf16.msra.mxu0 %v7205
        %7625 = vmatprep.mubr.bf16.mxu0 %v6528
        %7626 = vmatmul.mubr.bf16.gmra.mrb[0].mxu0 %v6527
        %v7627 = vpop.f32.mrb[0].mxu0
        %v7628 = vadd.f32 %v7515, %v7627
        %v7629 = vpop.f32.mrb[0].mxu0
        %v7630 = vadd.f32 %v7517, %v7629
        %v7631 = vpop.f32.mrb[0].mxu0
        %v7632 = vadd.f32 %v7519, %v7631
        %v7633 = vpop.f32.mrb[0].mxu0
        %v7634 = vadd.f32 %v7521, %v7633
        %7635 = vmatprep.mubr.bf16.mxu0 %v6536
        %7636 = vmatmul.mubr.bf16.gmra.mrb[0].mxu0 %v6535
        %v7637 = vpop.f32.mrb[0].mxu0
        %v7638 = vadd.f32 %v7525, %v7637
        %v7639 = vpop.f32.mrb[0].mxu0
        %v7640 = vadd.f32 %v7527, %v7639
        %v7641 = vpop.f32.mrb[0].mxu0
        %v7642 = vadd.f32 %v7529, %v7641
        %v7643 = vpop.f32.mrb[0].mxu0
        %v7644 = vadd.f32 %v7531, %v7643
        %7645 = vmatprep.mubr.bf16.mxu0 %v6544
        %7646 = vmatmul.mubr.bf16.gmra.mrb[0].mxu0 %v6543
        %v7647 = vpop.f32.mrb[0].mxu0
        %v7648 = vadd.f32 %v7535, %v7647
        %v7649 = vpop.f32.mrb[0].mxu0
        %v7650 = vadd.f32 %v7537, %v7649
        %v7651 = vpop.f32.mrb[0].mxu0
        %v7652 = vadd.f32 %v7539, %v7651
        %v7653 = vpop.f32.mrb[0].mxu0
        %v7654 = vadd.f32 %v7541, %v7653
        %7655 = vmatprep.mubr.bf16.mxu0 %v6552
        %7656 = vmatmul.mubr.bf16.gmra.mrb[0].mxu0 %v6551
        %v7657 = vpop.f32.mrb[0].mxu0
        %v7658 = vadd.f32 %v7545, %v7657
        %v7659 = vpop.f32.mrb[0].mxu0
        %v7660 = vadd.f32 %v7547, %v7659
        %v7661 = vpop.f32.mrb[0].mxu0
        %v7662 = vadd.f32 %v7549, %v7661
        %v7663 = vpop.f32.mrb[0].mxu0
        %v7664 = vadd.f32 %v7551, %v7663
        %7665 = vmatprep.mubr.bf16.mxu0 %v6560
        %7666 = vmatmul.mubr.bf16.gmra.mrb[0].mxu0 %v6559
        %v7667 = vpop.f32.mrb[0].mxu0
        %v7668 = vadd.f32 %v7555, %v7667
        %v7669 = vpop.f32.mrb[0].mxu0
        %v7670 = vadd.f32 %v7557, %v7669
        %v7671 = vpop.f32.mrb[0].mxu0
        %v7672 = vadd.f32 %v7559, %v7671
        %v7673 = vpop.f32.mrb[0].mxu0
        %v7674 = vadd.f32 %v7561, %v7673
        %7675 = vmatprep.mubr.bf16.mxu0 %v6568
        %7676 = vmatmul.mubr.bf16.gmra.mrb[0].mxu0 %v6567
        %v7677 = vpop.f32.mrb[0].mxu0
        %v7678 = vadd.f32 %v7565, %v7677
        %v7679 = vpop.f32.mrb[0].mxu0
        %v7680 = vadd.f32 %v7567, %v7679
        %v7681 = vpop.f32.mrb[0].mxu0
        %v7682 = vadd.f32 %v7569, %v7681
        %v7683 = vpop.f32.mrb[0].mxu0
        %v7684 = vadd.f32 %v7571, %v7683
        %7685 = vmatprep.mubr.bf16.mxu0 %v6576
        %7686 = vmatmul.mubr.bf16.gmra.mrb[0].mxu0 %v6575
        %v7687 = vpop.f32.mrb[0].mxu0
        %v7688 = vadd.f32 %v7575, %v7687
        %v7689 = vpop.f32.mrb[0].mxu0
        %v7690 = vadd.f32 %v7577, %v7689
        %v7691 = vpop.f32.mrb[0].mxu0
        %v7692 = vadd.f32 %v7579, %v7691
        %v7693 = vpop.f32.mrb[0].mxu0
        %v7694 = vadd.f32 %v7581, %v7693
        %7695 = vmatprep.mubr.bf16.mxu0 %v6584
        %7696 = vmatmul.mubr.bf16.gmra.mrb[0].mxu0 %v6583
        %v7697 = vpop.f32.mrb[0].mxu0
        %v7698 = vadd.f32 %v7585, %v7697
        %v7699 = vpop.f32.mrb[0].mxu0
        %v7700 = vadd.f32 %v7587, %v7699
        %v7701 = vpop.f32.mrb[0].mxu0
        %v7702 = vadd.f32 %v7589, %v7701
        %v7703 = vpop.f32.mrb[0].mxu0
        %v7704 = vadd.f32 %v7591, %v7703
        %7705 = vdwg.mxu0
        %7706 = vmatprep.subr.bf16.mxu0 %v7208
        %7707 = vmatpush1.bf16.msra.mxu0 %v7207
        %7708 = vmatprep.subr.bf16.mxu0 %v7210
        %7709 = vmatpush1.bf16.msra.mxu0 %v7209
        %7710 = vmatprep.subr.bf16.mxu0 %v7212
        %7711 = vmatpush1.bf16.msra.mxu0 %v7211
        %7712 = vmatprep.subr.bf16.mxu0 %v7214
        %7713 = vmatpush1.bf16.msra.mxu0 %v7213
        %7714 = vmatprep.subr.bf16.mxu0 %v7216
        %7715 = vmatpush1.bf16.msra.mxu0 %v7215
        %7716 = vmatprep.subr.bf16.mxu0 %v7218
        %7717 = vmatpush1.bf16.msra.mxu0 %v7217
        %7718 = vmatprep.subr.bf16.mxu0 %v7220
        %7719 = vmatpush1.bf16.msra.mxu0 %v7219
        %7720 = vmatprep.subr.bf16.mxu0 %v7222
        %7721 = vmatpush1.bf16.msra.mxu0 %v7221
        %7722 = vmatprep.subr.bf16.mxu0 %v7224
        %7723 = vmatpush1.bf16.msra.mxu0 %v7223
        %7724 = vmatprep.subr.bf16.mxu0 %v7226
        %7725 = vmatpush1.bf16.msra.mxu0 %v7225
        %7726 = vmatprep.subr.bf16.mxu0 %v7228
        %7727 = vmatpush1.bf16.msra.mxu0 %v7227
        %7728 = vmatprep.subr.bf16.mxu0 %v7230
        %7729 = vmatpush1.bf16.msra.mxu0 %v7229
        %7730 = vmatprep.subr.bf16.mxu0 %v7232
        %7731 = vmatpush1.bf16.msra.mxu0 %v7231
        %7732 = vmatprep.subr.bf16.mxu0 %v7234
        %7733 = vmatpush1.bf16.msra.mxu0 %v7233
        %7734 = vmatprep.subr.bf16.mxu0 %v7236
        %7735 = vmatpush1.bf16.msra.mxu0 %v7235
        %7736 = vmatprep.subr.bf16.mxu0 %v7238
        %7737 = vmatpush1.bf16.msra.mxu0 %v7237
        %7738 = vmatprep.mubr.bf16.mxu0 %v6530
        %7739 = vmatmul.mubr.bf16.gmra.mrb[0].mxu0 %v6529
        %v7740 = vpop.f32.mrb[0].mxu0
        %v7741 = vadd.f32 %v7628, %v7740
        %v7742 = vpop.f32.mrb[0].mxu0
        %v7743 = vadd.f32 %v7630, %v7742
        %v7744 = vpop.f32.mrb[0].mxu0
        %v7745 = vadd.f32 %v7632, %v7744
        %v7746 = vpop.f32.mrb[0].mxu0
        %v7747 = vadd.f32 %v7634, %v7746
        %7748 = vmatprep.mubr.bf16.mxu0 %v6538
        %7749 = vmatmul.mubr.bf16.gmra.mrb[0].mxu0 %v6537
        %v7750 = vpop.f32.mrb[0].mxu0
        %v7751 = vadd.f32 %v7638, %v7750
        %v7752 = vpop.f32.mrb[0].mxu0
        %v7753 = vadd.f32 %v7640, %v7752
        %v7754 = vpop.f32.mrb[0].mxu0
        %v7755 = vadd.f32 %v7642, %v7754
        %v7756 = vpop.f32.mrb[0].mxu0
        %v7757 = vadd.f32 %v7644, %v7756
        %7758 = vmatprep.mubr.bf16.mxu0 %v6546
        %7759 = vmatmul.mubr.bf16.gmra.mrb[0].mxu0 %v6545
        %v7760 = vpop.f32.mrb[0].mxu0
        %v7761 = vadd.f32 %v7648, %v7760
        %v7762 = vpop.f32.mrb[0].mxu0
        %v7763 = vadd.f32 %v7650, %v7762
        %v7764 = vpop.f32.mrb[0].mxu0
        %v7765 = vadd.f32 %v7652, %v7764
        %v7766 = vpop.f32.mrb[0].mxu0
        %v7767 = vadd.f32 %v7654, %v7766
        %7768 = vmatprep.mubr.bf16.mxu0 %v6554
        %7769 = vmatmul.mubr.bf16.gmra.mrb[0].mxu0 %v6553
        %v7770 = vpop.f32.mrb[0].mxu0
        %v7771 = vadd.f32 %v7658, %v7770
        %v7772 = vpop.f32.mrb[0].mxu0
        %v7773 = vadd.f32 %v7660, %v7772
        %v7774 = vpop.f32.mrb[0].mxu0
        %v7775 = vadd.f32 %v7662, %v7774
        %v7776 = vpop.f32.mrb[0].mxu0
        %v7777 = vadd.f32 %v7664, %v7776
        %7778 = vmatprep.mubr.bf16.mxu0 %v6562
        %7779 = vmatmul.mubr.bf16.gmra.mrb[0].mxu0 %v6561
        %v7780 = vpop.f32.mrb[0].mxu0
        %v7781 = vadd.f32 %v7668, %v7780
        %v7782 = vpop.f32.mrb[0].mxu0
        %v7783 = vadd.f32 %v7670, %v7782
        %v7784 = vpop.f32.mrb[0].mxu0
        %v7785 = vadd.f32 %v7672, %v7784
        %v7786 = vpop.f32.mrb[0].mxu0
        %v7787 = vadd.f32 %v7674, %v7786
        %7788 = vmatprep.mubr.bf16.mxu0 %v6570
        %7789 = vmatmul.mubr.bf16.gmra.mrb[0].mxu0 %v6569
        %v7790 = vpop.f32.mrb[0].mxu0
        %v7791 = vadd.f32 %v7678, %v7790
        %v7792 = vpop.f32.mrb[0].mxu0
        %v7793 = vadd.f32 %v7680, %v7792
        %v7794 = vpop.f32.mrb[0].mxu0
        %v7795 = vadd.f32 %v7682, %v7794
        %v7796 = vpop.f32.mrb[0].mxu0
        %v7797 = vadd.f32 %v7684, %v7796
        %7798 = vmatprep.mubr.bf16.mxu0 %v6578
        %7799 = vmatmul.mubr.bf16.gmra.mrb[0].mxu0 %v6577
        %v7800 = vpop.f32.mrb[0].mxu0
        %v7801 = vadd.f32 %v7688, %v7800
        %v7802 = vpop.f32.mrb[0].mxu0
        %v7803 = vadd.f32 %v7690, %v7802
        %v7804 = vpop.f32.mrb[0].mxu0
        %v7805 = vadd.f32 %v7692, %v7804
        %v7806 = vpop.f32.mrb[0].mxu0
        %v7807 = vadd.f32 %v7694, %v7806
        %7808 = vmatprep.mubr.bf16.mxu0 %v6586
        %7809 = vmatmul.mubr.bf16.gmra.mrb[0].mxu0 %v6585
        %v7810 = vpop.f32.mrb[0].mxu0
        %v7811 = vadd.f32 %v7698, %v7810
        %v7812 = vpop.f32.mrb[0].mxu0
        %v7813 = vadd.f32 %v7700, %v7812
        %v7814 = vpop.f32.mrb[0].mxu0
        %v7815 = vadd.f32 %v7702, %v7814
        %v7816 = vpop.f32.mrb[0].mxu0
        %v7817 = vadd.f32 %v7704, %v7816
        %7818 = vdwg.mxu0
        %v7819 = vadd.f32 %v7741, %v3736
        %v7820 = vadd.f32 %v7743, %v3737
        %v7821 = vadd.f32 %v7745, %v3738
        %v7822 = vadd.f32 %v7747, %v3739
        %v7823 = vadd.f32 %v7751, %v3740
        %v7824 = vadd.f32 %v7753, %v3741
        %v7825 = vadd.f32 %v7755, %v3742
        %v7826 = vadd.f32 %v7757, %v3743
        %v7827 = vadd.f32 %v7761, %v3744
        %v7828 = vadd.f32 %v7763, %v3745
        %v7829 = vadd.f32 %v7765, %v3746
        %v7830 = vadd.f32 %v7767, %v3747
        %v7831 = vadd.f32 %v7771, %v3748
        %v7832 = vadd.f32 %v7773, %v3749
        %v7833 = vadd.f32 %v7775, %v3750
        %v7834 = vadd.f32 %v7777, %v3751
        %v7835 = vadd.f32 %v7781, %v3752
        %v7836 = vadd.f32 %v7783, %v3753
        %v7837 = vadd.f32 %v7785, %v3754
        %v7838 = vadd.f32 %v7787, %v3755
        %v7839 = vadd.f32 %v7791, %v3756
        %v7840 = vadd.f32 %v7793, %v3757
        %v7841 = vadd.f32 %v7795, %v3758
        %v7842 = vadd.f32 %v7797, %v3759
        %v7843 = vadd.f32 %v7801, %v3760
        %v7844 = vadd.f32 %v7803, %v3761
        %v7845 = vadd.f32 %v7805, %v3762
        %v7846 = vadd.f32 %v7807, %v3763
        %v7847 = vadd.f32 %v7811, %v3764
        %v7848 = vadd.f32 %v7813, %v3765
        %v7849 = vadd.f32 %v7815, %v3766
        %v7850 = vadd.f32 %v7817, %v3767
        %v7851 = vadd.f32 %v7819, %v4183
        %v7852 = vadd.f32 %v7820, %v4185
        %v7853 = vadd.f32 %v7821, %v4187
        %v7854 = vadd.f32 %v7822, %v4189
        %v7855 = vadd.f32 %v7823, %v4193
        %v7856 = vadd.f32 %v7824, %v4195
        %v7857 = vadd.f32 %v7825, %v4197
        %v7858 = vadd.f32 %v7826, %v4199
        %v7859 = vadd.f32 %v7827, %v4203
        %v7860 = vadd.f32 %v7828, %v4205
        %v7861 = vadd.f32 %v7829, %v4207
        %v7862 = vadd.f32 %v7830, %v4209
        %v7863 = vadd.f32 %v7831, %v4213
        %v7864 = vadd.f32 %v7832, %v4215
        %v7865 = vadd.f32 %v7833, %v4217
        %v7866 = vadd.f32 %v7834, %v4219
        %v7867 = vadd.f32 %v7835, %v4223
        %v7868 = vadd.f32 %v7836, %v4225
        %v7869 = vadd.f32 %v7837, %v4227
        %v7870 = vadd.f32 %v7838, %v4229
        %v7871 = vadd.f32 %v7839, %v4233
        %v7872 = vadd.f32 %v7840, %v4235
        %v7873 = vadd.f32 %v7841, %v4237
        %v7874 = vadd.f32 %v7842, %v4239
        %v7875 = vadd.f32 %v7843, %v4243
        %v7876 = vadd.f32 %v7844, %v4245
        %v7877 = vadd.f32 %v7845, %v4247
        %v7878 = vadd.f32 %v7846, %v4249
        %v7879 = vadd.f32 %v7847, %v4253
        %v7880 = vadd.f32 %v7848, %v4255
        %v7881 = vadd.f32 %v7849, %v4257
        %v7882 = vadd.f32 %v7850, %v4259
        %7883 = vst [vmem:[#allocation2] sm:$0xff] %v7851
        %7884 = vst [vmem:[#allocation2 + $0x8] sm:$0xff] %v7852
        %7885 = vst [vmem:[#allocation2 + $0x10] sm:$0xff] %v7853
        %7886 = vst [vmem:[#allocation2 + $0x18] sm:$0xff] %v7854
        %7887 = vst [vmem:[#allocation2 + $0x20] sm:$0xff] %v7855
        %7888 = vst [vmem:[#allocation2 + $0x28] sm:$0xff] %v7856
        %7889 = vst [vmem:[#allocation2 + $0x30] sm:$0xff] %v7857
        %7890 = vst [vmem:[#allocation2 + $0x38] sm:$0xff] %v7858
        %7891 = vst [vmem:[#allocation2 + $0x40] sm:$0xff] %v7859
        %7892 = vst [vmem:[#allocation2 + $0x48] sm:$0xff] %v7860
        %7893 = vst [vmem:[#allocation2 + $0x50] sm:$0xff] %v7861
        %7894 = vst [vmem:[#allocation2 + $0x58] sm:$0xff] %v7862
        %7895 = vst [vmem:[#allocation2 + $0x60] sm:$0xff] %v7863
        %7896 = vst [vmem:[#allocation2 + $0x68] sm:$0xff] %v7864
        %7897 = vst [vmem:[#allocation2 + $0x70] sm:$0xff] %v7865
        %7898 = vst [vmem:[#allocation2 + $0x78] sm:$0xff] %v7866
        %7899 = vst [vmem:[#allocation2 + $0x80] sm:$0xff] %v7867
        %7900 = vst [vmem:[#allocation2 + $0x88] sm:$0xff] %v7868
        %7901 = vst [vmem:[#allocation2 + $0x90] sm:$0xff] %v7869
        %7902 = vst [vmem:[#allocation2 + $0x98] sm:$0xff] %v7870
        %7903 = vst [vmem:[#allocation2 + $0xa0] sm:$0xff] %v7871
        %7904 = vst [vmem:[#allocation2 + $0xa8] sm:$0xff] %v7872
        %7905 = vst [vmem:[#allocation2 + $0xb0] sm:$0xff] %v7873
        %7906 = vst [vmem:[#allocation2 + $0xb8] sm:$0xff] %v7874
        %7907 = vst [vmem:[#allocation2 + $0xc0] sm:$0xff] %v7875
        %7908 = vst [vmem:[#allocation2 + $0xc8] sm:$0xff] %v7876
        %7909 = vst [vmem:[#allocation2 + $0xd0] sm:$0xff] %v7877
        %7910 = vst [vmem:[#allocation2 + $0xd8] sm:$0xff] %v7878
        %7911 = vst [vmem:[#allocation2 + $0xe0] sm:$0xff] %v7879
        %7912 = vst [vmem:[#allocation2 + $0xe8] sm:$0xff] %v7880
        %7913 = vst [vmem:[#allocation2 + $0xf0] sm:$0xff] %v7881
        %7914 = vst [vmem:[#allocation2 + $0xf8] sm:$0xff] %v7882
        %p7915 = scmp.eq.s32.totalorder %s63, 1
        // Predicated region
        $region161: #{vitseg_forward.3} parent=87 // pred_check
          %p7916 = pneg %p7915
        $region162: #{vitseg_forward.3} parent=87 // pred_check_branch
          %7918 = sbr.rel (%p7916) target = $region164
        $region163: #{vitseg_forward.3} parent=87 // pred_region
          %v7919 = vlaneseq
          %v7920 = vshrl.u32 %v7919, 7
          %v7921 = vadd.s32 %v7920, 8
          %v7922 = vadd.s32 %v7920, 16
          %v7923 = vadd.s32 %v7920, 24
          %v7924 = vadd.s32 %v7920, 32
          %v7925 = vadd.s32 %v7920, 40
          %v7926 = vadd.s32 %v7920, 48
          %v7927 = vadd.s32 %v7920, 56
          %v7928 = vadd.s32 %v7920, 64
          %v7929 = vadd.s32 %v7920, 72
          %v7930 = vadd.s32 %v7920, 80
          %v7931 = vadd.s32 %v7920, 88
          %v7932 = vadd.s32 %v7920, 96
          %v7933 = vadd.s32 %v7920, 104
          %v7934 = vadd.s32 %v7920, 112
          %v7935 = vadd.s32 %v7920, 120
          %vm7936 = vcmp.ge.s32.totalorder %v7920, 1
          %vm7937 = vcmp.ge.s32.totalorder %v7921, 1
          %vm7938 = vcmp.ge.s32.totalorder %v7922, 1
          %vm7939 = vcmp.ge.s32.totalorder %v7923, 1
          %vm7940 = vcmp.ge.s32.totalorder %v7924, 1
          %vm7941 = vcmp.ge.s32.totalorder %v7925, 1
          %vm7942 = vcmp.ge.s32.totalorder %v7926, 1
          %vm7943 = vcmp.ge.s32.totalorder %v7927, 1
          %vm7944 = vcmp.ge.s32.totalorder %v7928, 1
          %vm7945 = vcmp.ge.s32.totalorder %v7929, 1
          %vm7946 = vcmp.ge.s32.totalorder %v7930, 1
          %vm7947 = vcmp.ge.s32.totalorder %v7931, 1
          %vm7948 = vcmp.ge.s32.totalorder %v7932, 1
          %vm7949 = vcmp.ge.s32.totalorder %v7933, 1
          %vm7950 = vcmp.ge.s32.totalorder %v7934, 1
          %vm7951 = vcmp.ge.s32.totalorder %v7935, 1
          %vm7952 = vcmp.lt.s32.totalorder %v7920, 5
          %vm7953 = vcmp.lt.s32.totalorder %v7921, 5
          %vm7954 = vcmp.lt.s32.totalorder %v7922, 5
          %vm7955 = vcmp.lt.s32.totalorder %v7923, 5
          %vm7956 = vcmp.lt.s32.totalorder %v7924, 5
          %vm7957 = vcmp.lt.s32.totalorder %v7925, 5
          %vm7958 = vcmp.lt.s32.totalorder %v7926, 5
          %vm7959 = vcmp.lt.s32.totalorder %v7927, 5
          %vm7960 = vcmp.lt.s32.totalorder %v7928, 5
          %vm7961 = vcmp.lt.s32.totalorder %v7929, 5
          %vm7962 = vcmp.lt.s32.totalorder %v7930, 5
          %vm7963 = vcmp.lt.s32.totalorder %v7931, 5
          %vm7964 = vcmp.lt.s32.totalorder %v7932, 5
          %vm7965 = vcmp.lt.s32.totalorder %v7933, 5
          %vm7966 = vcmp.lt.s32.totalorder %v7934, 5
          %vm7967 = vcmp.lt.s32.totalorder %v7935, 5
          %vm7968 = vmand %vm7936, %vm7952
          %vm7969 = vmand %vm7937, %vm7953
          %vm7970 = vmand %vm7938, %vm7954
          %vm7971 = vmand %vm7939, %vm7955
          %vm7972 = vmand %vm7940, %vm7956
          %vm7973 = vmand %vm7941, %vm7957
          %vm7974 = vmand %vm7942, %vm7958
          %vm7975 = vmand %vm7943, %vm7959
          %vm7976 = vmand %vm7944, %vm7960
          %vm7977 = vmand %vm7945, %vm7961
          %vm7978 = vmand %vm7946, %vm7962
          %vm7979 = vmand %vm7947, %vm7963
          %vm7980 = vmand %vm7948, %vm7964
          %vm7981 = vmand %vm7949, %vm7965
          %vm7982 = vmand %vm7950, %vm7966
          %vm7983 = vmand %vm7951, %vm7967
          %v7984 = vsel %vm7968, 1, 0
          %v7985 = vsel %vm7969, 1, 0
          %v7986 = vsel %vm7970, 1, 0
          %v7987 = vsel %vm7971, 1, 0
          %v7988 = vsel %vm7972, 1, 0
          %v7989 = vsel %vm7973, 1, 0
          %v7990 = vsel %vm7974, 1, 0
          %v7991 = vsel %vm7975, 1, 0
          %v7992 = vsel %vm7976, 1, 0
          %v7993 = vsel %vm7977, 1, 0
          %v7994 = vsel %vm7978, 1, 0
          %v7995 = vsel %vm7979, 1, 0
          %v7996 = vsel %vm7980, 1, 0
          %v7997 = vsel %vm7981, 1, 0
          %v7998 = vsel %vm7982, 1, 0
          %v7999 = vsel %vm7983, 1, 0
          %v8000 = vcvt.s32.f32 %v7984
          %v8001 = vcvt.s32.f32 %v7985
          %v8002 = vcvt.s32.f32 %v7986
          %v8003 = vcvt.s32.f32 %v7987
          %v8004 = vcvt.s32.f32 %v7988
          %v8005 = vcvt.s32.f32 %v7989
          %v8006 = vcvt.s32.f32 %v7990
          %v8007 = vcvt.s32.f32 %v7991
          %v8008 = vcvt.s32.f32 %v7992
          %v8009 = vcvt.s32.f32 %v7993
          %v8010 = vcvt.s32.f32 %v7994
          %v8011 = vcvt.s32.f32 %v7995
          %v8012 = vcvt.s32.f32 %v7996
          %v8013 = vcvt.s32.f32 %v7997
          %v8014 = vcvt.s32.f32 %v7998
          %v8015 = vcvt.s32.f32 %v7999
          %v8016 = vmul.f32 %v7851, %v8000
          %v8017 = vmul.f32 %v7852, %v8000
          %v8018 = vmul.f32 %v7853, %v8001
          %v8019 = vmul.f32 %v7854, %v8001
          %v8020 = vmul.f32 %v7855, %v8002
          %v8021 = vmul.f32 %v7856, %v8002
          %v8022 = vmul.f32 %v7857, %v8003
          %v8023 = vmul.f32 %v7858, %v8003
          %v8024 = vmul.f32 %v7859, %v8004
          %v8025 = vmul.f32 %v7860, %v8004
          %v8026 = vmul.f32 %v7861, %v8005
          %v8027 = vmul.f32 %v7862, %v8005
          %v8028 = vmul.f32 %v7863, %v8006
          %v8029 = vmul.f32 %v7864, %v8006
          %v8030 = vmul.f32 %v7865, %v8007
          %v8031 = vmul.f32 %v7866, %v8007
          %v8032 = vmul.f32 %v7867, %v8008
          %v8033 = vmul.f32 %v7868, %v8008
          %v8034 = vmul.f32 %v7869, %v8009
          %v8035 = vmul.f32 %v7870, %v8009
          %v8036 = vmul.f32 %v7871, %v8010
          %v8037 = vmul.f32 %v7872, %v8010
          %v8038 = vmul.f32 %v7873, %v8011
          %v8039 = vmul.f32 %v7874, %v8011
          %v8040 = vmul.f32 %v7875, %v8012
          %v8041 = vmul.f32 %v7876, %v8012
          %v8042 = vmul.f32 %v7877, %v8013
          %v8043 = vmul.f32 %v7878, %v8013
          %v8044 = vmul.f32 %v7879, %v8014
          %v8045 = vmul.f32 %v7880, %v8014
          %v8046 = vmul.f32 %v7881, %v8015
          %v8047 = vmul.f32 %v7882, %v8015
          %v8048 = vadd.f32 %v8016, %v8018
          %v8049 = vadd.f32 %v8048, %v8020
          %v8050 = vadd.f32 %v8049, %v8022
          %v8051 = vadd.f32 %v8050, %v8024
          %v8052 = vadd.f32 %v8051, %v8026
          %v8053 = vadd.f32 %v8052, %v8028
          %v8054 = vadd.f32 %v8053, %v8030
          %v8055 = vadd.f32 %v8054, %v8032
          %v8056 = vadd.f32 %v8055, %v8034
          %v8057 = vadd.f32 %v8056, %v8036
          %v8058 = vadd.f32 %v8057, %v8038
          %v8059 = vadd.f32 %v8058, %v8040
          %v8060 = vadd.f32 %v8059, %v8042
          %v8061 = vadd.f32 %v8060, %v8044
          %v8062 = vadd.f32 %v8061, %v8046
          %v8063 = vrot.slane %v8062, 4
          %v8064 = vadd.f32 %v8062, %v8063
          %v8065 = vrot.slane %v8064, 2
          %v8066 = vadd.f32 %v8064, %v8065
          %v8067 = vrot.slane %v8066, 1
          %v8068 = vadd.f32 %v8066, %v8067
          %v8069 = vadd.f32 %v8017, %v8019
          %v8070 = vadd.f32 %v8069, %v8021
          %v8071 = vadd.f32 %v8070, %v8023
          %v8072 = vadd.f32 %v8071, %v8025
          %v8073 = vadd.f32 %v8072, %v8027
          %v8074 = vadd.f32 %v8073, %v8029
          %v8075 = vadd.f32 %v8074, %v8031
          %v8076 = vadd.f32 %v8075, %v8033
          %v8077 = vadd.f32 %v8076, %v8035
          %v8078 = vadd.f32 %v8077, %v8037
          %v8079 = vadd.f32 %v8078, %v8039
          %v8080 = vadd.f32 %v8079, %v8041
          %v8081 = vadd.f32 %v8080, %v8043
          %v8082 = vadd.f32 %v8081, %v8045
          %v8083 = vadd.f32 %v8082, %v8047
          %v8084 = vrot.slane %v8083, 4
          %v8085 = vadd.f32 %v8083, %v8084
          %v8086 = vrot.slane %v8085, 2
          %v8087 = vadd.f32 %v8085, %v8086
          %v8088 = vrot.slane %v8087, 1
          %v8089 = vadd.f32 %v8087, %v8088
          %v8090 = vmul.f32 %v8068, 0.25
          %v8091 = vmul.f32 %v8089, 0.25
          %v8094 = vcombine.low %v8090, %v8091
          %v8096 = vunpack.c.l.s4 1966171168
          %v8097 = vunpack.c.0.s8 %v8096
          %v8098 = vlaneseq
          %v8099 = vshrl.u32 %v8098, 7
          %v8100 = vsub.s32 %v8097, %v8099
          %v8101 = vrot.slane %v8094, %v8100
          %v8103 = vunpack.c.l.s4 1966171168
          %v8104 = vunpack.c.0.s8 %v8103
          %v8105 = vlaneseq
          %v8106 = vshrl.u32 %v8105, 7
          %v8107 = vsub.s32 %v8104, %v8106
          %v8108 = vrot.slane %v8101, %v8107
          %v8110 = vlaneseq
          %vm8111 = vcmp.ge.s32.totalorder %v8110, 0
          %vm8112 = vcmp.lt.s32.totalorder %v8110, 256
          %vm8113 = vmand %vm8111, %vm8112
          %8114 = vst.msk [vmem:[%s1170] sm:$0x3] %vm8113, %v8108
        $region164: #{vitseg_forward.3} parent=87 // pred_fallthru
          _
        %s8115 = sand.u32 %s520, 1
        %s8116 = scalar_lea.sflag [#allocation6], %s8115
        %s8117 = sand.u32 %s520, 1
        %s8118 = smul.addr %s8117, 2
        %s8119 = scalar_lea.vmem [#allocation31], %s8118
        // Predicated region
        $region165: #{vitseg_forward.3} parent=87 // pred_check
          %p8120 = pneg %p530
        $region166: #{vitseg_forward.3} parent=87 // pred_check_branch
          %8122 = sbr.rel (%p8120) target = $region168
        $region167: #{vitseg_forward.3} parent=87 // pred_region
          %s8124 = ssub.s32 32, 32
          %8125 = vsyncadd %s8116, %s8124
          %s8126 = smul.addr %s62, 2
          %s8127 = smul.addr %s8126, 16
          %s8128 = scalar_lea.hbm %s17, %s8127
          %s8130 = sshll.u32 %s8119, 4
          %s8131 = int_to_ptr.vmem [resolvable:$true] %s8130
          %8133 = dma.vmem_to_hbm [thread:$0]  %s8131, 32, %s8128, %s8116
        $region168: #{vitseg_forward.3} parent=87 // pred_fallthru
          _
      $region88: #{vitseg_forward.3} parent=5 // pred_fallthru
        _
      %p8134 = scmp.le.s32.totalorder 2, %s53
      // Predicated region
      $region169: #{vitseg_forward.3} parent=5 // pred_check
        %p8135 = pneg %p8134
      $region170: #{vitseg_forward.3} parent=5 // pred_check_branch
        %8137 = sbr.rel (%p8135) target = $region172
      $region171: #{vitseg_forward.3} parent=5 // pred_region
        %s8138 = ssub.s32 %s53, 2
        // Predicated region
        $region173: #{vitseg_forward.3} parent=171 // pred_check
          %p8139 = pneg %p536
        $region174: #{vitseg_forward.3} parent=171 // pred_check_branch
          %8141 = sbr.rel (%p8139) target = $region176
        $region175: #{vitseg_forward.3} parent=171 // pred_region
          %s8142 = sand.u32 %s521, 1
          %s8143 = scalar_lea.sflag [#allocation6], %s8142
          %s8144 = sand.u32 %s521, 1
          %s8145 = smul.addr %s8144, 2
          %s8146 = scalar_lea.vmem [#allocation31], %s8145
          %8147 = dma.done %s8143, 32
        $region176: #{vitseg_forward.3} parent=171 // pred_fallthru
          _
      $region172: #{vitseg_forward.3} parent=5 // pred_fallthru
        _
    $region6: #{vitseg_forward.3} parent=1 // loop_footer
      %s57 = sadd.s32 1, %s53
    $region7: #{vitseg_forward.3} parent=1 // loop_footer_branch
      %52 = sbr.rel target = $region3
    $region8: #{vitseg_forward.3} parent=1 // loop_exit
      _
    %8148 = vsyncpa [#allocation5], 1
    %s8149 = scalar_lea.sflag [#allocation5], 1
    %8150 = vsyncpa %s8149, 1
    %8151 = vsyncpa [#allocation8], 1
    %s8152 = scalar_lea.sflag [#allocation8], 1
    %8153 = vsyncpa %s8152, 1
    %8154 = vsyncpa [#allocation11], 1
    %s8155 = scalar_lea.sflag [#allocation11], 1
    %8156 = vsyncpa %s8155, 1
    %8157 = vsyncpa [#allocation14], 1
    %s8158 = scalar_lea.sflag [#allocation14], 1
    %8159 = vsyncpa %s8158, 1
    %8160 = vsyncpa [#allocation17], 1
    %s8161 = scalar_lea.sflag [#allocation17], 1
    %8162 = vsyncpa %s8161, 1
    %8163 = vsyncpa [#allocation20], 1
    %s8164 = scalar_lea.sflag [#allocation20], 1
    %8165 = vsyncpa %s8164, 1
    %8166 = vsyncpa [#allocation23], 1
    %s8167 = scalar_lea.sflag [#allocation23], 1
    %8168 = vsyncpa %s8167, 1
    %8169 = vsyncpa [#allocation26], 1
    %s8170 = scalar_lea.sflag [#allocation26], 1
    %8171 = vsyncpa %s8170, 1
    %8172 = vsyncpa [#allocation29], 1
    %s8173 = scalar_lea.sflag [#allocation29], 1
    %8174 = vsyncpa %s8173, 1
    %8175 = vsyncpa [#allocation6], 1
    %s8176 = scalar_lea.sflag [#allocation6], 1
    %8177 = vsyncpa %s8176, 1

</llo_original>
